<compile_context>
chip_gen: v7x
topology: tpu7x:2x2x1
jax: 0.10.0
libtpu: 0.0.40
codegen_flags: <defaults>
</compile_context>

<pallas_src>
import math

import jax
import jax.numpy as jnp
from jax.experimental import pallas as pl
from jax.experimental.pallas import tpu as pltpu


# ----------------------------- fused Pallas kernel ---------------------------

def _ddpm_fused_kernel(ab_ref,      # SMEM (B, 2) f32: [sqrt(acp_t), sqrt(1-acp_t)]
                       img_ref,     # (1, H, W, Ci)     f32   x0
                       noise_ref,   # (1, H, W, Ci)     f32   noise
                       cond_ref,    # (1, H, W, Cc)     bf16  seg-mask conditioning
                       temb_ref,    # (1, 1, Hd)        f32   temb projection + conv1 bias
                       w1_ref,      # (9, Ci+Cc, Hd)    bf16  conv1 taps (concat channels)
                       w2_ref,      # (9, Hd, Ci)       bf16  conv2 taps
                       b2_ref,      # (1, Ci)           f32
                       sse_ref,     # out (1, 1, 1)     f32   per-sample sum((noise-eps)^2)
                       xin_ref,     # VMEM (H+2, W+2, Ci+Cc) bf16  padded conv1 input
                       hpad_ref):   # VMEM (H+2, W+2, Hd)    bf16  padded hidden activation
    b = pl.program_id(0)
    _, H, W, Ci = img_ref.shape
    Cc = cond_ref.shape[3]
    Hd = hpad_ref.shape[2]

    # Zero the halo buffers. Scratch persists across grid steps, but the batch
    # axis is "parallel" (may be sharded across TensorCores), so a one-time
    # init gated on program_id==0 would be wrong on the second core; the full
    # fill is a trivial VPU cost per sample.
    xin_ref[...] = jnp.zeros_like(xin_ref)
    hpad_ref[...] = jnp.zeros_like(hpad_ref)

    # ---- fused q_sample + concat-conditioning, padded directly in VMEM ----
    a_t = ab_ref[b, 0]
    s_t = ab_ref[b, 1]
    xin_ref[1:H + 1, 1:W + 1, 0:Ci] = (
        a_t * img_ref[0] + s_t * noise_ref[0]).astype(jnp.bfloat16)
    xin_ref[1:H + 1, 1:W + 1, Ci:Ci + Cc] = cond_ref[0]

    # ---- conv1: 3x3 halo conv over concat([x_t, cond]) as 9 shifted MXU dots
    acc1 = jnp.zeros((H * W, Hd), jnp.float32)
    for ky in range(3):
        for kx in range(3):
            k = ky * 3 + kx
            xs = xin_ref[ky:ky + H, kx:kx + W, :].reshape(H * W, Ci + Cc)
            acc1 = acc1 + jnp.dot(xs, w1_ref[k],
                                  preferred_element_type=jnp.float32)

    # ---- conv1 epilogue: (+bias folded into temb) + SiLU (all f32) ----
    y = acc1 + temb_ref[0]
    y = y * jax.nn.sigmoid(y)

    # padded hidden activation lives only in VMEM (never written to HBM).
    hpad_ref[1:H + 1, 1:W + 1, :] = y.reshape(H, W, Hd).astype(jnp.bfloat16)

    # ---- conv2: 3x3 halo conv, hidden -> Ci (epsilon prediction) ----
    acc2 = jnp.zeros((H * W, Ci), jnp.float32)
    for ky in range(3):
        for kx in range(3):
            k = ky * 3 + kx
            hs = hpad_ref[ky:ky + H, kx:kx + W, :].reshape(H * W, Hd)
            acc2 = acc2 + jnp.dot(hs, w2_ref[k],
                                  preferred_element_type=jnp.float32)
    eps = acc2 + b2_ref[...]

    # ---- fused weighted-MSE partial: per-sample SSE (lane-sparse eps stays in VMEM)
    nz = noise_ref[0].reshape(H * W, Ci)
    d = nz - eps
    ss = jnp.sum(jnp.sum(d * d, axis=1, keepdims=True), axis=0, keepdims=True)
    sse_ref[...] = ss.reshape(1, 1, 1)


def _ddpm_fused_forward(ab, img, noise, cond, temb_b1, w1, w2, b2):
    B, H, W, Ci = img.shape
    Cc = cond.shape[-1]
    Hd = w1.shape[-1]
    return pl.pallas_call(
        _ddpm_fused_kernel,
        grid=(B,),
        in_specs=[
            pl.BlockSpec(memory_space=pltpu.MemorySpace.SMEM),      # ab (B, 2)
            pl.BlockSpec((1, H, W, Ci), lambda b: (b, 0, 0, 0)),    # img
            pl.BlockSpec((1, H, W, Ci), lambda b: (b, 0, 0, 0)),    # noise
            pl.BlockSpec((1, H, W, Cc), lambda b: (b, 0, 0, 0)),    # cond (bf16)
            pl.BlockSpec((1, 1, Hd), lambda b: (b, 0, 0)),          # temb_proj + bc1
            pl.BlockSpec((9, Ci + Cc, Hd), lambda b: (0, 0, 0)),    # conv1 W (concat)
            pl.BlockSpec((9, Hd, Ci), lambda b: (0, 0, 0)),         # conv2 W
            pl.BlockSpec((1, Ci), lambda b: (0, 0)),                # conv2 bias
        ],
        out_specs=pl.BlockSpec((1, 1, 1), lambda b: (b, 0, 0)),
        out_shape=jax.ShapeDtypeStruct((B, 1, 1), jnp.float32),
        scratch_shapes=[
            pltpu.VMEM((H + 2, W + 2, Ci + Cc), jnp.bfloat16),   # padded conv1 input
            pltpu.VMEM((H + 2, W + 2, Hd), jnp.bfloat16),        # padded hidden act.
        ],
        compiler_params=pltpu.CompilerParams(
            dimension_semantics=("parallel",),        # batch across v7x's 2 TCs
        ),
    )(ab, img, noise, cond, temb_b1, w1, w2, b2)


# --------------------------------- glue ---------------------------------------

def _timestep_embedding(t, dim):
    # OpenAI sinusoidal timestep embedding.
    half = dim // 2
    freqs = jnp.exp(-math.log(10000.0) *
                    jnp.arange(half, dtype=jnp.float32) / half)
    args = t.astype(jnp.float32)[:, None] * freqs[None, :]
    return jnp.concatenate([jnp.cos(args), jnp.sin(args)], axis=-1)


def init_params(key, c_img, c_cond, hidden, temb_dim):
    ks = jax.random.split(key, 5)

    def nrm(k, shape, scale, dtype=jnp.float32):
        return (scale * jax.random.normal(k, shape, jnp.float32)).astype(dtype)

    return {
        # time_embed MLP: Linear -> SiLU -> Linear ; emb_layers: SiLU -> Linear
        "wt1": nrm(ks[0], (temb_dim, temb_dim), 0.05),
        "bt1": jnp.zeros((temb_dim,), jnp.float32),
        "wt2": nrm(ks[1], (temb_dim, temb_dim), 0.05),
        "bt2": jnp.zeros((temb_dim,), jnp.float32),
        "wtp": nrm(ks[2], (temb_dim, hidden), 0.05),
        "btp": jnp.zeros((hidden,), jnp.float32),
        # conv1: 3x3, (C_img + C_cond) -> hidden, stored as 9 spatial taps with
        # the img/cond channels pre-concatenated along the input-channel axis.
        "wc1": nrm(ks[3], (9, c_img + c_cond, hidden), 0.05, jnp.bfloat16),
        "bc1": jnp.zeros((hidden,), jnp.float32),
        # conv2: 3x3, hidden -> C_img (epsilon prediction)
        "wc2": nrm(ks[4], (9, hidden, c_img), 0.05, jnp.bfloat16),
        "bc2": jnp.zeros((c_img,), jnp.float32),
    }


def conditional_gaussian_diffusion_loss(params, img, cond_img, t, weights,
                                        noise, sqrt_acp, sqrt_1macp):
    """img / cond_img / noise are NHWC (channels-last) -- kernel's required layout."""
    B, H, W, Ci = img.shape
    Hd = params["wc1"].shape[-1]
    temb_dim = params["wt1"].shape[0]

    # ---- time-embedding MLP (left to XLA: three tiny matmuls) ----
    emb = _timestep_embedding(t, temb_dim)
    h1 = emb @ params["wt1"] + params["bt1"]
    h1 = h1 * jax.nn.sigmoid(h1)
    h2 = h1 @ params["wt2"] + params["bt2"]
    h2 = h2 * jax.nn.sigmoid(h2)
    temb_proj = h2 @ params["wtp"] + params["btp"]
    # fold the conv1 bias into the per-sample time-embedding addend (tiny (B,Hd) add)
    temb_b1 = (temb_proj + params["bc1"][None, :]).reshape(B, 1, Hd)

    # per-sample q_sample coefficients, read from SMEM inside the kernel.
    ab = jnp.stack([sqrt_acp[t], sqrt_1macp[t]], axis=1).astype(jnp.float32)

    sse = _ddpm_fused_forward(
        ab, img, noise, cond_img.astype(jnp.bfloat16), temb_b1,
        params["wc1"], params["wc2"], params["bc2"].reshape(1, Ci))

    # finalize with the TRUE batch size on the host (no block-batch trap):
    # loss = mean_b( w_b * mean_chw((noise - eps)^2) )
    per_sample_mse = sse.reshape(B) / float(H * W * Ci)
    return jnp.mean(weights * per_sample_mse)


# ------------------------- pure-JAX reference (check) -------------------------

def _reference_loss(params, img, cond_img, t, weights, noise, sqrt_acp, sqrt_1macp):
    """Mirrors the kernel math (incl. bf16 rounding of MXU inputs) in plain JAX."""
    B, H, W, Ci = img.shape
    temb_dim = params["wt1"].shape[0]

    def f32(x):
        return x.astype(jnp.float32)

    def conv3x3(x, w):                        # x: (B,H,W,Cin) f32, w: (9,Cin,Cout)
        xp = jnp.pad(x, ((0, 0), (1, 1), (1, 1), (0, 0)))
        out = jnp.zeros(x.shape[:3] + (w.shape[-1],), jnp.float32)
        for ky in range(3):
            for kx in range(3):
                out = out + jnp.einsum("bhwc,cd->bhwd",
                                       xp[:, ky:ky + H, kx:kx + W, :],
                                       f32(w[ky * 3 + kx]))
        return out

    a = sqrt_acp[t][:, None, None, None]
    s = sqrt_1macp[t][:, None, None, None]
    x_t = f32((a * img + s * noise).astype(jnp.bfloat16))
    cond = f32(cond_img.astype(jnp.bfloat16))
    x_in = jnp.concatenate([x_t, cond], axis=-1)

    emb = _timestep_embedding(t, temb_dim)
    h1 = emb @ params["wt1"] + params["bt1"]
    h1 = h1 * jax.nn.sigmoid(h1)
    h2 = h1 @ params["wt2"] + params["bt2"]
    h2 = h2 * jax.nn.sigmoid(h2)
    temb = h2 @ params["wtp"] + params["btp"]

    h = (conv3x3(x_in, params["wc1"])
         + params["bc1"][None, None, None, :] + temb[:, None, None, :])
    h = h * jax.nn.sigmoid(h)
    h = f32(h.astype(jnp.bfloat16))
    eps = conv3x3(h, params["wc2"]) + params["bc2"][None, None, None, :]

    mse = jnp.mean((noise - eps) ** 2, axis=(1, 2, 3))
    return jnp.mean(weights * mse)


if __name__ == "__main__":
    B, C_IMG, C_COND, H, W = 2, 4, 4, 16, 16
    HIDDEN, TEMB, T = 128, 128, 100      # 128 = lane-dense hidden / temb dims

    key = jax.random.PRNGKey(0)
    k_img, k_cond, k_noise, k_t, k_params = jax.random.split(key, 5)

    # NHWC (channels-last) is the required kernel layout -- equivalent to the
    # PyTorch NCHW tensors transposed once outside the hot path.
    img = jax.random.normal(k_img, (B, H, W, C_IMG), jnp.float32)
    cond_img = jax.random.normal(k_cond, (B, H, W, C_COND), jnp.float32)
    noise = jax.random.normal(k_noise, (B, H, W, C_IMG), jnp.float32)

    # UniformSampler.sample: t ~ U[0, T), weights = 1
    t = jax.random.randint(k_t, (B,), 0, T)
    weights = jnp.ones((B,), jnp.float32)

    # Linear beta schedule -> alphas_cumprod (SpacedDiffusion coefficients).
    betas = jnp.linspace(1e-4, 0.02, T, dtype=jnp.float32)
    acp = jnp.cumprod(1.0 - betas)
    sqrt_acp = jnp.sqrt(acp)
    sqrt_1macp = jnp.sqrt(1.0 - acp)

    params = init_params(k_params, C_IMG, C_COND, HIDDEN, TEMB)

    loss_fn = jax.jit(conditional_gaussian_diffusion_loss)
    loss = jax.block_until_ready(
        loss_fn(params, img, cond_img, t, weights, noise, sqrt_acp, sqrt_1macp))

    ref = jax.block_until_ready(
        jax.jit(_reference_loss)(params, img, cond_img, t, weights, noise,
                                 sqrt_acp, sqrt_1macp))

    assert loss.shape == () and bool(jnp.isfinite(loss)), loss
    assert abs(float(loss) - float(ref)) <= 1e-2 * max(1.0, abs(float(ref))), (loss, ref)
    print("KERNEL_OK")
</pallas_src>

<mosaic_0001>
module attributes {stable_mosaic.version = 11 : i64} {
  func.func @_ddpm_fused_kernel(%arg0: i32, %arg1: memref<2x2xf32, #tpu.memory_space<smem>>, %arg2: memref<1x16x16x4xf32, #tpu.memory_space<vmem>>, %arg3: memref<1x16x16x4xf32, #tpu.memory_space<vmem>>, %arg4: memref<1x16x16x4xbf16, #tpu.memory_space<vmem>>, %arg5: memref<1x1x128xf32, #tpu.memory_space<vmem>>, %arg6: memref<9x8x128xbf16, #tpu.memory_space<vmem>>, %arg7: memref<9x128x4xbf16, #tpu.memory_space<vmem>>, %arg8: memref<1x4xf32, #tpu.memory_space<vmem>>, %arg9: memref<1x1x1xf32, #tpu.memory_space<vmem>>, %arg10: memref<18x18x8xbf16, #tpu.memory_space<vmem>>, %arg11: memref<18x18x128xbf16, #tpu.memory_space<vmem>>) attributes {dimension_semantics = [#tpu.dimension_semantics<parallel>], iteration_bounds = array<i64: 2>, scalar_prefetch = 0 : i64, scratch_operands = 2 : i64, tpu.core_type = #tpu.core_type<tc>, window_params = [{transform_indices = @transform_0, window_bounds = array<i64: 2, 2>}, {transform_indices = @transform_1, window_bounds = array<i64: 1, 16, 16, 4>}, {transform_indices = @transform_2, window_bounds = array<i64: 1, 16, 16, 4>}, {transform_indices = @transform_3, window_bounds = array<i64: 1, 16, 16, 4>}, {transform_indices = @transform_4, window_bounds = array<i64: 1, 1, 128>}, {pipeline_mode = #tpu.pipeline_mode<synchronous>, transform_indices = @transform_5, window_bounds = array<i64: 9, 8, 128>}, {pipeline_mode = #tpu.pipeline_mode<synchronous>, transform_indices = @transform_6, window_bounds = array<i64: 9, 128, 4>}, {pipeline_mode = #tpu.pipeline_mode<synchronous>, transform_indices = @transform_7, window_bounds = array<i64: 1, 4>}, {transform_indices = @transform_8, window_bounds = array<i64: 1, 1, 1>}]} {
    %cst = arith.constant 0.000000e+00 : bf16
    %0 = vector.broadcast %cst : bf16 to vector<18x18x8xbf16>
    %c0 = arith.constant 0 : index
    %c0_0 = arith.constant 0 : index
    %c0_1 = arith.constant 0 : index
    %1 = vector.load %arg10[%c0, %c0_0, %c0_1] : memref<18x18x8xbf16, #tpu.memory_space<vmem>>, vector<18x18x8xbf16>
    tpu.vector_store %arg10[%c0, %c0_0, %c0_1], %0 {strides = array<i32>} : memref<18x18x8xbf16, #tpu.memory_space<vmem>>, vector<18x18x8xbf16>,
    %cst_2 = arith.constant 0.000000e+00 : bf16
    %2 = vector.broadcast %cst_2 : bf16 to vector<18x18x128xbf16>
    %c0_3 = arith.constant 0 : index
    %c0_4 = arith.constant 0 : index
    %c0_5 = arith.constant 0 : index
    %3 = vector.load %arg11[%c0_3, %c0_4, %c0_5] : memref<18x18x128xbf16, #tpu.memory_space<vmem>>, vector<18x18x128xbf16>
    tpu.vector_store %arg11[%c0_3, %c0_4, %c0_5], %2 {strides = array<i32>} : memref<18x18x128xbf16, #tpu.memory_space<vmem>>, vector<18x18x128xbf16>,
    %4 = arith.index_cast %arg0 : i32 to index
    %c0_6 = arith.constant 0 : index
    %5 = memref.load %arg1[%4, %c0_6] : memref<2x2xf32, #tpu.memory_space<smem>>
    %6 = arith.index_cast %arg0 : i32 to index
    %c1 = arith.constant 1 : index
    %7 = memref.load %arg1[%6, %c1] : memref<2x2xf32, #tpu.memory_space<smem>>
    %c0_7 = arith.constant 0 : index
    %c0_8 = arith.constant 0 : index
    %c0_9 = arith.constant 0 : index
    %c0_10 = arith.constant 0 : index
    %8 = vector.load %arg2[%c0_7, %c0_8, %c0_9, %c0_10] : memref<1x16x16x4xf32, #tpu.memory_space<vmem>>, vector<1x16x16x4xf32>
    %9 = vector.shape_cast %8 : vector<1x16x16x4xf32> to vector<16x16x4xf32>
    %10 = vector.broadcast %5 : f32 to vector<16x16x4xf32>
    %11 = arith.mulf %10, %9 : vector<16x16x4xf32>
    %c0_11 = arith.constant 0 : index
    %c0_12 = arith.constant 0 : index
    %c0_13 = arith.constant 0 : index
    %c0_14 = arith.constant 0 : index
    %12 = vector.load %arg3[%c0_11, %c0_12, %c0_13, %c0_14] : memref<1x16x16x4xf32, #tpu.memory_space<vmem>>, vector<1x16x16x4xf32>
    %13 = vector.shape_cast %12 : vector<1x16x16x4xf32> to vector<16x16x4xf32>
    %14 = vector.broadcast %7 : f32 to vector<16x16x4xf32>
    %15 = arith.mulf %14, %13 : vector<16x16x4xf32>
    %16 = arith.addf %11, %15 : vector<16x16x4xf32>
    %17 = arith.truncf %16 : vector<16x16x4xf32> to vector<16x16x4xbf16>
    %c1_15 = arith.constant 1 : index
    %c1_16 = arith.constant 1 : index
    %c0_17 = arith.constant 0 : index
    %18 = vector.load %arg10[%c1_15, %c1_16, %c0_17] : memref<18x18x8xbf16, #tpu.memory_space<vmem>>, vector<16x16x4xbf16>
    tpu.vector_store %arg10[%c1_15, %c1_16, %c0_17], %17 {strides = array<i32>} : memref<18x18x8xbf16, #tpu.memory_space<vmem>>, vector<16x16x4xbf16>,
    %c0_18 = arith.constant 0 : index
    %c0_19 = arith.constant 0 : index
    %c0_20 = arith.constant 0 : index
    %c0_21 = arith.constant 0 : index
    %19 = vector.load %arg4[%c0_18, %c0_19, %c0_20, %c0_21] : memref<1x16x16x4xbf16, #tpu.memory_space<vmem>>, vector<1x16x16x4xbf16>
    %20 = vector.shape_cast %19 : vector<1x16x16x4xbf16> to vector<16x16x4xbf16>
    %c1_22 = arith.constant 1 : index
    %c1_23 = arith.constant 1 : index
    %c4 = arith.constant 4 : index
    %21 = vector.load %arg10[%c1_22, %c1_23, %c4] : memref<18x18x8xbf16, #tpu.memory_space<vmem>>, vector<16x16x4xbf16>
    tpu.vector_store %arg10[%c1_22, %c1_23, %c4], %20 {strides = array<i32>} : memref<18x18x8xbf16, #tpu.memory_space<vmem>>, vector<16x16x4xbf16>,
    %cst_24 = arith.constant 0.000000e+00 : f32
    %22 = vector.broadcast %cst_24 : f32 to vector<256x128xf32>
    %c0_25 = arith.constant 0 : index
    %c0_26 = arith.constant 0 : index
    %c0_27 = arith.constant 0 : index
    %23 = vector.load %arg10[%c0_25, %c0_26, %c0_27] : memref<18x18x8xbf16, #tpu.memory_space<vmem>>, vector<16x16x8xbf16>
    %24 = vector.shape_cast %23 : vector<16x16x8xbf16> to vector<256x8xbf16>
    %c0_28 = arith.constant 0 : index
    %c0_29 = arith.constant 0 : index
    %c0_30 = arith.constant 0 : index
    %25 = vector.load %arg6[%c0_28, %c0_29, %c0_30] : memref<9x8x128xbf16, #tpu.memory_space<vmem>>, vector<1x8x128xbf16>
    %26 = vector.shape_cast %25 : vector<1x8x128xbf16> to vector<8x128xbf16>
    %cst_31 = arith.constant dense<0.000000e+00> : vector<256x128xf32>
    %27 = tpu.matmul %24, %26, %cst_31 {dimension_numbers = #tpu.dot_dimension_numbers<[1], [0], [0], [1], [0, 0, 1, 1], [], []>} : vector<256x8xbf16>, vector<8x128xbf16>, vector<256x128xf32> -> vector<256x128xf32>
    %28 = arith.addf %22, %27 : vector<256x128xf32>
    %c0_32 = arith.constant 0 : index
    %c1_33 = arith.constant 1 : index
    %c0_34 = arith.constant 0 : index
    %29 = vector.load %arg10[%c0_32, %c1_33, %c0_34] : memref<18x18x8xbf16, #tpu.memory_space<vmem>>, vector<16x16x8xbf16>
    %30 = vector.shape_cast %29 : vector<16x16x8xbf16> to vector<256x8xbf16>
    %c1_35 = arith.constant 1 : index
    %c0_36 = arith.constant 0 : index
    %c0_37 = arith.constant 0 : index
    %31 = vector.load %arg6[%c1_35, %c0_36, %c0_37] : memref<9x8x128xbf16, #tpu.memory_space<vmem>>, vector<1x8x128xbf16>
    %32 = vector.shape_cast %31 : vector<1x8x128xbf16> to vector<8x128xbf16>
    %cst_38 = arith.constant dense<0.000000e+00> : vector<256x128xf32>
    %33 = tpu.matmul %30, %32, %cst_38 {dimension_numbers = #tpu.dot_dimension_numbers<[1], [0], [0], [1], [0, 0, 1, 1], [], []>} : vector<256x8xbf16>, vector<8x128xbf16>, vector<256x128xf32> -> vector<256x128xf32>
    %34 = arith.addf %28, %33 : vector<256x128xf32>
    %c0_39 = arith.constant 0 : index
    %c2 = arith.constant 2 : index
    %c0_40 = arith.constant 0 : index
    %35 = vector.load %arg10[%c0_39, %c2, %c0_40] : memref<18x18x8xbf16, #tpu.memory_space<vmem>>, vector<16x16x8xbf16>
    %36 = vector.shape_cast %35 : vector<16x16x8xbf16> to vector<256x8xbf16>
    %c2_41 = arith.constant 2 : index
    %c0_42 = arith.constant 0 : index
    %c0_43 = arith.constant 0 : index
    %37 = vector.load %arg6[%c2_41, %c0_42, %c0_43] : memref<9x8x128xbf16, #tpu.memory_space<vmem>>, vector<1x8x128xbf16>
    %38 = vector.shape_cast %37 : vector<1x8x128xbf16> to vector<8x128xbf16>
    %cst_44 = arith.constant dense<0.000000e+00> : vector<256x128xf32>
    %39 = tpu.matmul %36, %38, %cst_44 {dimension_numbers = #tpu.dot_dimension_numbers<[1], [0], [0], [1], [0, 0, 1, 1], [], []>} : vector<256x8xbf16>, vector<8x128xbf16>, vector<256x128xf32> -> vector<256x128xf32>
    %40 = arith.addf %34, %39 : vector<256x128xf32>
    %c1_45 = arith.constant 1 : index
    %c0_46 = arith.constant 0 : index
    %c0_47 = arith.constant 0 : index
    %41 = vector.load %arg10[%c1_45, %c0_46, %c0_47] : memref<18x18x8xbf16, #tpu.memory_space<vmem>>, vector<16x16x8xbf16>
    %42 = vector.shape_cast %41 : vector<16x16x8xbf16> to vector<256x8xbf16>
    %c3 = arith.constant 3 : index
    %c0_48 = arith.constant 0 : index
    %c0_49 = arith.constant 0 : index
    %43 = vector.load %arg6[%c3, %c0_48, %c0_49] : memref<9x8x128xbf16, #tpu.memory_space<vmem>>, vector<1x8x128xbf16>
    %44 = vector.shape_cast %43 : vector<1x8x128xbf16> to vector<8x128xbf16>
    %cst_50 = arith.constant dense<0.000000e+00> : vector<256x128xf32>
    %45 = tpu.matmul %42, %44, %cst_50 {dimension_numbers = #tpu.dot_dimension_numbers<[1], [0], [0], [1], [0, 0, 1, 1], [], []>} : vector<256x8xbf16>, vector<8x128xbf16>, vector<256x128xf32> -> vector<256x128xf32>
    %46 = arith.addf %40, %45 : vector<256x128xf32>
    %c1_51 = arith.constant 1 : index
    %c1_52 = arith.constant 1 : index
    %c0_53 = arith.constant 0 : index
    %47 = vector.load %arg10[%c1_51, %c1_52, %c0_53] : memref<18x18x8xbf16, #tpu.memory_space<vmem>>, vector<16x16x8xbf16>
    %48 = vector.shape_cast %47 : vector<16x16x8xbf16> to vector<256x8xbf16>
    %c4_54 = arith.constant 4 : index
    %c0_55 = arith.constant 0 : index
    %c0_56 = arith.constant 0 : index
    %49 = vector.load %arg6[%c4_54, %c0_55, %c0_56] : memref<9x8x128xbf16, #tpu.memory_space<vmem>>, vector<1x8x128xbf16>
    %50 = vector.shape_cast %49 : vector<1x8x128xbf16> to vector<8x128xbf16>
    %cst_57 = arith.constant dense<0.000000e+00> : vector<256x128xf32>
    %51 = tpu.matmul %48, %50, %cst_57 {dimension_numbers = #tpu.dot_dimension_numbers<[1], [0], [0], [1], [0, 0, 1, 1], [], []>} : vector<256x8xbf16>, vector<8x128xbf16>, vector<256x128xf32> -> vector<256x128xf32>
    %52 = arith.addf %46, %51 : vector<256x128xf32>
    %c1_58 = arith.constant 1 : index
    %c2_59 = arith.constant 2 : index
    %c0_60 = arith.constant 0 : index
    %53 = vector.load %arg10[%c1_58, %c2_59, %c0_60] : memref<18x18x8xbf16, #tpu.memory_space<vmem>>, vector<16x16x8xbf16>
    %54 = vector.shape_cast %53 : vector<16x16x8xbf16> to vector<256x8xbf16>
    %c5 = arith.constant 5 : index
    %c0_61 = arith.constant 0 : index
    %c0_62 = arith.constant 0 : index
    %55 = vector.load %arg6[%c5, %c0_61, %c0_62] : memref<9x8x128xbf16, #tpu.memory_space<vmem>>, vector<1x8x128xbf16>
    %56 = vector.shape_cast %55 : vector<1x8x128xbf16> to vector<8x128xbf16>
    %cst_63 = arith.constant dense<0.000000e+00> : vector<256x128xf32>
    %57 = tpu.matmul %54, %56, %cst_63 {dimension_numbers = #tpu.dot_dimension_numbers<[1], [0], [0], [1], [0, 0, 1, 1], [], []>} : vector<256x8xbf16>, vector<8x128xbf16>, vector<256x128xf32> -> vector<256x128xf32>
    %58 = arith.addf %52, %57 : vector<256x128xf32>
    %c2_64 = arith.constant 2 : index
    %c0_65 = arith.constant 0 : index
    %c0_66 = arith.constant 0 : index
    %59 = vector.load %arg10[%c2_64, %c0_65, %c0_66] : memref<18x18x8xbf16, #tpu.memory_space<vmem>>, vector<16x16x8xbf16>
    %60 = vector.shape_cast %59 : vector<16x16x8xbf16> to vector<256x8xbf16>
    %c6 = arith.constant 6 : index
    %c0_67 = arith.constant 0 : index
    %c0_68 = arith.constant 0 : index
    %61 = vector.load %arg6[%c6, %c0_67, %c0_68] : memref<9x8x128xbf16, #tpu.memory_space<vmem>>, vector<1x8x128xbf16>
    %62 = vector.shape_cast %61 : vector<1x8x128xbf16> to vector<8x128xbf16>
    %cst_69 = arith.constant dense<0.000000e+00> : vector<256x128xf32>
    %63 = tpu.matmul %60, %62, %cst_69 {dimension_numbers = #tpu.dot_dimension_numbers<[1], [0], [0], [1], [0, 0, 1, 1], [], []>} : vector<256x8xbf16>, vector<8x128xbf16>, vector<256x128xf32> -> vector<256x128xf32>
    %64 = arith.addf %58, %63 : vector<256x128xf32>
    %c2_70 = arith.constant 2 : index
    %c1_71 = arith.constant 1 : index
    %c0_72 = arith.constant 0 : index
    %65 = vector.load %arg10[%c2_70, %c1_71, %c0_72] : memref<18x18x8xbf16, #tpu.memory_space<vmem>>, vector<16x16x8xbf16>
    %66 = vector.shape_cast %65 : vector<16x16x8xbf16> to vector<256x8xbf16>
    %c7 = arith.constant 7 : index
    %c0_73 = arith.constant 0 : index
    %c0_74 = arith.constant 0 : index
    %67 = vector.load %arg6[%c7, %c0_73, %c0_74] : memref<9x8x128xbf16, #tpu.memory_space<vmem>>, vector<1x8x128xbf16>
    %68 = vector.shape_cast %67 : vector<1x8x128xbf16> to vector<8x128xbf16>
    %cst_75 = arith.constant dense<0.000000e+00> : vector<256x128xf32>
    %69 = tpu.matmul %66, %68, %cst_75 {dimension_numbers = #tpu.dot_dimension_numbers<[1], [0], [0], [1], [0, 0, 1, 1], [], []>} : vector<256x8xbf16>, vector<8x128xbf16>, vector<256x128xf32> -> vector<256x128xf32>
    %70 = arith.addf %64, %69 : vector<256x128xf32>
    %c2_76 = arith.constant 2 : index
    %c2_77 = arith.constant 2 : index
    %c0_78 = arith.constant 0 : index
    %71 = vector.load %arg10[%c2_76, %c2_77, %c0_78] : memref<18x18x8xbf16, #tpu.memory_space<vmem>>, vector<16x16x8xbf16>
    %72 = vector.shape_cast %71 : vector<16x16x8xbf16> to vector<256x8xbf16>
    %c8 = arith.constant 8 : index
    %c0_79 = arith.constant 0 : index
    %c0_80 = arith.constant 0 : index
    %73 = vector.load %arg6[%c8, %c0_79, %c0_80] : memref<9x8x128xbf16, #tpu.memory_space<vmem>>, vector<1x8x128xbf16>
    %74 = vector.shape_cast %73 : vector<1x8x128xbf16> to vector<8x128xbf16>
    %cst_81 = arith.constant dense<0.000000e+00> : vector<256x128xf32>
    %75 = tpu.matmul %72, %74, %cst_81 {dimension_numbers = #tpu.dot_dimension_numbers<[1], [0], [0], [1], [0, 0, 1, 1], [], []>} : vector<256x8xbf16>, vector<8x128xbf16>, vector<256x128xf32> -> vector<256x128xf32>
    %76 = arith.addf %70, %75 : vector<256x128xf32>
    %c0_82 = arith.constant 0 : index
    %c0_83 = arith.constant 0 : index
    %c0_84 = arith.constant 0 : index
    %77 = vector.load %arg5[%c0_82, %c0_83, %c0_84] : memref<1x1x128xf32, #tpu.memory_space<vmem>>, vector<1x1x128xf32>
    %78 = vector.shape_cast %77 : vector<1x1x128xf32> to vector<1x128xf32>
    %79 = vector.broadcast %78 : vector<1x128xf32> to vector<256x128xf32>
    %80 = arith.addf %76, %79 : vector<256x128xf32>
    %81 = arith.negf %80 : vector<256x128xf32>
    %82 = math.exp %81 : vector<256x128xf32>
    %cst_85 = arith.constant 1.000000e+00 : f32
    %83 = vector.broadcast %cst_85 : f32 to vector<256x128xf32>
    %84 = arith.addf %83, %82 : vector<256x128xf32>
    %85 = arith.divf %83, %84 : vector<256x128xf32>
    %86 = arith.mulf %80, %85 : vector<256x128xf32>
    %87 = vector.shape_cast %86 : vector<256x128xf32> to vector<16x16x128xf32>
    %88 = arith.truncf %87 : vector<16x16x128xf32> to vector<16x16x128xbf16>
    %c1_86 = arith.constant 1 : index
    %c1_87 = arith.constant 1 : index
    %c0_88 = arith.constant 0 : index
    %89 = vector.load %arg11[%c1_86, %c1_87, %c0_88] : memref<18x18x128xbf16, #tpu.memory_space<vmem>>, vector<16x16x128xbf16>
    tpu.vector_store %arg11[%c1_86, %c1_87, %c0_88], %88 {strides = array<i32>} : memref<18x18x128xbf16, #tpu.memory_space<vmem>>, vector<16x16x128xbf16>,
    %cst_89 = arith.constant 0.000000e+00 : f32
    %90 = vector.broadcast %cst_89 : f32 to vector<256x4xf32>
    %c0_90 = arith.constant 0 : index
    %c0_91 = arith.constant 0 : index
    %c0_92 = arith.constant 0 : index
    %91 = vector.load %arg11[%c0_90, %c0_91, %c0_92] : memref<18x18x128xbf16, #tpu.memory_space<vmem>>, vector<16x16x128xbf16>
    %92 = vector.shape_cast %91 : vector<16x16x128xbf16> to vector<256x128xbf16>
    %c0_93 = arith.constant 0 : index
    %c0_94 = arith.constant 0 : index
    %c0_95 = arith.constant 0 : index
    %93 = vector.load %arg7[%c0_93, %c0_94, %c0_95] : memref<9x128x4xbf16, #tpu.memory_space<vmem>>, vector<1x128x4xbf16>
    %94 = vector.shape_cast %93 : vector<1x128x4xbf16> to vector<128x4xbf16>
    %cst_96 = arith.constant dense<0.000000e+00> : vector<256x4xf32>
    %95 = tpu.matmul %92, %94, %cst_96 {dimension_numbers = #tpu.dot_dimension_numbers<[1], [0], [0], [1], [0, 0, 1, 1], [], []>} : vector<256x128xbf16>, vector<128x4xbf16>, vector<256x4xf32> -> vector<256x4xf32>
    %96 = arith.addf %90, %95 : vector<256x4xf32>
    %c0_97 = arith.constant 0 : index
    %c1_98 = arith.constant 1 : index
    %c0_99 = arith.constant 0 : index
    %97 = vector.load %arg11[%c0_97, %c1_98, %c0_99] : memref<18x18x128xbf16, #tpu.memory_space<vmem>>, vector<16x16x128xbf16>
    %98 = vector.shape_cast %97 : vector<16x16x128xbf16> to vector<256x128xbf16>
    %c1_100 = arith.constant 1 : index
    %c0_101 = arith.constant 0 : index
    %c0_102 = arith.constant 0 : index
    %99 = vector.load %arg7[%c1_100, %c0_101, %c0_102] : memref<9x128x4xbf16, #tpu.memory_space<vmem>>, vector<1x128x4xbf16>
    %100 = vector.shape_cast %99 : vector<1x128x4xbf16> to vector<128x4xbf16>
    %cst_103 = arith.constant dense<0.000000e+00> : vector<256x4xf32>
    %101 = tpu.matmul %98, %100, %cst_103 {dimension_numbers = #tpu.dot_dimension_numbers<[1], [0], [0], [1], [0, 0, 1, 1], [], []>} : vector<256x128xbf16>, vector<128x4xbf16>, vector<256x4xf32> -> vector<256x4xf32>
    %102 = arith.addf %96, %101 : vector<256x4xf32>
    %c0_104 = arith.constant 0 : index
    %c2_105 = arith.constant 2 : index
    %c0_106 = arith.constant 0 : index
    %103 = vector.load %arg11[%c0_104, %c2_105, %c0_106] : memref<18x18x128xbf16, #tpu.memory_space<vmem>>, vector<16x16x128xbf16>
    %104 = vector.shape_cast %103 : vector<16x16x128xbf16> to vector<256x128xbf16>
    %c2_107 = arith.constant 2 : index
    %c0_108 = arith.constant 0 : index
    %c0_109 = arith.constant 0 : index
    %105 = vector.load %arg7[%c2_107, %c0_108, %c0_109] : memref<9x128x4xbf16, #tpu.memory_space<vmem>>, vector<1x128x4xbf16>
    %106 = vector.shape_cast %105 : vector<1x128x4xbf16> to vector<128x4xbf16>
    %cst_110 = arith.constant dense<0.000000e+00> : vector<256x4xf32>
    %107 = tpu.matmul %104, %106, %cst_110 {dimension_numbers = #tpu.dot_dimension_numbers<[1], [0], [0], [1], [0, 0, 1, 1], [], []>} : vector<256x128xbf16>, vector<128x4xbf16>, vector<256x4xf32> -> vector<256x4xf32>
    %108 = arith.addf %102, %107 : vector<256x4xf32>
    %c1_111 = arith.constant 1 : index
    %c0_112 = arith.constant 0 : index
    %c0_113 = arith.constant 0 : index
    %109 = vector.load %arg11[%c1_111, %c0_112, %c0_113] : memref<18x18x128xbf16, #tpu.memory_space<vmem>>, vector<16x16x128xbf16>
    %110 = vector.shape_cast %109 : vector<16x16x128xbf16> to vector<256x128xbf16>
    %c3_114 = arith.constant 3 : index
    %c0_115 = arith.constant 0 : index
    %c0_116 = arith.constant 0 : index
    %111 = vector.load %arg7[%c3_114, %c0_115, %c0_116] : memref<9x128x4xbf16, #tpu.memory_space<vmem>>, vector<1x128x4xbf16>
    %112 = vector.shape_cast %111 : vector<1x128x4xbf16> to vector<128x4xbf16>
    %cst_117 = arith.constant dense<0.000000e+00> : vector<256x4xf32>
    %113 = tpu.matmul %110, %112, %cst_117 {dimension_numbers = #tpu.dot_dimension_numbers<[1], [0], [0], [1], [0, 0, 1, 1], [], []>} : vector<256x128xbf16>, vector<128x4xbf16>, vector<256x4xf32> -> vector<256x4xf32>
    %114 = arith.addf %108, %113 : vector<256x4xf32>
    %c1_118 = arith.constant 1 : index
    %c1_119 = arith.constant 1 : index
    %c0_120 = arith.constant 0 : index
    %115 = vector.load %arg11[%c1_118, %c1_119, %c0_120] : memref<18x18x128xbf16, #tpu.memory_space<vmem>>, vector<16x16x128xbf16>
    %116 = vector.shape_cast %115 : vector<16x16x128xbf16> to vector<256x128xbf16>
    %c4_121 = arith.constant 4 : index
    %c0_122 = arith.constant 0 : index
    %c0_123 = arith.constant 0 : index
    %117 = vector.load %arg7[%c4_121, %c0_122, %c0_123] : memref<9x128x4xbf16, #tpu.memory_space<vmem>>, vector<1x128x4xbf16>
    %118 = vector.shape_cast %117 : vector<1x128x4xbf16> to vector<128x4xbf16>
    %cst_124 = arith.constant dense<0.000000e+00> : vector<256x4xf32>
    %119 = tpu.matmul %116, %118, %cst_124 {dimension_numbers = #tpu.dot_dimension_numbers<[1], [0], [0], [1], [0, 0, 1, 1], [], []>} : vector<256x128xbf16>, vector<128x4xbf16>, vector<256x4xf32> -> vector<256x4xf32>
    %120 = arith.addf %114, %119 : vector<256x4xf32>
    %c1_125 = arith.constant 1 : index
    %c2_126 = arith.constant 2 : index
    %c0_127 = arith.constant 0 : index
    %121 = vector.load %arg11[%c1_125, %c2_126, %c0_127] : memref<18x18x128xbf16, #tpu.memory_space<vmem>>, vector<16x16x128xbf16>
    %122 = vector.shape_cast %121 : vector<16x16x128xbf16> to vector<256x128xbf16>
    %c5_128 = arith.constant 5 : index
    %c0_129 = arith.constant 0 : index
    %c0_130 = arith.constant 0 : index
    %123 = vector.load %arg7[%c5_128, %c0_129, %c0_130] : memref<9x128x4xbf16, #tpu.memory_space<vmem>>, vector<1x128x4xbf16>
    %124 = vector.shape_cast %123 : vector<1x128x4xbf16> to vector<128x4xbf16>
    %cst_131 = arith.constant dense<0.000000e+00> : vector<256x4xf32>
    %125 = tpu.matmul %122, %124, %cst_131 {dimension_numbers = #tpu.dot_dimension_numbers<[1], [0], [0], [1], [0, 0, 1, 1], [], []>} : vector<256x128xbf16>, vector<128x4xbf16>, vector<256x4xf32> -> vector<256x4xf32>
    %126 = arith.addf %120, %125 : vector<256x4xf32>
    %c2_132 = arith.constant 2 : index
    %c0_133 = arith.constant 0 : index
    %c0_134 = arith.constant 0 : index
    %127 = vector.load %arg11[%c2_132, %c0_133, %c0_134] : memref<18x18x128xbf16, #tpu.memory_space<vmem>>, vector<16x16x128xbf16>
    %128 = vector.shape_cast %127 : vector<16x16x128xbf16> to vector<256x128xbf16>
    %c6_135 = arith.constant 6 : index
    %c0_136 = arith.constant 0 : index
    %c0_137 = arith.constant 0 : index
    %129 = vector.load %arg7[%c6_135, %c0_136, %c0_137] : memref<9x128x4xbf16, #tpu.memory_space<vmem>>, vector<1x128x4xbf16>
    %130 = vector.shape_cast %129 : vector<1x128x4xbf16> to vector<128x4xbf16>
    %cst_138 = arith.constant dense<0.000000e+00> : vector<256x4xf32>
    %131 = tpu.matmul %128, %130, %cst_138 {dimension_numbers = #tpu.dot_dimension_numbers<[1], [0], [0], [1], [0, 0, 1, 1], [], []>} : vector<256x128xbf16>, vector<128x4xbf16>, vector<256x4xf32> -> vector<256x4xf32>
    %132 = arith.addf %126, %131 : vector<256x4xf32>
    %c2_139 = arith.constant 2 : index
    %c1_140 = arith.constant 1 : index
    %c0_141 = arith.constant 0 : index
    %133 = vector.load %arg11[%c2_139, %c1_140, %c0_141] : memref<18x18x128xbf16, #tpu.memory_space<vmem>>, vector<16x16x128xbf16>
    %134 = vector.shape_cast %133 : vector<16x16x128xbf16> to vector<256x128xbf16>
    %c7_142 = arith.constant 7 : index
    %c0_143 = arith.constant 0 : index
    %c0_144 = arith.constant 0 : index
    %135 = vector.load %arg7[%c7_142, %c0_143, %c0_144] : memref<9x128x4xbf16, #tpu.memory_space<vmem>>, vector<1x128x4xbf16>
    %136 = vector.shape_cast %135 : vector<1x128x4xbf16> to vector<128x4xbf16>
    %cst_145 = arith.constant dense<0.000000e+00> : vector<256x4xf32>
    %137 = tpu.matmul %134, %136, %cst_145 {dimension_numbers = #tpu.dot_dimension_numbers<[1], [0], [0], [1], [0, 0, 1, 1], [], []>} : vector<256x128xbf16>, vector<128x4xbf16>, vector<256x4xf32> -> vector<256x4xf32>
    %138 = arith.addf %132, %137 : vector<256x4xf32>
    %c2_146 = arith.constant 2 : index
    %c2_147 = arith.constant 2 : index
    %c0_148 = arith.constant 0 : index
    %139 = vector.load %arg11[%c2_146, %c2_147, %c0_148] : memref<18x18x128xbf16, #tpu.memory_space<vmem>>, vector<16x16x128xbf16>
    %140 = vector.shape_cast %139 : vector<16x16x128xbf16> to vector<256x128xbf16>
    %c8_149 = arith.constant 8 : index
    %c0_150 = arith.constant 0 : index
    %c0_151 = arith.constant 0 : index
    %141 = vector.load %arg7[%c8_149, %c0_150, %c0_151] : memref<9x128x4xbf16, #tpu.memory_space<vmem>>, vector<1x128x4xbf16>
    %142 = vector.shape_cast %141 : vector<1x128x4xbf16> to vector<128x4xbf16>
    %cst_152 = arith.constant dense<0.000000e+00> : vector<256x4xf32>
    %143 = tpu.matmul %140, %142, %cst_152 {dimension_numbers = #tpu.dot_dimension_numbers<[1], [0], [0], [1], [0, 0, 1, 1], [], []>} : vector<256x128xbf16>, vector<128x4xbf16>, vector<256x4xf32> -> vector<256x4xf32>
    %144 = arith.addf %138, %143 : vector<256x4xf32>
    %c0_153 = arith.constant 0 : index
    %c0_154 = arith.constant 0 : index
    %145 = vector.load %arg8[%c0_153, %c0_154] : memref<1x4xf32, #tpu.memory_space<vmem>>, vector<1x4xf32>
    %146 = vector.broadcast %145 : vector<1x4xf32> to vector<256x4xf32>
    %147 = arith.addf %144, %146 : vector<256x4xf32>
    %c0_155 = arith.constant 0 : index
    %c0_156 = arith.constant 0 : index
    %c0_157 = arith.constant 0 : index
    %c0_158 = arith.constant 0 : index
    %148 = vector.load %arg3[%c0_155, %c0_156, %c0_157, %c0_158] : memref<1x16x16x4xf32, #tpu.memory_space<vmem>>, vector<1x16x16x4xf32>
    %149 = vector.shape_cast %148 : vector<1x16x16x4xf32> to vector<16x16x4xf32>
    %150 = vector.shape_cast %149 : vector<16x16x4xf32> to vector<256x4xf32>
    %151 = arith.subf %150, %147 : vector<256x4xf32>
    %152 = arith.mulf %151, %151 : vector<256x4xf32>
    %cst_159 = arith.constant dense<0.000000e+00> : vector<256xf32>
    %153 = vector.multi_reduction <add>, %152, %cst_159 [1] : vector<256x4xf32> to vector<256xf32>
    %154 = vector.shape_cast %153 : vector<256xf32> to vector<256x1xf32>
    %cst_160 = arith.constant dense<0.000000e+00> : vector<1xf32>
    %155 = vector.multi_reduction <add>, %154, %cst_160 [0] : vector<256x1xf32> to vector<1xf32>
    %156 = vector.shape_cast %155 : vector<1xf32> to vector<1x1xf32>
    %157 = vector.shape_cast %156 : vector<1x1xf32> to vector<1x1x1xf32>
    %c0_161 = arith.constant 0 : index
    %c0_162 = arith.constant 0 : index
    %c0_163 = arith.constant 0 : index
    %158 = vector.load %arg9[%c0_161, %c0_162, %c0_163] : memref<1x1x1xf32, #tpu.memory_space<vmem>>, vector<1x1x1xf32>
    tpu.vector_store %arg9[%c0_161, %c0_162, %c0_163], %157 {strides = array<i32>} : memref<1x1x1xf32, #tpu.memory_space<vmem>>, vector<1x1x1xf32>,
    return
  }
  func.func @transform_0(%arg0: i32) -> (i32, i32) {
    %c0_i32 = arith.constant 0 : i32
    %c0_i32_0 = arith.constant 0 : i32
    %c0_i32_1 = arith.constant 0 : i32
    return %c0_i32, %c0_i32_0 : i32, i32
  }
  func.func @transform_1(%arg0: i32) -> (i32, i32, i32, i32) {
    %c0_i32 = arith.constant 0 : i32
    %c0_i32_0 = arith.constant 0 : i32
    %c0_i32_1 = arith.constant 0 : i32
    %c0_i32_2 = arith.constant 0 : i32
    return %arg0, %c0_i32, %c0_i32_0, %c0_i32_1 : i32, i32, i32, i32
  }
  func.func @transform_2(%arg0: i32) -> (i32, i32, i32, i32) {
    %c0_i32 = arith.constant 0 : i32
    %c0_i32_0 = arith.constant 0 : i32
    %c0_i32_1 = arith.constant 0 : i32
    %c0_i32_2 = arith.constant 0 : i32
    return %arg0, %c0_i32, %c0_i32_0, %c0_i32_1 : i32, i32, i32, i32
  }
  func.func @transform_3(%arg0: i32) -> (i32, i32, i32, i32) {
    %c0_i32 = arith.constant 0 : i32
    %c0_i32_0 = arith.constant 0 : i32
    %c0_i32_1 = arith.constant 0 : i32
    %c0_i32_2 = arith.constant 0 : i32
    return %arg0, %c0_i32, %c0_i32_0, %c0_i32_1 : i32, i32, i32, i32
  }
  func.func @transform_4(%arg0: i32) -> (i32, i32, i32) {
    %c0_i32 = arith.constant 0 : i32
    %c0_i32_0 = arith.constant 0 : i32
    %c0_i32_1 = arith.constant 0 : i32
    return %arg0, %c0_i32, %c0_i32_0 : i32, i32, i32
  }
  func.func @transform_5(%arg0: i32) -> (i32, i32, i32) {
    %c0_i32 = arith.constant 0 : i32
    %c0_i32_0 = arith.constant 0 : i32
    %c0_i32_1 = arith.constant 0 : i32
    %c0_i32_2 = arith.constant 0 : i32
    return %c0_i32, %c0_i32_0, %c0_i32_1 : i32, i32, i32
  }
  func.func @transform_6(%arg0: i32) -> (i32, i32, i32) {
    %c0_i32 = arith.constant 0 : i32
    %c0_i32_0 = arith.constant 0 : i32
    %c0_i32_1 = arith.constant 0 : i32
    %c0_i32_2 = arith.constant 0 : i32
    return %c0_i32, %c0_i32_0, %c0_i32_1 : i32, i32, i32
  }
  func.func @transform_7(%arg0: i32) -> (i32, i32) {
    %c0_i32 = arith.constant 0 : i32
    %c0_i32_0 = arith.constant 0 : i32
    %c0_i32_1 = arith.constant 0 : i32
    return %c0_i32, %c0_i32_0 : i32, i32
  }
  func.func @transform_8(%arg0: i32) -> (i32, i32, i32) {
    %c0_i32 = arith.constant 0 : i32
    %c0_i32_0 = arith.constant 0 : i32
    %c0_i32_1 = arith.constant 0 : i32
    return %arg0, %c0_i32, %c0_i32_0 : i32, i32, i32
  }
}

</mosaic_0001>

<llo_original>
// kernel: conditional_gaussian_diffusion_loss.1
$region0: #{conditional_gaussian_diffusion_loss.1}
  #allocation0 [shape = 'u32[]', space=smem, size = 0x4, offset = 0x4, fixed_abs, tag = 'smem constant byte address 0x4 - core index']
  #allocation1 [shape = 'u32[144,128]{1,0:T(1,128)}', space=vmem, size = 0x12000, scoped, tag = 'internal scratch']
  #allocation2 [shape = 'bf16[18,18,8]{2,1,0:T(8,128)(2,1)}', space=vmem, size = 0x1b000, scoped, tag = 'scratch operand']
  #allocation3 [shape = 'bf16[18,18,128]{2,1,0:T(8,128)(2,1)}', space=vmem, size = 0x1b000, scoped, tag = 'scratch operand']
  %s0 = inlined_call_operand.vmem [shape: f32[2,2], index: 0, kind: input, shape index: {}]
  %s1 = inlined_call_operand.vmem [shape: f32[2,16,16,4], index: 1, kind: input, shape index: {}]
  %s2 = inlined_call_operand.vmem [shape: f32[2,16,16,4], index: 2, kind: input, shape index: {}]
  %s3 = inlined_call_operand.vmem [shape: bf16[2,16,16,4], index: 3, kind: input, shape index: {}]
  %s4 = inlined_call_operand.vmem [shape: f32[2,1,128], index: 4, kind: input, shape index: {}]
  %s5 = inlined_call_operand.vmem [shape: bf16[9,8,128], index: 5, kind: input, shape index: {}]
  %s6 = inlined_call_operand.vmem [shape: bf16[9,128,4], index: 6, kind: input, shape index: {}]
  %s7 = inlined_call_operand.vmem [shape: f32[1,4], index: 7, kind: input, shape index: {}]
  %s8 = inlined_call_operand.vmem [shape: f32[2,1,1], index: 8, kind: output, shape index: {}]
  %s9 = sld [smem:[#allocation0]]
  $region69: #{conditional_gaussian_diffusion_loss.1} parent=0
    _
  %s11 = ssub.s32 1, %s9
  %s12 = scalar_select 0, %s11, %s9
  $region1: #{conditional_gaussian_diffusion_loss.1} parent=0
    #allocation4 [shape = 'u8[1024]{0}', space=smem, size = 0x400, scoped, tag = 'input window, operand 0, single buffered']
    #allocation5 [shape = 's32[2]{0}', space=sflag, size = 0x8, scoped, tag = 'scoped memory for conditional_gaussian_diffusion_loss.1']
    %13 = vsyncpa [#allocation5], 0
    loop: start=0, step=1, limit=4
    $region2: #{conditional_gaussian_diffusion_loss.1} parent=1 // loop_pre_header
      _
    $region3: #{conditional_gaussian_diffusion_loss.1} parent=1 // loop_header
      %s15 = sphi 0, %s19
      %p16 = scmp.ge.s32.totalorder %s15, 4
      %s23 = sphi 0, %s23
      %s25 = sphi 0, %s23
      %s26 = sphi 0, %s25
      %s40 = sphi 0, %s26
      %s46 = sphi 0, %s48
      %s49 = sphi 0, %s46
      %s50 = sphi 0, %s49
      %s66 = sphi 0, %s50
      %s72 = sphi 0, %s74
      %s75 = sphi 0, %s72
      %s76 = sphi 0, %s75
      %s92 = sphi 0, %s76
      %s98 = sphi 0, %s100
      %s101 = sphi 0, %s98
      %s102 = sphi 0, %s101
      %s118 = sphi 0, %s102
      %s124 = sphi 0, %s126
      %s127 = sphi 0, %s124
      %s128 = sphi 0, %s127
      %s144 = sphi 0, %s128
      %s148 = sphi 0, %s148
      %s150 = sphi 0, %s148
      %s151 = sphi 0, %s150
      %s165 = sphi 0, %s151
      %s169 = sphi 0, %s169
      %s171 = sphi 0, %s169
      %s172 = sphi 0, %s171
      %s186 = sphi 0, %s172
      %s190 = sphi 0, %s190
      %s192 = sphi 0, %s190
      %s193 = sphi 0, %s192
      %s207 = sphi 0, %s193
      %s213 = sphi 0, %s215
      %s216 = sphi 0, %s213
      %s217 = sphi 0, %s216
      %s233 = sphi 0, %s217
    $region4: #{conditional_gaussian_diffusion_loss.1} parent=1 // loop_header_branch
      %18 = sbr.rel (%p16) target = $region8
    $region5: #{conditional_gaussian_diffusion_loss.1} parent=1 // loop_body
      %s20 = ssub.s32 %s15, 1
      %s21 = ssub.s32 %s15, 2
      %s22 = sadd.s32 %s15, 1
      %s24 = sadd.s32 %s23, 1
      %p27 = scmp.eq.s32.totalorder %s15, 1
      %p28 = scmp.ne.s32.totalorder %s23, %s25
      %p29 = scmp.eq.s32.totalorder %s15, 0
      %p30 = por %p28, %p29
      %p31 = scmp.ne.s32.totalorder %s23, %s25
      %p32 = scmp.eq.s32.totalorder %s20, 1
      %p33 = por %p31, %p32
      %p34 = scmp.ne.s32.totalorder %s25, %s26
      %p35 = scmp.eq.s32.totalorder %s20, 0
      %p36 = por %p34, %p35
      %p37 = scmp.ne.s32.totalorder %s25, %s26
      %p38 = scmp.eq.s32.totalorder %s21, 1
      %p39 = por %p37, %p38
      %p41 = scmp.ne.s32.totalorder %s26, %s40
      %p42 = scmp.eq.s32.totalorder %s21, 0
      %p43 = por %p41, %p42
      %s44 = ssub.s32 %s15, %s22
      %p45 = scmp.eq.s32.totalorder %s44, 0
      %s47 = sadd.s32 %s46, 1
      %s48 = scalar_select %p45, %s46, %s47
      %p51 = pneg %p45
      %p52 = scmp.eq.s32.totalorder %s15, 1
      %p53 = por %p51, %p52
      %p54 = scmp.ne.s32.totalorder %s46, %s49
      %p55 = scmp.eq.s32.totalorder %s15, 0
      %p56 = por %p54, %p55
      %p57 = scmp.ne.s32.totalorder %s46, %s49
      %p58 = scmp.eq.s32.totalorder %s20, 1
      %p59 = por %p57, %p58
      %p60 = scmp.ne.s32.totalorder %s49, %s50
      %p61 = scmp.eq.s32.totalorder %s20, 0
      %p62 = por %p60, %p61
      %p63 = scmp.ne.s32.totalorder %s49, %s50
      %p64 = scmp.eq.s32.totalorder %s21, 1
      %p65 = por %p63, %p64
      %p67 = scmp.ne.s32.totalorder %s50, %s66
      %p68 = scmp.eq.s32.totalorder %s21, 0
      %p69 = por %p67, %p68
      %s70 = ssub.s32 %s15, %s22
      %p71 = scmp.eq.s32.totalorder %s70, 0
      %s73 = sadd.s32 %s72, 1
      %s74 = scalar_select %p71, %s72, %s73
      %p77 = pneg %p71
      %p78 = scmp.eq.s32.totalorder %s15, 1
      %p79 = por %p77, %p78
      %p80 = scmp.ne.s32.totalorder %s72, %s75
      %p81 = scmp.eq.s32.totalorder %s15, 0
      %p82 = por %p80, %p81
      %p83 = scmp.ne.s32.totalorder %s72, %s75
      %p84 = scmp.eq.s32.totalorder %s20, 1
      %p85 = por %p83, %p84
      %p86 = scmp.ne.s32.totalorder %s75, %s76
      %p87 = scmp.eq.s32.totalorder %s20, 0
      %p88 = por %p86, %p87
      %p89 = scmp.ne.s32.totalorder %s75, %s76
      %p90 = scmp.eq.s32.totalorder %s21, 1
      %p91 = por %p89, %p90
      %p93 = scmp.ne.s32.totalorder %s76, %s92
      %p94 = scmp.eq.s32.totalorder %s21, 0
      %p95 = por %p93, %p94
      %s96 = ssub.s32 %s15, %s22
      %p97 = scmp.eq.s32.totalorder %s96, 0
      %s99 = sadd.s32 %s98, 1
      %s100 = scalar_select %p97, %s98, %s99
      %p103 = pneg %p97
      %p104 = scmp.eq.s32.totalorder %s15, 1
      %p105 = por %p103, %p104
      %p106 = scmp.ne.s32.totalorder %s98, %s101
      %p107 = scmp.eq.s32.totalorder %s15, 0
      %p108 = por %p106, %p107
      %p109 = scmp.ne.s32.totalorder %s98, %s101
      %p110 = scmp.eq.s32.totalorder %s20, 1
      %p111 = por %p109, %p110
      %p112 = scmp.ne.s32.totalorder %s101, %s102
      %p113 = scmp.eq.s32.totalorder %s20, 0
      %p114 = por %p112, %p113
      %p115 = scmp.ne.s32.totalorder %s101, %s102
      %p116 = scmp.eq.s32.totalorder %s21, 1
      %p117 = por %p115, %p116
      %p119 = scmp.ne.s32.totalorder %s102, %s118
      %p120 = scmp.eq.s32.totalorder %s21, 0
      %p121 = por %p119, %p120
      %s122 = ssub.s32 %s15, %s22
      %p123 = scmp.eq.s32.totalorder %s122, 0
      %s125 = sadd.s32 %s124, 1
      %s126 = scalar_select %p123, %s124, %s125
      %p129 = pneg %p123
      %p130 = scmp.eq.s32.totalorder %s15, 1
      %p131 = por %p129, %p130
      %p132 = scmp.ne.s32.totalorder %s124, %s127
      %p133 = scmp.eq.s32.totalorder %s15, 0
      %p134 = por %p132, %p133
      %p135 = scmp.ne.s32.totalorder %s124, %s127
      %p136 = scmp.eq.s32.totalorder %s20, 1
      %p137 = por %p135, %p136
      %p138 = scmp.ne.s32.totalorder %s127, %s128
      %p139 = scmp.eq.s32.totalorder %s20, 0
      %p140 = por %p138, %p139
      %p141 = scmp.ne.s32.totalorder %s127, %s128
      %p142 = scmp.eq.s32.totalorder %s21, 1
      %p143 = por %p141, %p142
      %p145 = scmp.ne.s32.totalorder %s128, %s144
      %p146 = scmp.eq.s32.totalorder %s21, 0
      %p147 = por %p145, %p146
      %s149 = sadd.s32 %s148, 1
      %p152 = scmp.eq.s32.totalorder %s15, 1
      %p153 = scmp.ne.s32.totalorder %s148, %s150
      %p154 = scmp.eq.s32.totalorder %s15, 0
      %p155 = por %p153, %p154
      %p156 = scmp.ne.s32.totalorder %s148, %s150
      %p157 = scmp.eq.s32.totalorder %s20, 1
      %p158 = por %p156, %p157
      %p159 = scmp.ne.s32.totalorder %s150, %s151
      %p160 = scmp.eq.s32.totalorder %s20, 0
      %p161 = por %p159, %p160
      %p162 = scmp.ne.s32.totalorder %s150, %s151
      %p163 = scmp.eq.s32.totalorder %s21, 1
      %p164 = por %p162, %p163
      %p166 = scmp.ne.s32.totalorder %s151, %s165
      %p167 = scmp.eq.s32.totalorder %s21, 0
      %p168 = por %p166, %p167
      %s170 = sadd.s32 %s169, 1
      %p173 = scmp.eq.s32.totalorder %s15, 1
      %p174 = scmp.ne.s32.totalorder %s169, %s171
      %p175 = scmp.eq.s32.totalorder %s15, 0
      %p176 = por %p174, %p175
      %p177 = scmp.ne.s32.totalorder %s169, %s171
      %p178 = scmp.eq.s32.totalorder %s20, 1
      %p179 = por %p177, %p178
      %p180 = scmp.ne.s32.totalorder %s171, %s172
      %p181 = scmp.eq.s32.totalorder %s20, 0
      %p182 = por %p180, %p181
      %p183 = scmp.ne.s32.totalorder %s171, %s172
      %p184 = scmp.eq.s32.totalorder %s21, 1
      %p185 = por %p183, %p184
      %p187 = scmp.ne.s32.totalorder %s172, %s186
      %p188 = scmp.eq.s32.totalorder %s21, 0
      %p189 = por %p187, %p188
      %s191 = sadd.s32 %s190, 1
      %p194 = scmp.eq.s32.totalorder %s15, 1
      %p195 = scmp.ne.s32.totalorder %s190, %s192
      %p196 = scmp.eq.s32.totalorder %s15, 0
      %p197 = por %p195, %p196
      %p198 = scmp.ne.s32.totalorder %s190, %s192
      %p199 = scmp.eq.s32.totalorder %s20, 1
      %p200 = por %p198, %p199
      %p201 = scmp.ne.s32.totalorder %s192, %s193
      %p202 = scmp.eq.s32.totalorder %s20, 0
      %p203 = por %p201, %p202
      %p204 = scmp.ne.s32.totalorder %s192, %s193
      %p205 = scmp.eq.s32.totalorder %s21, 1
      %p206 = por %p204, %p205
      %p208 = scmp.ne.s32.totalorder %s193, %s207
      %p209 = scmp.eq.s32.totalorder %s21, 0
      %p210 = por %p208, %p209
      %s211 = ssub.s32 %s15, %s22
      %p212 = scmp.eq.s32.totalorder %s211, 0
      %s214 = sadd.s32 %s213, 1
      %s215 = scalar_select %p212, %s213, %s214
      %p218 = pneg %p212
      %p219 = scmp.eq.s32.totalorder %s15, 1
      %p220 = por %p218, %p219
      %p221 = scmp.ne.s32.totalorder %s213, %s216
      %p222 = scmp.eq.s32.totalorder %s15, 0
      %p223 = por %p221, %p222
      %p224 = scmp.ne.s32.totalorder %s213, %s216
      %p225 = scmp.eq.s32.totalorder %s20, 1
      %p226 = por %p224, %p225
      %p227 = scmp.ne.s32.totalorder %s216, %s217
      %p228 = scmp.eq.s32.totalorder %s20, 0
      %p229 = por %p227, %p228
      %p230 = scmp.ne.s32.totalorder %s216, %s217
      %p231 = scmp.eq.s32.totalorder %s21, 1
      %p232 = por %p230, %p231
      %p234 = scmp.ne.s32.totalorder %s217, %s233
      %p235 = scmp.eq.s32.totalorder %s21, 0
      %p236 = por %p234, %p235
      %p237 = scmp.le.s32.totalorder 1, %s15
      %p238 = scmp.lt.s32.totalorder %s15, 3
      %p239 = pnand %p237, %p238
      %p240 = pneg %p239
      // Predicated region
      $region9: #{conditional_gaussian_diffusion_loss.1} parent=5 // pred_check
        _
      $region10: #{conditional_gaussian_diffusion_loss.1} parent=5 // pred_check_branch
        %242 = sbr.rel (%p239) target = $region12
      $region11: #{conditional_gaussian_diffusion_loss.1} parent=5 // pred_region
        %s243 = ssub.s32 %s15, 1
        // Predicated region
        $region13: #{conditional_gaussian_diffusion_loss.1} parent=11 // pred_check
          %p244 = pneg %p36
        $region14: #{conditional_gaussian_diffusion_loss.1} parent=11 // pred_check_branch
          %246 = sbr.rel (%p244) target = $region16
        $region15: #{conditional_gaussian_diffusion_loss.1} parent=11 // pred_region
          %s248 = ssub.s32 32, 32
          %249 = vsyncadd [#allocation5], %s248
          %s251 = sshll.u32 %s0, 4
          %s252 = int_to_ptr.vmem [resolvable:$true] %s251
          %254 = dma.vmem_to_smem %s252, 32, [#allocation4], [#allocation5]
        $region16: #{conditional_gaussian_diffusion_loss.1} parent=11 // pred_fallthru
          _
        // Predicated region
        $region17: #{conditional_gaussian_diffusion_loss.1} parent=11 // pred_check
          %p255 = pneg %p161
        $region18: #{conditional_gaussian_diffusion_loss.1} parent=11 // pred_check_branch
          %257 = sbr.rel (%p255) target = $region20
        $region19: #{conditional_gaussian_diffusion_loss.1} parent=11 // pred_region
          _
        $region20: #{conditional_gaussian_diffusion_loss.1} parent=11 // pred_fallthru
          _
        // Predicated region
        $region21: #{conditional_gaussian_diffusion_loss.1} parent=11 // pred_check
          %p258 = pneg %p182
        $region22: #{conditional_gaussian_diffusion_loss.1} parent=11 // pred_check_branch
          %260 = sbr.rel (%p258) target = $region24
        $region23: #{conditional_gaussian_diffusion_loss.1} parent=11 // pred_region
          _
        $region24: #{conditional_gaussian_diffusion_loss.1} parent=11 // pred_fallthru
          _
        // Predicated region
        $region25: #{conditional_gaussian_diffusion_loss.1} parent=11 // pred_check
          %p261 = pneg %p203
        $region26: #{conditional_gaussian_diffusion_loss.1} parent=11 // pred_check_branch
          %263 = sbr.rel (%p261) target = $region28
        $region27: #{conditional_gaussian_diffusion_loss.1} parent=11 // pred_region
          _
        $region28: #{conditional_gaussian_diffusion_loss.1} parent=11 // pred_fallthru
          _
      $region12: #{conditional_gaussian_diffusion_loss.1} parent=5 // pred_fallthru
        _
      %p264 = scmp.lt.s32.totalorder %s15, 2
      // Predicated region
      $region29: #{conditional_gaussian_diffusion_loss.1} parent=5 // pred_check
        %p265 = pneg %p264
      $region30: #{conditional_gaussian_diffusion_loss.1} parent=5 // pred_check_branch
        %267 = sbr.rel (%p265) target = $region32
      $region31: #{conditional_gaussian_diffusion_loss.1} parent=5 // pred_region
        // Predicated region
        $region33: #{conditional_gaussian_diffusion_loss.1} parent=31 // pred_check
          %p268 = pneg %p56
        $region34: #{conditional_gaussian_diffusion_loss.1} parent=31 // pred_check_branch
          %270 = sbr.rel (%p268) target = $region36
        $region35: #{conditional_gaussian_diffusion_loss.1} parent=31 // pred_region
          %p271 = scmp.lt.s32.totalorder %s15, 1
          %s272 = scalar_select %p271, %s15, 1
          %s273 = smul.addr %s272, 32
          %s274 = smul.addr %s273, 8
          %s275 = scalar_lea.vmem %s1, %s274
        $region36: #{conditional_gaussian_diffusion_loss.1} parent=31 // pred_fallthru
          _
        // Predicated region
        $region37: #{conditional_gaussian_diffusion_loss.1} parent=31 // pred_check
          %p276 = pneg %p82
        $region38: #{conditional_gaussian_diffusion_loss.1} parent=31 // pred_check_branch
          %278 = sbr.rel (%p276) target = $region40
        $region39: #{conditional_gaussian_diffusion_loss.1} parent=31 // pred_region
          %p279 = scmp.lt.s32.totalorder %s15, 1
          %s280 = scalar_select %p279, %s15, 1
          %s281 = smul.addr %s280, 32
          %s282 = smul.addr %s281, 8
          %s283 = scalar_lea.vmem %s2, %s282
        $region40: #{conditional_gaussian_diffusion_loss.1} parent=31 // pred_fallthru
          _
        // Predicated region
        $region41: #{conditional_gaussian_diffusion_loss.1} parent=31 // pred_check
          %p284 = pneg %p108
        $region42: #{conditional_gaussian_diffusion_loss.1} parent=31 // pred_check_branch
          %286 = sbr.rel (%p284) target = $region44
        $region43: #{conditional_gaussian_diffusion_loss.1} parent=31 // pred_region
          %p287 = scmp.lt.s32.totalorder %s15, 1
          %s288 = scalar_select %p287, %s15, 1
          %s289 = smul.addr %s288, 32
          %s290 = smul.addr %s289, 4
          %s291 = scalar_lea.vmem %s3, %s290
        $region44: #{conditional_gaussian_diffusion_loss.1} parent=31 // pred_fallthru
          _
        // Predicated region
        $region45: #{conditional_gaussian_diffusion_loss.1} parent=31 // pred_check
          %p292 = pneg %p134
        $region46: #{conditional_gaussian_diffusion_loss.1} parent=31 // pred_check_branch
          %294 = sbr.rel (%p292) target = $region48
        $region47: #{conditional_gaussian_diffusion_loss.1} parent=31 // pred_region
          %p295 = scmp.lt.s32.totalorder %s15, 1
          %s296 = scalar_select %p295, %s15, 1
          %s297 = scalar_lea.vmem %s4, %s296
        $region48: #{conditional_gaussian_diffusion_loss.1} parent=31 // pred_fallthru
          _
      $region32: #{conditional_gaussian_diffusion_loss.1} parent=5 // pred_fallthru
        _
      %p298 = scmp.le.s32.totalorder 1, %s15
      %p299 = scmp.lt.s32.totalorder %s15, 3
      %p300 = pnand %p298, %p299
      %p301 = pneg %p300
      // Predicated region
      $region49: #{conditional_gaussian_diffusion_loss.1} parent=5 // pred_check
        _
      $region50: #{conditional_gaussian_diffusion_loss.1} parent=5 // pred_check_branch
        %303 = sbr.rel (%p300) target = $region52
      $region51: #{conditional_gaussian_diffusion_loss.1} parent=5 // pred_region
        %s304 = ssub.s32 %s15, 1
        // Predicated region
        $region53: #{conditional_gaussian_diffusion_loss.1} parent=51 // pred_check
          %p305 = pneg %p36
        $region54: #{conditional_gaussian_diffusion_loss.1} parent=51 // pred_check_branch
          %307 = sbr.rel (%p305) target = $region56
        $region55: #{conditional_gaussian_diffusion_loss.1} parent=51 // pred_region
          %308 = dma.done [#allocation5], 32
        $region56: #{conditional_gaussian_diffusion_loss.1} parent=51 // pred_fallthru
          _
        %309 = sfence
        %p310 = pneg %p36
        %p311 = pneg %p33
        %p312 = scmp.lt.s32.totalorder %s20, 1
        %s313 = scalar_select %p312, %s20, 1
        %s314 = smul.addr %s313, 32
        %s315 = smul.addr %s314, 8
        %s316 = scalar_lea.vmem %s1, %s315
        %p317 = pneg %p62
        %p318 = pneg %p59
        %p319 = scmp.lt.s32.totalorder %s20, 1
        %s320 = scalar_select %p319, %s20, 1
        %s321 = smul.addr %s320, 32
        %s322 = smul.addr %s321, 8
        %s323 = scalar_lea.vmem %s2, %s322
        %p324 = pneg %p88
        %p325 = pneg %p85
        %p326 = scmp.lt.s32.totalorder %s20, 1
        %s327 = scalar_select %p326, %s20, 1
        %s328 = smul.addr %s327, 32
        %s329 = smul.addr %s328, 4
        %s330 = scalar_lea.vmem %s3, %s329
        %p331 = pneg %p114
        %p332 = pneg %p111
        %p333 = scmp.lt.s32.totalorder %s20, 1
        %s334 = scalar_select %p333, %s20, 1
        %s335 = scalar_lea.vmem %s4, %s334
        %p336 = pneg %p140
        %p337 = pneg %p137
        %p338 = pneg %p161
        %p339 = pneg %p158
        %p340 = pneg %p182
        %p341 = pneg %p179
        %p342 = pneg %p203
        %p343 = pneg %p200
        %p344 = pneg %p229
        %p345 = pneg %p226
        %p346 = scmp.lt.s32.totalorder %s20, 1
        %s347 = scalar_select %p346, %s20, 1
        %s348 = scalar_lea.vmem %s8, %s347
        %p349 = scmp.lt.s32.totalorder %s20, 1
        %s350 = scalar_select %p349, %s20, 1
        %s351 = smul.addr %s350, 32
        %s352 = smul.addr %s351, 8
        %s353 = scalar_lea.vmem %s1, %s352
        %p354 = scmp.lt.s32.totalorder %s20, 1
        %s355 = scalar_select %p354, %s20, 1
        %s356 = smul.addr %s355, 32
        %s357 = smul.addr %s356, 8
        %s358 = scalar_lea.vmem %s2, %s357
        %p359 = scmp.lt.s32.totalorder %s20, 1
        %s360 = scalar_select %p359, %s20, 1
        %s361 = smul.addr %s360, 32
        %s362 = smul.addr %s361, 4
        %s363 = scalar_lea.vmem %s3, %s362
        %p364 = scmp.lt.s32.totalorder %s20, 1
        %s365 = scalar_select %p364, %s20, 1
        %s366 = scalar_lea.vmem %s4, %s365
        %p367 = scmp.lt.s32.totalorder %s20, 1
        %s368 = scalar_select %p367, %s20, 1
        %s369 = scalar_lea.vmem %s8, %s368
        %vm371 = vcmask 60416
        %372 = vst.msk [vmem:[#allocation2] sm:$0xf] %vm371, 0
        %373 = vst.msk [vmem:[#allocation2 + $0x4] sm:$0xf] %vm371, 0
        %vm374 = vcmask 57344
        %375 = vst.msk [vmem:[#allocation2 + $0x8] sm:$0x1] %vm374, 0
        %376 = vst.msk [vmem:[#allocation2 + $0xc] sm:$0xf] %vm371, 0
        %377 = vst.msk [vmem:[#allocation2 + $0x10] sm:$0xf] %vm371, 0
        %378 = vst.msk [vmem:[#allocation2 + $0x14] sm:$0x1] %vm374, 0
        %379 = vst.msk [vmem:[#allocation2 + $0x18] sm:$0xf] %vm371, 0
        %380 = vst.msk [vmem:[#allocation2 + $0x1c] sm:$0xf] %vm371, 0
        %381 = vst.msk [vmem:[#allocation2 + $0x20] sm:$0x1] %vm374, 0
        %382 = vst.msk [vmem:[#allocation2 + $0x24] sm:$0xf] %vm371, 0
        %383 = vst.msk [vmem:[#allocation2 + $0x28] sm:$0xf] %vm371, 0
        %384 = vst.msk [vmem:[#allocation2 + $0x2c] sm:$0x1] %vm374, 0
        %385 = vst.msk [vmem:[#allocation2 + $0x30] sm:$0xf] %vm371, 0
        %386 = vst.msk [vmem:[#allocation2 + $0x34] sm:$0xf] %vm371, 0
        %387 = vst.msk [vmem:[#allocation2 + $0x38] sm:$0x1] %vm374, 0
        %388 = vst.msk [vmem:[#allocation2 + $0x3c] sm:$0xf] %vm371, 0
        %389 = vst.msk [vmem:[#allocation2 + $0x40] sm:$0xf] %vm371, 0
        %390 = vst.msk [vmem:[#allocation2 + $0x44] sm:$0x1] %vm374, 0
        %391 = vst.msk [vmem:[#allocation2 + $0x48] sm:$0xf] %vm371, 0
        %392 = vst.msk [vmem:[#allocation2 + $0x4c] sm:$0xf] %vm371, 0
        %393 = vst.msk [vmem:[#allocation2 + $0x50] sm:$0x1] %vm374, 0
        %394 = vst.msk [vmem:[#allocation2 + $0x54] sm:$0xf] %vm371, 0
        %395 = vst.msk [vmem:[#allocation2 + $0x58] sm:$0xf] %vm371, 0
        %396 = vst.msk [vmem:[#allocation2 + $0x5c] sm:$0x1] %vm374, 0
        %397 = vst.msk [vmem:[#allocation2 + $0x60] sm:$0xf] %vm371, 0
        %398 = vst.msk [vmem:[#allocation2 + $0x64] sm:$0xf] %vm371, 0
        %399 = vst.msk [vmem:[#allocation2 + $0x68] sm:$0x1] %vm374, 0
        %400 = vst.msk [vmem:[#allocation2 + $0x6c] sm:$0xf] %vm371, 0
        %401 = vst.msk [vmem:[#allocation2 + $0x70] sm:$0xf] %vm371, 0
        %402 = vst.msk [vmem:[#allocation2 + $0x74] sm:$0x1] %vm374, 0
        %403 = vst.msk [vmem:[#allocation2 + $0x78] sm:$0xf] %vm371, 0
        %404 = vst.msk [vmem:[#allocation2 + $0x7c] sm:$0xf] %vm371, 0
        %405 = vst.msk [vmem:[#allocation2 + $0x80] sm:$0x1] %vm374, 0
        %406 = vst.msk [vmem:[#allocation2 + $0x84] sm:$0xf] %vm371, 0
        %407 = vst.msk [vmem:[#allocation2 + $0x88] sm:$0xf] %vm371, 0
        %408 = vst.msk [vmem:[#allocation2 + $0x8c] sm:$0x1] %vm374, 0
        %409 = vst.msk [vmem:[#allocation2 + $0x90] sm:$0xf] %vm371, 0
        %410 = vst.msk [vmem:[#allocation2 + $0x94] sm:$0xf] %vm371, 0
        %411 = vst.msk [vmem:[#allocation2 + $0x98] sm:$0x1] %vm374, 0
        %412 = vst.msk [vmem:[#allocation2 + $0x9c] sm:$0xf] %vm371, 0
        %413 = vst.msk [vmem:[#allocation2 + $0xa0] sm:$0xf] %vm371, 0
        %414 = vst.msk [vmem:[#allocation2 + $0xa4] sm:$0x1] %vm374, 0
        %415 = vst.msk [vmem:[#allocation2 + $0xa8] sm:$0xf] %vm371, 0
        %416 = vst.msk [vmem:[#allocation2 + $0xac] sm:$0xf] %vm371, 0
        %417 = vst.msk [vmem:[#allocation2 + $0xb0] sm:$0x1] %vm374, 0
        %418 = vst.msk [vmem:[#allocation2 + $0xb4] sm:$0xf] %vm371, 0
        %419 = vst.msk [vmem:[#allocation2 + $0xb8] sm:$0xf] %vm371, 0
        %420 = vst.msk [vmem:[#allocation2 + $0xbc] sm:$0x1] %vm374, 0
        %421 = vst.msk [vmem:[#allocation2 + $0xc0] sm:$0xf] %vm371, 0
        %422 = vst.msk [vmem:[#allocation2 + $0xc4] sm:$0xf] %vm371, 0
        %423 = vst.msk [vmem:[#allocation2 + $0xc8] sm:$0x1] %vm374, 0
        %424 = vst.msk [vmem:[#allocation2 + $0xcc] sm:$0xf] %vm371, 0
        %425 = vst.msk [vmem:[#allocation2 + $0xd0] sm:$0xf] %vm371, 0
        %426 = vst.msk [vmem:[#allocation2 + $0xd4] sm:$0x1] %vm374, 0
        %427 = vst [vmem:[#allocation3] sm:$0xf] 0
        %428 = vst [vmem:[#allocation3 + $0x4] sm:$0xf] 0
        %429 = vst [vmem:[#allocation3 + $0x8] sm:$0x1] 0
        %430 = vst [vmem:[#allocation3 + $0xc] sm:$0xf] 0
        %431 = vst [vmem:[#allocation3 + $0x10] sm:$0xf] 0
        %432 = vst [vmem:[#allocation3 + $0x14] sm:$0x1] 0
        %433 = vst [vmem:[#allocation3 + $0x18] sm:$0xf] 0
        %434 = vst [vmem:[#allocation3 + $0x1c] sm:$0xf] 0
        %435 = vst [vmem:[#allocation3 + $0x20] sm:$0x1] 0
        %436 = vst [vmem:[#allocation3 + $0x24] sm:$0xf] 0
        %437 = vst [vmem:[#allocation3 + $0x28] sm:$0xf] 0
        %438 = vst [vmem:[#allocation3 + $0x2c] sm:$0x1] 0
        %439 = vst [vmem:[#allocation3 + $0x30] sm:$0xf] 0
        %440 = vst [vmem:[#allocation3 + $0x34] sm:$0xf] 0
        %441 = vst [vmem:[#allocation3 + $0x38] sm:$0x1] 0
        %442 = vst [vmem:[#allocation3 + $0x3c] sm:$0xf] 0
        %443 = vst [vmem:[#allocation3 + $0x40] sm:$0xf] 0
        %444 = vst [vmem:[#allocation3 + $0x44] sm:$0x1] 0
        %445 = vst [vmem:[#allocation3 + $0x48] sm:$0xf] 0
        %446 = vst [vmem:[#allocation3 + $0x4c] sm:$0xf] 0
        %447 = vst [vmem:[#allocation3 + $0x50] sm:$0x1] 0
        %448 = vst [vmem:[#allocation3 + $0x54] sm:$0xf] 0
        %449 = vst [vmem:[#allocation3 + $0x58] sm:$0xf] 0
        %450 = vst [vmem:[#allocation3 + $0x5c] sm:$0x1] 0
        %451 = vst [vmem:[#allocation3 + $0x60] sm:$0xf] 0
        %452 = vst [vmem:[#allocation3 + $0x64] sm:$0xf] 0
        %453 = vst [vmem:[#allocation3 + $0x68] sm:$0x1] 0
        %454 = vst [vmem:[#allocation3 + $0x6c] sm:$0xf] 0
        %455 = vst [vmem:[#allocation3 + $0x70] sm:$0xf] 0
        %456 = vst [vmem:[#allocation3 + $0x74] sm:$0x1] 0
        %457 = vst [vmem:[#allocation3 + $0x78] sm:$0xf] 0
        %458 = vst [vmem:[#allocation3 + $0x7c] sm:$0xf] 0
        %459 = vst [vmem:[#allocation3 + $0x80] sm:$0x1] 0
        %460 = vst [vmem:[#allocation3 + $0x84] sm:$0xf] 0
        %461 = vst [vmem:[#allocation3 + $0x88] sm:$0xf] 0
        %462 = vst [vmem:[#allocation3 + $0x8c] sm:$0x1] 0
        %463 = vst [vmem:[#allocation3 + $0x90] sm:$0xf] 0
        %464 = vst [vmem:[#allocation3 + $0x94] sm:$0xf] 0
        %465 = vst [vmem:[#allocation3 + $0x98] sm:$0x1] 0
        %466 = vst [vmem:[#allocation3 + $0x9c] sm:$0xf] 0
        %467 = vst [vmem:[#allocation3 + $0xa0] sm:$0xf] 0
        %468 = vst [vmem:[#allocation3 + $0xa4] sm:$0x1] 0
        %469 = vst [vmem:[#allocation3 + $0xa8] sm:$0xf] 0
        %470 = vst [vmem:[#allocation3 + $0xac] sm:$0xf] 0
        %471 = vst [vmem:[#allocation3 + $0xb0] sm:$0x1] 0
        %472 = vst [vmem:[#allocation3 + $0xb4] sm:$0xf] 0
        %473 = vst [vmem:[#allocation3 + $0xb8] sm:$0xf] 0
        %474 = vst [vmem:[#allocation3 + $0xbc] sm:$0x1] 0
        %475 = vst [vmem:[#allocation3 + $0xc0] sm:$0xf] 0
        %476 = vst [vmem:[#allocation3 + $0xc4] sm:$0xf] 0
        %477 = vst [vmem:[#allocation3 + $0xc8] sm:$0x1] 0
        %478 = vst [vmem:[#allocation3 + $0xcc] sm:$0xf] 0
        %479 = vst [vmem:[#allocation3 + $0xd0] sm:$0xf] 0
        %480 = vst [vmem:[#allocation3 + $0xd4] sm:$0x1] 0
        %s481 = smul.u32 %s20, 128
        %s482 = sld [smem:[#allocation4 + %s481]]
        %s483 = sadd.s32 %s481, 1
        %s484 = sld [smem:[#allocation4 + %s483]]
        %v485 = vld [vmem:[%s353] sm:$0xff]
        %v486 = vld [vmem:[%s353 + $0x8] sm:$0xff]
        %v487 = vld [vmem:[%s353 + $0x10] sm:$0xff]
        %v488 = vld [vmem:[%s353 + $0x18] sm:$0xff]
        %v489 = vld [vmem:[%s353 + $0x20] sm:$0xff]
        %v490 = vld [vmem:[%s353 + $0x28] sm:$0xff]
        %v491 = vld [vmem:[%s353 + $0x30] sm:$0xff]
        %v492 = vld [vmem:[%s353 + $0x38] sm:$0xff]
        %v493 = vld [vmem:[%s353 + $0x40] sm:$0xff]
        %v494 = vld [vmem:[%s353 + $0x48] sm:$0xff]
        %v495 = vld [vmem:[%s353 + $0x50] sm:$0xff]
        %v496 = vld [vmem:[%s353 + $0x58] sm:$0xff]
        %v497 = vld [vmem:[%s353 + $0x60] sm:$0xff]
        %v498 = vld [vmem:[%s353 + $0x68] sm:$0xff]
        %v499 = vld [vmem:[%s353 + $0x70] sm:$0xff]
        %v500 = vld [vmem:[%s353 + $0x78] sm:$0xff]
        %v501 = vld [vmem:[%s353 + $0x80] sm:$0xff]
        %v502 = vld [vmem:[%s353 + $0x88] sm:$0xff]
        %v503 = vld [vmem:[%s353 + $0x90] sm:$0xff]
        %v504 = vld [vmem:[%s353 + $0x98] sm:$0xff]
        %v505 = vld [vmem:[%s353 + $0xa0] sm:$0xff]
        %v506 = vld [vmem:[%s353 + $0xa8] sm:$0xff]
        %v507 = vld [vmem:[%s353 + $0xb0] sm:$0xff]
        %v508 = vld [vmem:[%s353 + $0xb8] sm:$0xff]
        %v509 = vld [vmem:[%s353 + $0xc0] sm:$0xff]
        %v510 = vld [vmem:[%s353 + $0xc8] sm:$0xff]
        %v511 = vld [vmem:[%s353 + $0xd0] sm:$0xff]
        %v512 = vld [vmem:[%s353 + $0xd8] sm:$0xff]
        %v513 = vld [vmem:[%s353 + $0xe0] sm:$0xff]
        %v514 = vld [vmem:[%s353 + $0xe8] sm:$0xff]
        %v515 = vld [vmem:[%s353 + $0xf0] sm:$0xff]
        %v516 = vld [vmem:[%s353 + $0xf8] sm:$0xff]
        %v517 = vstv %s482
        %v518 = vmul.f32 %v517, %v485
        %v519 = vmul.f32 %v517, %v486
        %v520 = vmul.f32 %v517, %v487
        %v521 = vmul.f32 %v517, %v488
        %v522 = vmul.f32 %v517, %v489
        %v523 = vmul.f32 %v517, %v490
        %v524 = vmul.f32 %v517, %v491
        %v525 = vmul.f32 %v517, %v492
        %v526 = vmul.f32 %v517, %v493
        %v527 = vmul.f32 %v517, %v494
        %v528 = vmul.f32 %v517, %v495
        %v529 = vmul.f32 %v517, %v496
        %v530 = vmul.f32 %v517, %v497
        %v531 = vmul.f32 %v517, %v498
        %v532 = vmul.f32 %v517, %v499
        %v533 = vmul.f32 %v517, %v500
        %v534 = vmul.f32 %v517, %v501
        %v535 = vmul.f32 %v517, %v502
        %v536 = vmul.f32 %v517, %v503
        %v537 = vmul.f32 %v517, %v504
        %v538 = vmul.f32 %v517, %v505
        %v539 = vmul.f32 %v517, %v506
        %v540 = vmul.f32 %v517, %v507
        %v541 = vmul.f32 %v517, %v508
        %v542 = vmul.f32 %v517, %v509
        %v543 = vmul.f32 %v517, %v510
        %v544 = vmul.f32 %v517, %v511
        %v545 = vmul.f32 %v517, %v512
        %v546 = vmul.f32 %v517, %v513
        %v547 = vmul.f32 %v517, %v514
        %v548 = vmul.f32 %v517, %v515
        %v549 = vmul.f32 %v517, %v516
        %v550 = vld [vmem:[%s358] sm:$0xff]
        %v551 = vld [vmem:[%s358 + $0x8] sm:$0xff]
        %v552 = vld [vmem:[%s358 + $0x10] sm:$0xff]
        %v553 = vld [vmem:[%s358 + $0x18] sm:$0xff]
        %v554 = vld [vmem:[%s358 + $0x20] sm:$0xff]
        %v555 = vld [vmem:[%s358 + $0x28] sm:$0xff]
        %v556 = vld [vmem:[%s358 + $0x30] sm:$0xff]
        %v557 = vld [vmem:[%s358 + $0x38] sm:$0xff]
        %v558 = vld [vmem:[%s358 + $0x40] sm:$0xff]
        %v559 = vld [vmem:[%s358 + $0x48] sm:$0xff]
        %v560 = vld [vmem:[%s358 + $0x50] sm:$0xff]
        %v561 = vld [vmem:[%s358 + $0x58] sm:$0xff]
        %v562 = vld [vmem:[%s358 + $0x60] sm:$0xff]
        %v563 = vld [vmem:[%s358 + $0x68] sm:$0xff]
        %v564 = vld [vmem:[%s358 + $0x70] sm:$0xff]
        %v565 = vld [vmem:[%s358 + $0x78] sm:$0xff]
        %v566 = vld [vmem:[%s358 + $0x80] sm:$0xff]
        %v567 = vld [vmem:[%s358 + $0x88] sm:$0xff]
        %v568 = vld [vmem:[%s358 + $0x90] sm:$0xff]
        %v569 = vld [vmem:[%s358 + $0x98] sm:$0xff]
        %v570 = vld [vmem:[%s358 + $0xa0] sm:$0xff]
        %v571 = vld [vmem:[%s358 + $0xa8] sm:$0xff]
        %v572 = vld [vmem:[%s358 + $0xb0] sm:$0xff]
        %v573 = vld [vmem:[%s358 + $0xb8] sm:$0xff]
        %v574 = vld [vmem:[%s358 + $0xc0] sm:$0xff]
        %v575 = vld [vmem:[%s358 + $0xc8] sm:$0xff]
        %v576 = vld [vmem:[%s358 + $0xd0] sm:$0xff]
        %v577 = vld [vmem:[%s358 + $0xd8] sm:$0xff]
        %v578 = vld [vmem:[%s358 + $0xe0] sm:$0xff]
        %v579 = vld [vmem:[%s358 + $0xe8] sm:$0xff]
        %v580 = vld [vmem:[%s358 + $0xf0] sm:$0xff]
        %v581 = vld [vmem:[%s358 + $0xf8] sm:$0xff]
        %v582 = vstv %s484
        %v583 = vmul.f32 %v582, %v550
        %v584 = vmul.f32 %v582, %v551
        %v585 = vmul.f32 %v582, %v552
        %v586 = vmul.f32 %v582, %v553
        %v587 = vmul.f32 %v582, %v554
        %v588 = vmul.f32 %v582, %v555
        %v589 = vmul.f32 %v582, %v556
        %v590 = vmul.f32 %v582, %v557
        %v591 = vmul.f32 %v582, %v558
        %v592 = vmul.f32 %v582, %v559
        %v593 = vmul.f32 %v582, %v560
        %v594 = vmul.f32 %v582, %v561
        %v595 = vmul.f32 %v582, %v562
        %v596 = vmul.f32 %v582, %v563
        %v597 = vmul.f32 %v582, %v564
        %v598 = vmul.f32 %v582, %v565
        %v599 = vmul.f32 %v582, %v566
        %v600 = vmul.f32 %v582, %v567
        %v601 = vmul.f32 %v582, %v568
        %v602 = vmul.f32 %v582, %v569
        %v603 = vmul.f32 %v582, %v570
        %v604 = vmul.f32 %v582, %v571
        %v605 = vmul.f32 %v582, %v572
        %v606 = vmul.f32 %v582, %v573
        %v607 = vmul.f32 %v582, %v574
        %v608 = vmul.f32 %v582, %v575
        %v609 = vmul.f32 %v582, %v576
        %v610 = vmul.f32 %v582, %v577
        %v611 = vmul.f32 %v582, %v578
        %v612 = vmul.f32 %v582, %v579
        %v613 = vmul.f32 %v582, %v580
        %v614 = vmul.f32 %v582, %v581
        %v615 = vadd.f32 %v518, %v583
        %v616 = vadd.f32 %v519, %v584
        %v617 = vadd.f32 %v520, %v585
        %v618 = vadd.f32 %v521, %v586
        %v619 = vadd.f32 %v522, %v587
        %v620 = vadd.f32 %v523, %v588
        %v621 = vadd.f32 %v524, %v589
        %v622 = vadd.f32 %v525, %v590
        %v623 = vadd.f32 %v526, %v591
        %v624 = vadd.f32 %v527, %v592
        %v625 = vadd.f32 %v528, %v593
        %v626 = vadd.f32 %v529, %v594
        %v627 = vadd.f32 %v530, %v595
        %v628 = vadd.f32 %v531, %v596
        %v629 = vadd.f32 %v532, %v597
        %v630 = vadd.f32 %v533, %v598
        %v631 = vadd.f32 %v534, %v599
        %v632 = vadd.f32 %v535, %v600
        %v633 = vadd.f32 %v536, %v601
        %v634 = vadd.f32 %v537, %v602
        %v635 = vadd.f32 %v538, %v603
        %v636 = vadd.f32 %v539, %v604
        %v637 = vadd.f32 %v540, %v605
        %v638 = vadd.f32 %v541, %v606
        %v639 = vadd.f32 %v542, %v607
        %v640 = vadd.f32 %v543, %v608
        %v641 = vadd.f32 %v544, %v609
        %v642 = vadd.f32 %v545, %v610
        %v643 = vadd.f32 %v546, %v611
        %v644 = vadd.f32 %v547, %v612
        %v645 = vadd.f32 %v548, %v613
        %v646 = vadd.f32 %v549, %v614
        %v647 = vpack.c.bf16 %v616, %v615
        %v648 = vpack.c.bf16 %v618, %v617
        %v649 = vpack.c.bf16 %v620, %v619
        %v650 = vpack.c.bf16 %v622, %v621
        %v651 = vpack.c.bf16 %v624, %v623
        %v652 = vpack.c.bf16 %v626, %v625
        %v653 = vpack.c.bf16 %v628, %v627
        %v654 = vpack.c.bf16 %v630, %v629
        %v655 = vpack.c.bf16 %v632, %v631
        %v656 = vpack.c.bf16 %v634, %v633
        %v657 = vpack.c.bf16 %v636, %v635
        %v658 = vpack.c.bf16 %v638, %v637
        %v659 = vpack.c.bf16 %v640, %v639
        %v660 = vpack.c.bf16 %v642, %v641
        %v661 = vpack.c.bf16 %v644, %v643
        %v662 = vpack.c.bf16 %v646, %v645
        %v679 = vunpack.c.l.b16 %v647
        %v680 = vunpack.c.h.b16 %v647
        %v681 = vunpack.c.l.b16 %v648
        %v682 = vunpack.c.h.b16 %v648
        %v683 = vunpack.c.l.b16 %v649
        %v684 = vunpack.c.h.b16 %v649
        %v685 = vunpack.c.l.b16 %v650
        %v686 = vunpack.c.h.b16 %v650
        %v687 = vunpack.c.l.b16 %v651
        %v688 = vunpack.c.h.b16 %v651
        %v689 = vunpack.c.l.b16 %v652
        %v690 = vunpack.c.h.b16 %v652
        %v691 = vunpack.c.l.b16 %v653
        %v692 = vunpack.c.h.b16 %v653
        %v693 = vunpack.c.l.b16 %v654
        %v694 = vunpack.c.h.b16 %v654
        %v695 = vunpack.c.l.b16 %v655
        %v696 = vunpack.c.h.b16 %v655
        %v697 = vunpack.c.l.b16 %v656
        %v698 = vunpack.c.h.b16 %v656
        %v699 = vunpack.c.l.b16 %v657
        %v700 = vunpack.c.h.b16 %v657
        %v701 = vunpack.c.l.b16 %v658
        %v702 = vunpack.c.h.b16 %v658
        %v703 = vunpack.c.l.b16 %v659
        %v704 = vunpack.c.h.b16 %v659
        %v705 = vunpack.c.l.b16 %v660
        %v706 = vunpack.c.h.b16 %v660
        %v707 = vunpack.c.l.b16 %v661
        %v708 = vunpack.c.h.b16 %v661
        %v709 = vunpack.c.l.b16 %v662
        %v710 = vunpack.c.h.b16 %v662
        %v711 = vpack.c.b16 %v679, %v679
        %v712 = vpack.c.b16 %v680, %v680
        %v713 = vpack.c.b16 %v681, %v681
        %v714 = vpack.c.b16 %v682, %v682
        %v715 = vpack.c.b16 %v683, %v683
        %v716 = vpack.c.b16 %v684, %v684
        %v717 = vpack.c.b16 %v685, %v685
        %v718 = vpack.c.b16 %v686, %v686
        %v719 = vpack.c.b16 %v687, %v687
        %v720 = vpack.c.b16 %v688, %v688
        %v721 = vpack.c.b16 %v689, %v689
        %v722 = vpack.c.b16 %v690, %v690
        %v723 = vpack.c.b16 %v691, %v691
        %v724 = vpack.c.b16 %v692, %v692
        %v725 = vpack.c.b16 %v693, %v693
        %v726 = vpack.c.b16 %v694, %v694
        %v727 = vpack.c.b16 %v695, %v695
        %v728 = vpack.c.b16 %v696, %v696
        %v729 = vpack.c.b16 %v697, %v697
        %v730 = vpack.c.b16 %v698, %v698
        %v731 = vpack.c.b16 %v699, %v699
        %v732 = vpack.c.b16 %v700, %v700
        %v733 = vpack.c.b16 %v701, %v701
        %v734 = vpack.c.b16 %v702, %v702
        %v735 = vpack.c.b16 %v703, %v703
        %v736 = vpack.c.b16 %v704, %v704
        %v737 = vpack.c.b16 %v705, %v705
        %v738 = vpack.c.b16 %v706, %v706
        %v739 = vpack.c.b16 %v707, %v707
        %v740 = vpack.c.b16 %v708, %v708
        %v741 = vpack.c.b16 %v709, %v709
        %v742 = vpack.c.b16 %v710, %v710
        %vm743 = vsmask.f32 256
        %vm744 = vsmask.f32 4368
        %vm745 = vmor %vm743, %vm744
        %v747 = vshrl.u32 %v711, 16
        %v749 = vrot.slane %v747, 7
        %v750 = vshll.u32 %v711, 16
        %v752 = vor.u32 %v749, %v750
        %v753 = vrot.slane %v749, 4
        %v755 = vshrl.u32 %v712, 16
        %v757 = vrot.slane %v755, 7
        %v758 = vshll.u32 %v712, 16
        %v760 = vor.u32 %v757, %v758
        %v761 = vsel %vm745, %v753, %v760
        %v762 = vrot.slane %v757, 4
        %v764 = vshrl.u32 %v713, 16
        %v766 = vrot.slane %v764, 7
        %v767 = vshll.u32 %v713, 16
        %v769 = vor.u32 %v766, %v767
        %v770 = vrot.slane %v766, 4
        %v772 = vshrl.u32 %v714, 16
        %v774 = vrot.slane %v772, 7
        %v775 = vshll.u32 %v714, 16
        %v777 = vor.u32 %v774, %v775
        %v778 = vsel %vm745, %v770, %v777
        %v779 = vrot.slane %v774, 4
        %v781 = vshrl.u32 %v715, 16
        %v783 = vrot.slane %v781, 7
        %v784 = vshll.u32 %v715, 16
        %v786 = vor.u32 %v783, %v784
        %v787 = vrot.slane %v783, 4
        %v789 = vshrl.u32 %v716, 16
        %v791 = vrot.slane %v789, 7
        %v792 = vshll.u32 %v716, 16
        %v794 = vor.u32 %v791, %v792
        %v795 = vsel %vm745, %v787, %v794
        %v796 = vrot.slane %v791, 4
        %v798 = vshrl.u32 %v717, 16
        %v800 = vrot.slane %v798, 7
        %v801 = vshll.u32 %v717, 16
        %v803 = vor.u32 %v800, %v801
        %v804 = vrot.slane %v800, 4
        %v806 = vshrl.u32 %v718, 16
        %v808 = vrot.slane %v806, 7
        %v809 = vshll.u32 %v718, 16
        %v811 = vor.u32 %v808, %v809
        %v812 = vsel %vm745, %v804, %v811
        %v813 = vrot.slane %v808, 4
        %v815 = vshrl.u32 %v719, 16
        %v817 = vrot.slane %v815, 7
        %v818 = vshll.u32 %v719, 16
        %v820 = vor.u32 %v817, %v818
        %v821 = vrot.slane %v817, 4
        %v823 = vshrl.u32 %v720, 16
        %v825 = vrot.slane %v823, 7
        %v826 = vshll.u32 %v720, 16
        %v828 = vor.u32 %v825, %v826
        %v829 = vsel %vm745, %v821, %v828
        %v830 = vrot.slane %v825, 4
        %v832 = vshrl.u32 %v721, 16
        %v834 = vrot.slane %v832, 7
        %v835 = vshll.u32 %v721, 16
        %v837 = vor.u32 %v834, %v835
        %v838 = vrot.slane %v834, 4
        %v840 = vshrl.u32 %v722, 16
        %v842 = vrot.slane %v840, 7
        %v843 = vshll.u32 %v722, 16
        %v845 = vor.u32 %v842, %v843
        %v846 = vsel %vm745, %v838, %v845
        %v847 = vrot.slane %v842, 4
        %v849 = vshrl.u32 %v723, 16
        %v851 = vrot.slane %v849, 7
        %v852 = vshll.u32 %v723, 16
        %v854 = vor.u32 %v851, %v852
        %v855 = vrot.slane %v851, 4
        %v857 = vshrl.u32 %v724, 16
        %v859 = vrot.slane %v857, 7
        %v860 = vshll.u32 %v724, 16
        %v862 = vor.u32 %v859, %v860
        %v863 = vsel %vm745, %v855, %v862
        %v864 = vrot.slane %v859, 4
        %v866 = vshrl.u32 %v725, 16
        %v868 = vrot.slane %v866, 7
        %v869 = vshll.u32 %v725, 16
        %v871 = vor.u32 %v868, %v869
        %v872 = vrot.slane %v868, 4
        %v874 = vshrl.u32 %v726, 16
        %v876 = vrot.slane %v874, 7
        %v877 = vshll.u32 %v726, 16
        %v879 = vor.u32 %v876, %v877
        %v880 = vsel %vm745, %v872, %v879
        %v881 = vrot.slane %v876, 4
        %v883 = vshrl.u32 %v727, 16
        %v885 = vrot.slane %v883, 7
        %v886 = vshll.u32 %v727, 16
        %v888 = vor.u32 %v885, %v886
        %v889 = vrot.slane %v885, 4
        %v891 = vshrl.u32 %v728, 16
        %v893 = vrot.slane %v891, 7
        %v894 = vshll.u32 %v728, 16
        %v896 = vor.u32 %v893, %v894
        %v897 = vsel %vm745, %v889, %v896
        %v898 = vrot.slane %v893, 4
        %v900 = vshrl.u32 %v729, 16
        %v902 = vrot.slane %v900, 7
        %v903 = vshll.u32 %v729, 16
        %v905 = vor.u32 %v902, %v903
        %v906 = vrot.slane %v902, 4
        %v908 = vshrl.u32 %v730, 16
        %v910 = vrot.slane %v908, 7
        %v911 = vshll.u32 %v730, 16
        %v913 = vor.u32 %v910, %v911
        %v914 = vsel %vm745, %v906, %v913
        %v915 = vrot.slane %v910, 4
        %v917 = vshrl.u32 %v731, 16
        %v919 = vrot.slane %v917, 7
        %v920 = vshll.u32 %v731, 16
        %v922 = vor.u32 %v919, %v920
        %v923 = vrot.slane %v919, 4
        %v925 = vshrl.u32 %v732, 16
        %v927 = vrot.slane %v925, 7
        %v928 = vshll.u32 %v732, 16
        %v930 = vor.u32 %v927, %v928
        %v931 = vsel %vm745, %v923, %v930
        %v932 = vrot.slane %v927, 4
        %v934 = vshrl.u32 %v733, 16
        %v936 = vrot.slane %v934, 7
        %v937 = vshll.u32 %v733, 16
        %v939 = vor.u32 %v936, %v937
        %v940 = vrot.slane %v936, 4
        %v942 = vshrl.u32 %v734, 16
        %v944 = vrot.slane %v942, 7
        %v945 = vshll.u32 %v734, 16
        %v947 = vor.u32 %v944, %v945
        %v948 = vsel %vm745, %v940, %v947
        %v949 = vrot.slane %v944, 4
        %v951 = vshrl.u32 %v735, 16
        %v953 = vrot.slane %v951, 7
        %v954 = vshll.u32 %v735, 16
        %v956 = vor.u32 %v953, %v954
        %v957 = vrot.slane %v953, 4
        %v959 = vshrl.u32 %v736, 16
        %v961 = vrot.slane %v959, 7
        %v962 = vshll.u32 %v736, 16
        %v964 = vor.u32 %v961, %v962
        %v965 = vsel %vm745, %v957, %v964
        %v966 = vrot.slane %v961, 4
        %v968 = vshrl.u32 %v737, 16
        %v970 = vrot.slane %v968, 7
        %v971 = vshll.u32 %v737, 16
        %v973 = vor.u32 %v970, %v971
        %v974 = vrot.slane %v970, 4
        %v976 = vshrl.u32 %v738, 16
        %v978 = vrot.slane %v976, 7
        %v979 = vshll.u32 %v738, 16
        %v981 = vor.u32 %v978, %v979
        %v982 = vsel %vm745, %v974, %v981
        %v983 = vrot.slane %v978, 4
        %v985 = vshrl.u32 %v739, 16
        %v987 = vrot.slane %v985, 7
        %v988 = vshll.u32 %v739, 16
        %v990 = vor.u32 %v987, %v988
        %v991 = vrot.slane %v987, 4
        %v993 = vshrl.u32 %v740, 16
        %v995 = vrot.slane %v993, 7
        %v996 = vshll.u32 %v740, 16
        %v998 = vor.u32 %v995, %v996
        %v999 = vsel %vm745, %v991, %v998
        %v1000 = vrot.slane %v995, 4
        %v1002 = vshrl.u32 %v741, 16
        %v1004 = vrot.slane %v1002, 7
        %v1005 = vshll.u32 %v741, 16
        %v1007 = vor.u32 %v1004, %v1005
        %v1008 = vrot.slane %v1004, 4
        %v1010 = vshrl.u32 %v742, 16
        %v1012 = vrot.slane %v1010, 7
        %v1013 = vshll.u32 %v742, 16
        %v1015 = vor.u32 %v1012, %v1013
        %v1016 = vsel %vm745, %v1008, %v1015
        %v1017 = vrot.slane %v1012, 4
        %s1066 = scalar_lea.vmem [#allocation2], 12
        %vm1067 = vcmask 27648
        %vm1068 = vsmask.f32 7938
        %vm1069 = vmand %vm1067, %vm1068
        %v1070 = vld [vmem:[%s1066] sm:$0xf]
        %v1071 = vsel %vm1069, %v752, %v1070
        %1072 = vst [vmem:[%s1066] sm:$0xf] %v1071
        %vm1073 = vcmask 27648
        %1074 = vst.msk [vmem:[%s1066 + $0x4] sm:$0xf] %vm1073, %v761
        %vm1075 = vcmask 24576
        %vm1076 = vmand %vm1075, %vm743
        %v1077 = vld [vmem:[%s1066 + $0x8] sm:$0x1]
        %v1078 = vsel %vm1076, %v762, %v1077
        %1079 = vst [vmem:[%s1066 + $0x8] sm:$0x1] %v1078
        %v1080 = vld [vmem:[%s1066 + $0xc] sm:$0xf]
        %v1081 = vsel %vm1069, %v769, %v1080
        %1082 = vst [vmem:[%s1066 + $0xc] sm:$0xf] %v1081
        %1083 = vst.msk [vmem:[%s1066 + $0x10] sm:$0xf] %vm1073, %v778
        %v1084 = vld [vmem:[%s1066 + $0x14] sm:$0x1]
        %v1085 = vsel %vm1076, %v779, %v1084
        %1086 = vst [vmem:[%s1066 + $0x14] sm:$0x1] %v1085
        %v1087 = vld [vmem:[%s1066 + $0x18] sm:$0xf]
        %v1088 = vsel %vm1069, %v786, %v1087
        %1089 = vst [vmem:[%s1066 + $0x18] sm:$0xf] %v1088
        %1090 = vst.msk [vmem:[%s1066 + $0x1c] sm:$0xf] %vm1073, %v795
        %v1091 = vld [vmem:[%s1066 + $0x20] sm:$0x1]
        %v1092 = vsel %vm1076, %v796, %v1091
        %1093 = vst [vmem:[%s1066 + $0x20] sm:$0x1] %v1092
        %v1094 = vld [vmem:[%s1066 + $0x24] sm:$0xf]
        %v1095 = vsel %vm1069, %v803, %v1094
        %1096 = vst [vmem:[%s1066 + $0x24] sm:$0xf] %v1095
        %1097 = vst.msk [vmem:[%s1066 + $0x28] sm:$0xf] %vm1073, %v812
        %v1098 = vld [vmem:[%s1066 + $0x2c] sm:$0x1]
        %v1099 = vsel %vm1076, %v813, %v1098
        %1100 = vst [vmem:[%s1066 + $0x2c] sm:$0x1] %v1099
        %v1101 = vld [vmem:[%s1066 + $0x30] sm:$0xf]
        %v1102 = vsel %vm1069, %v820, %v1101
        %1103 = vst [vmem:[%s1066 + $0x30] sm:$0xf] %v1102
        %1104 = vst.msk [vmem:[%s1066 + $0x34] sm:$0xf] %vm1073, %v829
        %v1105 = vld [vmem:[%s1066 + $0x38] sm:$0x1]
        %v1106 = vsel %vm1076, %v830, %v1105
        %1107 = vst [vmem:[%s1066 + $0x38] sm:$0x1] %v1106
        %v1108 = vld [vmem:[%s1066 + $0x3c] sm:$0xf]
        %v1109 = vsel %vm1069, %v837, %v1108
        %1110 = vst [vmem:[%s1066 + $0x3c] sm:$0xf] %v1109
        %1111 = vst.msk [vmem:[%s1066 + $0x40] sm:$0xf] %vm1073, %v846
        %v1112 = vld [vmem:[%s1066 + $0x44] sm:$0x1]
        %v1113 = vsel %vm1076, %v847, %v1112
        %1114 = vst [vmem:[%s1066 + $0x44] sm:$0x1] %v1113
        %v1115 = vld [vmem:[%s1066 + $0x48] sm:$0xf]
        %v1116 = vsel %vm1069, %v854, %v1115
        %1117 = vst [vmem:[%s1066 + $0x48] sm:$0xf] %v1116
        %1118 = vst.msk [vmem:[%s1066 + $0x4c] sm:$0xf] %vm1073, %v863
        %v1119 = vld [vmem:[%s1066 + $0x50] sm:$0x1]
        %v1120 = vsel %vm1076, %v864, %v1119
        %1121 = vst [vmem:[%s1066 + $0x50] sm:$0x1] %v1120
        %v1122 = vld [vmem:[%s1066 + $0x54] sm:$0xf]
        %v1123 = vsel %vm1069, %v871, %v1122
        %1124 = vst [vmem:[%s1066 + $0x54] sm:$0xf] %v1123
        %1125 = vst.msk [vmem:[%s1066 + $0x58] sm:$0xf] %vm1073, %v880
        %v1126 = vld [vmem:[%s1066 + $0x5c] sm:$0x1]
        %v1127 = vsel %vm1076, %v881, %v1126
        %1128 = vst [vmem:[%s1066 + $0x5c] sm:$0x1] %v1127
        %v1129 = vld [vmem:[%s1066 + $0x60] sm:$0xf]
        %v1130 = vsel %vm1069, %v888, %v1129
        %1131 = vst [vmem:[%s1066 + $0x60] sm:$0xf] %v1130
        %1132 = vst.msk [vmem:[%s1066 + $0x64] sm:$0xf] %vm1073, %v897
        %v1133 = vld [vmem:[%s1066 + $0x68] sm:$0x1]
        %v1134 = vsel %vm1076, %v898, %v1133
        %1135 = vst [vmem:[%s1066 + $0x68] sm:$0x1] %v1134
        %v1136 = vld [vmem:[%s1066 + $0x6c] sm:$0xf]
        %v1137 = vsel %vm1069, %v905, %v1136
        %1138 = vst [vmem:[%s1066 + $0x6c] sm:$0xf] %v1137
        %1139 = vst.msk [vmem:[%s1066 + $0x70] sm:$0xf] %vm1073, %v914
        %v1140 = vld [vmem:[%s1066 + $0x74] sm:$0x1]
        %v1141 = vsel %vm1076, %v915, %v1140
        %1142 = vst [vmem:[%s1066 + $0x74] sm:$0x1] %v1141
        %v1143 = vld [vmem:[%s1066 + $0x78] sm:$0xf]
        %v1144 = vsel %vm1069, %v922, %v1143
        %1145 = vst [vmem:[%s1066 + $0x78] sm:$0xf] %v1144
        %1146 = vst.msk [vmem:[%s1066 + $0x7c] sm:$0xf] %vm1073, %v931
        %v1147 = vld [vmem:[%s1066 + $0x80] sm:$0x1]
        %v1148 = vsel %vm1076, %v932, %v1147
        %1149 = vst [vmem:[%s1066 + $0x80] sm:$0x1] %v1148
        %v1150 = vld [vmem:[%s1066 + $0x84] sm:$0xf]
        %v1151 = vsel %vm1069, %v939, %v1150
        %1152 = vst [vmem:[%s1066 + $0x84] sm:$0xf] %v1151
        %1153 = vst.msk [vmem:[%s1066 + $0x88] sm:$0xf] %vm1073, %v948
        %v1154 = vld [vmem:[%s1066 + $0x8c] sm:$0x1]
        %v1155 = vsel %vm1076, %v949, %v1154
        %1156 = vst [vmem:[%s1066 + $0x8c] sm:$0x1] %v1155
        %v1157 = vld [vmem:[%s1066 + $0x90] sm:$0xf]
        %v1158 = vsel %vm1069, %v956, %v1157
        %1159 = vst [vmem:[%s1066 + $0x90] sm:$0xf] %v1158
        %1160 = vst.msk [vmem:[%s1066 + $0x94] sm:$0xf] %vm1073, %v965
        %v1161 = vld [vmem:[%s1066 + $0x98] sm:$0x1]
        %v1162 = vsel %vm1076, %v966, %v1161
        %1163 = vst [vmem:[%s1066 + $0x98] sm:$0x1] %v1162
        %v1164 = vld [vmem:[%s1066 + $0x9c] sm:$0xf]
        %v1165 = vsel %vm1069, %v973, %v1164
        %1166 = vst [vmem:[%s1066 + $0x9c] sm:$0xf] %v1165
        %1167 = vst.msk [vmem:[%s1066 + $0xa0] sm:$0xf] %vm1073, %v982
        %v1168 = vld [vmem:[%s1066 + $0xa4] sm:$0x1]
        %v1169 = vsel %vm1076, %v983, %v1168
        %1170 = vst [vmem:[%s1066 + $0xa4] sm:$0x1] %v1169
        %v1171 = vld [vmem:[%s1066 + $0xa8] sm:$0xf]
        %v1172 = vsel %vm1069, %v990, %v1171
        %1173 = vst [vmem:[%s1066 + $0xa8] sm:$0xf] %v1172
        %1174 = vst.msk [vmem:[%s1066 + $0xac] sm:$0xf] %vm1073, %v999
        %v1175 = vld [vmem:[%s1066 + $0xb0] sm:$0x1]
        %v1176 = vsel %vm1076, %v1000, %v1175
        %1177 = vst [vmem:[%s1066 + $0xb0] sm:$0x1] %v1176
        %v1178 = vld [vmem:[%s1066 + $0xb4] sm:$0xf]
        %v1179 = vsel %vm1069, %v1007, %v1178
        %1180 = vst [vmem:[%s1066 + $0xb4] sm:$0xf] %v1179
        %1181 = vst.msk [vmem:[%s1066 + $0xb8] sm:$0xf] %vm1073, %v1016
        %v1182 = vld [vmem:[%s1066 + $0xbc] sm:$0x1]
        %v1183 = vsel %vm1076, %v1017, %v1182
        %1184 = vst [vmem:[%s1066 + $0xbc] sm:$0x1] %v1183
        %v1185 = vld [vmem:[%s363] sm:$0xf]
        %v1186 = vld [vmem:[%s363 + $0x4] sm:$0xf]
        %v1187 = vld [vmem:[%s363 + $0x8] sm:$0xf]
        %v1188 = vld [vmem:[%s363 + $0xc] sm:$0xf]
        %v1189 = vld [vmem:[%s363 + $0x10] sm:$0xf]
        %v1190 = vld [vmem:[%s363 + $0x14] sm:$0xf]
        %v1191 = vld [vmem:[%s363 + $0x18] sm:$0xf]
        %v1192 = vld [vmem:[%s363 + $0x1c] sm:$0xf]
        %v1193 = vld [vmem:[%s363 + $0x20] sm:$0xf]
        %v1194 = vld [vmem:[%s363 + $0x24] sm:$0xf]
        %v1195 = vld [vmem:[%s363 + $0x28] sm:$0xf]
        %v1196 = vld [vmem:[%s363 + $0x2c] sm:$0xf]
        %v1197 = vld [vmem:[%s363 + $0x30] sm:$0xf]
        %v1198 = vld [vmem:[%s363 + $0x34] sm:$0xf]
        %v1199 = vld [vmem:[%s363 + $0x38] sm:$0xf]
        %v1200 = vld [vmem:[%s363 + $0x3c] sm:$0xf]
        %v1201 = vld [vmem:[%s363 + $0x40] sm:$0xf]
        %v1202 = vld [vmem:[%s363 + $0x44] sm:$0xf]
        %v1203 = vld [vmem:[%s363 + $0x48] sm:$0xf]
        %v1204 = vld [vmem:[%s363 + $0x4c] sm:$0xf]
        %v1205 = vld [vmem:[%s363 + $0x50] sm:$0xf]
        %v1206 = vld [vmem:[%s363 + $0x54] sm:$0xf]
        %v1207 = vld [vmem:[%s363 + $0x58] sm:$0xf]
        %v1208 = vld [vmem:[%s363 + $0x5c] sm:$0xf]
        %v1209 = vld [vmem:[%s363 + $0x60] sm:$0xf]
        %v1210 = vld [vmem:[%s363 + $0x64] sm:$0xf]
        %v1211 = vld [vmem:[%s363 + $0x68] sm:$0xf]
        %v1212 = vld [vmem:[%s363 + $0x6c] sm:$0xf]
        %v1213 = vld [vmem:[%s363 + $0x70] sm:$0xf]
        %v1214 = vld [vmem:[%s363 + $0x74] sm:$0xf]
        %v1215 = vld [vmem:[%s363 + $0x78] sm:$0xf]
        %v1216 = vld [vmem:[%s363 + $0x7c] sm:$0xf]
        %v1218 = vshrl.u32 %v1185, 16
        %v1220 = vrot.slane %v1218, 7
        %v1221 = vshll.u32 %v1185, 16
        %v1223 = vor.u32 %v1220, %v1221
        %v1224 = vrot.slane %v1220, 4
        %v1226 = vshrl.u32 %v1186, 16
        %v1228 = vrot.slane %v1226, 7
        %v1229 = vshll.u32 %v1186, 16
        %v1231 = vor.u32 %v1228, %v1229
        %v1232 = vsel %vm745, %v1224, %v1231
        %v1233 = vrot.slane %v1228, 4
        %v1235 = vshrl.u32 %v1187, 16
        %v1237 = vrot.slane %v1235, 7
        %v1238 = vshll.u32 %v1187, 16
        %v1240 = vor.u32 %v1237, %v1238
        %v1241 = vrot.slane %v1237, 4
        %v1243 = vshrl.u32 %v1188, 16
        %v1245 = vrot.slane %v1243, 7
        %v1246 = vshll.u32 %v1188, 16
        %v1248 = vor.u32 %v1245, %v1246
        %v1249 = vsel %vm745, %v1241, %v1248
        %v1250 = vrot.slane %v1245, 4
        %v1252 = vshrl.u32 %v1189, 16
        %v1254 = vrot.slane %v1252, 7
        %v1255 = vshll.u32 %v1189, 16
        %v1257 = vor.u32 %v1254, %v1255
        %v1258 = vrot.slane %v1254, 4
        %v1260 = vshrl.u32 %v1190, 16
        %v1262 = vrot.slane %v1260, 7
        %v1263 = vshll.u32 %v1190, 16
        %v1265 = vor.u32 %v1262, %v1263
        %v1266 = vsel %vm745, %v1258, %v1265
        %v1267 = vrot.slane %v1262, 4
        %v1269 = vshrl.u32 %v1191, 16
        %v1271 = vrot.slane %v1269, 7
        %v1272 = vshll.u32 %v1191, 16
        %v1274 = vor.u32 %v1271, %v1272
        %v1275 = vrot.slane %v1271, 4
        %v1277 = vshrl.u32 %v1192, 16
        %v1279 = vrot.slane %v1277, 7
        %v1280 = vshll.u32 %v1192, 16
        %v1282 = vor.u32 %v1279, %v1280
        %v1283 = vsel %vm745, %v1275, %v1282
        %v1284 = vrot.slane %v1279, 4
        %v1286 = vshrl.u32 %v1193, 16
        %v1288 = vrot.slane %v1286, 7
        %v1289 = vshll.u32 %v1193, 16
        %v1291 = vor.u32 %v1288, %v1289
        %v1292 = vrot.slane %v1288, 4
        %v1294 = vshrl.u32 %v1194, 16
        %v1296 = vrot.slane %v1294, 7
        %v1297 = vshll.u32 %v1194, 16
        %v1299 = vor.u32 %v1296, %v1297
        %v1300 = vsel %vm745, %v1292, %v1299
        %v1301 = vrot.slane %v1296, 4
        %v1303 = vshrl.u32 %v1195, 16
        %v1305 = vrot.slane %v1303, 7
        %v1306 = vshll.u32 %v1195, 16
        %v1308 = vor.u32 %v1305, %v1306
        %v1309 = vrot.slane %v1305, 4
        %v1311 = vshrl.u32 %v1196, 16
        %v1313 = vrot.slane %v1311, 7
        %v1314 = vshll.u32 %v1196, 16
        %v1316 = vor.u32 %v1313, %v1314
        %v1317 = vsel %vm745, %v1309, %v1316
        %v1318 = vrot.slane %v1313, 4
        %v1320 = vshrl.u32 %v1197, 16
        %v1322 = vrot.slane %v1320, 7
        %v1323 = vshll.u32 %v1197, 16
        %v1325 = vor.u32 %v1322, %v1323
        %v1326 = vrot.slane %v1322, 4
        %v1328 = vshrl.u32 %v1198, 16
        %v1330 = vrot.slane %v1328, 7
        %v1331 = vshll.u32 %v1198, 16
        %v1333 = vor.u32 %v1330, %v1331
        %v1334 = vsel %vm745, %v1326, %v1333
        %v1335 = vrot.slane %v1330, 4
        %v1337 = vshrl.u32 %v1199, 16
        %v1339 = vrot.slane %v1337, 7
        %v1340 = vshll.u32 %v1199, 16
        %v1342 = vor.u32 %v1339, %v1340
        %v1343 = vrot.slane %v1339, 4
        %v1345 = vshrl.u32 %v1200, 16
        %v1347 = vrot.slane %v1345, 7
        %v1348 = vshll.u32 %v1200, 16
        %v1350 = vor.u32 %v1347, %v1348
        %v1351 = vsel %vm745, %v1343, %v1350
        %v1352 = vrot.slane %v1347, 4
        %v1354 = vshrl.u32 %v1201, 16
        %v1356 = vrot.slane %v1354, 7
        %v1357 = vshll.u32 %v1201, 16
        %v1359 = vor.u32 %v1356, %v1357
        %v1360 = vrot.slane %v1356, 4
        %v1362 = vshrl.u32 %v1202, 16
        %v1364 = vrot.slane %v1362, 7
        %v1365 = vshll.u32 %v1202, 16
        %v1367 = vor.u32 %v1364, %v1365
        %v1368 = vsel %vm745, %v1360, %v1367
        %v1369 = vrot.slane %v1364, 4
        %v1371 = vshrl.u32 %v1203, 16
        %v1373 = vrot.slane %v1371, 7
        %v1374 = vshll.u32 %v1203, 16
        %v1376 = vor.u32 %v1373, %v1374
        %v1377 = vrot.slane %v1373, 4
        %v1379 = vshrl.u32 %v1204, 16
        %v1381 = vrot.slane %v1379, 7
        %v1382 = vshll.u32 %v1204, 16
        %v1384 = vor.u32 %v1381, %v1382
        %v1385 = vsel %vm745, %v1377, %v1384
        %v1386 = vrot.slane %v1381, 4
        %v1388 = vshrl.u32 %v1205, 16
        %v1390 = vrot.slane %v1388, 7
        %v1391 = vshll.u32 %v1205, 16
        %v1393 = vor.u32 %v1390, %v1391
        %v1394 = vrot.slane %v1390, 4
        %v1396 = vshrl.u32 %v1206, 16
        %v1398 = vrot.slane %v1396, 7
        %v1399 = vshll.u32 %v1206, 16
        %v1401 = vor.u32 %v1398, %v1399
        %v1402 = vsel %vm745, %v1394, %v1401
        %v1403 = vrot.slane %v1398, 4
        %v1405 = vshrl.u32 %v1207, 16
        %v1407 = vrot.slane %v1405, 7
        %v1408 = vshll.u32 %v1207, 16
        %v1410 = vor.u32 %v1407, %v1408
        %v1411 = vrot.slane %v1407, 4
        %v1413 = vshrl.u32 %v1208, 16
        %v1415 = vrot.slane %v1413, 7
        %v1416 = vshll.u32 %v1208, 16
        %v1418 = vor.u32 %v1415, %v1416
        %v1419 = vsel %vm745, %v1411, %v1418
        %v1420 = vrot.slane %v1415, 4
        %v1422 = vshrl.u32 %v1209, 16
        %v1424 = vrot.slane %v1422, 7
        %v1425 = vshll.u32 %v1209, 16
        %v1427 = vor.u32 %v1424, %v1425
        %v1428 = vrot.slane %v1424, 4
        %v1430 = vshrl.u32 %v1210, 16
        %v1432 = vrot.slane %v1430, 7
        %v1433 = vshll.u32 %v1210, 16
        %v1435 = vor.u32 %v1432, %v1433
        %v1436 = vsel %vm745, %v1428, %v1435
        %v1437 = vrot.slane %v1432, 4
        %v1439 = vshrl.u32 %v1211, 16
        %v1441 = vrot.slane %v1439, 7
        %v1442 = vshll.u32 %v1211, 16
        %v1444 = vor.u32 %v1441, %v1442
        %v1445 = vrot.slane %v1441, 4
        %v1447 = vshrl.u32 %v1212, 16
        %v1449 = vrot.slane %v1447, 7
        %v1450 = vshll.u32 %v1212, 16
        %v1452 = vor.u32 %v1449, %v1450
        %v1453 = vsel %vm745, %v1445, %v1452
        %v1454 = vrot.slane %v1449, 4
        %v1456 = vshrl.u32 %v1213, 16
        %v1458 = vrot.slane %v1456, 7
        %v1459 = vshll.u32 %v1213, 16
        %v1461 = vor.u32 %v1458, %v1459
        %v1462 = vrot.slane %v1458, 4
        %v1464 = vshrl.u32 %v1214, 16
        %v1466 = vrot.slane %v1464, 7
        %v1467 = vshll.u32 %v1214, 16
        %v1469 = vor.u32 %v1466, %v1467
        %v1470 = vsel %vm745, %v1462, %v1469
        %v1471 = vrot.slane %v1466, 4
        %v1473 = vshrl.u32 %v1215, 16
        %v1475 = vrot.slane %v1473, 7
        %v1476 = vshll.u32 %v1215, 16
        %v1478 = vor.u32 %v1475, %v1476
        %v1479 = vrot.slane %v1475, 4
        %v1481 = vshrl.u32 %v1216, 16
        %v1483 = vrot.slane %v1481, 7
        %v1484 = vshll.u32 %v1216, 16
        %v1486 = vor.u32 %v1483, %v1484
        %v1487 = vsel %vm745, %v1479, %v1486
        %v1488 = vrot.slane %v1483, 4
        %1489 = vrot.lane.b32.xlu0 %v1223, 4
        %v1490 = vpop.permute.xlu0 %1489
        %1491 = vrot.lane.b32.xlu0 %v1232, 4
        %v1492 = vpop.permute.xlu0 %1491
        %1493 = vrot.lane.b32.xlu0 %v1233, 4
        %v1494 = vpop.permute.xlu0 %1493
        %1495 = vrot.lane.b32.xlu0 %v1240, 4
        %v1496 = vpop.permute.xlu0 %1495
        %1497 = vrot.lane.b32.xlu0 %v1249, 4
        %v1498 = vpop.permute.xlu0 %1497
        %1499 = vrot.lane.b32.xlu0 %v1250, 4
        %v1500 = vpop.permute.xlu0 %1499
        %1501 = vrot.lane.b32.xlu0 %v1257, 4
        %v1502 = vpop.permute.xlu0 %1501
        %1503 = vrot.lane.b32.xlu0 %v1266, 4
        %v1504 = vpop.permute.xlu0 %1503
        %1505 = vrot.lane.b32.xlu0 %v1267, 4
        %v1506 = vpop.permute.xlu0 %1505
        %1507 = vrot.lane.b32.xlu0 %v1274, 4
        %v1508 = vpop.permute.xlu0 %1507
        %1509 = vrot.lane.b32.xlu0 %v1283, 4
        %v1510 = vpop.permute.xlu0 %1509
        %1511 = vrot.lane.b32.xlu0 %v1284, 4
        %v1512 = vpop.permute.xlu0 %1511
        %1513 = vrot.lane.b32.xlu0 %v1291, 4
        %v1514 = vpop.permute.xlu0 %1513
        %1515 = vrot.lane.b32.xlu0 %v1300, 4
        %v1516 = vpop.permute.xlu0 %1515
        %1517 = vrot.lane.b32.xlu0 %v1301, 4
        %v1518 = vpop.permute.xlu0 %1517
        %1519 = vrot.lane.b32.xlu0 %v1308, 4
        %v1520 = vpop.permute.xlu0 %1519
        %1521 = vrot.lane.b32.xlu0 %v1317, 4
        %v1522 = vpop.permute.xlu0 %1521
        %1523 = vrot.lane.b32.xlu0 %v1318, 4
        %v1524 = vpop.permute.xlu0 %1523
        %1525 = vrot.lane.b32.xlu0 %v1325, 4
        %v1526 = vpop.permute.xlu0 %1525
        %1527 = vrot.lane.b32.xlu0 %v1334, 4
        %v1528 = vpop.permute.xlu0 %1527
        %1529 = vrot.lane.b32.xlu0 %v1335, 4
        %v1530 = vpop.permute.xlu0 %1529
        %1531 = vrot.lane.b32.xlu0 %v1342, 4
        %v1532 = vpop.permute.xlu0 %1531
        %1533 = vrot.lane.b32.xlu0 %v1351, 4
        %v1534 = vpop.permute.xlu0 %1533
        %1535 = vrot.lane.b32.xlu0 %v1352, 4
        %v1536 = vpop.permute.xlu0 %1535
        %1537 = vrot.lane.b32.xlu0 %v1359, 4
        %v1538 = vpop.permute.xlu0 %1537
        %1539 = vrot.lane.b32.xlu0 %v1368, 4
        %v1540 = vpop.permute.xlu0 %1539
        %1541 = vrot.lane.b32.xlu0 %v1369, 4
        %v1542 = vpop.permute.xlu0 %1541
        %1543 = vrot.lane.b32.xlu0 %v1376, 4
        %v1544 = vpop.permute.xlu0 %1543
        %1545 = vrot.lane.b32.xlu0 %v1385, 4
        %v1546 = vpop.permute.xlu0 %1545
        %1547 = vrot.lane.b32.xlu0 %v1386, 4
        %v1548 = vpop.permute.xlu0 %1547
        %1549 = vrot.lane.b32.xlu0 %v1393, 4
        %v1550 = vpop.permute.xlu0 %1549
        %1551 = vrot.lane.b32.xlu0 %v1402, 4
        %v1552 = vpop.permute.xlu0 %1551
        %1553 = vrot.lane.b32.xlu0 %v1403, 4
        %v1554 = vpop.permute.xlu0 %1553
        %1555 = vrot.lane.b32.xlu0 %v1410, 4
        %v1556 = vpop.permute.xlu0 %1555
        %1557 = vrot.lane.b32.xlu0 %v1419, 4
        %v1558 = vpop.permute.xlu0 %1557
        %1559 = vrot.lane.b32.xlu0 %v1420, 4
        %v1560 = vpop.permute.xlu0 %1559
        %1561 = vrot.lane.b32.xlu0 %v1427, 4
        %v1562 = vpop.permute.xlu0 %1561
        %1563 = vrot.lane.b32.xlu0 %v1436, 4
        %v1564 = vpop.permute.xlu0 %1563
        %1565 = vrot.lane.b32.xlu0 %v1437, 4
        %v1566 = vpop.permute.xlu0 %1565
        %1567 = vrot.lane.b32.xlu0 %v1444, 4
        %v1568 = vpop.permute.xlu0 %1567
        %1569 = vrot.lane.b32.xlu0 %v1453, 4
        %v1570 = vpop.permute.xlu0 %1569
        %1571 = vrot.lane.b32.xlu0 %v1454, 4
        %v1572 = vpop.permute.xlu0 %1571
        %1573 = vrot.lane.b32.xlu0 %v1461, 4
        %v1574 = vpop.permute.xlu0 %1573
        %1575 = vrot.lane.b32.xlu0 %v1470, 4
        %v1576 = vpop.permute.xlu0 %1575
        %1577 = vrot.lane.b32.xlu0 %v1471, 4
        %v1578 = vpop.permute.xlu0 %1577
        %1579 = vrot.lane.b32.xlu0 %v1478, 4
        %v1580 = vpop.permute.xlu0 %1579
        %1581 = vrot.lane.b32.xlu0 %v1487, 4
        %v1582 = vpop.permute.xlu0 %1581
        %1583 = vrot.lane.b32.xlu0 %v1488, 4
        %v1584 = vpop.permute.xlu0 %1583
        %vm1633 = vcmask 60448
        %vm1634 = vmand %vm1633, %vm1068
        %v1635 = vld [vmem:[%s1066] sm:$0xf]
        %v1636 = vsel %vm1634, %v1490, %v1635
        %1637 = vst [vmem:[%s1066] sm:$0xf] %v1636
        %vm1638 = vcmask 60448
        %1639 = vst.msk [vmem:[%s1066 + $0x4] sm:$0xf] %vm1638, %v1492
        %vm1640 = vcmask 57376
        %vm1641 = vmand %vm1640, %vm743
        %v1642 = vld [vmem:[%s1066 + $0x8] sm:$0x1]
        %v1643 = vsel %vm1641, %v1494, %v1642
        %1644 = vst [vmem:[%s1066 + $0x8] sm:$0x1] %v1643
        %v1645 = vld [vmem:[%s1066 + $0xc] sm:$0xf]
        %v1646 = vsel %vm1634, %v1496, %v1645
        %1647 = vst [vmem:[%s1066 + $0xc] sm:$0xf] %v1646
        %1648 = vst.msk [vmem:[%s1066 + $0x10] sm:$0xf] %vm1638, %v1498
        %v1649 = vld [vmem:[%s1066 + $0x14] sm:$0x1]
        %v1650 = vsel %vm1641, %v1500, %v1649
        %1651 = vst [vmem:[%s1066 + $0x14] sm:$0x1] %v1650
        %v1652 = vld [vmem:[%s1066 + $0x18] sm:$0xf]
        %v1653 = vsel %vm1634, %v1502, %v1652
        %1654 = vst [vmem:[%s1066 + $0x18] sm:$0xf] %v1653
        %1655 = vst.msk [vmem:[%s1066 + $0x1c] sm:$0xf] %vm1638, %v1504
        %v1656 = vld [vmem:[%s1066 + $0x20] sm:$0x1]
        %v1657 = vsel %vm1641, %v1506, %v1656
        %1658 = vst [vmem:[%s1066 + $0x20] sm:$0x1] %v1657
        %v1659 = vld [vmem:[%s1066 + $0x24] sm:$0xf]
        %v1660 = vsel %vm1634, %v1508, %v1659
        %1661 = vst [vmem:[%s1066 + $0x24] sm:$0xf] %v1660
        %1662 = vst.msk [vmem:[%s1066 + $0x28] sm:$0xf] %vm1638, %v1510
        %v1663 = vld [vmem:[%s1066 + $0x2c] sm:$0x1]
        %v1664 = vsel %vm1641, %v1512, %v1663
        %1665 = vst [vmem:[%s1066 + $0x2c] sm:$0x1] %v1664
        %v1666 = vld [vmem:[%s1066 + $0x30] sm:$0xf]
        %v1667 = vsel %vm1634, %v1514, %v1666
        %1668 = vst [vmem:[%s1066 + $0x30] sm:$0xf] %v1667
        %1669 = vst.msk [vmem:[%s1066 + $0x34] sm:$0xf] %vm1638, %v1516
        %v1670 = vld [vmem:[%s1066 + $0x38] sm:$0x1]
        %v1671 = vsel %vm1641, %v1518, %v1670
        %1672 = vst [vmem:[%s1066 + $0x38] sm:$0x1] %v1671
        %v1673 = vld [vmem:[%s1066 + $0x3c] sm:$0xf]
        %v1674 = vsel %vm1634, %v1520, %v1673
        %1675 = vst [vmem:[%s1066 + $0x3c] sm:$0xf] %v1674
        %1676 = vst.msk [vmem:[%s1066 + $0x40] sm:$0xf] %vm1638, %v1522
        %v1677 = vld [vmem:[%s1066 + $0x44] sm:$0x1]
        %v1678 = vsel %vm1641, %v1524, %v1677
        %1679 = vst [vmem:[%s1066 + $0x44] sm:$0x1] %v1678
        %v1680 = vld [vmem:[%s1066 + $0x48] sm:$0xf]
        %v1681 = vsel %vm1634, %v1526, %v1680
        %1682 = vst [vmem:[%s1066 + $0x48] sm:$0xf] %v1681
        %1683 = vst.msk [vmem:[%s1066 + $0x4c] sm:$0xf] %vm1638, %v1528
        %v1684 = vld [vmem:[%s1066 + $0x50] sm:$0x1]
        %v1685 = vsel %vm1641, %v1530, %v1684
        %1686 = vst [vmem:[%s1066 + $0x50] sm:$0x1] %v1685
        %v1687 = vld [vmem:[%s1066 + $0x54] sm:$0xf]
        %v1688 = vsel %vm1634, %v1532, %v1687
        %1689 = vst [vmem:[%s1066 + $0x54] sm:$0xf] %v1688
        %1690 = vst.msk [vmem:[%s1066 + $0x58] sm:$0xf] %vm1638, %v1534
        %v1691 = vld [vmem:[%s1066 + $0x5c] sm:$0x1]
        %v1692 = vsel %vm1641, %v1536, %v1691
        %1693 = vst [vmem:[%s1066 + $0x5c] sm:$0x1] %v1692
        %v1694 = vld [vmem:[%s1066 + $0x60] sm:$0xf]
        %v1695 = vsel %vm1634, %v1538, %v1694
        %1696 = vst [vmem:[%s1066 + $0x60] sm:$0xf] %v1695
        %1697 = vst.msk [vmem:[%s1066 + $0x64] sm:$0xf] %vm1638, %v1540
        %v1698 = vld [vmem:[%s1066 + $0x68] sm:$0x1]
        %v1699 = vsel %vm1641, %v1542, %v1698
        %1700 = vst [vmem:[%s1066 + $0x68] sm:$0x1] %v1699
        %v1701 = vld [vmem:[%s1066 + $0x6c] sm:$0xf]
        %v1702 = vsel %vm1634, %v1544, %v1701
        %1703 = vst [vmem:[%s1066 + $0x6c] sm:$0xf] %v1702
        %1704 = vst.msk [vmem:[%s1066 + $0x70] sm:$0xf] %vm1638, %v1546
        %v1705 = vld [vmem:[%s1066 + $0x74] sm:$0x1]
        %v1706 = vsel %vm1641, %v1548, %v1705
        %1707 = vst [vmem:[%s1066 + $0x74] sm:$0x1] %v1706
        %v1708 = vld [vmem:[%s1066 + $0x78] sm:$0xf]
        %v1709 = vsel %vm1634, %v1550, %v1708
        %1710 = vst [vmem:[%s1066 + $0x78] sm:$0xf] %v1709
        %1711 = vst.msk [vmem:[%s1066 + $0x7c] sm:$0xf] %vm1638, %v1552
        %v1712 = vld [vmem:[%s1066 + $0x80] sm:$0x1]
        %v1713 = vsel %vm1641, %v1554, %v1712
        %1714 = vst [vmem:[%s1066 + $0x80] sm:$0x1] %v1713
        %v1715 = vld [vmem:[%s1066 + $0x84] sm:$0xf]
        %v1716 = vsel %vm1634, %v1556, %v1715
        %1717 = vst [vmem:[%s1066 + $0x84] sm:$0xf] %v1716
        %1718 = vst.msk [vmem:[%s1066 + $0x88] sm:$0xf] %vm1638, %v1558
        %v1719 = vld [vmem:[%s1066 + $0x8c] sm:$0x1]
        %v1720 = vsel %vm1641, %v1560, %v1719
        %1721 = vst [vmem:[%s1066 + $0x8c] sm:$0x1] %v1720
        %v1722 = vld [vmem:[%s1066 + $0x90] sm:$0xf]
        %v1723 = vsel %vm1634, %v1562, %v1722
        %1724 = vst [vmem:[%s1066 + $0x90] sm:$0xf] %v1723
        %1725 = vst.msk [vmem:[%s1066 + $0x94] sm:$0xf] %vm1638, %v1564
        %v1726 = vld [vmem:[%s1066 + $0x98] sm:$0x1]
        %v1727 = vsel %vm1641, %v1566, %v1726
        %1728 = vst [vmem:[%s1066 + $0x98] sm:$0x1] %v1727
        %v1729 = vld [vmem:[%s1066 + $0x9c] sm:$0xf]
        %v1730 = vsel %vm1634, %v1568, %v1729
        %1731 = vst [vmem:[%s1066 + $0x9c] sm:$0xf] %v1730
        %1732 = vst.msk [vmem:[%s1066 + $0xa0] sm:$0xf] %vm1638, %v1570
        %v1733 = vld [vmem:[%s1066 + $0xa4] sm:$0x1]
        %v1734 = vsel %vm1641, %v1572, %v1733
        %1735 = vst [vmem:[%s1066 + $0xa4] sm:$0x1] %v1734
        %v1736 = vld [vmem:[%s1066 + $0xa8] sm:$0xf]
        %v1737 = vsel %vm1634, %v1574, %v1736
        %1738 = vst [vmem:[%s1066 + $0xa8] sm:$0xf] %v1737
        %1739 = vst.msk [vmem:[%s1066 + $0xac] sm:$0xf] %vm1638, %v1576
        %v1740 = vld [vmem:[%s1066 + $0xb0] sm:$0x1]
        %v1741 = vsel %vm1641, %v1578, %v1740
        %1742 = vst [vmem:[%s1066 + $0xb0] sm:$0x1] %v1741
        %v1743 = vld [vmem:[%s1066 + $0xb4] sm:$0xf]
        %v1744 = vsel %vm1634, %v1580, %v1743
        %1745 = vst [vmem:[%s1066 + $0xb4] sm:$0xf] %v1744
        %1746 = vst.msk [vmem:[%s1066 + $0xb8] sm:$0xf] %vm1638, %v1582
        %v1747 = vld [vmem:[%s1066 + $0xbc] sm:$0x1]
        %v1748 = vsel %vm1641, %v1584, %v1747
        %1749 = vst [vmem:[%s1066 + $0xbc] sm:$0x1] %v1748
        %v1750 = vld [vmem:[#allocation2] sm:$0xf]
        %v1751 = vld [vmem:[#allocation2 + $0x4] sm:$0xf]
        %v1752 = vld [vmem:[#allocation2 + $0xc] sm:$0xf]
        %v1753 = vld [vmem:[#allocation2 + $0x10] sm:$0xf]
        %v1754 = vld [vmem:[#allocation2 + $0x18] sm:$0xf]
        %v1755 = vld [vmem:[#allocation2 + $0x1c] sm:$0xf]
        %v1756 = vld [vmem:[#allocation2 + $0x24] sm:$0xf]
        %v1757 = vld [vmem:[#allocation2 + $0x28] sm:$0xf]
        %v1758 = vld [vmem:[#allocation2 + $0x30] sm:$0xf]
        %v1759 = vld [vmem:[#allocation2 + $0x34] sm:$0xf]
        %v1760 = vld [vmem:[#allocation2 + $0x3c] sm:$0xf]
        %v1761 = vld [vmem:[#allocation2 + $0x40] sm:$0xf]
        %v1762 = vld [vmem:[#allocation2 + $0x48] sm:$0xf]
        %v1763 = vld [vmem:[#allocation2 + $0x4c] sm:$0xf]
        %v1764 = vld [vmem:[#allocation2 + $0x54] sm:$0xf]
        %v1765 = vld [vmem:[#allocation2 + $0x58] sm:$0xf]
        %v1766 = vld [vmem:[#allocation2 + $0x60] sm:$0xf]
        %v1767 = vld [vmem:[#allocation2 + $0x64] sm:$0xf]
        %v1768 = vld [vmem:[#allocation2 + $0x6c] sm:$0xf]
        %v1769 = vld [vmem:[#allocation2 + $0x70] sm:$0xf]
        %v1770 = vld [vmem:[#allocation2 + $0x78] sm:$0xf]
        %v1771 = vld [vmem:[#allocation2 + $0x7c] sm:$0xf]
        %v1772 = vld [vmem:[#allocation2 + $0x84] sm:$0xf]
        %v1773 = vld [vmem:[#allocation2 + $0x88] sm:$0xf]
        %v1774 = vld [vmem:[#allocation2 + $0x90] sm:$0xf]
        %v1775 = vld [vmem:[#allocation2 + $0x94] sm:$0xf]
        %v1776 = vld [vmem:[#allocation2 + $0x9c] sm:$0xf]
        %v1777 = vld [vmem:[#allocation2 + $0xa0] sm:$0xf]
        %v1778 = vld [vmem:[#allocation2 + $0xa8] sm:$0xf]
        %v1779 = vld [vmem:[#allocation2 + $0xac] sm:$0xf]
        %v1780 = vld [vmem:[#allocation2 + $0xb4] sm:$0xf]
        %v1781 = vld [vmem:[#allocation2 + $0xb8] sm:$0xf]
        %v1782 = vld [vmem:[%s5] sm:$0xf]
        %v1783 = vld [vmem:[#allocation2 + $0x8] sm:$0x1]
        %v1784 = vld [vmem:[#allocation2 + $0x14] sm:$0x1]
        %v1785 = vld [vmem:[#allocation2 + $0x20] sm:$0x1]
        %v1786 = vld [vmem:[#allocation2 + $0x2c] sm:$0x1]
        %v1787 = vld [vmem:[#allocation2 + $0x38] sm:$0x1]
        %v1788 = vld [vmem:[#allocation2 + $0x44] sm:$0x1]
        %v1789 = vld [vmem:[#allocation2 + $0x50] sm:$0x1]
        %v1790 = vld [vmem:[#allocation2 + $0x5c] sm:$0x1]
        %v1791 = vld [vmem:[#allocation2 + $0x68] sm:$0x1]
        %v1792 = vld [vmem:[#allocation2 + $0x74] sm:$0x1]
        %v1793 = vld [vmem:[#allocation2 + $0x80] sm:$0x1]
        %v1794 = vld [vmem:[#allocation2 + $0x8c] sm:$0x1]
        %v1795 = vld [vmem:[#allocation2 + $0x98] sm:$0x1]
        %v1796 = vld [vmem:[#allocation2 + $0xa4] sm:$0x1]
        %v1797 = vld [vmem:[#allocation2 + $0xb0] sm:$0x1]
        %v1798 = vld [vmem:[#allocation2 + $0xbc] sm:$0x1]
        %vm1799 = vsmask.f32 3328
        %vm1800 = vsmask.f32 7440
        %vm1801 = vmor %vm1799, %vm1800
        %v1803 = vshrl.u32 %v1750, 16
        %v1805 = vrot.slane %v1803, 4
        %v1806 = vshll.u32 %v1750, 16
        %v1808 = vrot.slane %v1806, 5
        %v1809 = vor.u32 %v1805, %v1808
        %v1810 = vrot.slane %v1809, 4
        %v1812 = vshll.u32 %v1751, 16
        %v1814 = vrot.slane %v1812, 5
        %v1815 = vsel %vm1801, %v1810, %v1814
        %v1816 = vshrl.u32 %v1751, 16
        %v1818 = vrot.slane %v1816, 4
        %v1819 = vor.u32 %v1818, %v1814
        %v1820 = vrot.slane %v1819, 4
        %v1822 = vshll.u32 %v1783, 16
        %v1824 = vrot.slane %v1822, 5
        %v1825 = vsel %vm1801, %v1820, %v1824
        %v1827 = vshrl.u32 %v1752, 16
        %v1829 = vrot.slane %v1827, 4
        %v1830 = vshll.u32 %v1752, 16
        %v1832 = vrot.slane %v1830, 5
        %v1833 = vor.u32 %v1829, %v1832
        %v1834 = vrot.slane %v1833, 4
        %v1836 = vshll.u32 %v1753, 16
        %v1838 = vrot.slane %v1836, 5
        %v1839 = vsel %vm1801, %v1834, %v1838
        %v1840 = vshrl.u32 %v1753, 16
        %v1842 = vrot.slane %v1840, 4
        %v1843 = vor.u32 %v1842, %v1838
        %v1844 = vrot.slane %v1843, 4
        %v1846 = vshll.u32 %v1784, 16
        %v1848 = vrot.slane %v1846, 5
        %v1849 = vsel %vm1801, %v1844, %v1848
        %v1851 = vshrl.u32 %v1754, 16
        %v1853 = vrot.slane %v1851, 4
        %v1854 = vshll.u32 %v1754, 16
        %v1856 = vrot.slane %v1854, 5
        %v1857 = vor.u32 %v1853, %v1856
        %v1858 = vrot.slane %v1857, 4
        %v1860 = vshll.u32 %v1755, 16
        %v1862 = vrot.slane %v1860, 5
        %v1863 = vsel %vm1801, %v1858, %v1862
        %v1864 = vshrl.u32 %v1755, 16
        %v1866 = vrot.slane %v1864, 4
        %v1867 = vor.u32 %v1866, %v1862
        %v1868 = vrot.slane %v1867, 4
        %v1870 = vshll.u32 %v1785, 16
        %v1872 = vrot.slane %v1870, 5
        %v1873 = vsel %vm1801, %v1868, %v1872
        %v1875 = vshrl.u32 %v1756, 16
        %v1877 = vrot.slane %v1875, 4
        %v1878 = vshll.u32 %v1756, 16
        %v1880 = vrot.slane %v1878, 5
        %v1881 = vor.u32 %v1877, %v1880
        %v1882 = vrot.slane %v1881, 4
        %v1884 = vshll.u32 %v1757, 16
        %v1886 = vrot.slane %v1884, 5
        %v1887 = vsel %vm1801, %v1882, %v1886
        %v1888 = vshrl.u32 %v1757, 16
        %v1890 = vrot.slane %v1888, 4
        %v1891 = vor.u32 %v1890, %v1886
        %v1892 = vrot.slane %v1891, 4
        %v1894 = vshll.u32 %v1786, 16
        %v1896 = vrot.slane %v1894, 5
        %v1897 = vsel %vm1801, %v1892, %v1896
        %v1899 = vshrl.u32 %v1758, 16
        %v1901 = vrot.slane %v1899, 4
        %v1902 = vshll.u32 %v1758, 16
        %v1904 = vrot.slane %v1902, 5
        %v1905 = vor.u32 %v1901, %v1904
        %v1906 = vrot.slane %v1905, 4
        %v1908 = vshll.u32 %v1759, 16
        %v1910 = vrot.slane %v1908, 5
        %v1911 = vsel %vm1801, %v1906, %v1910
        %v1912 = vshrl.u32 %v1759, 16
        %v1914 = vrot.slane %v1912, 4
        %v1915 = vor.u32 %v1914, %v1910
        %v1916 = vrot.slane %v1915, 4
        %v1918 = vshll.u32 %v1787, 16
        %v1920 = vrot.slane %v1918, 5
        %v1921 = vsel %vm1801, %v1916, %v1920
        %v1923 = vshrl.u32 %v1760, 16
        %v1925 = vrot.slane %v1923, 4
        %v1926 = vshll.u32 %v1760, 16
        %v1928 = vrot.slane %v1926, 5
        %v1929 = vor.u32 %v1925, %v1928
        %v1930 = vrot.slane %v1929, 4
        %v1932 = vshll.u32 %v1761, 16
        %v1934 = vrot.slane %v1932, 5
        %v1935 = vsel %vm1801, %v1930, %v1934
        %v1936 = vshrl.u32 %v1761, 16
        %v1938 = vrot.slane %v1936, 4
        %v1939 = vor.u32 %v1938, %v1934
        %v1940 = vrot.slane %v1939, 4
        %v1942 = vshll.u32 %v1788, 16
        %v1944 = vrot.slane %v1942, 5
        %v1945 = vsel %vm1801, %v1940, %v1944
        %v1947 = vshrl.u32 %v1762, 16
        %v1949 = vrot.slane %v1947, 4
        %v1950 = vshll.u32 %v1762, 16
        %v1952 = vrot.slane %v1950, 5
        %v1953 = vor.u32 %v1949, %v1952
        %v1954 = vrot.slane %v1953, 4
        %v1956 = vshll.u32 %v1763, 16
        %v1958 = vrot.slane %v1956, 5
        %v1959 = vsel %vm1801, %v1954, %v1958
        %v1960 = vshrl.u32 %v1763, 16
        %v1962 = vrot.slane %v1960, 4
        %v1963 = vor.u32 %v1962, %v1958
        %v1964 = vrot.slane %v1963, 4
        %v1966 = vshll.u32 %v1789, 16
        %v1968 = vrot.slane %v1966, 5
        %v1969 = vsel %vm1801, %v1964, %v1968
        %v1971 = vshrl.u32 %v1764, 16
        %v1973 = vrot.slane %v1971, 4
        %v1974 = vshll.u32 %v1764, 16
        %v1976 = vrot.slane %v1974, 5
        %v1977 = vor.u32 %v1973, %v1976
        %v1978 = vrot.slane %v1977, 4
        %v1980 = vshll.u32 %v1765, 16
        %v1982 = vrot.slane %v1980, 5
        %v1983 = vsel %vm1801, %v1978, %v1982
        %v1984 = vshrl.u32 %v1765, 16
        %v1986 = vrot.slane %v1984, 4
        %v1987 = vor.u32 %v1986, %v1982
        %v1988 = vrot.slane %v1987, 4
        %v1990 = vshll.u32 %v1790, 16
        %v1992 = vrot.slane %v1990, 5
        %v1993 = vsel %vm1801, %v1988, %v1992
        %v1995 = vshrl.u32 %v1766, 16
        %v1997 = vrot.slane %v1995, 4
        %v1998 = vshll.u32 %v1766, 16
        %v2000 = vrot.slane %v1998, 5
        %v2001 = vor.u32 %v1997, %v2000
        %v2002 = vrot.slane %v2001, 4
        %v2004 = vshll.u32 %v1767, 16
        %v2006 = vrot.slane %v2004, 5
        %v2007 = vsel %vm1801, %v2002, %v2006
        %v2008 = vshrl.u32 %v1767, 16
        %v2010 = vrot.slane %v2008, 4
        %v2011 = vor.u32 %v2010, %v2006
        %v2012 = vrot.slane %v2011, 4
        %v2014 = vshll.u32 %v1791, 16
        %v2016 = vrot.slane %v2014, 5
        %v2017 = vsel %vm1801, %v2012, %v2016
        %v2019 = vshrl.u32 %v1768, 16
        %v2021 = vrot.slane %v2019, 4
        %v2022 = vshll.u32 %v1768, 16
        %v2024 = vrot.slane %v2022, 5
        %v2025 = vor.u32 %v2021, %v2024
        %v2026 = vrot.slane %v2025, 4
        %v2028 = vshll.u32 %v1769, 16
        %v2030 = vrot.slane %v2028, 5
        %v2031 = vsel %vm1801, %v2026, %v2030
        %v2032 = vshrl.u32 %v1769, 16
        %v2034 = vrot.slane %v2032, 4
        %v2035 = vor.u32 %v2034, %v2030
        %v2036 = vrot.slane %v2035, 4
        %v2038 = vshll.u32 %v1792, 16
        %v2040 = vrot.slane %v2038, 5
        %v2041 = vsel %vm1801, %v2036, %v2040
        %v2043 = vshrl.u32 %v1770, 16
        %v2045 = vrot.slane %v2043, 4
        %v2046 = vshll.u32 %v1770, 16
        %v2048 = vrot.slane %v2046, 5
        %v2049 = vor.u32 %v2045, %v2048
        %v2050 = vrot.slane %v2049, 4
        %v2052 = vshll.u32 %v1771, 16
        %v2054 = vrot.slane %v2052, 5
        %v2055 = vsel %vm1801, %v2050, %v2054
        %v2056 = vshrl.u32 %v1771, 16
        %v2058 = vrot.slane %v2056, 4
        %v2059 = vor.u32 %v2058, %v2054
        %v2060 = vrot.slane %v2059, 4
        %v2062 = vshll.u32 %v1793, 16
        %v2064 = vrot.slane %v2062, 5
        %v2065 = vsel %vm1801, %v2060, %v2064
        %v2067 = vshrl.u32 %v1772, 16
        %v2069 = vrot.slane %v2067, 4
        %v2070 = vshll.u32 %v1772, 16
        %v2072 = vrot.slane %v2070, 5
        %v2073 = vor.u32 %v2069, %v2072
        %v2074 = vrot.slane %v2073, 4
        %v2076 = vshll.u32 %v1773, 16
        %v2078 = vrot.slane %v2076, 5
        %v2079 = vsel %vm1801, %v2074, %v2078
        %v2080 = vshrl.u32 %v1773, 16
        %v2082 = vrot.slane %v2080, 4
        %v2083 = vor.u32 %v2082, %v2078
        %v2084 = vrot.slane %v2083, 4
        %v2086 = vshll.u32 %v1794, 16
        %v2088 = vrot.slane %v2086, 5
        %v2089 = vsel %vm1801, %v2084, %v2088
        %v2091 = vshrl.u32 %v1774, 16
        %v2093 = vrot.slane %v2091, 4
        %v2094 = vshll.u32 %v1774, 16
        %v2096 = vrot.slane %v2094, 5
        %v2097 = vor.u32 %v2093, %v2096
        %v2098 = vrot.slane %v2097, 4
        %v2100 = vshll.u32 %v1775, 16
        %v2102 = vrot.slane %v2100, 5
        %v2103 = vsel %vm1801, %v2098, %v2102
        %v2104 = vshrl.u32 %v1775, 16
        %v2106 = vrot.slane %v2104, 4
        %v2107 = vor.u32 %v2106, %v2102
        %v2108 = vrot.slane %v2107, 4
        %v2110 = vshll.u32 %v1795, 16
        %v2112 = vrot.slane %v2110, 5
        %v2113 = vsel %vm1801, %v2108, %v2112
        %v2115 = vshrl.u32 %v1776, 16
        %v2117 = vrot.slane %v2115, 4
        %v2118 = vshll.u32 %v1776, 16
        %v2120 = vrot.slane %v2118, 5
        %v2121 = vor.u32 %v2117, %v2120
        %v2122 = vrot.slane %v2121, 4
        %v2124 = vshll.u32 %v1777, 16
        %v2126 = vrot.slane %v2124, 5
        %v2127 = vsel %vm1801, %v2122, %v2126
        %v2128 = vshrl.u32 %v1777, 16
        %v2130 = vrot.slane %v2128, 4
        %v2131 = vor.u32 %v2130, %v2126
        %v2132 = vrot.slane %v2131, 4
        %v2134 = vshll.u32 %v1796, 16
        %v2136 = vrot.slane %v2134, 5
        %v2137 = vsel %vm1801, %v2132, %v2136
        %v2139 = vshrl.u32 %v1778, 16
        %v2141 = vrot.slane %v2139, 4
        %v2142 = vshll.u32 %v1778, 16
        %v2144 = vrot.slane %v2142, 5
        %v2145 = vor.u32 %v2141, %v2144
        %v2146 = vrot.slane %v2145, 4
        %v2148 = vshll.u32 %v1779, 16
        %v2150 = vrot.slane %v2148, 5
        %v2151 = vsel %vm1801, %v2146, %v2150
        %v2152 = vshrl.u32 %v1779, 16
        %v2154 = vrot.slane %v2152, 4
        %v2155 = vor.u32 %v2154, %v2150
        %v2156 = vrot.slane %v2155, 4
        %v2158 = vshll.u32 %v1797, 16
        %v2160 = vrot.slane %v2158, 5
        %v2161 = vsel %vm1801, %v2156, %v2160
        %v2163 = vshrl.u32 %v1780, 16
        %v2165 = vrot.slane %v2163, 4
        %v2166 = vshll.u32 %v1780, 16
        %v2168 = vrot.slane %v2166, 5
        %v2169 = vor.u32 %v2165, %v2168
        %v2170 = vrot.slane %v2169, 4
        %v2172 = vshll.u32 %v1781, 16
        %v2174 = vrot.slane %v2172, 5
        %v2175 = vsel %vm1801, %v2170, %v2174
        %v2176 = vshrl.u32 %v1781, 16
        %v2178 = vrot.slane %v2176, 4
        %v2179 = vor.u32 %v2178, %v2174
        %v2180 = vrot.slane %v2179, 4
        %v2182 = vshll.u32 %v1798, 16
        %v2184 = vrot.slane %v2182, 5
        %v2185 = vsel %vm1801, %v2180, %v2184
        %s2186 = scalar_lea.vmem %s5, 4
        %v2187 = vld [vmem:[%s2186] sm:$0xf]
        %v2188 = vunpack.c.l.b16 %v1815
        %v2189 = vunpack.c.l.b16 %v1825
        %v2190 = vunpack.c.l.b16 %v1839
        %v2191 = vunpack.c.l.b16 %v1849
        %v2192 = vunpack.c.l.b16 %v1863
        %v2193 = vunpack.c.l.b16 %v1873
        %v2194 = vunpack.c.l.b16 %v1887
        %v2195 = vunpack.c.l.b16 %v1897
        %v2196 = vunpack.c.l.b16 %v1911
        %v2197 = vunpack.c.l.b16 %v1921
        %v2198 = vunpack.c.l.b16 %v1935
        %v2199 = vunpack.c.l.b16 %v1945
        %v2200 = vunpack.c.l.b16 %v1959
        %v2201 = vunpack.c.l.b16 %v1969
        %v2202 = vunpack.c.l.b16 %v1983
        %v2203 = vunpack.c.l.b16 %v1993
        %v2204 = vunpack.c.l.b16 %v2007
        %v2205 = vunpack.c.l.b16 %v2017
        %v2206 = vunpack.c.l.b16 %v2031
        %v2207 = vunpack.c.l.b16 %v2041
        %v2208 = vunpack.c.l.b16 %v2055
        %v2209 = vunpack.c.l.b16 %v2065
        %v2210 = vunpack.c.l.b16 %v2079
        %v2211 = vunpack.c.l.b16 %v2089
        %v2212 = vunpack.c.l.b16 %v2103
        %v2213 = vunpack.c.l.b16 %v2113
        %v2214 = vunpack.c.l.b16 %v2127
        %v2215 = vunpack.c.l.b16 %v2137
        %v2216 = vunpack.c.l.b16 %v2151
        %v2217 = vunpack.c.l.b16 %v2161
        %v2218 = vunpack.c.l.b16 %v2175
        %v2219 = vunpack.c.l.b16 %v2185
        %v2220 = vpack.c.b16 %v2189, %v2188
        %v2221 = vpack.c.b16 %v2191, %v2190
        %v2222 = vpack.c.b16 %v2193, %v2192
        %v2223 = vpack.c.b16 %v2195, %v2194
        %v2224 = vpack.c.b16 %v2197, %v2196
        %v2225 = vpack.c.b16 %v2199, %v2198
        %v2226 = vpack.c.b16 %v2201, %v2200
        %v2227 = vpack.c.b16 %v2203, %v2202
        %v2228 = vpack.c.b16 %v2205, %v2204
        %v2229 = vpack.c.b16 %v2207, %v2206
        %v2230 = vpack.c.b16 %v2209, %v2208
        %v2231 = vpack.c.b16 %v2211, %v2210
        %v2232 = vpack.c.b16 %v2213, %v2212
        %v2233 = vpack.c.b16 %v2215, %v2214
        %v2234 = vpack.c.b16 %v2217, %v2216
        %v2235 = vpack.c.b16 %v2219, %v2218
        %vm2236 = vcmask 64512
        %v2238 = vsel %vm2236, %v2220, 0
        %v2241 = vsel %vm2236, %v2221, 0
        %v2244 = vsel %vm2236, %v2222, 0
        %v2247 = vsel %vm2236, %v2223, 0
        %v2250 = vsel %vm2236, %v2224, 0
        %v2253 = vsel %vm2236, %v2225, 0
        %v2256 = vsel %vm2236, %v2226, 0
        %v2259 = vsel %vm2236, %v2227, 0
        %v2262 = vsel %vm2236, %v2228, 0
        %v2265 = vsel %vm2236, %v2229, 0
        %v2268 = vsel %vm2236, %v2230, 0
        %v2271 = vsel %vm2236, %v2231, 0
        %v2274 = vsel %vm2236, %v2232, 0
        %v2277 = vsel %vm2236, %v2233, 0
        %v2280 = vsel %vm2236, %v2234, 0
        %v2283 = vsel %vm2236, %v2235, 0
        %vm2285 = vcmask 1043456
        %v2287 = vsel %vm2285, %v2187, 0
        %2289 = vmatprep.subr.bf16.mxu0 0
        %2290 = vmatpush1.bf16.msra.mxu0 %v2287
        %2291 = vmatprep.subr.bf16.mxu0 0
        %2292 = vmatpush1.bf16.msra.mxu0 0
        %2293 = vmatprep.subr.bf16.mxu0 0
        %2294 = vmatpush1.bf16.msra.mxu0 0
        %2295 = vmatprep.subr.bf16.mxu0 0
        %2296 = vmatpush1.bf16.msra.mxu0 0
        %2297 = vmatprep.subr.bf16.mxu0 0
        %2298 = vmatpush1.bf16.msra.mxu0 0
        %2299 = vmatprep.subr.bf16.mxu0 0
        %2300 = vmatpush1.bf16.msra.mxu0 0
        %2301 = vmatprep.subr.bf16.mxu0 0
        %2302 = vmatpush1.bf16.msra.mxu0 0
        %2303 = vmatprep.subr.bf16.mxu0 0
        %2304 = vmatpush1.bf16.msra.mxu0 0
        %2305 = vmatprep.subr.bf16.mxu0 0
        %2306 = vmatpush1.bf16.msra.mxu0 0
        %2307 = vmatprep.subr.bf16.mxu0 0
        %2308 = vmatpush1.bf16.msra.mxu0 0
        %2309 = vmatprep.subr.bf16.mxu0 0
        %2310 = vmatpush1.bf16.msra.mxu0 0
        %2311 = vmatprep.subr.bf16.mxu0 0
        %2312 = vmatpush1.bf16.msra.mxu0 0
        %2313 = vmatprep.subr.bf16.mxu0 0
        %2314 = vmatpush1.bf16.msra.mxu0 0
        %2315 = vmatprep.subr.bf16.mxu0 0
        %2316 = vmatpush1.bf16.msra.mxu0 0
        %2317 = vmatprep.subr.bf16.mxu0 0
        %2318 = vmatpush1.bf16.msra.mxu0 0
        %2319 = vmatprep.subr.bf16.mxu0 0
        %2320 = vmatpush1.bf16.msra.mxu0 0
        %2321 = vmatprep.mubr.bf16.mxu0 0
        %2322 = vmatmul.mubr.bf16.gmra.mrb[0].mxu0 %v2238
        %v2323 = vpop.f32.mrb[0].mxu0
        %v2324 = vadd.f32 0.0, %v2323
        %v2325 = vpop.f32.mrb[0].mxu0
        %v2326 = vpop.f32.mrb[0].mxu0
        %v2327 = vadd.f32 0.0, %v2326
        %v2328 = vpop.f32.mrb[0].mxu0
        %2329 = vmatprep.mubr.bf16.mxu0 0
        %2330 = vmatmul.mubr.bf16.gmra.mrb[0].mxu0 %v2241
        %v2331 = vpop.f32.mrb[0].mxu0
        %v2332 = vadd.f32 0.0, %v2331
        %v2333 = vpop.f32.mrb[0].mxu0
        %v2334 = vpop.f32.mrb[0].mxu0
        %v2335 = vadd.f32 0.0, %v2334
        %v2336 = vpop.f32.mrb[0].mxu0
        %2337 = vmatprep.mubr.bf16.mxu0 0
        %2338 = vmatmul.mubr.bf16.gmra.mrb[0].mxu0 %v2244
        %v2339 = vpop.f32.mrb[0].mxu0
        %v2340 = vadd.f32 0.0, %v2339
        %v2341 = vpop.f32.mrb[0].mxu0
        %v2342 = vpop.f32.mrb[0].mxu0
        %v2343 = vadd.f32 0.0, %v2342
        %v2344 = vpop.f32.mrb[0].mxu0
        %2345 = vmatprep.mubr.bf16.mxu0 0
        %2346 = vmatmul.mubr.bf16.gmra.mrb[0].mxu0 %v2247
        %v2347 = vpop.f32.mrb[0].mxu0
        %v2348 = vadd.f32 0.0, %v2347
        %v2349 = vpop.f32.mrb[0].mxu0
        %v2350 = vpop.f32.mrb[0].mxu0
        %v2351 = vadd.f32 0.0, %v2350
        %v2352 = vpop.f32.mrb[0].mxu0
        %2353 = vmatprep.mubr.bf16.mxu0 0
        %2354 = vmatmul.mubr.bf16.gmra.mrb[0].mxu0 %v2250
        %v2355 = vpop.f32.mrb[0].mxu0
        %v2356 = vadd.f32 0.0, %v2355
        %v2357 = vpop.f32.mrb[0].mxu0
        %v2358 = vpop.f32.mrb[0].mxu0
        %v2359 = vadd.f32 0.0, %v2358
        %v2360 = vpop.f32.mrb[0].mxu0
        %2361 = vmatprep.mubr.bf16.mxu0 0
        %2362 = vmatmul.mubr.bf16.gmra.mrb[0].mxu0 %v2253
        %v2363 = vpop.f32.mrb[0].mxu0
        %v2364 = vadd.f32 0.0, %v2363
        %v2365 = vpop.f32.mrb[0].mxu0
        %v2366 = vpop.f32.mrb[0].mxu0
        %v2367 = vadd.f32 0.0, %v2366
        %v2368 = vpop.f32.mrb[0].mxu0
        %2369 = vmatprep.mubr.bf16.mxu0 0
        %2370 = vmatmul.mubr.bf16.gmra.mrb[0].mxu0 %v2256
        %v2371 = vpop.f32.mrb[0].mxu0
        %v2372 = vadd.f32 0.0, %v2371
        %v2373 = vpop.f32.mrb[0].mxu0
        %v2374 = vpop.f32.mrb[0].mxu0
        %v2375 = vadd.f32 0.0, %v2374
        %v2376 = vpop.f32.mrb[0].mxu0
        %2377 = vmatprep.mubr.bf16.mxu0 0
        %2378 = vmatmul.mubr.bf16.gmra.mrb[0].mxu0 %v2259
        %v2379 = vpop.f32.mrb[0].mxu0
        %v2380 = vadd.f32 0.0, %v2379
        %v2381 = vpop.f32.mrb[0].mxu0
        %v2382 = vpop.f32.mrb[0].mxu0
        %v2383 = vadd.f32 0.0, %v2382
        %v2384 = vpop.f32.mrb[0].mxu0
        %2385 = vmatprep.mubr.bf16.mxu0 0
        %2386 = vmatmul.mubr.bf16.gmra.mrb[0].mxu0 %v2262
        %v2387 = vpop.f32.mrb[0].mxu0
        %v2388 = vadd.f32 0.0, %v2387
        %v2389 = vpop.f32.mrb[0].mxu0
        %v2390 = vpop.f32.mrb[0].mxu0
        %v2391 = vadd.f32 0.0, %v2390
        %v2392 = vpop.f32.mrb[0].mxu0
        %2393 = vmatprep.mubr.bf16.mxu0 0
        %2394 = vmatmul.mubr.bf16.gmra.mrb[0].mxu0 %v2265
        %v2395 = vpop.f32.mrb[0].mxu0
        %v2396 = vadd.f32 0.0, %v2395
        %v2397 = vpop.f32.mrb[0].mxu0
        %v2398 = vpop.f32.mrb[0].mxu0
        %v2399 = vadd.f32 0.0, %v2398
        %v2400 = vpop.f32.mrb[0].mxu0
        %2401 = vmatprep.mubr.bf16.mxu0 0
        %2402 = vmatmul.mubr.bf16.gmra.mrb[0].mxu0 %v2268
        %v2403 = vpop.f32.mrb[0].mxu0
        %v2404 = vadd.f32 0.0, %v2403
        %v2405 = vpop.f32.mrb[0].mxu0
        %v2406 = vpop.f32.mrb[0].mxu0
        %v2407 = vadd.f32 0.0, %v2406
        %v2408 = vpop.f32.mrb[0].mxu0
        %2409 = vmatprep.mubr.bf16.mxu0 0
        %2410 = vmatmul.mubr.bf16.gmra.mrb[0].mxu0 %v2271
        %v2411 = vpop.f32.mrb[0].mxu0
        %v2412 = vadd.f32 0.0, %v2411
        %v2413 = vpop.f32.mrb[0].mxu0
        %v2414 = vpop.f32.mrb[0].mxu0
        %v2415 = vadd.f32 0.0, %v2414
        %v2416 = vpop.f32.mrb[0].mxu0
        %2417 = vmatprep.mubr.bf16.mxu0 0
        %2418 = vmatmul.mubr.bf16.gmra.mrb[0].mxu0 %v2274
        %v2419 = vpop.f32.mrb[0].mxu0
        %v2420 = vadd.f32 0.0, %v2419
        %v2421 = vpop.f32.mrb[0].mxu0
        %v2422 = vpop.f32.mrb[0].mxu0
        %v2423 = vadd.f32 0.0, %v2422
        %v2424 = vpop.f32.mrb[0].mxu0
        %2425 = vmatprep.mubr.bf16.mxu0 0
        %2426 = vmatmul.mubr.bf16.gmra.mrb[0].mxu0 %v2277
        %v2427 = vpop.f32.mrb[0].mxu0
        %v2428 = vadd.f32 0.0, %v2427
        %v2429 = vpop.f32.mrb[0].mxu0
        %v2430 = vpop.f32.mrb[0].mxu0
        %v2431 = vadd.f32 0.0, %v2430
        %v2432 = vpop.f32.mrb[0].mxu0
        %2433 = vmatprep.mubr.bf16.mxu0 0
        %2434 = vmatmul.mubr.bf16.gmra.mrb[0].mxu0 %v2280
        %v2435 = vpop.f32.mrb[0].mxu0
        %v2436 = vadd.f32 0.0, %v2435
        %v2437 = vpop.f32.mrb[0].mxu0
        %v2438 = vpop.f32.mrb[0].mxu0
        %v2439 = vadd.f32 0.0, %v2438
        %v2440 = vpop.f32.mrb[0].mxu0
        %2441 = vmatprep.mubr.bf16.mxu0 0
        %2442 = vmatmul.mubr.bf16.gmra.mrb[0].mxu0 %v2283
        %v2443 = vpop.f32.mrb[0].mxu0
        %v2444 = vadd.f32 0.0, %v2443
        %v2445 = vpop.f32.mrb[0].mxu0
        %v2446 = vpop.f32.mrb[0].mxu0
        %v2447 = vadd.f32 0.0, %v2446
        %v2448 = vpop.f32.mrb[0].mxu0
        %2449 = vdwg.mxu0
        %v2482 = vunpack.c.l.b16 %v1750
        %v2483 = vunpack.c.l.b16 %v1751
        %v2484 = vunpack.c.l.b16 %v1752
        %v2485 = vunpack.c.l.b16 %v1753
        %v2486 = vunpack.c.l.b16 %v1754
        %v2487 = vunpack.c.l.b16 %v1755
        %v2488 = vunpack.c.l.b16 %v1756
        %v2489 = vunpack.c.l.b16 %v1757
        %v2490 = vunpack.c.l.b16 %v1758
        %v2491 = vunpack.c.l.b16 %v1759
        %v2492 = vunpack.c.l.b16 %v1760
        %v2493 = vunpack.c.l.b16 %v1761
        %v2494 = vunpack.c.l.b16 %v1762
        %v2495 = vunpack.c.l.b16 %v1763
        %v2496 = vunpack.c.l.b16 %v1764
        %v2497 = vunpack.c.l.b16 %v1765
        %v2498 = vunpack.c.l.b16 %v1766
        %v2499 = vunpack.c.l.b16 %v1767
        %v2500 = vunpack.c.l.b16 %v1768
        %v2501 = vunpack.c.l.b16 %v1769
        %v2502 = vunpack.c.l.b16 %v1770
        %v2503 = vunpack.c.l.b16 %v1771
        %v2504 = vunpack.c.l.b16 %v1772
        %v2505 = vunpack.c.l.b16 %v1773
        %v2506 = vunpack.c.l.b16 %v1774
        %v2507 = vunpack.c.l.b16 %v1775
        %v2508 = vunpack.c.l.b16 %v1776
        %v2509 = vunpack.c.l.b16 %v1777
        %v2510 = vunpack.c.l.b16 %v1778
        %v2511 = vunpack.c.l.b16 %v1779
        %v2512 = vunpack.c.l.b16 %v1780
        %v2513 = vunpack.c.l.b16 %v1781
        %v2514 = vpack.c.b16 %v2483, %v2482
        %v2515 = vpack.c.b16 %v2485, %v2484
        %v2516 = vpack.c.b16 %v2487, %v2486
        %v2517 = vpack.c.b16 %v2489, %v2488
        %v2518 = vpack.c.b16 %v2491, %v2490
        %v2519 = vpack.c.b16 %v2493, %v2492
        %v2520 = vpack.c.b16 %v2495, %v2494
        %v2521 = vpack.c.b16 %v2497, %v2496
        %v2522 = vpack.c.b16 %v2499, %v2498
        %v2523 = vpack.c.b16 %v2501, %v2500
        %v2524 = vpack.c.b16 %v2503, %v2502
        %v2525 = vpack.c.b16 %v2505, %v2504
        %v2526 = vpack.c.b16 %v2507, %v2506
        %v2527 = vpack.c.b16 %v2509, %v2508
        %v2528 = vpack.c.b16 %v2511, %v2510
        %v2529 = vpack.c.b16 %v2513, %v2512
        %v2531 = vsel %vm2236, %v2514, 0
        %v2534 = vsel %vm2236, %v2515, 0
        %v2537 = vsel %vm2236, %v2516, 0
        %v2540 = vsel %vm2236, %v2517, 0
        %v2543 = vsel %vm2236, %v2518, 0
        %v2546 = vsel %vm2236, %v2519, 0
        %v2549 = vsel %vm2236, %v2520, 0
        %v2552 = vsel %vm2236, %v2521, 0
        %v2555 = vsel %vm2236, %v2522, 0
        %v2558 = vsel %vm2236, %v2523, 0
        %v2561 = vsel %vm2236, %v2524, 0
        %v2564 = vsel %vm2236, %v2525, 0
        %v2567 = vsel %vm2236, %v2526, 0
        %v2570 = vsel %vm2236, %v2527, 0
        %v2573 = vsel %vm2236, %v2528, 0
        %v2576 = vsel %vm2236, %v2529, 0
        %v2579 = vsel %vm2285, %v1782, 0
        %2581 = vmatprep.subr.bf16.mxu0 0
        %2582 = vmatpush1.bf16.msra.mxu0 %v2579
        %2583 = vmatprep.subr.bf16.mxu0 0
        %2584 = vmatpush1.bf16.msra.mxu0 0
        %2585 = vmatprep.subr.bf16.mxu0 0
        %2586 = vmatpush1.bf16.msra.mxu0 0
        %2587 = vmatprep.subr.bf16.mxu0 0
        %2588 = vmatpush1.bf16.msra.mxu0 0
        %2589 = vmatprep.subr.bf16.mxu0 0
        %2590 = vmatpush1.bf16.msra.mxu0 0
        %2591 = vmatprep.subr.bf16.mxu0 0
        %2592 = vmatpush1.bf16.msra.mxu0 0
        %2593 = vmatprep.subr.bf16.mxu0 0
        %2594 = vmatpush1.bf16.msra.mxu0 0
        %2595 = vmatprep.subr.bf16.mxu0 0
        %2596 = vmatpush1.bf16.msra.mxu0 0
        %2597 = vmatprep.subr.bf16.mxu0 0
        %2598 = vmatpush1.bf16.msra.mxu0 0
        %2599 = vmatprep.subr.bf16.mxu0 0
        %2600 = vmatpush1.bf16.msra.mxu0 0
        %2601 = vmatprep.subr.bf16.mxu0 0
        %2602 = vmatpush1.bf16.msra.mxu0 0
        %2603 = vmatprep.subr.bf16.mxu0 0
        %2604 = vmatpush1.bf16.msra.mxu0 0
        %2605 = vmatprep.subr.bf16.mxu0 0
        %2606 = vmatpush1.bf16.msra.mxu0 0
        %2607 = vmatprep.subr.bf16.mxu0 0
        %2608 = vmatpush1.bf16.msra.mxu0 0
        %2609 = vmatprep.subr.bf16.mxu0 0
        %2610 = vmatpush1.bf16.msra.mxu0 0
        %2611 = vmatprep.subr.bf16.mxu0 0
        %2612 = vmatpush1.bf16.msra.mxu0 0
        %2613 = vmatprep.mubr.bf16.mxu0 0
        %2614 = vmatmul.mubr.bf16.gmra.mrb[0].mxu0 %v2531
        %v2615 = vpop.f32.mrb[0].mxu0
        %v2616 = vadd.f32 %v2324, %v2615
        %v2617 = vpop.f32.mrb[0].mxu0
        %v2618 = vpop.f32.mrb[0].mxu0
        %v2619 = vadd.f32 %v2327, %v2618
        %v2620 = vpop.f32.mrb[0].mxu0
        %2621 = vmatprep.mubr.bf16.mxu0 0
        %2622 = vmatmul.mubr.bf16.gmra.mrb[0].mxu0 %v2534
        %v2623 = vpop.f32.mrb[0].mxu0
        %v2624 = vadd.f32 %v2332, %v2623
        %v2625 = vpop.f32.mrb[0].mxu0
        %v2626 = vpop.f32.mrb[0].mxu0
        %v2627 = vadd.f32 %v2335, %v2626
        %v2628 = vpop.f32.mrb[0].mxu0
        %2629 = vmatprep.mubr.bf16.mxu0 0
        %2630 = vmatmul.mubr.bf16.gmra.mrb[0].mxu0 %v2537
        %v2631 = vpop.f32.mrb[0].mxu0
        %v2632 = vadd.f32 %v2340, %v2631
        %v2633 = vpop.f32.mrb[0].mxu0
        %v2634 = vpop.f32.mrb[0].mxu0
        %v2635 = vadd.f32 %v2343, %v2634
        %v2636 = vpop.f32.mrb[0].mxu0
        %2637 = vmatprep.mubr.bf16.mxu0 0
        %2638 = vmatmul.mubr.bf16.gmra.mrb[0].mxu0 %v2540
        %v2639 = vpop.f32.mrb[0].mxu0
        %v2640 = vadd.f32 %v2348, %v2639
        %v2641 = vpop.f32.mrb[0].mxu0
        %v2642 = vpop.f32.mrb[0].mxu0
        %v2643 = vadd.f32 %v2351, %v2642
        %v2644 = vpop.f32.mrb[0].mxu0
        %2645 = vmatprep.mubr.bf16.mxu0 0
        %2646 = vmatmul.mubr.bf16.gmra.mrb[0].mxu0 %v2543
        %v2647 = vpop.f32.mrb[0].mxu0
        %v2648 = vadd.f32 %v2356, %v2647
        %v2649 = vpop.f32.mrb[0].mxu0
        %v2650 = vpop.f32.mrb[0].mxu0
        %v2651 = vadd.f32 %v2359, %v2650
        %v2652 = vpop.f32.mrb[0].mxu0
        %2653 = vmatprep.mubr.bf16.mxu0 0
        %2654 = vmatmul.mubr.bf16.gmra.mrb[0].mxu0 %v2546
        %v2655 = vpop.f32.mrb[0].mxu0
        %v2656 = vadd.f32 %v2364, %v2655
        %v2657 = vpop.f32.mrb[0].mxu0
        %v2658 = vpop.f32.mrb[0].mxu0
        %v2659 = vadd.f32 %v2367, %v2658
        %v2660 = vpop.f32.mrb[0].mxu0
        %2661 = vmatprep.mubr.bf16.mxu0 0
        %2662 = vmatmul.mubr.bf16.gmra.mrb[0].mxu0 %v2549
        %v2663 = vpop.f32.mrb[0].mxu0
        %v2664 = vadd.f32 %v2372, %v2663
        %v2665 = vpop.f32.mrb[0].mxu0
        %v2666 = vpop.f32.mrb[0].mxu0
        %v2667 = vadd.f32 %v2375, %v2666
        %v2668 = vpop.f32.mrb[0].mxu0
        %2669 = vmatprep.mubr.bf16.mxu0 0
        %2670 = vmatmul.mubr.bf16.gmra.mrb[0].mxu0 %v2552
        %v2671 = vpop.f32.mrb[0].mxu0
        %v2672 = vadd.f32 %v2380, %v2671
        %v2673 = vpop.f32.mrb[0].mxu0
        %v2674 = vpop.f32.mrb[0].mxu0
        %v2675 = vadd.f32 %v2383, %v2674
        %v2676 = vpop.f32.mrb[0].mxu0
        %2677 = vmatprep.mubr.bf16.mxu0 0
        %2678 = vmatmul.mubr.bf16.gmra.mrb[0].mxu0 %v2555
        %v2679 = vpop.f32.mrb[0].mxu0
        %v2680 = vadd.f32 %v2388, %v2679
        %v2681 = vpop.f32.mrb[0].mxu0
        %v2682 = vpop.f32.mrb[0].mxu0
        %v2683 = vadd.f32 %v2391, %v2682
        %v2684 = vpop.f32.mrb[0].mxu0
        %2685 = vmatprep.mubr.bf16.mxu0 0
        %2686 = vmatmul.mubr.bf16.gmra.mrb[0].mxu0 %v2558
        %v2687 = vpop.f32.mrb[0].mxu0
        %v2688 = vadd.f32 %v2396, %v2687
        %v2689 = vpop.f32.mrb[0].mxu0
        %v2690 = vpop.f32.mrb[0].mxu0
        %v2691 = vadd.f32 %v2399, %v2690
        %v2692 = vpop.f32.mrb[0].mxu0
        %2693 = vmatprep.mubr.bf16.mxu0 0
        %2694 = vmatmul.mubr.bf16.gmra.mrb[0].mxu0 %v2561
        %v2695 = vpop.f32.mrb[0].mxu0
        %v2696 = vadd.f32 %v2404, %v2695
        %v2697 = vpop.f32.mrb[0].mxu0
        %v2698 = vpop.f32.mrb[0].mxu0
        %v2699 = vadd.f32 %v2407, %v2698
        %v2700 = vpop.f32.mrb[0].mxu0
        %2701 = vmatprep.mubr.bf16.mxu0 0
        %2702 = vmatmul.mubr.bf16.gmra.mrb[0].mxu0 %v2564
        %v2703 = vpop.f32.mrb[0].mxu0
        %v2704 = vadd.f32 %v2412, %v2703
        %v2705 = vpop.f32.mrb[0].mxu0
        %v2706 = vpop.f32.mrb[0].mxu0
        %v2707 = vadd.f32 %v2415, %v2706
        %v2708 = vpop.f32.mrb[0].mxu0
        %2709 = vmatprep.mubr.bf16.mxu0 0
        %2710 = vmatmul.mubr.bf16.gmra.mrb[0].mxu0 %v2567
        %v2711 = vpop.f32.mrb[0].mxu0
        %v2712 = vadd.f32 %v2420, %v2711
        %v2713 = vpop.f32.mrb[0].mxu0
        %v2714 = vpop.f32.mrb[0].mxu0
        %v2715 = vadd.f32 %v2423, %v2714
        %v2716 = vpop.f32.mrb[0].mxu0
        %2717 = vmatprep.mubr.bf16.mxu0 0
        %2718 = vmatmul.mubr.bf16.gmra.mrb[0].mxu0 %v2570
        %v2719 = vpop.f32.mrb[0].mxu0
        %v2720 = vadd.f32 %v2428, %v2719
        %v2721 = vpop.f32.mrb[0].mxu0
        %v2722 = vpop.f32.mrb[0].mxu0
        %v2723 = vadd.f32 %v2431, %v2722
        %v2724 = vpop.f32.mrb[0].mxu0
        %2725 = vmatprep.mubr.bf16.mxu0 0
        %2726 = vmatmul.mubr.bf16.gmra.mrb[0].mxu0 %v2573
        %v2727 = vpop.f32.mrb[0].mxu0
        %v2728 = vadd.f32 %v2436, %v2727
        %v2729 = vpop.f32.mrb[0].mxu0
        %v2730 = vpop.f32.mrb[0].mxu0
        %v2731 = vadd.f32 %v2439, %v2730
        %v2732 = vpop.f32.mrb[0].mxu0
        %2733 = vmatprep.mubr.bf16.mxu0 0
        %2734 = vmatmul.mubr.bf16.gmra.mrb[0].mxu0 %v2576
        %v2735 = vpop.f32.mrb[0].mxu0
        %v2736 = vadd.f32 %v2444, %v2735
        %v2737 = vpop.f32.mrb[0].mxu0
        %v2738 = vpop.f32.mrb[0].mxu0
        %v2739 = vadd.f32 %v2447, %v2738
        %v2740 = vpop.f32.mrb[0].mxu0
        %2741 = vdwg.mxu0
        %v2742 = vld [vmem:[#allocation2] sm:$0xe]
        %v2743 = vld [vmem:[#allocation2 + $0xc] sm:$0xe]
        %v2744 = vld [vmem:[#allocation2 + $0x18] sm:$0xe]
        %v2745 = vld [vmem:[#allocation2 + $0x24] sm:$0xe]
        %v2746 = vld [vmem:[#allocation2 + $0x30] sm:$0xe]
        %v2747 = vld [vmem:[#allocation2 + $0x3c] sm:$0xe]
        %v2748 = vld [vmem:[#allocation2 + $0x48] sm:$0xe]
        %v2749 = vld [vmem:[#allocation2 + $0x54] sm:$0xe]
        %v2750 = vld [vmem:[#allocation2 + $0x60] sm:$0xe]
        %v2751 = vld [vmem:[#allocation2 + $0x6c] sm:$0xe]
        %v2752 = vld [vmem:[#allocation2 + $0x78] sm:$0xe]
        %v2753 = vld [vmem:[#allocation2 + $0x84] sm:$0xe]
        %v2754 = vld [vmem:[#allocation2 + $0x90] sm:$0xe]
        %v2755 = vld [vmem:[#allocation2 + $0x9c] sm:$0xe]
        %v2756 = vld [vmem:[#allocation2 + $0xa8] sm:$0xe]
        %v2757 = vld [vmem:[#allocation2 + $0xb4] sm:$0xe]
        %vm2790 = vcmask 1042432
        %vm2791 = vcmask 1046532
        %vm2792 = vmor %vm2790, %vm2791
        %v2793 = vrot.slane %v2742, 5
        %v2794 = vrot.slane %v2793, 4
        %v2795 = vrot.slane %v1751, 5
        %v2796 = vsel %vm2792, %v2794, %v2795
        %v2797 = vrot.slane %v2795, 4
        %v2798 = vrot.slane %v1783, 5
        %v2799 = vsel %vm2792, %v2797, %v2798
        %v2800 = vrot.slane %v2743, 5
        %v2801 = vrot.slane %v2800, 4
        %v2802 = vrot.slane %v1753, 5
        %v2803 = vsel %vm2792, %v2801, %v2802
        %v2804 = vrot.slane %v2802, 4
        %v2805 = vrot.slane %v1784, 5
        %v2806 = vsel %vm2792, %v2804, %v2805
        %v2807 = vrot.slane %v2744, 5
        %v2808 = vrot.slane %v2807, 4
        %v2809 = vrot.slane %v1755, 5
        %v2810 = vsel %vm2792, %v2808, %v2809
        %v2811 = vrot.slane %v2809, 4
        %v2812 = vrot.slane %v1785, 5
        %v2813 = vsel %vm2792, %v2811, %v2812
        %v2814 = vrot.slane %v2745, 5
        %v2815 = vrot.slane %v2814, 4
        %v2816 = vrot.slane %v1757, 5
        %v2817 = vsel %vm2792, %v2815, %v2816
        %v2818 = vrot.slane %v2816, 4
        %v2819 = vrot.slane %v1786, 5
        %v2820 = vsel %vm2792, %v2818, %v2819
        %v2821 = vrot.slane %v2746, 5
        %v2822 = vrot.slane %v2821, 4
        %v2823 = vrot.slane %v1759, 5
        %v2824 = vsel %vm2792, %v2822, %v2823
        %v2825 = vrot.slane %v2823, 4
        %v2826 = vrot.slane %v1787, 5
        %v2827 = vsel %vm2792, %v2825, %v2826
        %v2828 = vrot.slane %v2747, 5
        %v2829 = vrot.slane %v2828, 4
        %v2830 = vrot.slane %v1761, 5
        %v2831 = vsel %vm2792, %v2829, %v2830
        %v2832 = vrot.slane %v2830, 4
        %v2833 = vrot.slane %v1788, 5
        %v2834 = vsel %vm2792, %v2832, %v2833
        %v2835 = vrot.slane %v2748, 5
        %v2836 = vrot.slane %v2835, 4
        %v2837 = vrot.slane %v1763, 5
        %v2838 = vsel %vm2792, %v2836, %v2837
        %v2839 = vrot.slane %v2837, 4
        %v2840 = vrot.slane %v1789, 5
        %v2841 = vsel %vm2792, %v2839, %v2840
        %v2842 = vrot.slane %v2749, 5
        %v2843 = vrot.slane %v2842, 4
        %v2844 = vrot.slane %v1765, 5
        %v2845 = vsel %vm2792, %v2843, %v2844
        %v2846 = vrot.slane %v2844, 4
        %v2847 = vrot.slane %v1790, 5
        %v2848 = vsel %vm2792, %v2846, %v2847
        %v2849 = vrot.slane %v2750, 5
        %v2850 = vrot.slane %v2849, 4
        %v2851 = vrot.slane %v1767, 5
        %v2852 = vsel %vm2792, %v2850, %v2851
        %v2853 = vrot.slane %v2851, 4
        %v2854 = vrot.slane %v1791, 5
        %v2855 = vsel %vm2792, %v2853, %v2854
        %v2856 = vrot.slane %v2751, 5
        %v2857 = vrot.slane %v2856, 4
        %v2858 = vrot.slane %v1769, 5
        %v2859 = vsel %vm2792, %v2857, %v2858
        %v2860 = vrot.slane %v2858, 4
        %v2861 = vrot.slane %v1792, 5
        %v2862 = vsel %vm2792, %v2860, %v2861
        %v2863 = vrot.slane %v2752, 5
        %v2864 = vrot.slane %v2863, 4
        %v2865 = vrot.slane %v1771, 5
        %v2866 = vsel %vm2792, %v2864, %v2865
        %v2867 = vrot.slane %v2865, 4
        %v2868 = vrot.slane %v1793, 5
        %v2869 = vsel %vm2792, %v2867, %v2868
        %v2870 = vrot.slane %v2753, 5
        %v2871 = vrot.slane %v2870, 4
        %v2872 = vrot.slane %v1773, 5
        %v2873 = vsel %vm2792, %v2871, %v2872
        %v2874 = vrot.slane %v2872, 4
        %v2875 = vrot.slane %v1794, 5
        %v2876 = vsel %vm2792, %v2874, %v2875
        %v2877 = vrot.slane %v2754, 5
        %v2878 = vrot.slane %v2877, 4
        %v2879 = vrot.slane %v1775, 5
        %v2880 = vsel %vm2792, %v2878, %v2879
        %v2881 = vrot.slane %v2879, 4
        %v2882 = vrot.slane %v1795, 5
        %v2883 = vsel %vm2792, %v2881, %v2882
        %v2884 = vrot.slane %v2755, 5
        %v2885 = vrot.slane %v2884, 4
        %v2886 = vrot.slane %v1777, 5
        %v2887 = vsel %vm2792, %v2885, %v2886
        %v2888 = vrot.slane %v2886, 4
        %v2889 = vrot.slane %v1796, 5
        %v2890 = vsel %vm2792, %v2888, %v2889
        %v2891 = vrot.slane %v2756, 5
        %v2892 = vrot.slane %v2891, 4
        %v2893 = vrot.slane %v1779, 5
        %v2894 = vsel %vm2792, %v2892, %v2893
        %v2895 = vrot.slane %v2893, 4
        %v2896 = vrot.slane %v1797, 5
        %v2897 = vsel %vm2792, %v2895, %v2896
        %v2898 = vrot.slane %v2757, 5
        %v2899 = vrot.slane %v2898, 4
        %v2900 = vrot.slane %v1781, 5
        %v2901 = vsel %vm2792, %v2899, %v2900
        %v2902 = vrot.slane %v2900, 4
        %v2903 = vrot.slane %v1798, 5
        %v2904 = vsel %vm2792, %v2902, %v2903
        %s2905 = scalar_lea.vmem %s5, 8
        %v2906 = vld [vmem:[%s2905] sm:$0xf]
        %v2907 = vunpack.c.l.b16 %v2796
        %v2908 = vunpack.c.l.b16 %v2799
        %v2909 = vunpack.c.l.b16 %v2803
        %v2910 = vunpack.c.l.b16 %v2806
        %v2911 = vunpack.c.l.b16 %v2810
        %v2912 = vunpack.c.l.b16 %v2813
        %v2913 = vunpack.c.l.b16 %v2817
        %v2914 = vunpack.c.l.b16 %v2820
        %v2915 = vunpack.c.l.b16 %v2824
        %v2916 = vunpack.c.l.b16 %v2827
        %v2917 = vunpack.c.l.b16 %v2831
        %v2918 = vunpack.c.l.b16 %v2834
        %v2919 = vunpack.c.l.b16 %v2838
        %v2920 = vunpack.c.l.b16 %v2841
        %v2921 = vunpack.c.l.b16 %v2845
        %v2922 = vunpack.c.l.b16 %v2848
        %v2923 = vunpack.c.l.b16 %v2852
        %v2924 = vunpack.c.l.b16 %v2855
        %v2925 = vunpack.c.l.b16 %v2859
        %v2926 = vunpack.c.l.b16 %v2862
        %v2927 = vunpack.c.l.b16 %v2866
        %v2928 = vunpack.c.l.b16 %v2869
        %v2929 = vunpack.c.l.b16 %v2873
        %v2930 = vunpack.c.l.b16 %v2876
        %v2931 = vunpack.c.l.b16 %v2880
        %v2932 = vunpack.c.l.b16 %v2883
        %v2933 = vunpack.c.l.b16 %v2887
        %v2934 = vunpack.c.l.b16 %v2890
        %v2935 = vunpack.c.l.b16 %v2894
        %v2936 = vunpack.c.l.b16 %v2897
        %v2937 = vunpack.c.l.b16 %v2901
        %v2938 = vunpack.c.l.b16 %v2904
        %v2939 = vpack.c.b16 %v2908, %v2907
        %v2940 = vpack.c.b16 %v2910, %v2909
        %v2941 = vpack.c.b16 %v2912, %v2911
        %v2942 = vpack.c.b16 %v2914, %v2913
        %v2943 = vpack.c.b16 %v2916, %v2915
        %v2944 = vpack.c.b16 %v2918, %v2917
        %v2945 = vpack.c.b16 %v2920, %v2919
        %v2946 = vpack.c.b16 %v2922, %v2921
        %v2947 = vpack.c.b16 %v2924, %v2923
        %v2948 = vpack.c.b16 %v2926, %v2925
        %v2949 = vpack.c.b16 %v2928, %v2927
        %v2950 = vpack.c.b16 %v2930, %v2929
        %v2951 = vpack.c.b16 %v2932, %v2931
        %v2952 = vpack.c.b16 %v2934, %v2933
        %v2953 = vpack.c.b16 %v2936, %v2935
        %v2954 = vpack.c.b16 %v2938, %v2937
        %v2956 = vsel %vm2236, %v2939, 0
        %v2959 = vsel %vm2236, %v2940, 0
        %v2962 = vsel %vm2236, %v2941, 0
        %v2965 = vsel %vm2236, %v2942, 0
        %v2968 = vsel %vm2236, %v2943, 0
        %v2971 = vsel %vm2236, %v2944, 0
        %v2974 = vsel %vm2236, %v2945, 0
        %v2977 = vsel %vm2236, %v2946, 0
        %v2980 = vsel %vm2236, %v2947, 0
        %v2983 = vsel %vm2236, %v2948, 0
        %v2986 = vsel %vm2236, %v2949, 0
        %v2989 = vsel %vm2236, %v2950, 0
        %v2992 = vsel %vm2236, %v2951, 0
        %v2995 = vsel %vm2236, %v2952, 0
        %v2998 = vsel %vm2236, %v2953, 0
        %v3001 = vsel %vm2236, %v2954, 0
        %v3004 = vsel %vm2285, %v2906, 0
        %3006 = vmatprep.subr.bf16.mxu0 0
        %3007 = vmatpush1.bf16.msra.mxu0 %v3004
        %3008 = vmatprep.subr.bf16.mxu0 0
        %3009 = vmatpush1.bf16.msra.mxu0 0
        %3010 = vmatprep.subr.bf16.mxu0 0
        %3011 = vmatpush1.bf16.msra.mxu0 0
        %3012 = vmatprep.subr.bf16.mxu0 0
        %3013 = vmatpush1.bf16.msra.mxu0 0
        %3014 = vmatprep.subr.bf16.mxu0 0
        %3015 = vmatpush1.bf16.msra.mxu0 0
        %3016 = vmatprep.subr.bf16.mxu0 0
        %3017 = vmatpush1.bf16.msra.mxu0 0
        %3018 = vmatprep.subr.bf16.mxu0 0
        %3019 = vmatpush1.bf16.msra.mxu0 0
        %3020 = vmatprep.subr.bf16.mxu0 0
        %3021 = vmatpush1.bf16.msra.mxu0 0
        %3022 = vmatprep.subr.bf16.mxu0 0
        %3023 = vmatpush1.bf16.msra.mxu0 0
        %3024 = vmatprep.subr.bf16.mxu0 0
        %3025 = vmatpush1.bf16.msra.mxu0 0
        %3026 = vmatprep.subr.bf16.mxu0 0
        %3027 = vmatpush1.bf16.msra.mxu0 0
        %3028 = vmatprep.subr.bf16.mxu0 0
        %3029 = vmatpush1.bf16.msra.mxu0 0
        %3030 = vmatprep.subr.bf16.mxu0 0
        %3031 = vmatpush1.bf16.msra.mxu0 0
        %3032 = vmatprep.subr.bf16.mxu0 0
        %3033 = vmatpush1.bf16.msra.mxu0 0
        %3034 = vmatprep.subr.bf16.mxu0 0
        %3035 = vmatpush1.bf16.msra.mxu0 0
        %3036 = vmatprep.subr.bf16.mxu0 0
        %3037 = vmatpush1.bf16.msra.mxu0 0
        %3038 = vmatprep.mubr.bf16.mxu0 0
        %3039 = vmatmul.mubr.bf16.gmra.mrb[0].mxu0 %v2956
        %v3040 = vpop.f32.mrb[0].mxu0
        %v3041 = vadd.f32 0.0, %v3040
        %v3042 = vpop.f32.mrb[0].mxu0
        %v3043 = vpop.f32.mrb[0].mxu0
        %v3044 = vadd.f32 0.0, %v3043
        %v3045 = vpop.f32.mrb[0].mxu0
        %3046 = vmatprep.mubr.bf16.mxu0 0
        %3047 = vmatmul.mubr.bf16.gmra.mrb[0].mxu0 %v2959
        %v3048 = vpop.f32.mrb[0].mxu0
        %v3049 = vadd.f32 0.0, %v3048
        %v3050 = vpop.f32.mrb[0].mxu0
        %v3051 = vpop.f32.mrb[0].mxu0
        %v3052 = vadd.f32 0.0, %v3051
        %v3053 = vpop.f32.mrb[0].mxu0
        %3054 = vmatprep.mubr.bf16.mxu0 0
        %3055 = vmatmul.mubr.bf16.gmra.mrb[0].mxu0 %v2962
        %v3056 = vpop.f32.mrb[0].mxu0
        %v3057 = vadd.f32 0.0, %v3056
        %v3058 = vpop.f32.mrb[0].mxu0
        %v3059 = vpop.f32.mrb[0].mxu0
        %v3060 = vadd.f32 0.0, %v3059
        %v3061 = vpop.f32.mrb[0].mxu0
        %3062 = vmatprep.mubr.bf16.mxu0 0
        %3063 = vmatmul.mubr.bf16.gmra.mrb[0].mxu0 %v2965
        %v3064 = vpop.f32.mrb[0].mxu0
        %v3065 = vadd.f32 0.0, %v3064
        %v3066 = vpop.f32.mrb[0].mxu0
        %v3067 = vpop.f32.mrb[0].mxu0
        %v3068 = vadd.f32 0.0, %v3067
        %v3069 = vpop.f32.mrb[0].mxu0
        %3070 = vmatprep.mubr.bf16.mxu0 0
        %3071 = vmatmul.mubr.bf16.gmra.mrb[0].mxu0 %v2968
        %v3072 = vpop.f32.mrb[0].mxu0
        %v3073 = vadd.f32 0.0, %v3072
        %v3074 = vpop.f32.mrb[0].mxu0
        %v3075 = vpop.f32.mrb[0].mxu0
        %v3076 = vadd.f32 0.0, %v3075
        %v3077 = vpop.f32.mrb[0].mxu0
        %3078 = vmatprep.mubr.bf16.mxu0 0
        %3079 = vmatmul.mubr.bf16.gmra.mrb[0].mxu0 %v2971
        %v3080 = vpop.f32.mrb[0].mxu0
        %v3081 = vadd.f32 0.0, %v3080
        %v3082 = vpop.f32.mrb[0].mxu0
        %v3083 = vpop.f32.mrb[0].mxu0
        %v3084 = vadd.f32 0.0, %v3083
        %v3085 = vpop.f32.mrb[0].mxu0
        %3086 = vmatprep.mubr.bf16.mxu0 0
        %3087 = vmatmul.mubr.bf16.gmra.mrb[0].mxu0 %v2974
        %v3088 = vpop.f32.mrb[0].mxu0
        %v3089 = vadd.f32 0.0, %v3088
        %v3090 = vpop.f32.mrb[0].mxu0
        %v3091 = vpop.f32.mrb[0].mxu0
        %v3092 = vadd.f32 0.0, %v3091
        %v3093 = vpop.f32.mrb[0].mxu0
        %3094 = vmatprep.mubr.bf16.mxu0 0
        %3095 = vmatmul.mubr.bf16.gmra.mrb[0].mxu0 %v2977
        %v3096 = vpop.f32.mrb[0].mxu0
        %v3097 = vadd.f32 0.0, %v3096
        %v3098 = vpop.f32.mrb[0].mxu0
        %v3099 = vpop.f32.mrb[0].mxu0
        %v3100 = vadd.f32 0.0, %v3099
        %v3101 = vpop.f32.mrb[0].mxu0
        %3102 = vmatprep.mubr.bf16.mxu0 0
        %3103 = vmatmul.mubr.bf16.gmra.mrb[0].mxu0 %v2980
        %v3104 = vpop.f32.mrb[0].mxu0
        %v3105 = vadd.f32 0.0, %v3104
        %v3106 = vpop.f32.mrb[0].mxu0
        %v3107 = vpop.f32.mrb[0].mxu0
        %v3108 = vadd.f32 0.0, %v3107
        %v3109 = vpop.f32.mrb[0].mxu0
        %3110 = vmatprep.mubr.bf16.mxu0 0
        %3111 = vmatmul.mubr.bf16.gmra.mrb[0].mxu0 %v2983
        %v3112 = vpop.f32.mrb[0].mxu0
        %v3113 = vadd.f32 0.0, %v3112
        %v3114 = vpop.f32.mrb[0].mxu0
        %v3115 = vpop.f32.mrb[0].mxu0
        %v3116 = vadd.f32 0.0, %v3115
        %v3117 = vpop.f32.mrb[0].mxu0
        %3118 = vmatprep.mubr.bf16.mxu0 0
        %3119 = vmatmul.mubr.bf16.gmra.mrb[0].mxu0 %v2986
        %v3120 = vpop.f32.mrb[0].mxu0
        %v3121 = vadd.f32 0.0, %v3120
        %v3122 = vpop.f32.mrb[0].mxu0
        %v3123 = vpop.f32.mrb[0].mxu0
        %v3124 = vadd.f32 0.0, %v3123
        %v3125 = vpop.f32.mrb[0].mxu0
        %3126 = vmatprep.mubr.bf16.mxu0 0
        %3127 = vmatmul.mubr.bf16.gmra.mrb[0].mxu0 %v2989
        %v3128 = vpop.f32.mrb[0].mxu0
        %v3129 = vadd.f32 0.0, %v3128
        %v3130 = vpop.f32.mrb[0].mxu0
        %v3131 = vpop.f32.mrb[0].mxu0
        %v3132 = vadd.f32 0.0, %v3131
        %v3133 = vpop.f32.mrb[0].mxu0
        %3134 = vmatprep.mubr.bf16.mxu0 0
        %3135 = vmatmul.mubr.bf16.gmra.mrb[0].mxu0 %v2992
        %v3136 = vpop.f32.mrb[0].mxu0
        %v3137 = vadd.f32 0.0, %v3136
        %v3138 = vpop.f32.mrb[0].mxu0
        %v3139 = vpop.f32.mrb[0].mxu0
        %v3140 = vadd.f32 0.0, %v3139
        %v3141 = vpop.f32.mrb[0].mxu0
        %3142 = vmatprep.mubr.bf16.mxu0 0
        %3143 = vmatmul.mubr.bf16.gmra.mrb[0].mxu0 %v2995
        %v3144 = vpop.f32.mrb[0].mxu0
        %v3145 = vadd.f32 0.0, %v3144
        %v3146 = vpop.f32.mrb[0].mxu0
        %v3147 = vpop.f32.mrb[0].mxu0
        %v3148 = vadd.f32 0.0, %v3147
        %v3149 = vpop.f32.mrb[0].mxu0
        %3150 = vmatprep.mubr.bf16.mxu0 0
        %3151 = vmatmul.mubr.bf16.gmra.mrb[0].mxu0 %v2998
        %v3152 = vpop.f32.mrb[0].mxu0
        %v3153 = vadd.f32 0.0, %v3152
        %v3154 = vpop.f32.mrb[0].mxu0
        %v3155 = vpop.f32.mrb[0].mxu0
        %v3156 = vadd.f32 0.0, %v3155
        %v3157 = vpop.f32.mrb[0].mxu0
        %3158 = vmatprep.mubr.bf16.mxu0 0
        %3159 = vmatmul.mubr.bf16.gmra.mrb[0].mxu0 %v3001
        %v3160 = vpop.f32.mrb[0].mxu0
        %v3161 = vadd.f32 0.0, %v3160
        %v3162 = vpop.f32.mrb[0].mxu0
        %v3163 = vpop.f32.mrb[0].mxu0
        %v3164 = vadd.f32 0.0, %v3163
        %v3165 = vpop.f32.mrb[0].mxu0
        %3166 = vdwg.mxu0
        %v3167 = vadd.f32 %v2616, %v3041
        %v3168 = vadd.f32 %v2619, %v3044
        %v3169 = vadd.f32 %v2624, %v3049
        %v3170 = vadd.f32 %v2627, %v3052
        %v3171 = vadd.f32 %v2632, %v3057
        %v3172 = vadd.f32 %v2635, %v3060
        %v3173 = vadd.f32 %v2640, %v3065
        %v3174 = vadd.f32 %v2643, %v3068
        %v3175 = vadd.f32 %v2648, %v3073
        %v3176 = vadd.f32 %v2651, %v3076
        %v3177 = vadd.f32 %v2656, %v3081
        %v3178 = vadd.f32 %v2659, %v3084
        %v3179 = vadd.f32 %v2664, %v3089
        %v3180 = vadd.f32 %v2667, %v3092
        %v3181 = vadd.f32 %v2672, %v3097
        %v3182 = vadd.f32 %v2675, %v3100
        %v3183 = vadd.f32 %v2680, %v3105
        %v3184 = vadd.f32 %v2683, %v3108
        %v3185 = vadd.f32 %v2688, %v3113
        %v3186 = vadd.f32 %v2691, %v3116
        %v3187 = vadd.f32 %v2696, %v3121
        %v3188 = vadd.f32 %v2699, %v3124
        %v3189 = vadd.f32 %v2704, %v3129
        %v3190 = vadd.f32 %v2707, %v3132
        %v3191 = vadd.f32 %v2712, %v3137
        %v3192 = vadd.f32 %v2715, %v3140
        %v3193 = vadd.f32 %v2720, %v3145
        %v3194 = vadd.f32 %v2723, %v3148
        %v3195 = vadd.f32 %v2728, %v3153
        %v3196 = vadd.f32 %v2731, %v3156
        %v3197 = vadd.f32 %v2736, %v3161
        %v3198 = vadd.f32 %v2739, %v3164
        %v3199 = vld [vmem:[%s1066] sm:$0xf]
        %v3200 = vld [vmem:[%s1066 + $0x4] sm:$0xf]
        %v3201 = vld [vmem:[%s1066 + $0xc] sm:$0xf]
        %v3202 = vld [vmem:[%s1066 + $0x10] sm:$0xf]
        %v3203 = vld [vmem:[%s1066 + $0x18] sm:$0xf]
        %v3204 = vld [vmem:[%s1066 + $0x1c] sm:$0xf]
        %v3205 = vld [vmem:[%s1066 + $0x24] sm:$0xf]
        %v3206 = vld [vmem:[%s1066 + $0x28] sm:$0xf]
        %v3207 = vld [vmem:[%s1066 + $0x30] sm:$0xf]
        %v3208 = vld [vmem:[%s1066 + $0x34] sm:$0xf]
        %v3209 = vld [vmem:[%s1066 + $0x3c] sm:$0xf]
        %v3210 = vld [vmem:[%s1066 + $0x40] sm:$0xf]
        %v3211 = vld [vmem:[%s1066 + $0x48] sm:$0xf]
        %v3212 = vld [vmem:[%s1066 + $0x4c] sm:$0xf]
        %v3213 = vld [vmem:[%s1066 + $0x54] sm:$0xf]
        %v3214 = vld [vmem:[%s1066 + $0x58] sm:$0xf]
        %v3215 = vld [vmem:[%s1066 + $0x60] sm:$0xf]
        %v3216 = vld [vmem:[%s1066 + $0x64] sm:$0xf]
        %v3217 = vld [vmem:[%s1066 + $0x6c] sm:$0xf]
        %v3218 = vld [vmem:[%s1066 + $0x70] sm:$0xf]
        %v3219 = vld [vmem:[%s1066 + $0x78] sm:$0xf]
        %v3220 = vld [vmem:[%s1066 + $0x7c] sm:$0xf]
        %v3221 = vld [vmem:[%s1066 + $0x84] sm:$0xf]
        %v3222 = vld [vmem:[%s1066 + $0x88] sm:$0xf]
        %v3223 = vld [vmem:[%s1066 + $0x90] sm:$0xf]
        %v3224 = vld [vmem:[%s1066 + $0x94] sm:$0xf]
        %v3225 = vld [vmem:[%s1066 + $0x9c] sm:$0xf]
        %v3226 = vld [vmem:[%s1066 + $0xa0] sm:$0xf]
        %v3227 = vld [vmem:[%s1066 + $0xa8] sm:$0xf]
        %v3228 = vld [vmem:[%s1066 + $0xac] sm:$0xf]
        %v3229 = vld [vmem:[%s1066 + $0xb4] sm:$0xf]
        %v3230 = vld [vmem:[%s1066 + $0xb8] sm:$0xf]
        %s3231 = scalar_lea.vmem %s5, 12
        %v3232 = vld [vmem:[%s3231] sm:$0xf]
        %v3265 = vunpack.c.l.b16 %v3199
        %v3266 = vunpack.c.l.b16 %v3200
        %v3267 = vunpack.c.l.b16 %v3201
        %v3268 = vunpack.c.l.b16 %v3202
        %v3269 = vunpack.c.l.b16 %v3203
        %v3270 = vunpack.c.l.b16 %v3204
        %v3271 = vunpack.c.l.b16 %v3205
        %v3272 = vunpack.c.l.b16 %v3206
        %v3273 = vunpack.c.l.b16 %v3207
        %v3274 = vunpack.c.l.b16 %v3208
        %v3275 = vunpack.c.l.b16 %v3209
        %v3276 = vunpack.c.l.b16 %v3210
        %v3277 = vunpack.c.l.b16 %v3211
        %v3278 = vunpack.c.l.b16 %v3212
        %v3279 = vunpack.c.l.b16 %v3213
        %v3280 = vunpack.c.l.b16 %v3214
        %v3281 = vunpack.c.l.b16 %v3215
        %v3282 = vunpack.c.l.b16 %v3216
        %v3283 = vunpack.c.l.b16 %v3217
        %v3284 = vunpack.c.l.b16 %v3218
        %v3285 = vunpack.c.l.b16 %v3219
        %v3286 = vunpack.c.l.b16 %v3220
        %v3287 = vunpack.c.l.b16 %v3221
        %v3288 = vunpack.c.l.b16 %v3222
        %v3289 = vunpack.c.l.b16 %v3223
        %v3290 = vunpack.c.l.b16 %v3224
        %v3291 = vunpack.c.l.b16 %v3225
        %v3292 = vunpack.c.l.b16 %v3226
        %v3293 = vunpack.c.l.b16 %v3227
        %v3294 = vunpack.c.l.b16 %v3228
        %v3295 = vunpack.c.l.b16 %v3229
        %v3296 = vunpack.c.l.b16 %v3230
        %v3297 = vpack.c.b16 %v3266, %v3265
        %v3298 = vpack.c.b16 %v3268, %v3267
        %v3299 = vpack.c.b16 %v3270, %v3269
        %v3300 = vpack.c.b16 %v3272, %v3271
        %v3301 = vpack.c.b16 %v3274, %v3273
        %v3302 = vpack.c.b16 %v3276, %v3275
        %v3303 = vpack.c.b16 %v3278, %v3277
        %v3304 = vpack.c.b16 %v3280, %v3279
        %v3305 = vpack.c.b16 %v3282, %v3281
        %v3306 = vpack.c.b16 %v3284, %v3283
        %v3307 = vpack.c.b16 %v3286, %v3285
        %v3308 = vpack.c.b16 %v3288, %v3287
        %v3309 = vpack.c.b16 %v3290, %v3289
        %v3310 = vpack.c.b16 %v3292, %v3291
        %v3311 = vpack.c.b16 %v3294, %v3293
        %v3312 = vpack.c.b16 %v3296, %v3295
        %v3314 = vsel %vm2236, %v3297, 0
        %v3317 = vsel %vm2236, %v3298, 0
        %v3320 = vsel %vm2236, %v3299, 0
        %v3323 = vsel %vm2236, %v3300, 0
        %v3326 = vsel %vm2236, %v3301, 0
        %v3329 = vsel %vm2236, %v3302, 0
        %v3332 = vsel %vm2236, %v3303, 0
        %v3335 = vsel %vm2236, %v3304, 0
        %v3338 = vsel %vm2236, %v3305, 0
        %v3341 = vsel %vm2236, %v3306, 0
        %v3344 = vsel %vm2236, %v3307, 0
        %v3347 = vsel %vm2236, %v3308, 0
        %v3350 = vsel %vm2236, %v3309, 0
        %v3353 = vsel %vm2236, %v3310, 0
        %v3356 = vsel %vm2236, %v3311, 0
        %v3359 = vsel %vm2236, %v3312, 0
        %v3362 = vsel %vm2285, %v3232, 0
        %3364 = vmatprep.subr.bf16.mxu0 0
        %3365 = vmatpush1.bf16.msra.mxu0 %v3362
        %3366 = vmatprep.subr.bf16.mxu0 0
        %3367 = vmatpush1.bf16.msra.mxu0 0
        %3368 = vmatprep.subr.bf16.mxu0 0
        %3369 = vmatpush1.bf16.msra.mxu0 0
        %3370 = vmatprep.subr.bf16.mxu0 0
        %3371 = vmatpush1.bf16.msra.mxu0 0
        %3372 = vmatprep.subr.bf16.mxu0 0
        %3373 = vmatpush1.bf16.msra.mxu0 0
        %3374 = vmatprep.subr.bf16.mxu0 0
        %3375 = vmatpush1.bf16.msra.mxu0 0
        %3376 = vmatprep.subr.bf16.mxu0 0
        %3377 = vmatpush1.bf16.msra.mxu0 0
        %3378 = vmatprep.subr.bf16.mxu0 0
        %3379 = vmatpush1.bf16.msra.mxu0 0
        %3380 = vmatprep.subr.bf16.mxu0 0
        %3381 = vmatpush1.bf16.msra.mxu0 0
        %3382 = vmatprep.subr.bf16.mxu0 0
        %3383 = vmatpush1.bf16.msra.mxu0 0
        %3384 = vmatprep.subr.bf16.mxu0 0
        %3385 = vmatpush1.bf16.msra.mxu0 0
        %3386 = vmatprep.subr.bf16.mxu0 0
        %3387 = vmatpush1.bf16.msra.mxu0 0
        %3388 = vmatprep.subr.bf16.mxu0 0
        %3389 = vmatpush1.bf16.msra.mxu0 0
        %3390 = vmatprep.subr.bf16.mxu0 0
        %3391 = vmatpush1.bf16.msra.mxu0 0
        %3392 = vmatprep.subr.bf16.mxu0 0
        %3393 = vmatpush1.bf16.msra.mxu0 0
        %3394 = vmatprep.subr.bf16.mxu0 0
        %3395 = vmatpush1.bf16.msra.mxu0 0
        %3396 = vmatprep.mubr.bf16.mxu0 0
        %3397 = vmatmul.mubr.bf16.gmra.mrb[0].mxu0 %v3314
        %v3398 = vpop.f32.mrb[0].mxu0
        %v3399 = vadd.f32 0.0, %v3398
        %v3400 = vpop.f32.mrb[0].mxu0
        %v3401 = vpop.f32.mrb[0].mxu0
        %v3402 = vadd.f32 0.0, %v3401
        %v3403 = vpop.f32.mrb[0].mxu0
        %3404 = vmatprep.mubr.bf16.mxu0 0
        %3405 = vmatmul.mubr.bf16.gmra.mrb[0].mxu0 %v3317
        %v3406 = vpop.f32.mrb[0].mxu0
        %v3407 = vadd.f32 0.0, %v3406
        %v3408 = vpop.f32.mrb[0].mxu0
        %v3409 = vpop.f32.mrb[0].mxu0
        %v3410 = vadd.f32 0.0, %v3409
        %v3411 = vpop.f32.mrb[0].mxu0
        %3412 = vmatprep.mubr.bf16.mxu0 0
        %3413 = vmatmul.mubr.bf16.gmra.mrb[0].mxu0 %v3320
        %v3414 = vpop.f32.mrb[0].mxu0
        %v3415 = vadd.f32 0.0, %v3414
        %v3416 = vpop.f32.mrb[0].mxu0
        %v3417 = vpop.f32.mrb[0].mxu0
        %v3418 = vadd.f32 0.0, %v3417
        %v3419 = vpop.f32.mrb[0].mxu0
        %3420 = vmatprep.mubr.bf16.mxu0 0
        %3421 = vmatmul.mubr.bf16.gmra.mrb[0].mxu0 %v3323
        %v3422 = vpop.f32.mrb[0].mxu0
        %v3423 = vadd.f32 0.0, %v3422
        %v3424 = vpop.f32.mrb[0].mxu0
        %v3425 = vpop.f32.mrb[0].mxu0
        %v3426 = vadd.f32 0.0, %v3425
        %v3427 = vpop.f32.mrb[0].mxu0
        %3428 = vmatprep.mubr.bf16.mxu0 0
        %3429 = vmatmul.mubr.bf16.gmra.mrb[0].mxu0 %v3326
        %v3430 = vpop.f32.mrb[0].mxu0
        %v3431 = vadd.f32 0.0, %v3430
        %v3432 = vpop.f32.mrb[0].mxu0
        %v3433 = vpop.f32.mrb[0].mxu0
        %v3434 = vadd.f32 0.0, %v3433
        %v3435 = vpop.f32.mrb[0].mxu0
        %3436 = vmatprep.mubr.bf16.mxu0 0
        %3437 = vmatmul.mubr.bf16.gmra.mrb[0].mxu0 %v3329
        %v3438 = vpop.f32.mrb[0].mxu0
        %v3439 = vadd.f32 0.0, %v3438
        %v3440 = vpop.f32.mrb[0].mxu0
        %v3441 = vpop.f32.mrb[0].mxu0
        %v3442 = vadd.f32 0.0, %v3441
        %v3443 = vpop.f32.mrb[0].mxu0
        %3444 = vmatprep.mubr.bf16.mxu0 0
        %3445 = vmatmul.mubr.bf16.gmra.mrb[0].mxu0 %v3332
        %v3446 = vpop.f32.mrb[0].mxu0
        %v3447 = vadd.f32 0.0, %v3446
        %v3448 = vpop.f32.mrb[0].mxu0
        %v3449 = vpop.f32.mrb[0].mxu0
        %v3450 = vadd.f32 0.0, %v3449
        %v3451 = vpop.f32.mrb[0].mxu0
        %3452 = vmatprep.mubr.bf16.mxu0 0
        %3453 = vmatmul.mubr.bf16.gmra.mrb[0].mxu0 %v3335
        %v3454 = vpop.f32.mrb[0].mxu0
        %v3455 = vadd.f32 0.0, %v3454
        %v3456 = vpop.f32.mrb[0].mxu0
        %v3457 = vpop.f32.mrb[0].mxu0
        %v3458 = vadd.f32 0.0, %v3457
        %v3459 = vpop.f32.mrb[0].mxu0
        %3460 = vmatprep.mubr.bf16.mxu0 0
        %3461 = vmatmul.mubr.bf16.gmra.mrb[0].mxu0 %v3338
        %v3462 = vpop.f32.mrb[0].mxu0
        %v3463 = vadd.f32 0.0, %v3462
        %v3464 = vpop.f32.mrb[0].mxu0
        %v3465 = vpop.f32.mrb[0].mxu0
        %v3466 = vadd.f32 0.0, %v3465
        %v3467 = vpop.f32.mrb[0].mxu0
        %3468 = vmatprep.mubr.bf16.mxu0 0
        %3469 = vmatmul.mubr.bf16.gmra.mrb[0].mxu0 %v3341
        %v3470 = vpop.f32.mrb[0].mxu0
        %v3471 = vadd.f32 0.0, %v3470
        %v3472 = vpop.f32.mrb[0].mxu0
        %v3473 = vpop.f32.mrb[0].mxu0
        %v3474 = vadd.f32 0.0, %v3473
        %v3475 = vpop.f32.mrb[0].mxu0
        %3476 = vmatprep.mubr.bf16.mxu0 0
        %3477 = vmatmul.mubr.bf16.gmra.mrb[0].mxu0 %v3344
        %v3478 = vpop.f32.mrb[0].mxu0
        %v3479 = vadd.f32 0.0, %v3478
        %v3480 = vpop.f32.mrb[0].mxu0
        %v3481 = vpop.f32.mrb[0].mxu0
        %v3482 = vadd.f32 0.0, %v3481
        %v3483 = vpop.f32.mrb[0].mxu0
        %3484 = vmatprep.mubr.bf16.mxu0 0
        %3485 = vmatmul.mubr.bf16.gmra.mrb[0].mxu0 %v3347
        %v3486 = vpop.f32.mrb[0].mxu0
        %v3487 = vadd.f32 0.0, %v3486
        %v3488 = vpop.f32.mrb[0].mxu0
        %v3489 = vpop.f32.mrb[0].mxu0
        %v3490 = vadd.f32 0.0, %v3489
        %v3491 = vpop.f32.mrb[0].mxu0
        %3492 = vmatprep.mubr.bf16.mxu0 0
        %3493 = vmatmul.mubr.bf16.gmra.mrb[0].mxu0 %v3350
        %v3494 = vpop.f32.mrb[0].mxu0
        %v3495 = vadd.f32 0.0, %v3494
        %v3496 = vpop.f32.mrb[0].mxu0
        %v3497 = vpop.f32.mrb[0].mxu0
        %v3498 = vadd.f32 0.0, %v3497
        %v3499 = vpop.f32.mrb[0].mxu0
        %3500 = vmatprep.mubr.bf16.mxu0 0
        %3501 = vmatmul.mubr.bf16.gmra.mrb[0].mxu0 %v3353
        %v3502 = vpop.f32.mrb[0].mxu0
        %v3503 = vadd.f32 0.0, %v3502
        %v3504 = vpop.f32.mrb[0].mxu0
        %v3505 = vpop.f32.mrb[0].mxu0
        %v3506 = vadd.f32 0.0, %v3505
        %v3507 = vpop.f32.mrb[0].mxu0
        %3508 = vmatprep.mubr.bf16.mxu0 0
        %3509 = vmatmul.mubr.bf16.gmra.mrb[0].mxu0 %v3356
        %v3510 = vpop.f32.mrb[0].mxu0
        %v3511 = vadd.f32 0.0, %v3510
        %v3512 = vpop.f32.mrb[0].mxu0
        %v3513 = vpop.f32.mrb[0].mxu0
        %v3514 = vadd.f32 0.0, %v3513
        %v3515 = vpop.f32.mrb[0].mxu0
        %3516 = vmatprep.mubr.bf16.mxu0 0
        %3517 = vmatmul.mubr.bf16.gmra.mrb[0].mxu0 %v3359
        %v3518 = vpop.f32.mrb[0].mxu0
        %v3519 = vadd.f32 0.0, %v3518
        %v3520 = vpop.f32.mrb[0].mxu0
        %v3521 = vpop.f32.mrb[0].mxu0
        %v3522 = vadd.f32 0.0, %v3521
        %v3523 = vpop.f32.mrb[0].mxu0
        %3524 = vdwg.mxu0
        %v3525 = vadd.f32 %v3167, %v3399
        %v3526 = vadd.f32 %v3168, %v3402
        %v3527 = vadd.f32 %v3169, %v3407
        %v3528 = vadd.f32 %v3170, %v3410
        %v3529 = vadd.f32 %v3171, %v3415
        %v3530 = vadd.f32 %v3172, %v3418
        %v3531 = vadd.f32 %v3173, %v3423
        %v3532 = vadd.f32 %v3174, %v3426
        %v3533 = vadd.f32 %v3175, %v3431
        %v3534 = vadd.f32 %v3176, %v3434
        %v3535 = vadd.f32 %v3177, %v3439
        %v3536 = vadd.f32 %v3178, %v3442
        %v3537 = vadd.f32 %v3179, %v3447
        %v3538 = vadd.f32 %v3180, %v3450
        %v3539 = vadd.f32 %v3181, %v3455
        %v3540 = vadd.f32 %v3182, %v3458
        %v3541 = vadd.f32 %v3183, %v3463
        %v3542 = vadd.f32 %v3184, %v3466
        %v3543 = vadd.f32 %v3185, %v3471
        %v3544 = vadd.f32 %v3186, %v3474
        %v3545 = vadd.f32 %v3187, %v3479
        %v3546 = vadd.f32 %v3188, %v3482
        %v3547 = vadd.f32 %v3189, %v3487
        %v3548 = vadd.f32 %v3190, %v3490
        %v3549 = vadd.f32 %v3191, %v3495
        %v3550 = vadd.f32 %v3192, %v3498
        %v3551 = vadd.f32 %v3193, %v3503
        %v3552 = vadd.f32 %v3194, %v3506
        %v3553 = vadd.f32 %v3195, %v3511
        %v3554 = vadd.f32 %v3196, %v3514
        %v3555 = vadd.f32 %v3197, %v3519
        %v3556 = vadd.f32 %v3198, %v3522
        %v3557 = vld [vmem:[%s1066] sm:$0xf]
        %v3558 = vld [vmem:[%s1066 + $0x4] sm:$0xf]
        %v3559 = vld [vmem:[%s1066 + $0x8] sm:$0x1]
        %v3560 = vld [vmem:[%s1066 + $0xc] sm:$0xf]
        %v3561 = vld [vmem:[%s1066 + $0x10] sm:$0xf]
        %v3562 = vld [vmem:[%s1066 + $0x14] sm:$0x1]
        %v3563 = vld [vmem:[%s1066 + $0x18] sm:$0xf]
        %v3564 = vld [vmem:[%s1066 + $0x1c] sm:$0xf]
        %v3565 = vld [vmem:[%s1066 + $0x20] sm:$0x1]
        %v3566 = vld [vmem:[%s1066 + $0x24] sm:$0xf]
        %v3567 = vld [vmem:[%s1066 + $0x28] sm:$0xf]
        %v3568 = vld [vmem:[%s1066 + $0x2c] sm:$0x1]
        %v3569 = vld [vmem:[%s1066 + $0x30] sm:$0xf]
        %v3570 = vld [vmem:[%s1066 + $0x34] sm:$0xf]
        %v3571 = vld [vmem:[%s1066 + $0x38] sm:$0x1]
        %v3572 = vld [vmem:[%s1066 + $0x3c] sm:$0xf]
        %v3573 = vld [vmem:[%s1066 + $0x40] sm:$0xf]
        %v3574 = vld [vmem:[%s1066 + $0x44] sm:$0x1]
        %v3575 = vld [vmem:[%s1066 + $0x48] sm:$0xf]
        %v3576 = vld [vmem:[%s1066 + $0x4c] sm:$0xf]
        %v3577 = vld [vmem:[%s1066 + $0x50] sm:$0x1]
        %v3578 = vld [vmem:[%s1066 + $0x54] sm:$0xf]
        %v3579 = vld [vmem:[%s1066 + $0x58] sm:$0xf]
        %v3580 = vld [vmem:[%s1066 + $0x5c] sm:$0x1]
        %v3581 = vld [vmem:[%s1066 + $0x60] sm:$0xf]
        %v3582 = vld [vmem:[%s1066 + $0x64] sm:$0xf]
        %v3583 = vld [vmem:[%s1066 + $0x68] sm:$0x1]
        %v3584 = vld [vmem:[%s1066 + $0x6c] sm:$0xf]
        %v3585 = vld [vmem:[%s1066 + $0x70] sm:$0xf]
        %v3586 = vld [vmem:[%s1066 + $0x74] sm:$0x1]
        %v3587 = vld [vmem:[%s1066 + $0x78] sm:$0xf]
        %v3588 = vld [vmem:[%s1066 + $0x7c] sm:$0xf]
        %v3589 = vld [vmem:[%s1066 + $0x80] sm:$0x1]
        %v3590 = vld [vmem:[%s1066 + $0x84] sm:$0xf]
        %v3591 = vld [vmem:[%s1066 + $0x88] sm:$0xf]
        %v3592 = vld [vmem:[%s1066 + $0x8c] sm:$0x1]
        %v3593 = vld [vmem:[%s1066 + $0x90] sm:$0xf]
        %v3594 = vld [vmem:[%s1066 + $0x94] sm:$0xf]
        %v3595 = vld [vmem:[%s1066 + $0x98] sm:$0x1]
        %v3596 = vld [vmem:[%s1066 + $0x9c] sm:$0xf]
        %v3597 = vld [vmem:[%s1066 + $0xa0] sm:$0xf]
        %v3598 = vld [vmem:[%s1066 + $0xa4] sm:$0x1]
        %v3599 = vld [vmem:[%s1066 + $0xa8] sm:$0xf]
        %v3600 = vld [vmem:[%s1066 + $0xac] sm:$0xf]
        %v3601 = vld [vmem:[%s1066 + $0xb0] sm:$0x1]
        %v3602 = vld [vmem:[%s1066 + $0xb4] sm:$0xf]
        %v3603 = vld [vmem:[%s1066 + $0xb8] sm:$0xf]
        %v3604 = vld [vmem:[%s1066 + $0xbc] sm:$0x1]
        %v3606 = vshrl.u32 %v3557, 16
        %v3608 = vrot.slane %v3606, 4
        %v3609 = vshll.u32 %v3557, 16
        %v3611 = vrot.slane %v3609, 5
        %v3612 = vor.u32 %v3608, %v3611
        %v3613 = vrot.slane %v3612, 4
        %v3615 = vshll.u32 %v3558, 16
        %v3617 = vrot.slane %v3615, 5
        %v3618 = vsel %vm1801, %v3613, %v3617
        %v3619 = vshrl.u32 %v3558, 16
        %v3621 = vrot.slane %v3619, 4
        %v3622 = vor.u32 %v3621, %v3617
        %v3623 = vrot.slane %v3622, 4
        %v3625 = vshll.u32 %v3559, 16
        %v3627 = vrot.slane %v3625, 5
        %v3628 = vsel %vm1801, %v3623, %v3627
        %v3630 = vshrl.u32 %v3560, 16
        %v3632 = vrot.slane %v3630, 4
        %v3633 = vshll.u32 %v3560, 16
        %v3635 = vrot.slane %v3633, 5
        %v3636 = vor.u32 %v3632, %v3635
        %v3637 = vrot.slane %v3636, 4
        %v3639 = vshll.u32 %v3561, 16
        %v3641 = vrot.slane %v3639, 5
        %v3642 = vsel %vm1801, %v3637, %v3641
        %v3643 = vshrl.u32 %v3561, 16
        %v3645 = vrot.slane %v3643, 4
        %v3646 = vor.u32 %v3645, %v3641
        %v3647 = vrot.slane %v3646, 4
        %v3649 = vshll.u32 %v3562, 16
        %v3651 = vrot.slane %v3649, 5
        %v3652 = vsel %vm1801, %v3647, %v3651
        %v3654 = vshrl.u32 %v3563, 16
        %v3656 = vrot.slane %v3654, 4
        %v3657 = vshll.u32 %v3563, 16
        %v3659 = vrot.slane %v3657, 5
        %v3660 = vor.u32 %v3656, %v3659
        %v3661 = vrot.slane %v3660, 4
        %v3663 = vshll.u32 %v3564, 16
        %v3665 = vrot.slane %v3663, 5
        %v3666 = vsel %vm1801, %v3661, %v3665
        %v3667 = vshrl.u32 %v3564, 16
        %v3669 = vrot.slane %v3667, 4
        %v3670 = vor.u32 %v3669, %v3665
        %v3671 = vrot.slane %v3670, 4
        %v3673 = vshll.u32 %v3565, 16
        %v3675 = vrot.slane %v3673, 5
        %v3676 = vsel %vm1801, %v3671, %v3675
        %v3678 = vshrl.u32 %v3566, 16
        %v3680 = vrot.slane %v3678, 4
        %v3681 = vshll.u32 %v3566, 16
        %v3683 = vrot.slane %v3681, 5
        %v3684 = vor.u32 %v3680, %v3683
        %v3685 = vrot.slane %v3684, 4
        %v3687 = vshll.u32 %v3567, 16
        %v3689 = vrot.slane %v3687, 5
        %v3690 = vsel %vm1801, %v3685, %v3689
        %v3691 = vshrl.u32 %v3567, 16
        %v3693 = vrot.slane %v3691, 4
        %v3694 = vor.u32 %v3693, %v3689
        %v3695 = vrot.slane %v3694, 4
        %v3697 = vshll.u32 %v3568, 16
        %v3699 = vrot.slane %v3697, 5
        %v3700 = vsel %vm1801, %v3695, %v3699
        %v3702 = vshrl.u32 %v3569, 16
        %v3704 = vrot.slane %v3702, 4
        %v3705 = vshll.u32 %v3569, 16
        %v3707 = vrot.slane %v3705, 5
        %v3708 = vor.u32 %v3704, %v3707
        %v3709 = vrot.slane %v3708, 4
        %v3711 = vshll.u32 %v3570, 16
        %v3713 = vrot.slane %v3711, 5
        %v3714 = vsel %vm1801, %v3709, %v3713
        %v3715 = vshrl.u32 %v3570, 16
        %v3717 = vrot.slane %v3715, 4
        %v3718 = vor.u32 %v3717, %v3713
        %v3719 = vrot.slane %v3718, 4
        %v3721 = vshll.u32 %v3571, 16
        %v3723 = vrot.slane %v3721, 5
        %v3724 = vsel %vm1801, %v3719, %v3723
        %v3726 = vshrl.u32 %v3572, 16
        %v3728 = vrot.slane %v3726, 4
        %v3729 = vshll.u32 %v3572, 16
        %v3731 = vrot.slane %v3729, 5
        %v3732 = vor.u32 %v3728, %v3731
        %v3733 = vrot.slane %v3732, 4
        %v3735 = vshll.u32 %v3573, 16
        %v3737 = vrot.slane %v3735, 5
        %v3738 = vsel %vm1801, %v3733, %v3737
        %v3739 = vshrl.u32 %v3573, 16
        %v3741 = vrot.slane %v3739, 4
        %v3742 = vor.u32 %v3741, %v3737
        %v3743 = vrot.slane %v3742, 4
        %v3745 = vshll.u32 %v3574, 16
        %v3747 = vrot.slane %v3745, 5
        %v3748 = vsel %vm1801, %v3743, %v3747
        %v3750 = vshrl.u32 %v3575, 16
        %v3752 = vrot.slane %v3750, 4
        %v3753 = vshll.u32 %v3575, 16
        %v3755 = vrot.slane %v3753, 5
        %v3756 = vor.u32 %v3752, %v3755
        %v3757 = vrot.slane %v3756, 4
        %v3759 = vshll.u32 %v3576, 16
        %v3761 = vrot.slane %v3759, 5
        %v3762 = vsel %vm1801, %v3757, %v3761
        %v3763 = vshrl.u32 %v3576, 16
        %v3765 = vrot.slane %v3763, 4
        %v3766 = vor.u32 %v3765, %v3761
        %v3767 = vrot.slane %v3766, 4
        %v3769 = vshll.u32 %v3577, 16
        %v3771 = vrot.slane %v3769, 5
        %v3772 = vsel %vm1801, %v3767, %v3771
        %v3774 = vshrl.u32 %v3578, 16
        %v3776 = vrot.slane %v3774, 4
        %v3777 = vshll.u32 %v3578, 16
        %v3779 = vrot.slane %v3777, 5
        %v3780 = vor.u32 %v3776, %v3779
        %v3781 = vrot.slane %v3780, 4
        %v3783 = vshll.u32 %v3579, 16
        %v3785 = vrot.slane %v3783, 5
        %v3786 = vsel %vm1801, %v3781, %v3785
        %v3787 = vshrl.u32 %v3579, 16
        %v3789 = vrot.slane %v3787, 4
        %v3790 = vor.u32 %v3789, %v3785
        %v3791 = vrot.slane %v3790, 4
        %v3793 = vshll.u32 %v3580, 16
        %v3795 = vrot.slane %v3793, 5
        %v3796 = vsel %vm1801, %v3791, %v3795
        %v3798 = vshrl.u32 %v3581, 16
        %v3800 = vrot.slane %v3798, 4
        %v3801 = vshll.u32 %v3581, 16
        %v3803 = vrot.slane %v3801, 5
        %v3804 = vor.u32 %v3800, %v3803
        %v3805 = vrot.slane %v3804, 4
        %v3807 = vshll.u32 %v3582, 16
        %v3809 = vrot.slane %v3807, 5
        %v3810 = vsel %vm1801, %v3805, %v3809
        %v3811 = vshrl.u32 %v3582, 16
        %v3813 = vrot.slane %v3811, 4
        %v3814 = vor.u32 %v3813, %v3809
        %v3815 = vrot.slane %v3814, 4
        %v3817 = vshll.u32 %v3583, 16
        %v3819 = vrot.slane %v3817, 5
        %v3820 = vsel %vm1801, %v3815, %v3819
        %v3822 = vshrl.u32 %v3584, 16
        %v3824 = vrot.slane %v3822, 4
        %v3825 = vshll.u32 %v3584, 16
        %v3827 = vrot.slane %v3825, 5
        %v3828 = vor.u32 %v3824, %v3827
        %v3829 = vrot.slane %v3828, 4
        %v3831 = vshll.u32 %v3585, 16
        %v3833 = vrot.slane %v3831, 5
        %v3834 = vsel %vm1801, %v3829, %v3833
        %v3835 = vshrl.u32 %v3585, 16
        %v3837 = vrot.slane %v3835, 4
        %v3838 = vor.u32 %v3837, %v3833
        %v3839 = vrot.slane %v3838, 4
        %v3841 = vshll.u32 %v3586, 16
        %v3843 = vrot.slane %v3841, 5
        %v3844 = vsel %vm1801, %v3839, %v3843
        %v3846 = vshrl.u32 %v3587, 16
        %v3848 = vrot.slane %v3846, 4
        %v3849 = vshll.u32 %v3587, 16
        %v3851 = vrot.slane %v3849, 5
        %v3852 = vor.u32 %v3848, %v3851
        %v3853 = vrot.slane %v3852, 4
        %v3855 = vshll.u32 %v3588, 16
        %v3857 = vrot.slane %v3855, 5
        %v3858 = vsel %vm1801, %v3853, %v3857
        %v3859 = vshrl.u32 %v3588, 16
        %v3861 = vrot.slane %v3859, 4
        %v3862 = vor.u32 %v3861, %v3857
        %v3863 = vrot.slane %v3862, 4
        %v3865 = vshll.u32 %v3589, 16
        %v3867 = vrot.slane %v3865, 5
        %v3868 = vsel %vm1801, %v3863, %v3867
        %v3870 = vshrl.u32 %v3590, 16
        %v3872 = vrot.slane %v3870, 4
        %v3873 = vshll.u32 %v3590, 16
        %v3875 = vrot.slane %v3873, 5
        %v3876 = vor.u32 %v3872, %v3875
        %v3877 = vrot.slane %v3876, 4
        %v3879 = vshll.u32 %v3591, 16
        %v3881 = vrot.slane %v3879, 5
        %v3882 = vsel %vm1801, %v3877, %v3881
        %v3883 = vshrl.u32 %v3591, 16
        %v3885 = vrot.slane %v3883, 4
        %v3886 = vor.u32 %v3885, %v3881
        %v3887 = vrot.slane %v3886, 4
        %v3889 = vshll.u32 %v3592, 16
        %v3891 = vrot.slane %v3889, 5
        %v3892 = vsel %vm1801, %v3887, %v3891
        %v3894 = vshrl.u32 %v3593, 16
        %v3896 = vrot.slane %v3894, 4
        %v3897 = vshll.u32 %v3593, 16
        %v3899 = vrot.slane %v3897, 5
        %v3900 = vor.u32 %v3896, %v3899
        %v3901 = vrot.slane %v3900, 4
        %v3903 = vshll.u32 %v3594, 16
        %v3905 = vrot.slane %v3903, 5
        %v3906 = vsel %vm1801, %v3901, %v3905
        %v3907 = vshrl.u32 %v3594, 16
        %v3909 = vrot.slane %v3907, 4
        %v3910 = vor.u32 %v3909, %v3905
        %v3911 = vrot.slane %v3910, 4
        %v3913 = vshll.u32 %v3595, 16
        %v3915 = vrot.slane %v3913, 5
        %v3916 = vsel %vm1801, %v3911, %v3915
        %v3918 = vshrl.u32 %v3596, 16
        %v3920 = vrot.slane %v3918, 4
        %v3921 = vshll.u32 %v3596, 16
        %v3923 = vrot.slane %v3921, 5
        %v3924 = vor.u32 %v3920, %v3923
        %v3925 = vrot.slane %v3924, 4
        %v3927 = vshll.u32 %v3597, 16
        %v3929 = vrot.slane %v3927, 5
        %v3930 = vsel %vm1801, %v3925, %v3929
        %v3931 = vshrl.u32 %v3597, 16
        %v3933 = vrot.slane %v3931, 4
        %v3934 = vor.u32 %v3933, %v3929
        %v3935 = vrot.slane %v3934, 4
        %v3937 = vshll.u32 %v3598, 16
        %v3939 = vrot.slane %v3937, 5
        %v3940 = vsel %vm1801, %v3935, %v3939
        %v3942 = vshrl.u32 %v3599, 16
        %v3944 = vrot.slane %v3942, 4
        %v3945 = vshll.u32 %v3599, 16
        %v3947 = vrot.slane %v3945, 5
        %v3948 = vor.u32 %v3944, %v3947
        %v3949 = vrot.slane %v3948, 4
        %v3951 = vshll.u32 %v3600, 16
        %v3953 = vrot.slane %v3951, 5
        %v3954 = vsel %vm1801, %v3949, %v3953
        %v3955 = vshrl.u32 %v3600, 16
        %v3957 = vrot.slane %v3955, 4
        %v3958 = vor.u32 %v3957, %v3953
        %v3959 = vrot.slane %v3958, 4
        %v3961 = vshll.u32 %v3601, 16
        %v3963 = vrot.slane %v3961, 5
        %v3964 = vsel %vm1801, %v3959, %v3963
        %v3966 = vshrl.u32 %v3602, 16
        %v3968 = vrot.slane %v3966, 4
        %v3969 = vshll.u32 %v3602, 16
        %v3971 = vrot.slane %v3969, 5
        %v3972 = vor.u32 %v3968, %v3971
        %v3973 = vrot.slane %v3972, 4
        %v3975 = vshll.u32 %v3603, 16
        %v3977 = vrot.slane %v3975, 5
        %v3978 = vsel %vm1801, %v3973, %v3977
        %v3979 = vshrl.u32 %v3603, 16
        %v3981 = vrot.slane %v3979, 4
        %v3982 = vor.u32 %v3981, %v3977
        %v3983 = vrot.slane %v3982, 4
        %v3985 = vshll.u32 %v3604, 16
        %v3987 = vrot.slane %v3985, 5
        %v3988 = vsel %vm1801, %v3983, %v3987
        %s3989 = scalar_lea.vmem %s5, 16
        %v3990 = vld [vmem:[%s3989] sm:$0xf]
        %v3991 = vunpack.c.l.b16 %v3618
        %v3992 = vunpack.c.l.b16 %v3628
        %v3993 = vunpack.c.l.b16 %v3642
        %v3994 = vunpack.c.l.b16 %v3652
        %v3995 = vunpack.c.l.b16 %v3666
        %v3996 = vunpack.c.l.b16 %v3676
        %v3997 = vunpack.c.l.b16 %v3690
        %v3998 = vunpack.c.l.b16 %v3700
        %v3999 = vunpack.c.l.b16 %v3714
        %v4000 = vunpack.c.l.b16 %v3724
        %v4001 = vunpack.c.l.b16 %v3738
        %v4002 = vunpack.c.l.b16 %v3748
        %v4003 = vunpack.c.l.b16 %v3762
        %v4004 = vunpack.c.l.b16 %v3772
        %v4005 = vunpack.c.l.b16 %v3786
        %v4006 = vunpack.c.l.b16 %v3796
        %v4007 = vunpack.c.l.b16 %v3810
        %v4008 = vunpack.c.l.b16 %v3820
        %v4009 = vunpack.c.l.b16 %v3834
        %v4010 = vunpack.c.l.b16 %v3844
        %v4011 = vunpack.c.l.b16 %v3858
        %v4012 = vunpack.c.l.b16 %v3868
        %v4013 = vunpack.c.l.b16 %v3882
        %v4014 = vunpack.c.l.b16 %v3892
        %v4015 = vunpack.c.l.b16 %v3906
        %v4016 = vunpack.c.l.b16 %v3916
        %v4017 = vunpack.c.l.b16 %v3930
        %v4018 = vunpack.c.l.b16 %v3940
        %v4019 = vunpack.c.l.b16 %v3954
        %v4020 = vunpack.c.l.b16 %v3964
        %v4021 = vunpack.c.l.b16 %v3978
        %v4022 = vunpack.c.l.b16 %v3988
        %v4023 = vpack.c.b16 %v3992, %v3991
        %v4024 = vpack.c.b16 %v3994, %v3993
        %v4025 = vpack.c.b16 %v3996, %v3995
        %v4026 = vpack.c.b16 %v3998, %v3997
        %v4027 = vpack.c.b16 %v4000, %v3999
        %v4028 = vpack.c.b16 %v4002, %v4001
        %v4029 = vpack.c.b16 %v4004, %v4003
        %v4030 = vpack.c.b16 %v4006, %v4005
        %v4031 = vpack.c.b16 %v4008, %v4007
        %v4032 = vpack.c.b16 %v4010, %v4009
        %v4033 = vpack.c.b16 %v4012, %v4011
        %v4034 = vpack.c.b16 %v4014, %v4013
        %v4035 = vpack.c.b16 %v4016, %v4015
        %v4036 = vpack.c.b16 %v4018, %v4017
        %v4037 = vpack.c.b16 %v4020, %v4019
        %v4038 = vpack.c.b16 %v4022, %v4021
        %v4040 = vsel %vm2236, %v4023, 0
        %v4043 = vsel %vm2236, %v4024, 0
        %v4046 = vsel %vm2236, %v4025, 0
        %v4049 = vsel %vm2236, %v4026, 0
        %v4052 = vsel %vm2236, %v4027, 0
        %v4055 = vsel %vm2236, %v4028, 0
        %v4058 = vsel %vm2236, %v4029, 0
        %v4061 = vsel %vm2236, %v4030, 0
        %v4064 = vsel %vm2236, %v4031, 0
        %v4067 = vsel %vm2236, %v4032, 0
        %v4070 = vsel %vm2236, %v4033, 0
        %v4073 = vsel %vm2236, %v4034, 0
        %v4076 = vsel %vm2236, %v4035, 0
        %v4079 = vsel %vm2236, %v4036, 0
        %v4082 = vsel %vm2236, %v4037, 0
        %v4085 = vsel %vm2236, %v4038, 0
        %v4088 = vsel %vm2285, %v3990, 0
        %4090 = vmatprep.subr.bf16.mxu0 0
        %4091 = vmatpush1.bf16.msra.mxu0 %v4088
        %4092 = vmatprep.subr.bf16.mxu0 0
        %4093 = vmatpush1.bf16.msra.mxu0 0
        %4094 = vmatprep.subr.bf16.mxu0 0
        %4095 = vmatpush1.bf16.msra.mxu0 0
        %4096 = vmatprep.subr.bf16.mxu0 0
        %4097 = vmatpush1.bf16.msra.mxu0 0
        %4098 = vmatprep.subr.bf16.mxu0 0
        %4099 = vmatpush1.bf16.msra.mxu0 0
        %4100 = vmatprep.subr.bf16.mxu0 0
        %4101 = vmatpush1.bf16.msra.mxu0 0
        %4102 = vmatprep.subr.bf16.mxu0 0
        %4103 = vmatpush1.bf16.msra.mxu0 0
        %4104 = vmatprep.subr.bf16.mxu0 0
        %4105 = vmatpush1.bf16.msra.mxu0 0
        %4106 = vmatprep.subr.bf16.mxu0 0
        %4107 = vmatpush1.bf16.msra.mxu0 0
        %4108 = vmatprep.subr.bf16.mxu0 0
        %4109 = vmatpush1.bf16.msra.mxu0 0
        %4110 = vmatprep.subr.bf16.mxu0 0
        %4111 = vmatpush1.bf16.msra.mxu0 0
        %4112 = vmatprep.subr.bf16.mxu0 0
        %4113 = vmatpush1.bf16.msra.mxu0 0
        %4114 = vmatprep.subr.bf16.mxu0 0
        %4115 = vmatpush1.bf16.msra.mxu0 0
        %4116 = vmatprep.subr.bf16.mxu0 0
        %4117 = vmatpush1.bf16.msra.mxu0 0
        %4118 = vmatprep.subr.bf16.mxu0 0
        %4119 = vmatpush1.bf16.msra.mxu0 0
        %4120 = vmatprep.subr.bf16.mxu0 0
        %4121 = vmatpush1.bf16.msra.mxu0 0
        %4122 = vmatprep.mubr.bf16.mxu0 0
        %4123 = vmatmul.mubr.bf16.gmra.mrb[0].mxu0 %v4040
        %v4124 = vpop.f32.mrb[0].mxu0
        %v4125 = vadd.f32 0.0, %v4124
        %v4126 = vpop.f32.mrb[0].mxu0
        %v4127 = vpop.f32.mrb[0].mxu0
        %v4128 = vadd.f32 0.0, %v4127
        %v4129 = vpop.f32.mrb[0].mxu0
        %4130 = vmatprep.mubr.bf16.mxu0 0
        %4131 = vmatmul.mubr.bf16.gmra.mrb[0].mxu0 %v4043
        %v4132 = vpop.f32.mrb[0].mxu0
        %v4133 = vadd.f32 0.0, %v4132
        %v4134 = vpop.f32.mrb[0].mxu0
        %v4135 = vpop.f32.mrb[0].mxu0
        %v4136 = vadd.f32 0.0, %v4135
        %v4137 = vpop.f32.mrb[0].mxu0
        %4138 = vmatprep.mubr.bf16.mxu0 0
        %4139 = vmatmul.mubr.bf16.gmra.mrb[0].mxu0 %v4046
        %v4140 = vpop.f32.mrb[0].mxu0
        %v4141 = vadd.f32 0.0, %v4140
        %v4142 = vpop.f32.mrb[0].mxu0
        %v4143 = vpop.f32.mrb[0].mxu0
        %v4144 = vadd.f32 0.0, %v4143
        %v4145 = vpop.f32.mrb[0].mxu0
        %4146 = vmatprep.mubr.bf16.mxu0 0
        %4147 = vmatmul.mubr.bf16.gmra.mrb[0].mxu0 %v4049
        %v4148 = vpop.f32.mrb[0].mxu0
        %v4149 = vadd.f32 0.0, %v4148
        %v4150 = vpop.f32.mrb[0].mxu0
        %v4151 = vpop.f32.mrb[0].mxu0
        %v4152 = vadd.f32 0.0, %v4151
        %v4153 = vpop.f32.mrb[0].mxu0
        %4154 = vmatprep.mubr.bf16.mxu0 0
        %4155 = vmatmul.mubr.bf16.gmra.mrb[0].mxu0 %v4052
        %v4156 = vpop.f32.mrb[0].mxu0
        %v4157 = vadd.f32 0.0, %v4156
        %v4158 = vpop.f32.mrb[0].mxu0
        %v4159 = vpop.f32.mrb[0].mxu0
        %v4160 = vadd.f32 0.0, %v4159
        %v4161 = vpop.f32.mrb[0].mxu0
        %4162 = vmatprep.mubr.bf16.mxu0 0
        %4163 = vmatmul.mubr.bf16.gmra.mrb[0].mxu0 %v4055
        %v4164 = vpop.f32.mrb[0].mxu0
        %v4165 = vadd.f32 0.0, %v4164
        %v4166 = vpop.f32.mrb[0].mxu0
        %v4167 = vpop.f32.mrb[0].mxu0
        %v4168 = vadd.f32 0.0, %v4167
        %v4169 = vpop.f32.mrb[0].mxu0
        %4170 = vmatprep.mubr.bf16.mxu0 0
        %4171 = vmatmul.mubr.bf16.gmra.mrb[0].mxu0 %v4058
        %v4172 = vpop.f32.mrb[0].mxu0
        %v4173 = vadd.f32 0.0, %v4172
        %v4174 = vpop.f32.mrb[0].mxu0
        %v4175 = vpop.f32.mrb[0].mxu0
        %v4176 = vadd.f32 0.0, %v4175
        %v4177 = vpop.f32.mrb[0].mxu0
        %4178 = vmatprep.mubr.bf16.mxu0 0
        %4179 = vmatmul.mubr.bf16.gmra.mrb[0].mxu0 %v4061
        %v4180 = vpop.f32.mrb[0].mxu0
        %v4181 = vadd.f32 0.0, %v4180
        %v4182 = vpop.f32.mrb[0].mxu0
        %v4183 = vpop.f32.mrb[0].mxu0
        %v4184 = vadd.f32 0.0, %v4183
        %v4185 = vpop.f32.mrb[0].mxu0
        %4186 = vmatprep.mubr.bf16.mxu0 0
        %4187 = vmatmul.mubr.bf16.gmra.mrb[0].mxu0 %v4064
        %v4188 = vpop.f32.mrb[0].mxu0
        %v4189 = vadd.f32 0.0, %v4188
        %v4190 = vpop.f32.mrb[0].mxu0
        %v4191 = vpop.f32.mrb[0].mxu0
        %v4192 = vadd.f32 0.0, %v4191
        %v4193 = vpop.f32.mrb[0].mxu0
        %4194 = vmatprep.mubr.bf16.mxu0 0
        %4195 = vmatmul.mubr.bf16.gmra.mrb[0].mxu0 %v4067
        %v4196 = vpop.f32.mrb[0].mxu0
        %v4197 = vadd.f32 0.0, %v4196
        %v4198 = vpop.f32.mrb[0].mxu0
        %v4199 = vpop.f32.mrb[0].mxu0
        %v4200 = vadd.f32 0.0, %v4199
        %v4201 = vpop.f32.mrb[0].mxu0
        %4202 = vmatprep.mubr.bf16.mxu0 0
        %4203 = vmatmul.mubr.bf16.gmra.mrb[0].mxu0 %v4070
        %v4204 = vpop.f32.mrb[0].mxu0
        %v4205 = vadd.f32 0.0, %v4204
        %v4206 = vpop.f32.mrb[0].mxu0
        %v4207 = vpop.f32.mrb[0].mxu0
        %v4208 = vadd.f32 0.0, %v4207
        %v4209 = vpop.f32.mrb[0].mxu0
        %4210 = vmatprep.mubr.bf16.mxu0 0
        %4211 = vmatmul.mubr.bf16.gmra.mrb[0].mxu0 %v4073
        %v4212 = vpop.f32.mrb[0].mxu0
        %v4213 = vadd.f32 0.0, %v4212
        %v4214 = vpop.f32.mrb[0].mxu0
        %v4215 = vpop.f32.mrb[0].mxu0
        %v4216 = vadd.f32 0.0, %v4215
        %v4217 = vpop.f32.mrb[0].mxu0
        %4218 = vmatprep.mubr.bf16.mxu0 0
        %4219 = vmatmul.mubr.bf16.gmra.mrb[0].mxu0 %v4076
        %v4220 = vpop.f32.mrb[0].mxu0
        %v4221 = vadd.f32 0.0, %v4220
        %v4222 = vpop.f32.mrb[0].mxu0
        %v4223 = vpop.f32.mrb[0].mxu0
        %v4224 = vadd.f32 0.0, %v4223
        %v4225 = vpop.f32.mrb[0].mxu0
        %4226 = vmatprep.mubr.bf16.mxu0 0
        %4227 = vmatmul.mubr.bf16.gmra.mrb[0].mxu0 %v4079
        %v4228 = vpop.f32.mrb[0].mxu0
        %v4229 = vadd.f32 0.0, %v4228
        %v4230 = vpop.f32.mrb[0].mxu0
        %v4231 = vpop.f32.mrb[0].mxu0
        %v4232 = vadd.f32 0.0, %v4231
        %v4233 = vpop.f32.mrb[0].mxu0
        %4234 = vmatprep.mubr.bf16.mxu0 0
        %4235 = vmatmul.mubr.bf16.gmra.mrb[0].mxu0 %v4082
        %v4236 = vpop.f32.mrb[0].mxu0
        %v4237 = vadd.f32 0.0, %v4236
        %v4238 = vpop.f32.mrb[0].mxu0
        %v4239 = vpop.f32.mrb[0].mxu0
        %v4240 = vadd.f32 0.0, %v4239
        %v4241 = vpop.f32.mrb[0].mxu0
        %4242 = vmatprep.mubr.bf16.mxu0 0
        %4243 = vmatmul.mubr.bf16.gmra.mrb[0].mxu0 %v4085
        %v4244 = vpop.f32.mrb[0].mxu0
        %v4245 = vadd.f32 0.0, %v4244
        %v4246 = vpop.f32.mrb[0].mxu0
        %v4247 = vpop.f32.mrb[0].mxu0
        %v4248 = vadd.f32 0.0, %v4247
        %v4249 = vpop.f32.mrb[0].mxu0
        %4250 = vdwg.mxu0
        %v4251 = vadd.f32 %v3525, %v4125
        %v4252 = vadd.f32 %v3526, %v4128
        %v4253 = vadd.f32 %v3527, %v4133
        %v4254 = vadd.f32 %v3528, %v4136
        %v4255 = vadd.f32 %v3529, %v4141
        %v4256 = vadd.f32 %v3530, %v4144
        %v4257 = vadd.f32 %v3531, %v4149
        %v4258 = vadd.f32 %v3532, %v4152
        %v4259 = vadd.f32 %v3533, %v4157
        %v4260 = vadd.f32 %v3534, %v4160
        %v4261 = vadd.f32 %v3535, %v4165
        %v4262 = vadd.f32 %v3536, %v4168
        %v4263 = vadd.f32 %v3537, %v4173
        %v4264 = vadd.f32 %v3538, %v4176
        %v4265 = vadd.f32 %v3539, %v4181
        %v4266 = vadd.f32 %v3540, %v4184
        %v4267 = vadd.f32 %v3541, %v4189
        %v4268 = vadd.f32 %v3542, %v4192
        %v4269 = vadd.f32 %v3543, %v4197
        %v4270 = vadd.f32 %v3544, %v4200
        %v4271 = vadd.f32 %v3545, %v4205
        %v4272 = vadd.f32 %v3546, %v4208
        %v4273 = vadd.f32 %v3547, %v4213
        %v4274 = vadd.f32 %v3548, %v4216
        %v4275 = vadd.f32 %v3549, %v4221
        %v4276 = vadd.f32 %v3550, %v4224
        %v4277 = vadd.f32 %v3551, %v4229
        %v4278 = vadd.f32 %v3552, %v4232
        %v4279 = vadd.f32 %v3553, %v4237
        %v4280 = vadd.f32 %v3554, %v4240
        %v4281 = vadd.f32 %v3555, %v4245
        %v4282 = vadd.f32 %v3556, %v4248
        %v4283 = vld [vmem:[%s1066] sm:$0xe]
        %v4284 = vld [vmem:[%s1066 + $0xc] sm:$0xe]
        %v4285 = vld [vmem:[%s1066 + $0x18] sm:$0xe]
        %v4286 = vld [vmem:[%s1066 + $0x24] sm:$0xe]
        %v4287 = vld [vmem:[%s1066 + $0x30] sm:$0xe]
        %v4288 = vld [vmem:[%s1066 + $0x3c] sm:$0xe]
        %v4289 = vld [vmem:[%s1066 + $0x48] sm:$0xe]
        %v4290 = vld [vmem:[%s1066 + $0x54] sm:$0xe]
        %v4291 = vld [vmem:[%s1066 + $0x60] sm:$0xe]
        %v4292 = vld [vmem:[%s1066 + $0x6c] sm:$0xe]
        %v4293 = vld [vmem:[%s1066 + $0x78] sm:$0xe]
        %v4294 = vld [vmem:[%s1066 + $0x84] sm:$0xe]
        %v4295 = vld [vmem:[%s1066 + $0x90] sm:$0xe]
        %v4296 = vld [vmem:[%s1066 + $0x9c] sm:$0xe]
        %v4297 = vld [vmem:[%s1066 + $0xa8] sm:$0xe]
        %v4298 = vld [vmem:[%s1066 + $0xb4] sm:$0xe]
        %v4347 = vrot.slane %v4283, 5
        %v4348 = vrot.slane %v4347, 4
        %v4349 = vrot.slane %v3558, 5
        %v4350 = vsel %vm2792, %v4348, %v4349
        %v4351 = vrot.slane %v4349, 4
        %v4352 = vrot.slane %v3559, 5
        %v4353 = vsel %vm2792, %v4351, %v4352
        %v4354 = vrot.slane %v4284, 5
        %v4355 = vrot.slane %v4354, 4
        %v4356 = vrot.slane %v3561, 5
        %v4357 = vsel %vm2792, %v4355, %v4356
        %v4358 = vrot.slane %v4356, 4
        %v4359 = vrot.slane %v3562, 5
        %v4360 = vsel %vm2792, %v4358, %v4359
        %v4361 = vrot.slane %v4285, 5
        %v4362 = vrot.slane %v4361, 4
        %v4363 = vrot.slane %v3564, 5
        %v4364 = vsel %vm2792, %v4362, %v4363
        %v4365 = vrot.slane %v4363, 4
        %v4366 = vrot.slane %v3565, 5
        %v4367 = vsel %vm2792, %v4365, %v4366
        %v4368 = vrot.slane %v4286, 5
        %v4369 = vrot.slane %v4368, 4
        %v4370 = vrot.slane %v3567, 5
        %v4371 = vsel %vm2792, %v4369, %v4370
        %v4372 = vrot.slane %v4370, 4
        %v4373 = vrot.slane %v3568, 5
        %v4374 = vsel %vm2792, %v4372, %v4373
        %v4375 = vrot.slane %v4287, 5
        %v4376 = vrot.slane %v4375, 4
        %v4377 = vrot.slane %v3570, 5
        %v4378 = vsel %vm2792, %v4376, %v4377
        %v4379 = vrot.slane %v4377, 4
        %v4380 = vrot.slane %v3571, 5
        %v4381 = vsel %vm2792, %v4379, %v4380
        %v4382 = vrot.slane %v4288, 5
        %v4383 = vrot.slane %v4382, 4
        %v4384 = vrot.slane %v3573, 5
        %v4385 = vsel %vm2792, %v4383, %v4384
        %v4386 = vrot.slane %v4384, 4
        %v4387 = vrot.slane %v3574, 5
        %v4388 = vsel %vm2792, %v4386, %v4387
        %v4389 = vrot.slane %v4289, 5
        %v4390 = vrot.slane %v4389, 4
        %v4391 = vrot.slane %v3576, 5
        %v4392 = vsel %vm2792, %v4390, %v4391
        %v4393 = vrot.slane %v4391, 4
        %v4394 = vrot.slane %v3577, 5
        %v4395 = vsel %vm2792, %v4393, %v4394
        %v4396 = vrot.slane %v4290, 5
        %v4397 = vrot.slane %v4396, 4
        %v4398 = vrot.slane %v3579, 5
        %v4399 = vsel %vm2792, %v4397, %v4398
        %v4400 = vrot.slane %v4398, 4
        %v4401 = vrot.slane %v3580, 5
        %v4402 = vsel %vm2792, %v4400, %v4401
        %v4403 = vrot.slane %v4291, 5
        %v4404 = vrot.slane %v4403, 4
        %v4405 = vrot.slane %v3582, 5
        %v4406 = vsel %vm2792, %v4404, %v4405
        %v4407 = vrot.slane %v4405, 4
        %v4408 = vrot.slane %v3583, 5
        %v4409 = vsel %vm2792, %v4407, %v4408
        %v4410 = vrot.slane %v4292, 5
        %v4411 = vrot.slane %v4410, 4
        %v4412 = vrot.slane %v3585, 5
        %v4413 = vsel %vm2792, %v4411, %v4412
        %v4414 = vrot.slane %v4412, 4
        %v4415 = vrot.slane %v3586, 5
        %v4416 = vsel %vm2792, %v4414, %v4415
        %v4417 = vrot.slane %v4293, 5
        %v4418 = vrot.slane %v4417, 4
        %v4419 = vrot.slane %v3588, 5
        %v4420 = vsel %vm2792, %v4418, %v4419
        %v4421 = vrot.slane %v4419, 4
        %v4422 = vrot.slane %v3589, 5
        %v4423 = vsel %vm2792, %v4421, %v4422
        %v4424 = vrot.slane %v4294, 5
        %v4425 = vrot.slane %v4424, 4
        %v4426 = vrot.slane %v3591, 5
        %v4427 = vsel %vm2792, %v4425, %v4426
        %v4428 = vrot.slane %v4426, 4
        %v4429 = vrot.slane %v3592, 5
        %v4430 = vsel %vm2792, %v4428, %v4429
        %v4431 = vrot.slane %v4295, 5
        %v4432 = vrot.slane %v4431, 4
        %v4433 = vrot.slane %v3594, 5
        %v4434 = vsel %vm2792, %v4432, %v4433
        %v4435 = vrot.slane %v4433, 4
        %v4436 = vrot.slane %v3595, 5
        %v4437 = vsel %vm2792, %v4435, %v4436
        %v4438 = vrot.slane %v4296, 5
        %v4439 = vrot.slane %v4438, 4
        %v4440 = vrot.slane %v3597, 5
        %v4441 = vsel %vm2792, %v4439, %v4440
        %v4442 = vrot.slane %v4440, 4
        %v4443 = vrot.slane %v3598, 5
        %v4444 = vsel %vm2792, %v4442, %v4443
        %v4445 = vrot.slane %v4297, 5
        %v4446 = vrot.slane %v4445, 4
        %v4447 = vrot.slane %v3600, 5
        %v4448 = vsel %vm2792, %v4446, %v4447
        %v4449 = vrot.slane %v4447, 4
        %v4450 = vrot.slane %v3601, 5
        %v4451 = vsel %vm2792, %v4449, %v4450
        %v4452 = vrot.slane %v4298, 5
        %v4453 = vrot.slane %v4452, 4
        %v4454 = vrot.slane %v3603, 5
        %v4455 = vsel %vm2792, %v4453, %v4454
        %v4456 = vrot.slane %v4454, 4
        %v4457 = vrot.slane %v3604, 5
        %v4458 = vsel %vm2792, %v4456, %v4457
        %s4459 = scalar_lea.vmem %s5, 20
        %v4460 = vld [vmem:[%s4459] sm:$0xf]
        %v4461 = vunpack.c.l.b16 %v4350
        %v4462 = vunpack.c.l.b16 %v4353
        %v4463 = vunpack.c.l.b16 %v4357
        %v4464 = vunpack.c.l.b16 %v4360
        %v4465 = vunpack.c.l.b16 %v4364
        %v4466 = vunpack.c.l.b16 %v4367
        %v4467 = vunpack.c.l.b16 %v4371
        %v4468 = vunpack.c.l.b16 %v4374
        %v4469 = vunpack.c.l.b16 %v4378
        %v4470 = vunpack.c.l.b16 %v4381
        %v4471 = vunpack.c.l.b16 %v4385
        %v4472 = vunpack.c.l.b16 %v4388
        %v4473 = vunpack.c.l.b16 %v4392
        %v4474 = vunpack.c.l.b16 %v4395
        %v4475 = vunpack.c.l.b16 %v4399
        %v4476 = vunpack.c.l.b16 %v4402
        %v4477 = vunpack.c.l.b16 %v4406
        %v4478 = vunpack.c.l.b16 %v4409
        %v4479 = vunpack.c.l.b16 %v4413
        %v4480 = vunpack.c.l.b16 %v4416
        %v4481 = vunpack.c.l.b16 %v4420
        %v4482 = vunpack.c.l.b16 %v4423
        %v4483 = vunpack.c.l.b16 %v4427
        %v4484 = vunpack.c.l.b16 %v4430
        %v4485 = vunpack.c.l.b16 %v4434
        %v4486 = vunpack.c.l.b16 %v4437
        %v4487 = vunpack.c.l.b16 %v4441
        %v4488 = vunpack.c.l.b16 %v4444
        %v4489 = vunpack.c.l.b16 %v4448
        %v4490 = vunpack.c.l.b16 %v4451
        %v4491 = vunpack.c.l.b16 %v4455
        %v4492 = vunpack.c.l.b16 %v4458
        %v4493 = vpack.c.b16 %v4462, %v4461
        %v4494 = vpack.c.b16 %v4464, %v4463
        %v4495 = vpack.c.b16 %v4466, %v4465
        %v4496 = vpack.c.b16 %v4468, %v4467
        %v4497 = vpack.c.b16 %v4470, %v4469
        %v4498 = vpack.c.b16 %v4472, %v4471
        %v4499 = vpack.c.b16 %v4474, %v4473
        %v4500 = vpack.c.b16 %v4476, %v4475
        %v4501 = vpack.c.b16 %v4478, %v4477
        %v4502 = vpack.c.b16 %v4480, %v4479
        %v4503 = vpack.c.b16 %v4482, %v4481
        %v4504 = vpack.c.b16 %v4484, %v4483
        %v4505 = vpack.c.b16 %v4486, %v4485
        %v4506 = vpack.c.b16 %v4488, %v4487
        %v4507 = vpack.c.b16 %v4490, %v4489
        %v4508 = vpack.c.b16 %v4492, %v4491
        %v4510 = vsel %vm2236, %v4493, 0
        %v4513 = vsel %vm2236, %v4494, 0
        %v4516 = vsel %vm2236, %v4495, 0
        %v4519 = vsel %vm2236, %v4496, 0
        %v4522 = vsel %vm2236, %v4497, 0
        %v4525 = vsel %vm2236, %v4498, 0
        %v4528 = vsel %vm2236, %v4499, 0
        %v4531 = vsel %vm2236, %v4500, 0
        %v4534 = vsel %vm2236, %v4501, 0
        %v4537 = vsel %vm2236, %v4502, 0
        %v4540 = vsel %vm2236, %v4503, 0
        %v4543 = vsel %vm2236, %v4504, 0
        %v4546 = vsel %vm2236, %v4505, 0
        %v4549 = vsel %vm2236, %v4506, 0
        %v4552 = vsel %vm2236, %v4507, 0
        %v4555 = vsel %vm2236, %v4508, 0
        %v4558 = vsel %vm2285, %v4460, 0
        %4560 = vmatprep.subr.bf16.mxu0 0
        %4561 = vmatpush1.bf16.msra.mxu0 %v4558
        %4562 = vmatprep.subr.bf16.mxu0 0
        %4563 = vmatpush1.bf16.msra.mxu0 0
        %4564 = vmatprep.subr.bf16.mxu0 0
        %4565 = vmatpush1.bf16.msra.mxu0 0
        %4566 = vmatprep.subr.bf16.mxu0 0
        %4567 = vmatpush1.bf16.msra.mxu0 0
        %4568 = vmatprep.subr.bf16.mxu0 0
        %4569 = vmatpush1.bf16.msra.mxu0 0
        %4570 = vmatprep.subr.bf16.mxu0 0
        %4571 = vmatpush1.bf16.msra.mxu0 0
        %4572 = vmatprep.subr.bf16.mxu0 0
        %4573 = vmatpush1.bf16.msra.mxu0 0
        %4574 = vmatprep.subr.bf16.mxu0 0
        %4575 = vmatpush1.bf16.msra.mxu0 0
        %4576 = vmatprep.subr.bf16.mxu0 0
        %4577 = vmatpush1.bf16.msra.mxu0 0
        %4578 = vmatprep.subr.bf16.mxu0 0
        %4579 = vmatpush1.bf16.msra.mxu0 0
        %4580 = vmatprep.subr.bf16.mxu0 0
        %4581 = vmatpush1.bf16.msra.mxu0 0
        %4582 = vmatprep.subr.bf16.mxu0 0
        %4583 = vmatpush1.bf16.msra.mxu0 0
        %4584 = vmatprep.subr.bf16.mxu0 0
        %4585 = vmatpush1.bf16.msra.mxu0 0
        %4586 = vmatprep.subr.bf16.mxu0 0
        %4587 = vmatpush1.bf16.msra.mxu0 0
        %4588 = vmatprep.subr.bf16.mxu0 0
        %4589 = vmatpush1.bf16.msra.mxu0 0
        %4590 = vmatprep.subr.bf16.mxu0 0
        %4591 = vmatpush1.bf16.msra.mxu0 0
        %4592 = vmatprep.mubr.bf16.mxu0 0
        %4593 = vmatmul.mubr.bf16.gmra.mrb[0].mxu0 %v4510
        %v4594 = vpop.f32.mrb[0].mxu0
        %v4595 = vadd.f32 0.0, %v4594
        %v4596 = vpop.f32.mrb[0].mxu0
        %v4597 = vpop.f32.mrb[0].mxu0
        %v4598 = vadd.f32 0.0, %v4597
        %v4599 = vpop.f32.mrb[0].mxu0
        %4600 = vmatprep.mubr.bf16.mxu0 0
        %4601 = vmatmul.mubr.bf16.gmra.mrb[0].mxu0 %v4513
        %v4602 = vpop.f32.mrb[0].mxu0
        %v4603 = vadd.f32 0.0, %v4602
        %v4604 = vpop.f32.mrb[0].mxu0
        %v4605 = vpop.f32.mrb[0].mxu0
        %v4606 = vadd.f32 0.0, %v4605
        %v4607 = vpop.f32.mrb[0].mxu0
        %4608 = vmatprep.mubr.bf16.mxu0 0
        %4609 = vmatmul.mubr.bf16.gmra.mrb[0].mxu0 %v4516
        %v4610 = vpop.f32.mrb[0].mxu0
        %v4611 = vadd.f32 0.0, %v4610
        %v4612 = vpop.f32.mrb[0].mxu0
        %v4613 = vpop.f32.mrb[0].mxu0
        %v4614 = vadd.f32 0.0, %v4613
        %v4615 = vpop.f32.mrb[0].mxu0
        %4616 = vmatprep.mubr.bf16.mxu0 0
        %4617 = vmatmul.mubr.bf16.gmra.mrb[0].mxu0 %v4519
        %v4618 = vpop.f32.mrb[0].mxu0
        %v4619 = vadd.f32 0.0, %v4618
        %v4620 = vpop.f32.mrb[0].mxu0
        %v4621 = vpop.f32.mrb[0].mxu0
        %v4622 = vadd.f32 0.0, %v4621
        %v4623 = vpop.f32.mrb[0].mxu0
        %4624 = vmatprep.mubr.bf16.mxu0 0
        %4625 = vmatmul.mubr.bf16.gmra.mrb[0].mxu0 %v4522
        %v4626 = vpop.f32.mrb[0].mxu0
        %v4627 = vadd.f32 0.0, %v4626
        %v4628 = vpop.f32.mrb[0].mxu0
        %v4629 = vpop.f32.mrb[0].mxu0
        %v4630 = vadd.f32 0.0, %v4629
        %v4631 = vpop.f32.mrb[0].mxu0
        %4632 = vmatprep.mubr.bf16.mxu0 0
        %4633 = vmatmul.mubr.bf16.gmra.mrb[0].mxu0 %v4525
        %v4634 = vpop.f32.mrb[0].mxu0
        %v4635 = vadd.f32 0.0, %v4634
        %v4636 = vpop.f32.mrb[0].mxu0
        %v4637 = vpop.f32.mrb[0].mxu0
        %v4638 = vadd.f32 0.0, %v4637
        %v4639 = vpop.f32.mrb[0].mxu0
        %4640 = vmatprep.mubr.bf16.mxu0 0
        %4641 = vmatmul.mubr.bf16.gmra.mrb[0].mxu0 %v4528
        %v4642 = vpop.f32.mrb[0].mxu0
        %v4643 = vadd.f32 0.0, %v4642
        %v4644 = vpop.f32.mrb[0].mxu0
        %v4645 = vpop.f32.mrb[0].mxu0
        %v4646 = vadd.f32 0.0, %v4645
        %v4647 = vpop.f32.mrb[0].mxu0
        %4648 = vmatprep.mubr.bf16.mxu0 0
        %4649 = vmatmul.mubr.bf16.gmra.mrb[0].mxu0 %v4531
        %v4650 = vpop.f32.mrb[0].mxu0
        %v4651 = vadd.f32 0.0, %v4650
        %v4652 = vpop.f32.mrb[0].mxu0
        %v4653 = vpop.f32.mrb[0].mxu0
        %v4654 = vadd.f32 0.0, %v4653
        %v4655 = vpop.f32.mrb[0].mxu0
        %4656 = vmatprep.mubr.bf16.mxu0 0
        %4657 = vmatmul.mubr.bf16.gmra.mrb[0].mxu0 %v4534
        %v4658 = vpop.f32.mrb[0].mxu0
        %v4659 = vadd.f32 0.0, %v4658
        %v4660 = vpop.f32.mrb[0].mxu0
        %v4661 = vpop.f32.mrb[0].mxu0
        %v4662 = vadd.f32 0.0, %v4661
        %v4663 = vpop.f32.mrb[0].mxu0
        %4664 = vmatprep.mubr.bf16.mxu0 0
        %4665 = vmatmul.mubr.bf16.gmra.mrb[0].mxu0 %v4537
        %v4666 = vpop.f32.mrb[0].mxu0
        %v4667 = vadd.f32 0.0, %v4666
        %v4668 = vpop.f32.mrb[0].mxu0
        %v4669 = vpop.f32.mrb[0].mxu0
        %v4670 = vadd.f32 0.0, %v4669
        %v4671 = vpop.f32.mrb[0].mxu0
        %4672 = vmatprep.mubr.bf16.mxu0 0
        %4673 = vmatmul.mubr.bf16.gmra.mrb[0].mxu0 %v4540
        %v4674 = vpop.f32.mrb[0].mxu0
        %v4675 = vadd.f32 0.0, %v4674
        %v4676 = vpop.f32.mrb[0].mxu0
        %v4677 = vpop.f32.mrb[0].mxu0
        %v4678 = vadd.f32 0.0, %v4677
        %v4679 = vpop.f32.mrb[0].mxu0
        %4680 = vmatprep.mubr.bf16.mxu0 0
        %4681 = vmatmul.mubr.bf16.gmra.mrb[0].mxu0 %v4543
        %v4682 = vpop.f32.mrb[0].mxu0
        %v4683 = vadd.f32 0.0, %v4682
        %v4684 = vpop.f32.mrb[0].mxu0
        %v4685 = vpop.f32.mrb[0].mxu0
        %v4686 = vadd.f32 0.0, %v4685
        %v4687 = vpop.f32.mrb[0].mxu0
        %4688 = vmatprep.mubr.bf16.mxu0 0
        %4689 = vmatmul.mubr.bf16.gmra.mrb[0].mxu0 %v4546
        %v4690 = vpop.f32.mrb[0].mxu0
        %v4691 = vadd.f32 0.0, %v4690
        %v4692 = vpop.f32.mrb[0].mxu0
        %v4693 = vpop.f32.mrb[0].mxu0
        %v4694 = vadd.f32 0.0, %v4693
        %v4695 = vpop.f32.mrb[0].mxu0
        %4696 = vmatprep.mubr.bf16.mxu0 0
        %4697 = vmatmul.mubr.bf16.gmra.mrb[0].mxu0 %v4549
        %v4698 = vpop.f32.mrb[0].mxu0
        %v4699 = vadd.f32 0.0, %v4698
        %v4700 = vpop.f32.mrb[0].mxu0
        %v4701 = vpop.f32.mrb[0].mxu0
        %v4702 = vadd.f32 0.0, %v4701
        %v4703 = vpop.f32.mrb[0].mxu0
        %4704 = vmatprep.mubr.bf16.mxu0 0
        %4705 = vmatmul.mubr.bf16.gmra.mrb[0].mxu0 %v4552
        %v4706 = vpop.f32.mrb[0].mxu0
        %v4707 = vadd.f32 0.0, %v4706
        %v4708 = vpop.f32.mrb[0].mxu0
        %v4709 = vpop.f32.mrb[0].mxu0
        %v4710 = vadd.f32 0.0, %v4709
        %v4711 = vpop.f32.mrb[0].mxu0
        %4712 = vmatprep.mubr.bf16.mxu0 0
        %4713 = vmatmul.mubr.bf16.gmra.mrb[0].mxu0 %v4555
        %v4714 = vpop.f32.mrb[0].mxu0
        %v4715 = vadd.f32 0.0, %v4714
        %v4716 = vpop.f32.mrb[0].mxu0
        %v4717 = vpop.f32.mrb[0].mxu0
        %v4718 = vadd.f32 0.0, %v4717
        %v4719 = vpop.f32.mrb[0].mxu0
        %4720 = vdwg.mxu0
        %v4721 = vadd.f32 %v4251, %v4595
        %v4722 = vadd.f32 %v4252, %v4598
        %v4723 = vadd.f32 %v4253, %v4603
        %v4724 = vadd.f32 %v4254, %v4606
        %v4725 = vadd.f32 %v4255, %v4611
        %v4726 = vadd.f32 %v4256, %v4614
        %v4727 = vadd.f32 %v4257, %v4619
        %v4728 = vadd.f32 %v4258, %v4622
        %v4729 = vadd.f32 %v4259, %v4627
        %v4730 = vadd.f32 %v4260, %v4630
        %v4731 = vadd.f32 %v4261, %v4635
        %v4732 = vadd.f32 %v4262, %v4638
        %v4733 = vadd.f32 %v4263, %v4643
        %v4734 = vadd.f32 %v4264, %v4646
        %v4735 = vadd.f32 %v4265, %v4651
        %v4736 = vadd.f32 %v4266, %v4654
        %v4737 = vadd.f32 %v4267, %v4659
        %v4738 = vadd.f32 %v4268, %v4662
        %v4739 = vadd.f32 %v4269, %v4667
        %v4740 = vadd.f32 %v4270, %v4670
        %v4741 = vadd.f32 %v4271, %v4675
        %v4742 = vadd.f32 %v4272, %v4678
        %v4743 = vadd.f32 %v4273, %v4683
        %v4744 = vadd.f32 %v4274, %v4686
        %v4745 = vadd.f32 %v4275, %v4691
        %v4746 = vadd.f32 %v4276, %v4694
        %v4747 = vadd.f32 %v4277, %v4699
        %v4748 = vadd.f32 %v4278, %v4702
        %v4749 = vadd.f32 %v4279, %v4707
        %v4750 = vadd.f32 %v4280, %v4710
        %v4751 = vadd.f32 %v4281, %v4715
        %v4752 = vadd.f32 %v4282, %v4718
        %s4753 = scalar_lea.vmem [#allocation2], 24
        %v4754 = vld [vmem:[%s4753] sm:$0xf]
        %v4755 = vld [vmem:[%s4753 + $0x4] sm:$0xf]
        %v4756 = vld [vmem:[%s4753 + $0xc] sm:$0xf]
        %v4757 = vld [vmem:[%s4753 + $0x10] sm:$0xf]
        %v4758 = vld [vmem:[%s4753 + $0x18] sm:$0xf]
        %v4759 = vld [vmem:[%s4753 + $0x1c] sm:$0xf]
        %v4760 = vld [vmem:[%s4753 + $0x24] sm:$0xf]
        %v4761 = vld [vmem:[%s4753 + $0x28] sm:$0xf]
        %v4762 = vld [vmem:[%s4753 + $0x30] sm:$0xf]
        %v4763 = vld [vmem:[%s4753 + $0x34] sm:$0xf]
        %v4764 = vld [vmem:[%s4753 + $0x3c] sm:$0xf]
        %v4765 = vld [vmem:[%s4753 + $0x40] sm:$0xf]
        %v4766 = vld [vmem:[%s4753 + $0x48] sm:$0xf]
        %v4767 = vld [vmem:[%s4753 + $0x4c] sm:$0xf]
        %v4768 = vld [vmem:[%s4753 + $0x54] sm:$0xf]
        %v4769 = vld [vmem:[%s4753 + $0x58] sm:$0xf]
        %v4770 = vld [vmem:[%s4753 + $0x60] sm:$0xf]
        %v4771 = vld [vmem:[%s4753 + $0x64] sm:$0xf]
        %v4772 = vld [vmem:[%s4753 + $0x6c] sm:$0xf]
        %v4773 = vld [vmem:[%s4753 + $0x70] sm:$0xf]
        %v4774 = vld [vmem:[%s4753 + $0x78] sm:$0xf]
        %v4775 = vld [vmem:[%s4753 + $0x7c] sm:$0xf]
        %v4776 = vld [vmem:[%s4753 + $0x84] sm:$0xf]
        %v4777 = vld [vmem:[%s4753 + $0x88] sm:$0xf]
        %v4778 = vld [vmem:[%s4753 + $0x90] sm:$0xf]
        %v4779 = vld [vmem:[%s4753 + $0x94] sm:$0xf]
        %v4780 = vld [vmem:[%s4753 + $0x9c] sm:$0xf]
        %v4781 = vld [vmem:[%s4753 + $0xa0] sm:$0xf]
        %v4782 = vld [vmem:[%s4753 + $0xa8] sm:$0xf]
        %v4783 = vld [vmem:[%s4753 + $0xac] sm:$0xf]
        %v4784 = vld [vmem:[%s4753 + $0xb4] sm:$0xf]
        %v4785 = vld [vmem:[%s4753 + $0xb8] sm:$0xf]
        %s4786 = scalar_lea.vmem %s5, 24
        %v4787 = vld [vmem:[%s4786] sm:$0xf]
        %v4820 = vunpack.c.l.b16 %v4754
        %v4821 = vunpack.c.l.b16 %v4755
        %v4822 = vunpack.c.l.b16 %v4756
        %v4823 = vunpack.c.l.b16 %v4757
        %v4824 = vunpack.c.l.b16 %v4758
        %v4825 = vunpack.c.l.b16 %v4759
        %v4826 = vunpack.c.l.b16 %v4760
        %v4827 = vunpack.c.l.b16 %v4761
        %v4828 = vunpack.c.l.b16 %v4762
        %v4829 = vunpack.c.l.b16 %v4763
        %v4830 = vunpack.c.l.b16 %v4764
        %v4831 = vunpack.c.l.b16 %v4765
        %v4832 = vunpack.c.l.b16 %v4766
        %v4833 = vunpack.c.l.b16 %v4767
        %v4834 = vunpack.c.l.b16 %v4768
        %v4835 = vunpack.c.l.b16 %v4769
        %v4836 = vunpack.c.l.b16 %v4770
        %v4837 = vunpack.c.l.b16 %v4771
        %v4838 = vunpack.c.l.b16 %v4772
        %v4839 = vunpack.c.l.b16 %v4773
        %v4840 = vunpack.c.l.b16 %v4774
        %v4841 = vunpack.c.l.b16 %v4775
        %v4842 = vunpack.c.l.b16 %v4776
        %v4843 = vunpack.c.l.b16 %v4777
        %v4844 = vunpack.c.l.b16 %v4778
        %v4845 = vunpack.c.l.b16 %v4779
        %v4846 = vunpack.c.l.b16 %v4780
        %v4847 = vunpack.c.l.b16 %v4781
        %v4848 = vunpack.c.l.b16 %v4782
        %v4849 = vunpack.c.l.b16 %v4783
        %v4850 = vunpack.c.l.b16 %v4784
        %v4851 = vunpack.c.l.b16 %v4785
        %v4852 = vpack.c.b16 %v4821, %v4820
        %v4853 = vpack.c.b16 %v4823, %v4822
        %v4854 = vpack.c.b16 %v4825, %v4824
        %v4855 = vpack.c.b16 %v4827, %v4826
        %v4856 = vpack.c.b16 %v4829, %v4828
        %v4857 = vpack.c.b16 %v4831, %v4830
        %v4858 = vpack.c.b16 %v4833, %v4832
        %v4859 = vpack.c.b16 %v4835, %v4834
        %v4860 = vpack.c.b16 %v4837, %v4836
        %v4861 = vpack.c.b16 %v4839, %v4838
        %v4862 = vpack.c.b16 %v4841, %v4840
        %v4863 = vpack.c.b16 %v4843, %v4842
        %v4864 = vpack.c.b16 %v4845, %v4844
        %v4865 = vpack.c.b16 %v4847, %v4846
        %v4866 = vpack.c.b16 %v4849, %v4848
        %v4867 = vpack.c.b16 %v4851, %v4850
        %v4869 = vsel %vm2236, %v4852, 0
        %v4872 = vsel %vm2236, %v4853, 0
        %v4875 = vsel %vm2236, %v4854, 0
        %v4878 = vsel %vm2236, %v4855, 0
        %v4881 = vsel %vm2236, %v4856, 0
        %v4884 = vsel %vm2236, %v4857, 0
        %v4887 = vsel %vm2236, %v4858, 0
        %v4890 = vsel %vm2236, %v4859, 0
        %v4893 = vsel %vm2236, %v4860, 0
        %v4896 = vsel %vm2236, %v4861, 0
        %v4899 = vsel %vm2236, %v4862, 0
        %v4902 = vsel %vm2236, %v4863, 0
        %v4905 = vsel %vm2236, %v4864, 0
        %v4908 = vsel %vm2236, %v4865, 0
        %v4911 = vsel %vm2236, %v4866, 0
        %v4914 = vsel %vm2236, %v4867, 0
        %v4917 = vsel %vm2285, %v4787, 0
        %4919 = vmatprep.subr.bf16.mxu0 0
        %4920 = vmatpush1.bf16.msra.mxu0 %v4917
        %4921 = vmatprep.subr.bf16.mxu0 0
        %4922 = vmatpush1.bf16.msra.mxu0 0
        %4923 = vmatprep.subr.bf16.mxu0 0
        %4924 = vmatpush1.bf16.msra.mxu0 0
        %4925 = vmatprep.subr.bf16.mxu0 0
        %4926 = vmatpush1.bf16.msra.mxu0 0
        %4927 = vmatprep.subr.bf16.mxu0 0
        %4928 = vmatpush1.bf16.msra.mxu0 0
        %4929 = vmatprep.subr.bf16.mxu0 0
        %4930 = vmatpush1.bf16.msra.mxu0 0
        %4931 = vmatprep.subr.bf16.mxu0 0
        %4932 = vmatpush1.bf16.msra.mxu0 0
        %4933 = vmatprep.subr.bf16.mxu0 0
        %4934 = vmatpush1.bf16.msra.mxu0 0
        %4935 = vmatprep.subr.bf16.mxu0 0
        %4936 = vmatpush1.bf16.msra.mxu0 0
        %4937 = vmatprep.subr.bf16.mxu0 0
        %4938 = vmatpush1.bf16.msra.mxu0 0
        %4939 = vmatprep.subr.bf16.mxu0 0
        %4940 = vmatpush1.bf16.msra.mxu0 0
        %4941 = vmatprep.subr.bf16.mxu0 0
        %4942 = vmatpush1.bf16.msra.mxu0 0
        %4943 = vmatprep.subr.bf16.mxu0 0
        %4944 = vmatpush1.bf16.msra.mxu0 0
        %4945 = vmatprep.subr.bf16.mxu0 0
        %4946 = vmatpush1.bf16.msra.mxu0 0
        %4947 = vmatprep.subr.bf16.mxu0 0
        %4948 = vmatpush1.bf16.msra.mxu0 0
        %4949 = vmatprep.subr.bf16.mxu0 0
        %4950 = vmatpush1.bf16.msra.mxu0 0
        %4951 = vmatprep.mubr.bf16.mxu0 0
        %4952 = vmatmul.mubr.bf16.gmra.mrb[0].mxu0 %v4869
        %v4953 = vpop.f32.mrb[0].mxu0
        %v4954 = vadd.f32 0.0, %v4953
        %v4955 = vpop.f32.mrb[0].mxu0
        %v4956 = vpop.f32.mrb[0].mxu0
        %v4957 = vadd.f32 0.0, %v4956
        %v4958 = vpop.f32.mrb[0].mxu0
        %4959 = vmatprep.mubr.bf16.mxu0 0
        %4960 = vmatmul.mubr.bf16.gmra.mrb[0].mxu0 %v4872
        %v4961 = vpop.f32.mrb[0].mxu0
        %v4962 = vadd.f32 0.0, %v4961
        %v4963 = vpop.f32.mrb[0].mxu0
        %v4964 = vpop.f32.mrb[0].mxu0
        %v4965 = vadd.f32 0.0, %v4964
        %v4966 = vpop.f32.mrb[0].mxu0
        %4967 = vmatprep.mubr.bf16.mxu0 0
        %4968 = vmatmul.mubr.bf16.gmra.mrb[0].mxu0 %v4875
        %v4969 = vpop.f32.mrb[0].mxu0
        %v4970 = vadd.f32 0.0, %v4969
        %v4971 = vpop.f32.mrb[0].mxu0
        %v4972 = vpop.f32.mrb[0].mxu0
        %v4973 = vadd.f32 0.0, %v4972
        %v4974 = vpop.f32.mrb[0].mxu0
        %4975 = vmatprep.mubr.bf16.mxu0 0
        %4976 = vmatmul.mubr.bf16.gmra.mrb[0].mxu0 %v4878
        %v4977 = vpop.f32.mrb[0].mxu0
        %v4978 = vadd.f32 0.0, %v4977
        %v4979 = vpop.f32.mrb[0].mxu0
        %v4980 = vpop.f32.mrb[0].mxu0
        %v4981 = vadd.f32 0.0, %v4980
        %v4982 = vpop.f32.mrb[0].mxu0
        %4983 = vmatprep.mubr.bf16.mxu0 0
        %4984 = vmatmul.mubr.bf16.gmra.mrb[0].mxu0 %v4881
        %v4985 = vpop.f32.mrb[0].mxu0
        %v4986 = vadd.f32 0.0, %v4985
        %v4987 = vpop.f32.mrb[0].mxu0
        %v4988 = vpop.f32.mrb[0].mxu0
        %v4989 = vadd.f32 0.0, %v4988
        %v4990 = vpop.f32.mrb[0].mxu0
        %4991 = vmatprep.mubr.bf16.mxu0 0
        %4992 = vmatmul.mubr.bf16.gmra.mrb[0].mxu0 %v4884
        %v4993 = vpop.f32.mrb[0].mxu0
        %v4994 = vadd.f32 0.0, %v4993
        %v4995 = vpop.f32.mrb[0].mxu0
        %v4996 = vpop.f32.mrb[0].mxu0
        %v4997 = vadd.f32 0.0, %v4996
        %v4998 = vpop.f32.mrb[0].mxu0
        %4999 = vmatprep.mubr.bf16.mxu0 0
        %5000 = vmatmul.mubr.bf16.gmra.mrb[0].mxu0 %v4887
        %v5001 = vpop.f32.mrb[0].mxu0
        %v5002 = vadd.f32 0.0, %v5001
        %v5003 = vpop.f32.mrb[0].mxu0
        %v5004 = vpop.f32.mrb[0].mxu0
        %v5005 = vadd.f32 0.0, %v5004
        %v5006 = vpop.f32.mrb[0].mxu0
        %5007 = vmatprep.mubr.bf16.mxu0 0
        %5008 = vmatmul.mubr.bf16.gmra.mrb[0].mxu0 %v4890
        %v5009 = vpop.f32.mrb[0].mxu0
        %v5010 = vadd.f32 0.0, %v5009
        %v5011 = vpop.f32.mrb[0].mxu0
        %v5012 = vpop.f32.mrb[0].mxu0
        %v5013 = vadd.f32 0.0, %v5012
        %v5014 = vpop.f32.mrb[0].mxu0
        %5015 = vmatprep.mubr.bf16.mxu0 0
        %5016 = vmatmul.mubr.bf16.gmra.mrb[0].mxu0 %v4893
        %v5017 = vpop.f32.mrb[0].mxu0
        %v5018 = vadd.f32 0.0, %v5017
        %v5019 = vpop.f32.mrb[0].mxu0
        %v5020 = vpop.f32.mrb[0].mxu0
        %v5021 = vadd.f32 0.0, %v5020
        %v5022 = vpop.f32.mrb[0].mxu0
        %5023 = vmatprep.mubr.bf16.mxu0 0
        %5024 = vmatmul.mubr.bf16.gmra.mrb[0].mxu0 %v4896
        %v5025 = vpop.f32.mrb[0].mxu0
        %v5026 = vadd.f32 0.0, %v5025
        %v5027 = vpop.f32.mrb[0].mxu0
        %v5028 = vpop.f32.mrb[0].mxu0
        %v5029 = vadd.f32 0.0, %v5028
        %v5030 = vpop.f32.mrb[0].mxu0
        %5031 = vmatprep.mubr.bf16.mxu0 0
        %5032 = vmatmul.mubr.bf16.gmra.mrb[0].mxu0 %v4899
        %v5033 = vpop.f32.mrb[0].mxu0
        %v5034 = vadd.f32 0.0, %v5033
        %v5035 = vpop.f32.mrb[0].mxu0
        %v5036 = vpop.f32.mrb[0].mxu0
        %v5037 = vadd.f32 0.0, %v5036
        %v5038 = vpop.f32.mrb[0].mxu0
        %5039 = vmatprep.mubr.bf16.mxu0 0
        %5040 = vmatmul.mubr.bf16.gmra.mrb[0].mxu0 %v4902
        %v5041 = vpop.f32.mrb[0].mxu0
        %v5042 = vadd.f32 0.0, %v5041
        %v5043 = vpop.f32.mrb[0].mxu0
        %v5044 = vpop.f32.mrb[0].mxu0
        %v5045 = vadd.f32 0.0, %v5044
        %v5046 = vpop.f32.mrb[0].mxu0
        %5047 = vmatprep.mubr.bf16.mxu0 0
        %5048 = vmatmul.mubr.bf16.gmra.mrb[0].mxu0 %v4905
        %v5049 = vpop.f32.mrb[0].mxu0
        %v5050 = vadd.f32 0.0, %v5049
        %v5051 = vpop.f32.mrb[0].mxu0
        %v5052 = vpop.f32.mrb[0].mxu0
        %v5053 = vadd.f32 0.0, %v5052
        %v5054 = vpop.f32.mrb[0].mxu0
        %5055 = vmatprep.mubr.bf16.mxu0 0
        %5056 = vmatmul.mubr.bf16.gmra.mrb[0].mxu0 %v4908
        %v5057 = vpop.f32.mrb[0].mxu0
        %v5058 = vadd.f32 0.0, %v5057
        %v5059 = vpop.f32.mrb[0].mxu0
        %v5060 = vpop.f32.mrb[0].mxu0
        %v5061 = vadd.f32 0.0, %v5060
        %v5062 = vpop.f32.mrb[0].mxu0
        %5063 = vmatprep.mubr.bf16.mxu0 0
        %5064 = vmatmul.mubr.bf16.gmra.mrb[0].mxu0 %v4911
        %v5065 = vpop.f32.mrb[0].mxu0
        %v5066 = vadd.f32 0.0, %v5065
        %v5067 = vpop.f32.mrb[0].mxu0
        %v5068 = vpop.f32.mrb[0].mxu0
        %v5069 = vadd.f32 0.0, %v5068
        %v5070 = vpop.f32.mrb[0].mxu0
        %5071 = vmatprep.mubr.bf16.mxu0 0
        %5072 = vmatmul.mubr.bf16.gmra.mrb[0].mxu0 %v4914
        %v5073 = vpop.f32.mrb[0].mxu0
        %v5074 = vadd.f32 0.0, %v5073
        %v5075 = vpop.f32.mrb[0].mxu0
        %v5076 = vpop.f32.mrb[0].mxu0
        %v5077 = vadd.f32 0.0, %v5076
        %v5078 = vpop.f32.mrb[0].mxu0
        %5079 = vdwg.mxu0
        %v5080 = vadd.f32 %v4721, %v4954
        %v5081 = vadd.f32 %v4722, %v4957
        %v5082 = vadd.f32 %v4723, %v4962
        %v5083 = vadd.f32 %v4724, %v4965
        %v5084 = vadd.f32 %v4725, %v4970
        %v5085 = vadd.f32 %v4726, %v4973
        %v5086 = vadd.f32 %v4727, %v4978
        %v5087 = vadd.f32 %v4728, %v4981
        %v5088 = vadd.f32 %v4729, %v4986
        %v5089 = vadd.f32 %v4730, %v4989
        %v5090 = vadd.f32 %v4731, %v4994
        %v5091 = vadd.f32 %v4732, %v4997
        %v5092 = vadd.f32 %v4733, %v5002
        %v5093 = vadd.f32 %v4734, %v5005
        %v5094 = vadd.f32 %v4735, %v5010
        %v5095 = vadd.f32 %v4736, %v5013
        %v5096 = vadd.f32 %v4737, %v5018
        %v5097 = vadd.f32 %v4738, %v5021
        %v5098 = vadd.f32 %v4739, %v5026
        %v5099 = vadd.f32 %v4740, %v5029
        %v5100 = vadd.f32 %v4741, %v5034
        %v5101 = vadd.f32 %v4742, %v5037
        %v5102 = vadd.f32 %v4743, %v5042
        %v5103 = vadd.f32 %v4744, %v5045
        %v5104 = vadd.f32 %v4745, %v5050
        %v5105 = vadd.f32 %v4746, %v5053
        %v5106 = vadd.f32 %v4747, %v5058
        %v5107 = vadd.f32 %v4748, %v5061
        %v5108 = vadd.f32 %v4749, %v5066
        %v5109 = vadd.f32 %v4750, %v5069
        %v5110 = vadd.f32 %v4751, %v5074
        %v5111 = vadd.f32 %v4752, %v5077
        %v5112 = vld [vmem:[%s4753] sm:$0xf]
        %v5113 = vld [vmem:[%s4753 + $0x4] sm:$0xf]
        %v5114 = vld [vmem:[%s4753 + $0x8] sm:$0x1]
        %v5115 = vld [vmem:[%s4753 + $0xc] sm:$0xf]
        %v5116 = vld [vmem:[%s4753 + $0x10] sm:$0xf]
        %v5117 = vld [vmem:[%s4753 + $0x14] sm:$0x1]
        %v5118 = vld [vmem:[%s4753 + $0x18] sm:$0xf]
        %v5119 = vld [vmem:[%s4753 + $0x1c] sm:$0xf]
        %v5120 = vld [vmem:[%s4753 + $0x20] sm:$0x1]
        %v5121 = vld [vmem:[%s4753 + $0x24] sm:$0xf]
        %v5122 = vld [vmem:[%s4753 + $0x28] sm:$0xf]
        %v5123 = vld [vmem:[%s4753 + $0x2c] sm:$0x1]
        %v5124 = vld [vmem:[%s4753 + $0x30] sm:$0xf]
        %v5125 = vld [vmem:[%s4753 + $0x34] sm:$0xf]
        %v5126 = vld [vmem:[%s4753 + $0x38] sm:$0x1]
        %v5127 = vld [vmem:[%s4753 + $0x3c] sm:$0xf]
        %v5128 = vld [vmem:[%s4753 + $0x40] sm:$0xf]
        %v5129 = vld [vmem:[%s4753 + $0x44] sm:$0x1]
        %v5130 = vld [vmem:[%s4753 + $0x48] sm:$0xf]
        %v5131 = vld [vmem:[%s4753 + $0x4c] sm:$0xf]
        %v5132 = vld [vmem:[%s4753 + $0x50] sm:$0x1]
        %v5133 = vld [vmem:[%s4753 + $0x54] sm:$0xf]
        %v5134 = vld [vmem:[%s4753 + $0x58] sm:$0xf]
        %v5135 = vld [vmem:[%s4753 + $0x5c] sm:$0x1]
        %v5136 = vld [vmem:[%s4753 + $0x60] sm:$0xf]
        %v5137 = vld [vmem:[%s4753 + $0x64] sm:$0xf]
        %v5138 = vld [vmem:[%s4753 + $0x68] sm:$0x1]
        %v5139 = vld [vmem:[%s4753 + $0x6c] sm:$0xf]
        %v5140 = vld [vmem:[%s4753 + $0x70] sm:$0xf]
        %v5141 = vld [vmem:[%s4753 + $0x74] sm:$0x1]
        %v5142 = vld [vmem:[%s4753 + $0x78] sm:$0xf]
        %v5143 = vld [vmem:[%s4753 + $0x7c] sm:$0xf]
        %v5144 = vld [vmem:[%s4753 + $0x80] sm:$0x1]
        %v5145 = vld [vmem:[%s4753 + $0x84] sm:$0xf]
        %v5146 = vld [vmem:[%s4753 + $0x88] sm:$0xf]
        %v5147 = vld [vmem:[%s4753 + $0x8c] sm:$0x1]
        %v5148 = vld [vmem:[%s4753 + $0x90] sm:$0xf]
        %v5149 = vld [vmem:[%s4753 + $0x94] sm:$0xf]
        %v5150 = vld [vmem:[%s4753 + $0x98] sm:$0x1]
        %v5151 = vld [vmem:[%s4753 + $0x9c] sm:$0xf]
        %v5152 = vld [vmem:[%s4753 + $0xa0] sm:$0xf]
        %v5153 = vld [vmem:[%s4753 + $0xa4] sm:$0x1]
        %v5154 = vld [vmem:[%s4753 + $0xa8] sm:$0xf]
        %v5155 = vld [vmem:[%s4753 + $0xac] sm:$0xf]
        %v5156 = vld [vmem:[%s4753 + $0xb0] sm:$0x1]
        %v5157 = vld [vmem:[%s4753 + $0xb4] sm:$0xf]
        %v5158 = vld [vmem:[%s4753 + $0xb8] sm:$0xf]
        %v5159 = vld [vmem:[%s4753 + $0xbc] sm:$0x1]
        %v5161 = vshrl.u32 %v5112, 16
        %v5163 = vrot.slane %v5161, 4
        %v5164 = vshll.u32 %v5112, 16
        %v5166 = vrot.slane %v5164, 5
        %v5167 = vor.u32 %v5163, %v5166
        %v5168 = vrot.slane %v5167, 4
        %v5170 = vshll.u32 %v5113, 16
        %v5172 = vrot.slane %v5170, 5
        %v5173 = vsel %vm1801, %v5168, %v5172
        %v5174 = vshrl.u32 %v5113, 16
        %v5176 = vrot.slane %v5174, 4
        %v5177 = vor.u32 %v5176, %v5172
        %v5178 = vrot.slane %v5177, 4
        %v5180 = vshll.u32 %v5114, 16
        %v5182 = vrot.slane %v5180, 5
        %v5183 = vsel %vm1801, %v5178, %v5182
        %v5185 = vshrl.u32 %v5115, 16
        %v5187 = vrot.slane %v5185, 4
        %v5188 = vshll.u32 %v5115, 16
        %v5190 = vrot.slane %v5188, 5
        %v5191 = vor.u32 %v5187, %v5190
        %v5192 = vrot.slane %v5191, 4
        %v5194 = vshll.u32 %v5116, 16
        %v5196 = vrot.slane %v5194, 5
        %v5197 = vsel %vm1801, %v5192, %v5196
        %v5198 = vshrl.u32 %v5116, 16
        %v5200 = vrot.slane %v5198, 4
        %v5201 = vor.u32 %v5200, %v5196
        %v5202 = vrot.slane %v5201, 4
        %v5204 = vshll.u32 %v5117, 16
        %v5206 = vrot.slane %v5204, 5
        %v5207 = vsel %vm1801, %v5202, %v5206
        %v5209 = vshrl.u32 %v5118, 16
        %v5211 = vrot.slane %v5209, 4
        %v5212 = vshll.u32 %v5118, 16
        %v5214 = vrot.slane %v5212, 5
        %v5215 = vor.u32 %v5211, %v5214
        %v5216 = vrot.slane %v5215, 4
        %v5218 = vshll.u32 %v5119, 16
        %v5220 = vrot.slane %v5218, 5
        %v5221 = vsel %vm1801, %v5216, %v5220
        %v5222 = vshrl.u32 %v5119, 16
        %v5224 = vrot.slane %v5222, 4
        %v5225 = vor.u32 %v5224, %v5220
        %v5226 = vrot.slane %v5225, 4
        %v5228 = vshll.u32 %v5120, 16
        %v5230 = vrot.slane %v5228, 5
        %v5231 = vsel %vm1801, %v5226, %v5230
        %v5233 = vshrl.u32 %v5121, 16
        %v5235 = vrot.slane %v5233, 4
        %v5236 = vshll.u32 %v5121, 16
        %v5238 = vrot.slane %v5236, 5
        %v5239 = vor.u32 %v5235, %v5238
        %v5240 = vrot.slane %v5239, 4
        %v5242 = vshll.u32 %v5122, 16
        %v5244 = vrot.slane %v5242, 5
        %v5245 = vsel %vm1801, %v5240, %v5244
        %v5246 = vshrl.u32 %v5122, 16
        %v5248 = vrot.slane %v5246, 4
        %v5249 = vor.u32 %v5248, %v5244
        %v5250 = vrot.slane %v5249, 4
        %v5252 = vshll.u32 %v5123, 16
        %v5254 = vrot.slane %v5252, 5
        %v5255 = vsel %vm1801, %v5250, %v5254
        %v5257 = vshrl.u32 %v5124, 16
        %v5259 = vrot.slane %v5257, 4
        %v5260 = vshll.u32 %v5124, 16
        %v5262 = vrot.slane %v5260, 5
        %v5263 = vor.u32 %v5259, %v5262
        %v5264 = vrot.slane %v5263, 4
        %v5266 = vshll.u32 %v5125, 16
        %v5268 = vrot.slane %v5266, 5
        %v5269 = vsel %vm1801, %v5264, %v5268
        %v5270 = vshrl.u32 %v5125, 16
        %v5272 = vrot.slane %v5270, 4
        %v5273 = vor.u32 %v5272, %v5268
        %v5274 = vrot.slane %v5273, 4
        %v5276 = vshll.u32 %v5126, 16
        %v5278 = vrot.slane %v5276, 5
        %v5279 = vsel %vm1801, %v5274, %v5278
        %v5281 = vshrl.u32 %v5127, 16
        %v5283 = vrot.slane %v5281, 4
        %v5284 = vshll.u32 %v5127, 16
        %v5286 = vrot.slane %v5284, 5
        %v5287 = vor.u32 %v5283, %v5286
        %v5288 = vrot.slane %v5287, 4
        %v5290 = vshll.u32 %v5128, 16
        %v5292 = vrot.slane %v5290, 5
        %v5293 = vsel %vm1801, %v5288, %v5292
        %v5294 = vshrl.u32 %v5128, 16
        %v5296 = vrot.slane %v5294, 4
        %v5297 = vor.u32 %v5296, %v5292
        %v5298 = vrot.slane %v5297, 4
        %v5300 = vshll.u32 %v5129, 16
        %v5302 = vrot.slane %v5300, 5
        %v5303 = vsel %vm1801, %v5298, %v5302
        %v5305 = vshrl.u32 %v5130, 16
        %v5307 = vrot.slane %v5305, 4
        %v5308 = vshll.u32 %v5130, 16
        %v5310 = vrot.slane %v5308, 5
        %v5311 = vor.u32 %v5307, %v5310
        %v5312 = vrot.slane %v5311, 4
        %v5314 = vshll.u32 %v5131, 16
        %v5316 = vrot.slane %v5314, 5
        %v5317 = vsel %vm1801, %v5312, %v5316
        %v5318 = vshrl.u32 %v5131, 16
        %v5320 = vrot.slane %v5318, 4
        %v5321 = vor.u32 %v5320, %v5316
        %v5322 = vrot.slane %v5321, 4
        %v5324 = vshll.u32 %v5132, 16
        %v5326 = vrot.slane %v5324, 5
        %v5327 = vsel %vm1801, %v5322, %v5326
        %v5329 = vshrl.u32 %v5133, 16
        %v5331 = vrot.slane %v5329, 4
        %v5332 = vshll.u32 %v5133, 16
        %v5334 = vrot.slane %v5332, 5
        %v5335 = vor.u32 %v5331, %v5334
        %v5336 = vrot.slane %v5335, 4
        %v5338 = vshll.u32 %v5134, 16
        %v5340 = vrot.slane %v5338, 5
        %v5341 = vsel %vm1801, %v5336, %v5340
        %v5342 = vshrl.u32 %v5134, 16
        %v5344 = vrot.slane %v5342, 4
        %v5345 = vor.u32 %v5344, %v5340
        %v5346 = vrot.slane %v5345, 4
        %v5348 = vshll.u32 %v5135, 16
        %v5350 = vrot.slane %v5348, 5
        %v5351 = vsel %vm1801, %v5346, %v5350
        %v5353 = vshrl.u32 %v5136, 16
        %v5355 = vrot.slane %v5353, 4
        %v5356 = vshll.u32 %v5136, 16
        %v5358 = vrot.slane %v5356, 5
        %v5359 = vor.u32 %v5355, %v5358
        %v5360 = vrot.slane %v5359, 4
        %v5362 = vshll.u32 %v5137, 16
        %v5364 = vrot.slane %v5362, 5
        %v5365 = vsel %vm1801, %v5360, %v5364
        %v5366 = vshrl.u32 %v5137, 16
        %v5368 = vrot.slane %v5366, 4
        %v5369 = vor.u32 %v5368, %v5364
        %v5370 = vrot.slane %v5369, 4
        %v5372 = vshll.u32 %v5138, 16
        %v5374 = vrot.slane %v5372, 5
        %v5375 = vsel %vm1801, %v5370, %v5374
        %v5377 = vshrl.u32 %v5139, 16
        %v5379 = vrot.slane %v5377, 4
        %v5380 = vshll.u32 %v5139, 16
        %v5382 = vrot.slane %v5380, 5
        %v5383 = vor.u32 %v5379, %v5382
        %v5384 = vrot.slane %v5383, 4
        %v5386 = vshll.u32 %v5140, 16
        %v5388 = vrot.slane %v5386, 5
        %v5389 = vsel %vm1801, %v5384, %v5388
        %v5390 = vshrl.u32 %v5140, 16
        %v5392 = vrot.slane %v5390, 4
        %v5393 = vor.u32 %v5392, %v5388
        %v5394 = vrot.slane %v5393, 4
        %v5396 = vshll.u32 %v5141, 16
        %v5398 = vrot.slane %v5396, 5
        %v5399 = vsel %vm1801, %v5394, %v5398
        %v5401 = vshrl.u32 %v5142, 16
        %v5403 = vrot.slane %v5401, 4
        %v5404 = vshll.u32 %v5142, 16
        %v5406 = vrot.slane %v5404, 5
        %v5407 = vor.u32 %v5403, %v5406
        %v5408 = vrot.slane %v5407, 4
        %v5410 = vshll.u32 %v5143, 16
        %v5412 = vrot.slane %v5410, 5
        %v5413 = vsel %vm1801, %v5408, %v5412
        %v5414 = vshrl.u32 %v5143, 16
        %v5416 = vrot.slane %v5414, 4
        %v5417 = vor.u32 %v5416, %v5412
        %v5418 = vrot.slane %v5417, 4
        %v5420 = vshll.u32 %v5144, 16
        %v5422 = vrot.slane %v5420, 5
        %v5423 = vsel %vm1801, %v5418, %v5422
        %v5425 = vshrl.u32 %v5145, 16
        %v5427 = vrot.slane %v5425, 4
        %v5428 = vshll.u32 %v5145, 16
        %v5430 = vrot.slane %v5428, 5
        %v5431 = vor.u32 %v5427, %v5430
        %v5432 = vrot.slane %v5431, 4
        %v5434 = vshll.u32 %v5146, 16
        %v5436 = vrot.slane %v5434, 5
        %v5437 = vsel %vm1801, %v5432, %v5436
        %v5438 = vshrl.u32 %v5146, 16
        %v5440 = vrot.slane %v5438, 4
        %v5441 = vor.u32 %v5440, %v5436
        %v5442 = vrot.slane %v5441, 4
        %v5444 = vshll.u32 %v5147, 16
        %v5446 = vrot.slane %v5444, 5
        %v5447 = vsel %vm1801, %v5442, %v5446
        %v5449 = vshrl.u32 %v5148, 16
        %v5451 = vrot.slane %v5449, 4
        %v5452 = vshll.u32 %v5148, 16
        %v5454 = vrot.slane %v5452, 5
        %v5455 = vor.u32 %v5451, %v5454
        %v5456 = vrot.slane %v5455, 4
        %v5458 = vshll.u32 %v5149, 16
        %v5460 = vrot.slane %v5458, 5
        %v5461 = vsel %vm1801, %v5456, %v5460
        %v5462 = vshrl.u32 %v5149, 16
        %v5464 = vrot.slane %v5462, 4
        %v5465 = vor.u32 %v5464, %v5460
        %v5466 = vrot.slane %v5465, 4
        %v5468 = vshll.u32 %v5150, 16
        %v5470 = vrot.slane %v5468, 5
        %v5471 = vsel %vm1801, %v5466, %v5470
        %v5473 = vshrl.u32 %v5151, 16
        %v5475 = vrot.slane %v5473, 4
        %v5476 = vshll.u32 %v5151, 16
        %v5478 = vrot.slane %v5476, 5
        %v5479 = vor.u32 %v5475, %v5478
        %v5480 = vrot.slane %v5479, 4
        %v5482 = vshll.u32 %v5152, 16
        %v5484 = vrot.slane %v5482, 5
        %v5485 = vsel %vm1801, %v5480, %v5484
        %v5486 = vshrl.u32 %v5152, 16
        %v5488 = vrot.slane %v5486, 4
        %v5489 = vor.u32 %v5488, %v5484
        %v5490 = vrot.slane %v5489, 4
        %v5492 = vshll.u32 %v5153, 16
        %v5494 = vrot.slane %v5492, 5
        %v5495 = vsel %vm1801, %v5490, %v5494
        %v5497 = vshrl.u32 %v5154, 16
        %v5499 = vrot.slane %v5497, 4
        %v5500 = vshll.u32 %v5154, 16
        %v5502 = vrot.slane %v5500, 5
        %v5503 = vor.u32 %v5499, %v5502
        %v5504 = vrot.slane %v5503, 4
        %v5506 = vshll.u32 %v5155, 16
        %v5508 = vrot.slane %v5506, 5
        %v5509 = vsel %vm1801, %v5504, %v5508
        %v5510 = vshrl.u32 %v5155, 16
        %v5512 = vrot.slane %v5510, 4
        %v5513 = vor.u32 %v5512, %v5508
        %v5514 = vrot.slane %v5513, 4
        %v5516 = vshll.u32 %v5156, 16
        %v5518 = vrot.slane %v5516, 5
        %v5519 = vsel %vm1801, %v5514, %v5518
        %v5521 = vshrl.u32 %v5157, 16
        %v5523 = vrot.slane %v5521, 4
        %v5524 = vshll.u32 %v5157, 16
        %v5526 = vrot.slane %v5524, 5
        %v5527 = vor.u32 %v5523, %v5526
        %v5528 = vrot.slane %v5527, 4
        %v5530 = vshll.u32 %v5158, 16
        %v5532 = vrot.slane %v5530, 5
        %v5533 = vsel %vm1801, %v5528, %v5532
        %v5534 = vshrl.u32 %v5158, 16
        %v5536 = vrot.slane %v5534, 4
        %v5537 = vor.u32 %v5536, %v5532
        %v5538 = vrot.slane %v5537, 4
        %v5540 = vshll.u32 %v5159, 16
        %v5542 = vrot.slane %v5540, 5
        %v5543 = vsel %vm1801, %v5538, %v5542
        %s5544 = scalar_lea.vmem %s5, 28
        %v5545 = vld [vmem:[%s5544] sm:$0xf]
        %v5546 = vunpack.c.l.b16 %v5173
        %v5547 = vunpack.c.l.b16 %v5183
        %v5548 = vunpack.c.l.b16 %v5197
        %v5549 = vunpack.c.l.b16 %v5207
        %v5550 = vunpack.c.l.b16 %v5221
        %v5551 = vunpack.c.l.b16 %v5231
        %v5552 = vunpack.c.l.b16 %v5245
        %v5553 = vunpack.c.l.b16 %v5255
        %v5554 = vunpack.c.l.b16 %v5269
        %v5555 = vunpack.c.l.b16 %v5279
        %v5556 = vunpack.c.l.b16 %v5293
        %v5557 = vunpack.c.l.b16 %v5303
        %v5558 = vunpack.c.l.b16 %v5317
        %v5559 = vunpack.c.l.b16 %v5327
        %v5560 = vunpack.c.l.b16 %v5341
        %v5561 = vunpack.c.l.b16 %v5351
        %v5562 = vunpack.c.l.b16 %v5365
        %v5563 = vunpack.c.l.b16 %v5375
        %v5564 = vunpack.c.l.b16 %v5389
        %v5565 = vunpack.c.l.b16 %v5399
        %v5566 = vunpack.c.l.b16 %v5413
        %v5567 = vunpack.c.l.b16 %v5423
        %v5568 = vunpack.c.l.b16 %v5437
        %v5569 = vunpack.c.l.b16 %v5447
        %v5570 = vunpack.c.l.b16 %v5461
        %v5571 = vunpack.c.l.b16 %v5471
        %v5572 = vunpack.c.l.b16 %v5485
        %v5573 = vunpack.c.l.b16 %v5495
        %v5574 = vunpack.c.l.b16 %v5509
        %v5575 = vunpack.c.l.b16 %v5519
        %v5576 = vunpack.c.l.b16 %v5533
        %v5577 = vunpack.c.l.b16 %v5543
        %v5578 = vpack.c.b16 %v5547, %v5546
        %v5579 = vpack.c.b16 %v5549, %v5548
        %v5580 = vpack.c.b16 %v5551, %v5550
        %v5581 = vpack.c.b16 %v5553, %v5552
        %v5582 = vpack.c.b16 %v5555, %v5554
        %v5583 = vpack.c.b16 %v5557, %v5556
        %v5584 = vpack.c.b16 %v5559, %v5558
        %v5585 = vpack.c.b16 %v5561, %v5560
        %v5586 = vpack.c.b16 %v5563, %v5562
        %v5587 = vpack.c.b16 %v5565, %v5564
        %v5588 = vpack.c.b16 %v5567, %v5566
        %v5589 = vpack.c.b16 %v5569, %v5568
        %v5590 = vpack.c.b16 %v5571, %v5570
        %v5591 = vpack.c.b16 %v5573, %v5572
        %v5592 = vpack.c.b16 %v5575, %v5574
        %v5593 = vpack.c.b16 %v5577, %v5576
        %v5595 = vsel %vm2236, %v5578, 0
        %v5598 = vsel %vm2236, %v5579, 0
        %v5601 = vsel %vm2236, %v5580, 0
        %v5604 = vsel %vm2236, %v5581, 0
        %v5607 = vsel %vm2236, %v5582, 0
        %v5610 = vsel %vm2236, %v5583, 0
        %v5613 = vsel %vm2236, %v5584, 0
        %v5616 = vsel %vm2236, %v5585, 0
        %v5619 = vsel %vm2236, %v5586, 0
        %v5622 = vsel %vm2236, %v5587, 0
        %v5625 = vsel %vm2236, %v5588, 0
        %v5628 = vsel %vm2236, %v5589, 0
        %v5631 = vsel %vm2236, %v5590, 0
        %v5634 = vsel %vm2236, %v5591, 0
        %v5637 = vsel %vm2236, %v5592, 0
        %v5640 = vsel %vm2236, %v5593, 0
        %v5643 = vsel %vm2285, %v5545, 0
        %5645 = vmatprep.subr.bf16.mxu0 0
        %5646 = vmatpush1.bf16.msra.mxu0 %v5643
        %5647 = vmatprep.subr.bf16.mxu0 0
        %5648 = vmatpush1.bf16.msra.mxu0 0
        %5649 = vmatprep.subr.bf16.mxu0 0
        %5650 = vmatpush1.bf16.msra.mxu0 0
        %5651 = vmatprep.subr.bf16.mxu0 0
        %5652 = vmatpush1.bf16.msra.mxu0 0
        %5653 = vmatprep.subr.bf16.mxu0 0
        %5654 = vmatpush1.bf16.msra.mxu0 0
        %5655 = vmatprep.subr.bf16.mxu0 0
        %5656 = vmatpush1.bf16.msra.mxu0 0
        %5657 = vmatprep.subr.bf16.mxu0 0
        %5658 = vmatpush1.bf16.msra.mxu0 0
        %5659 = vmatprep.subr.bf16.mxu0 0
        %5660 = vmatpush1.bf16.msra.mxu0 0
        %5661 = vmatprep.subr.bf16.mxu0 0
        %5662 = vmatpush1.bf16.msra.mxu0 0
        %5663 = vmatprep.subr.bf16.mxu0 0
        %5664 = vmatpush1.bf16.msra.mxu0 0
        %5665 = vmatprep.subr.bf16.mxu0 0
        %5666 = vmatpush1.bf16.msra.mxu0 0
        %5667 = vmatprep.subr.bf16.mxu0 0
        %5668 = vmatpush1.bf16.msra.mxu0 0
        %5669 = vmatprep.subr.bf16.mxu0 0
        %5670 = vmatpush1.bf16.msra.mxu0 0
        %5671 = vmatprep.subr.bf16.mxu0 0
        %5672 = vmatpush1.bf16.msra.mxu0 0
        %5673 = vmatprep.subr.bf16.mxu0 0
        %5674 = vmatpush1.bf16.msra.mxu0 0
        %5675 = vmatprep.subr.bf16.mxu0 0
        %5676 = vmatpush1.bf16.msra.mxu0 0
        %5677 = vmatprep.mubr.bf16.mxu0 0
        %5678 = vmatmul.mubr.bf16.gmra.mrb[0].mxu0 %v5595
        %v5679 = vpop.f32.mrb[0].mxu0
        %v5680 = vadd.f32 0.0, %v5679
        %v5681 = vpop.f32.mrb[0].mxu0
        %v5682 = vpop.f32.mrb[0].mxu0
        %v5683 = vadd.f32 0.0, %v5682
        %v5684 = vpop.f32.mrb[0].mxu0
        %5685 = vmatprep.mubr.bf16.mxu0 0
        %5686 = vmatmul.mubr.bf16.gmra.mrb[0].mxu0 %v5598
        %v5687 = vpop.f32.mrb[0].mxu0
        %v5688 = vadd.f32 0.0, %v5687
        %v5689 = vpop.f32.mrb[0].mxu0
        %v5690 = vpop.f32.mrb[0].mxu0
        %v5691 = vadd.f32 0.0, %v5690
        %v5692 = vpop.f32.mrb[0].mxu0
        %5693 = vmatprep.mubr.bf16.mxu0 0
        %5694 = vmatmul.mubr.bf16.gmra.mrb[0].mxu0 %v5601
        %v5695 = vpop.f32.mrb[0].mxu0
        %v5696 = vadd.f32 0.0, %v5695
        %v5697 = vpop.f32.mrb[0].mxu0
        %v5698 = vpop.f32.mrb[0].mxu0
        %v5699 = vadd.f32 0.0, %v5698
        %v5700 = vpop.f32.mrb[0].mxu0
        %5701 = vmatprep.mubr.bf16.mxu0 0
        %5702 = vmatmul.mubr.bf16.gmra.mrb[0].mxu0 %v5604
        %v5703 = vpop.f32.mrb[0].mxu0
        %v5704 = vadd.f32 0.0, %v5703
        %v5705 = vpop.f32.mrb[0].mxu0
        %v5706 = vpop.f32.mrb[0].mxu0
        %v5707 = vadd.f32 0.0, %v5706
        %v5708 = vpop.f32.mrb[0].mxu0
        %5709 = vmatprep.mubr.bf16.mxu0 0
        %5710 = vmatmul.mubr.bf16.gmra.mrb[0].mxu0 %v5607
        %v5711 = vpop.f32.mrb[0].mxu0
        %v5712 = vadd.f32 0.0, %v5711
        %v5713 = vpop.f32.mrb[0].mxu0
        %v5714 = vpop.f32.mrb[0].mxu0
        %v5715 = vadd.f32 0.0, %v5714
        %v5716 = vpop.f32.mrb[0].mxu0
        %5717 = vmatprep.mubr.bf16.mxu0 0
        %5718 = vmatmul.mubr.bf16.gmra.mrb[0].mxu0 %v5610
        %v5719 = vpop.f32.mrb[0].mxu0
        %v5720 = vadd.f32 0.0, %v5719
        %v5721 = vpop.f32.mrb[0].mxu0
        %v5722 = vpop.f32.mrb[0].mxu0
        %v5723 = vadd.f32 0.0, %v5722
        %v5724 = vpop.f32.mrb[0].mxu0
        %5725 = vmatprep.mubr.bf16.mxu0 0
        %5726 = vmatmul.mubr.bf16.gmra.mrb[0].mxu0 %v5613
        %v5727 = vpop.f32.mrb[0].mxu0
        %v5728 = vadd.f32 0.0, %v5727
        %v5729 = vpop.f32.mrb[0].mxu0
        %v5730 = vpop.f32.mrb[0].mxu0
        %v5731 = vadd.f32 0.0, %v5730
        %v5732 = vpop.f32.mrb[0].mxu0
        %5733 = vmatprep.mubr.bf16.mxu0 0
        %5734 = vmatmul.mubr.bf16.gmra.mrb[0].mxu0 %v5616
        %v5735 = vpop.f32.mrb[0].mxu0
        %v5736 = vadd.f32 0.0, %v5735
        %v5737 = vpop.f32.mrb[0].mxu0
        %v5738 = vpop.f32.mrb[0].mxu0
        %v5739 = vadd.f32 0.0, %v5738
        %v5740 = vpop.f32.mrb[0].mxu0
        %5741 = vmatprep.mubr.bf16.mxu0 0
        %5742 = vmatmul.mubr.bf16.gmra.mrb[0].mxu0 %v5619
        %v5743 = vpop.f32.mrb[0].mxu0
        %v5744 = vadd.f32 0.0, %v5743
        %v5745 = vpop.f32.mrb[0].mxu0
        %v5746 = vpop.f32.mrb[0].mxu0
        %v5747 = vadd.f32 0.0, %v5746
        %v5748 = vpop.f32.mrb[0].mxu0
        %5749 = vmatprep.mubr.bf16.mxu0 0
        %5750 = vmatmul.mubr.bf16.gmra.mrb[0].mxu0 %v5622
        %v5751 = vpop.f32.mrb[0].mxu0
        %v5752 = vadd.f32 0.0, %v5751
        %v5753 = vpop.f32.mrb[0].mxu0
        %v5754 = vpop.f32.mrb[0].mxu0
        %v5755 = vadd.f32 0.0, %v5754
        %v5756 = vpop.f32.mrb[0].mxu0
        %5757 = vmatprep.mubr.bf16.mxu0 0
        %5758 = vmatmul.mubr.bf16.gmra.mrb[0].mxu0 %v5625
        %v5759 = vpop.f32.mrb[0].mxu0
        %v5760 = vadd.f32 0.0, %v5759
        %v5761 = vpop.f32.mrb[0].mxu0
        %v5762 = vpop.f32.mrb[0].mxu0
        %v5763 = vadd.f32 0.0, %v5762
        %v5764 = vpop.f32.mrb[0].mxu0
        %5765 = vmatprep.mubr.bf16.mxu0 0
        %5766 = vmatmul.mubr.bf16.gmra.mrb[0].mxu0 %v5628
        %v5767 = vpop.f32.mrb[0].mxu0
        %v5768 = vadd.f32 0.0, %v5767
        %v5769 = vpop.f32.mrb[0].mxu0
        %v5770 = vpop.f32.mrb[0].mxu0
        %v5771 = vadd.f32 0.0, %v5770
        %v5772 = vpop.f32.mrb[0].mxu0
        %5773 = vmatprep.mubr.bf16.mxu0 0
        %5774 = vmatmul.mubr.bf16.gmra.mrb[0].mxu0 %v5631
        %v5775 = vpop.f32.mrb[0].mxu0
        %v5776 = vadd.f32 0.0, %v5775
        %v5777 = vpop.f32.mrb[0].mxu0
        %v5778 = vpop.f32.mrb[0].mxu0
        %v5779 = vadd.f32 0.0, %v5778
        %v5780 = vpop.f32.mrb[0].mxu0
        %5781 = vmatprep.mubr.bf16.mxu0 0
        %5782 = vmatmul.mubr.bf16.gmra.mrb[0].mxu0 %v5634
        %v5783 = vpop.f32.mrb[0].mxu0
        %v5784 = vadd.f32 0.0, %v5783
        %v5785 = vpop.f32.mrb[0].mxu0
        %v5786 = vpop.f32.mrb[0].mxu0
        %v5787 = vadd.f32 0.0, %v5786
        %v5788 = vpop.f32.mrb[0].mxu0
        %5789 = vmatprep.mubr.bf16.mxu0 0
        %5790 = vmatmul.mubr.bf16.gmra.mrb[0].mxu0 %v5637
        %v5791 = vpop.f32.mrb[0].mxu0
        %v5792 = vadd.f32 0.0, %v5791
        %v5793 = vpop.f32.mrb[0].mxu0
        %v5794 = vpop.f32.mrb[0].mxu0
        %v5795 = vadd.f32 0.0, %v5794
        %v5796 = vpop.f32.mrb[0].mxu0
        %5797 = vmatprep.mubr.bf16.mxu0 0
        %5798 = vmatmul.mubr.bf16.gmra.mrb[0].mxu0 %v5640
        %v5799 = vpop.f32.mrb[0].mxu0
        %v5800 = vadd.f32 0.0, %v5799
        %v5801 = vpop.f32.mrb[0].mxu0
        %v5802 = vpop.f32.mrb[0].mxu0
        %v5803 = vadd.f32 0.0, %v5802
        %v5804 = vpop.f32.mrb[0].mxu0
        %5805 = vdwg.mxu0
        %v5806 = vadd.f32 %v5080, %v5680
        %v5807 = vadd.f32 %v5081, %v5683
        %v5808 = vadd.f32 %v5082, %v5688
        %v5809 = vadd.f32 %v5083, %v5691
        %v5810 = vadd.f32 %v5084, %v5696
        %v5811 = vadd.f32 %v5085, %v5699
        %v5812 = vadd.f32 %v5086, %v5704
        %v5813 = vadd.f32 %v5087, %v5707
        %v5814 = vadd.f32 %v5088, %v5712
        %v5815 = vadd.f32 %v5089, %v5715
        %v5816 = vadd.f32 %v5090, %v5720
        %v5817 = vadd.f32 %v5091, %v5723
        %v5818 = vadd.f32 %v5092, %v5728
        %v5819 = vadd.f32 %v5093, %v5731
        %v5820 = vadd.f32 %v5094, %v5736
        %v5821 = vadd.f32 %v5095, %v5739
        %v5822 = vadd.f32 %v5096, %v5744
        %v5823 = vadd.f32 %v5097, %v5747
        %v5824 = vadd.f32 %v5098, %v5752
        %v5825 = vadd.f32 %v5099, %v5755
        %v5826 = vadd.f32 %v5100, %v5760
        %v5827 = vadd.f32 %v5101, %v5763
        %v5828 = vadd.f32 %v5102, %v5768
        %v5829 = vadd.f32 %v5103, %v5771
        %v5830 = vadd.f32 %v5104, %v5776
        %v5831 = vadd.f32 %v5105, %v5779
        %v5832 = vadd.f32 %v5106, %v5784
        %v5833 = vadd.f32 %v5107, %v5787
        %v5834 = vadd.f32 %v5108, %v5792
        %v5835 = vadd.f32 %v5109, %v5795
        %v5836 = vadd.f32 %v5110, %v5800
        %v5837 = vadd.f32 %v5111, %v5803
        %v5838 = vld [vmem:[%s4753] sm:$0xe]
        %v5839 = vld [vmem:[%s4753 + $0xc] sm:$0xe]
        %v5840 = vld [vmem:[%s4753 + $0x18] sm:$0xe]
        %v5841 = vld [vmem:[%s4753 + $0x24] sm:$0xe]
        %v5842 = vld [vmem:[%s4753 + $0x30] sm:$0xe]
        %v5843 = vld [vmem:[%s4753 + $0x3c] sm:$0xe]
        %v5844 = vld [vmem:[%s4753 + $0x48] sm:$0xe]
        %v5845 = vld [vmem:[%s4753 + $0x54] sm:$0xe]
        %v5846 = vld [vmem:[%s4753 + $0x60] sm:$0xe]
        %v5847 = vld [vmem:[%s4753 + $0x6c] sm:$0xe]
        %v5848 = vld [vmem:[%s4753 + $0x78] sm:$0xe]
        %v5849 = vld [vmem:[%s4753 + $0x84] sm:$0xe]
        %v5850 = vld [vmem:[%s4753 + $0x90] sm:$0xe]
        %v5851 = vld [vmem:[%s4753 + $0x9c] sm:$0xe]
        %v5852 = vld [vmem:[%s4753 + $0xa8] sm:$0xe]
        %v5853 = vld [vmem:[%s4753 + $0xb4] sm:$0xe]
        %v5902 = vrot.slane %v5838, 5
        %v5903 = vrot.slane %v5902, 4
        %v5904 = vrot.slane %v5113, 5
        %v5905 = vsel %vm2792, %v5903, %v5904
        %v5906 = vrot.slane %v5904, 4
        %v5907 = vrot.slane %v5114, 5
        %v5908 = vsel %vm2792, %v5906, %v5907
        %v5909 = vrot.slane %v5839, 5
        %v5910 = vrot.slane %v5909, 4
        %v5911 = vrot.slane %v5116, 5
        %v5912 = vsel %vm2792, %v5910, %v5911
        %v5913 = vrot.slane %v5911, 4
        %v5914 = vrot.slane %v5117, 5
        %v5915 = vsel %vm2792, %v5913, %v5914
        %v5916 = vrot.slane %v5840, 5
        %v5917 = vrot.slane %v5916, 4
        %v5918 = vrot.slane %v5119, 5
        %v5919 = vsel %vm2792, %v5917, %v5918
        %v5920 = vrot.slane %v5918, 4
        %v5921 = vrot.slane %v5120, 5
        %v5922 = vsel %vm2792, %v5920, %v5921
        %v5923 = vrot.slane %v5841, 5
        %v5924 = vrot.slane %v5923, 4
        %v5925 = vrot.slane %v5122, 5
        %v5926 = vsel %vm2792, %v5924, %v5925
        %v5927 = vrot.slane %v5925, 4
        %v5928 = vrot.slane %v5123, 5
        %v5929 = vsel %vm2792, %v5927, %v5928
        %v5930 = vrot.slane %v5842, 5
        %v5931 = vrot.slane %v5930, 4
        %v5932 = vrot.slane %v5125, 5
        %v5933 = vsel %vm2792, %v5931, %v5932
        %v5934 = vrot.slane %v5932, 4
        %v5935 = vrot.slane %v5126, 5
        %v5936 = vsel %vm2792, %v5934, %v5935
        %v5937 = vrot.slane %v5843, 5
        %v5938 = vrot.slane %v5937, 4
        %v5939 = vrot.slane %v5128, 5
        %v5940 = vsel %vm2792, %v5938, %v5939
        %v5941 = vrot.slane %v5939, 4
        %v5942 = vrot.slane %v5129, 5
        %v5943 = vsel %vm2792, %v5941, %v5942
        %v5944 = vrot.slane %v5844, 5
        %v5945 = vrot.slane %v5944, 4
        %v5946 = vrot.slane %v5131, 5
        %v5947 = vsel %vm2792, %v5945, %v5946
        %v5948 = vrot.slane %v5946, 4
        %v5949 = vrot.slane %v5132, 5
        %v5950 = vsel %vm2792, %v5948, %v5949
        %v5951 = vrot.slane %v5845, 5
        %v5952 = vrot.slane %v5951, 4
        %v5953 = vrot.slane %v5134, 5
        %v5954 = vsel %vm2792, %v5952, %v5953
        %v5955 = vrot.slane %v5953, 4
        %v5956 = vrot.slane %v5135, 5
        %v5957 = vsel %vm2792, %v5955, %v5956
        %v5958 = vrot.slane %v5846, 5
        %v5959 = vrot.slane %v5958, 4
        %v5960 = vrot.slane %v5137, 5
        %v5961 = vsel %vm2792, %v5959, %v5960
        %v5962 = vrot.slane %v5960, 4
        %v5963 = vrot.slane %v5138, 5
        %v5964 = vsel %vm2792, %v5962, %v5963
        %v5965 = vrot.slane %v5847, 5
        %v5966 = vrot.slane %v5965, 4
        %v5967 = vrot.slane %v5140, 5
        %v5968 = vsel %vm2792, %v5966, %v5967
        %v5969 = vrot.slane %v5967, 4
        %v5970 = vrot.slane %v5141, 5
        %v5971 = vsel %vm2792, %v5969, %v5970
        %v5972 = vrot.slane %v5848, 5
        %v5973 = vrot.slane %v5972, 4
        %v5974 = vrot.slane %v5143, 5
        %v5975 = vsel %vm2792, %v5973, %v5974
        %v5976 = vrot.slane %v5974, 4
        %v5977 = vrot.slane %v5144, 5
        %v5978 = vsel %vm2792, %v5976, %v5977
        %v5979 = vrot.slane %v5849, 5
        %v5980 = vrot.slane %v5979, 4
        %v5981 = vrot.slane %v5146, 5
        %v5982 = vsel %vm2792, %v5980, %v5981
        %v5983 = vrot.slane %v5981, 4
        %v5984 = vrot.slane %v5147, 5
        %v5985 = vsel %vm2792, %v5983, %v5984
        %v5986 = vrot.slane %v5850, 5
        %v5987 = vrot.slane %v5986, 4
        %v5988 = vrot.slane %v5149, 5
        %v5989 = vsel %vm2792, %v5987, %v5988
        %v5990 = vrot.slane %v5988, 4
        %v5991 = vrot.slane %v5150, 5
        %v5992 = vsel %vm2792, %v5990, %v5991
        %v5993 = vrot.slane %v5851, 5
        %v5994 = vrot.slane %v5993, 4
        %v5995 = vrot.slane %v5152, 5
        %v5996 = vsel %vm2792, %v5994, %v5995
        %v5997 = vrot.slane %v5995, 4
        %v5998 = vrot.slane %v5153, 5
        %v5999 = vsel %vm2792, %v5997, %v5998
        %v6000 = vrot.slane %v5852, 5
        %v6001 = vrot.slane %v6000, 4
        %v6002 = vrot.slane %v5155, 5
        %v6003 = vsel %vm2792, %v6001, %v6002
        %v6004 = vrot.slane %v6002, 4
        %v6005 = vrot.slane %v5156, 5
        %v6006 = vsel %vm2792, %v6004, %v6005
        %v6007 = vrot.slane %v5853, 5
        %v6008 = vrot.slane %v6007, 4
        %v6009 = vrot.slane %v5158, 5
        %v6010 = vsel %vm2792, %v6008, %v6009
        %v6011 = vrot.slane %v6009, 4
        %v6012 = vrot.slane %v5159, 5
        %v6013 = vsel %vm2792, %v6011, %v6012
        %s6014 = scalar_lea.vmem %s5, 32
        %v6015 = vld [vmem:[%s6014] sm:$0xf]
        %v6016 = vunpack.c.l.b16 %v5905
        %v6017 = vunpack.c.l.b16 %v5908
        %v6018 = vunpack.c.l.b16 %v5912
        %v6019 = vunpack.c.l.b16 %v5915
        %v6020 = vunpack.c.l.b16 %v5919
        %v6021 = vunpack.c.l.b16 %v5922
        %v6022 = vunpack.c.l.b16 %v5926
        %v6023 = vunpack.c.l.b16 %v5929
        %v6024 = vunpack.c.l.b16 %v5933
        %v6025 = vunpack.c.l.b16 %v5936
        %v6026 = vunpack.c.l.b16 %v5940
        %v6027 = vunpack.c.l.b16 %v5943
        %v6028 = vunpack.c.l.b16 %v5947
        %v6029 = vunpack.c.l.b16 %v5950
        %v6030 = vunpack.c.l.b16 %v5954
        %v6031 = vunpack.c.l.b16 %v5957
        %v6032 = vunpack.c.l.b16 %v5961
        %v6033 = vunpack.c.l.b16 %v5964
        %v6034 = vunpack.c.l.b16 %v5968
        %v6035 = vunpack.c.l.b16 %v5971
        %v6036 = vunpack.c.l.b16 %v5975
        %v6037 = vunpack.c.l.b16 %v5978
        %v6038 = vunpack.c.l.b16 %v5982
        %v6039 = vunpack.c.l.b16 %v5985
        %v6040 = vunpack.c.l.b16 %v5989
        %v6041 = vunpack.c.l.b16 %v5992
        %v6042 = vunpack.c.l.b16 %v5996
        %v6043 = vunpack.c.l.b16 %v5999
        %v6044 = vunpack.c.l.b16 %v6003
        %v6045 = vunpack.c.l.b16 %v6006
        %v6046 = vunpack.c.l.b16 %v6010
        %v6047 = vunpack.c.l.b16 %v6013
        %v6048 = vpack.c.b16 %v6017, %v6016
        %v6049 = vpack.c.b16 %v6019, %v6018
        %v6050 = vpack.c.b16 %v6021, %v6020
        %v6051 = vpack.c.b16 %v6023, %v6022
        %v6052 = vpack.c.b16 %v6025, %v6024
        %v6053 = vpack.c.b16 %v6027, %v6026
        %v6054 = vpack.c.b16 %v6029, %v6028
        %v6055 = vpack.c.b16 %v6031, %v6030
        %v6056 = vpack.c.b16 %v6033, %v6032
        %v6057 = vpack.c.b16 %v6035, %v6034
        %v6058 = vpack.c.b16 %v6037, %v6036
        %v6059 = vpack.c.b16 %v6039, %v6038
        %v6060 = vpack.c.b16 %v6041, %v6040
        %v6061 = vpack.c.b16 %v6043, %v6042
        %v6062 = vpack.c.b16 %v6045, %v6044
        %v6063 = vpack.c.b16 %v6047, %v6046
        %v6065 = vsel %vm2236, %v6048, 0
        %v6068 = vsel %vm2236, %v6049, 0
        %v6071 = vsel %vm2236, %v6050, 0
        %v6074 = vsel %vm2236, %v6051, 0
        %v6077 = vsel %vm2236, %v6052, 0
        %v6080 = vsel %vm2236, %v6053, 0
        %v6083 = vsel %vm2236, %v6054, 0
        %v6086 = vsel %vm2236, %v6055, 0
        %v6089 = vsel %vm2236, %v6056, 0
        %v6092 = vsel %vm2236, %v6057, 0
        %v6095 = vsel %vm2236, %v6058, 0
        %v6098 = vsel %vm2236, %v6059, 0
        %v6101 = vsel %vm2236, %v6060, 0
        %v6104 = vsel %vm2236, %v6061, 0
        %v6107 = vsel %vm2236, %v6062, 0
        %v6110 = vsel %vm2236, %v6063, 0
        %v6113 = vsel %vm2285, %v6015, 0
        %6115 = vmatprep.subr.bf16.mxu0 0
        %6116 = vmatpush1.bf16.msra.mxu0 %v6113
        %6117 = vmatprep.subr.bf16.mxu0 0
        %6118 = vmatpush1.bf16.msra.mxu0 0
        %6119 = vmatprep.subr.bf16.mxu0 0
        %6120 = vmatpush1.bf16.msra.mxu0 0
        %6121 = vmatprep.subr.bf16.mxu0 0
        %6122 = vmatpush1.bf16.msra.mxu0 0
        %6123 = vmatprep.subr.bf16.mxu0 0
        %6124 = vmatpush1.bf16.msra.mxu0 0
        %6125 = vmatprep.subr.bf16.mxu0 0
        %6126 = vmatpush1.bf16.msra.mxu0 0
        %6127 = vmatprep.subr.bf16.mxu0 0
        %6128 = vmatpush1.bf16.msra.mxu0 0
        %6129 = vmatprep.subr.bf16.mxu0 0
        %6130 = vmatpush1.bf16.msra.mxu0 0
        %6131 = vmatprep.subr.bf16.mxu0 0
        %6132 = vmatpush1.bf16.msra.mxu0 0
        %6133 = vmatprep.subr.bf16.mxu0 0
        %6134 = vmatpush1.bf16.msra.mxu0 0
        %6135 = vmatprep.subr.bf16.mxu0 0
        %6136 = vmatpush1.bf16.msra.mxu0 0
        %6137 = vmatprep.subr.bf16.mxu0 0
        %6138 = vmatpush1.bf16.msra.mxu0 0
        %6139 = vmatprep.subr.bf16.mxu0 0
        %6140 = vmatpush1.bf16.msra.mxu0 0
        %6141 = vmatprep.subr.bf16.mxu0 0
        %6142 = vmatpush1.bf16.msra.mxu0 0
        %6143 = vmatprep.subr.bf16.mxu0 0
        %6144 = vmatpush1.bf16.msra.mxu0 0
        %6145 = vmatprep.subr.bf16.mxu0 0
        %6146 = vmatpush1.bf16.msra.mxu0 0
        %6147 = vmatprep.mubr.bf16.mxu0 0
        %6148 = vmatmul.mubr.bf16.gmra.mrb[0].mxu0 %v6065
        %v6149 = vpop.f32.mrb[0].mxu0
        %v6150 = vadd.f32 0.0, %v6149
        %v6151 = vpop.f32.mrb[0].mxu0
        %v6152 = vpop.f32.mrb[0].mxu0
        %v6153 = vadd.f32 0.0, %v6152
        %v6154 = vpop.f32.mrb[0].mxu0
        %6155 = vmatprep.mubr.bf16.mxu0 0
        %6156 = vmatmul.mubr.bf16.gmra.mrb[0].mxu0 %v6068
        %v6157 = vpop.f32.mrb[0].mxu0
        %v6158 = vadd.f32 0.0, %v6157
        %v6159 = vpop.f32.mrb[0].mxu0
        %v6160 = vpop.f32.mrb[0].mxu0
        %v6161 = vadd.f32 0.0, %v6160
        %v6162 = vpop.f32.mrb[0].mxu0
        %6163 = vmatprep.mubr.bf16.mxu0 0
        %6164 = vmatmul.mubr.bf16.gmra.mrb[0].mxu0 %v6071
        %v6165 = vpop.f32.mrb[0].mxu0
        %v6166 = vadd.f32 0.0, %v6165
        %v6167 = vpop.f32.mrb[0].mxu0
        %v6168 = vpop.f32.mrb[0].mxu0
        %v6169 = vadd.f32 0.0, %v6168
        %v6170 = vpop.f32.mrb[0].mxu0
        %6171 = vmatprep.mubr.bf16.mxu0 0
        %6172 = vmatmul.mubr.bf16.gmra.mrb[0].mxu0 %v6074
        %v6173 = vpop.f32.mrb[0].mxu0
        %v6174 = vadd.f32 0.0, %v6173
        %v6175 = vpop.f32.mrb[0].mxu0
        %v6176 = vpop.f32.mrb[0].mxu0
        %v6177 = vadd.f32 0.0, %v6176
        %v6178 = vpop.f32.mrb[0].mxu0
        %6179 = vmatprep.mubr.bf16.mxu0 0
        %6180 = vmatmul.mubr.bf16.gmra.mrb[0].mxu0 %v6077
        %v6181 = vpop.f32.mrb[0].mxu0
        %v6182 = vadd.f32 0.0, %v6181
        %v6183 = vpop.f32.mrb[0].mxu0
        %v6184 = vpop.f32.mrb[0].mxu0
        %v6185 = vadd.f32 0.0, %v6184
        %v6186 = vpop.f32.mrb[0].mxu0
        %6187 = vmatprep.mubr.bf16.mxu0 0
        %6188 = vmatmul.mubr.bf16.gmra.mrb[0].mxu0 %v6080
        %v6189 = vpop.f32.mrb[0].mxu0
        %v6190 = vadd.f32 0.0, %v6189
        %v6191 = vpop.f32.mrb[0].mxu0
        %v6192 = vpop.f32.mrb[0].mxu0
        %v6193 = vadd.f32 0.0, %v6192
        %v6194 = vpop.f32.mrb[0].mxu0
        %6195 = vmatprep.mubr.bf16.mxu0 0
        %6196 = vmatmul.mubr.bf16.gmra.mrb[0].mxu0 %v6083
        %v6197 = vpop.f32.mrb[0].mxu0
        %v6198 = vadd.f32 0.0, %v6197
        %v6199 = vpop.f32.mrb[0].mxu0
        %v6200 = vpop.f32.mrb[0].mxu0
        %v6201 = vadd.f32 0.0, %v6200
        %v6202 = vpop.f32.mrb[0].mxu0
        %6203 = vmatprep.mubr.bf16.mxu0 0
        %6204 = vmatmul.mubr.bf16.gmra.mrb[0].mxu0 %v6086
        %v6205 = vpop.f32.mrb[0].mxu0
        %v6206 = vadd.f32 0.0, %v6205
        %v6207 = vpop.f32.mrb[0].mxu0
        %v6208 = vpop.f32.mrb[0].mxu0
        %v6209 = vadd.f32 0.0, %v6208
        %v6210 = vpop.f32.mrb[0].mxu0
        %6211 = vmatprep.mubr.bf16.mxu0 0
        %6212 = vmatmul.mubr.bf16.gmra.mrb[0].mxu0 %v6089
        %v6213 = vpop.f32.mrb[0].mxu0
        %v6214 = vadd.f32 0.0, %v6213
        %v6215 = vpop.f32.mrb[0].mxu0
        %v6216 = vpop.f32.mrb[0].mxu0
        %v6217 = vadd.f32 0.0, %v6216
        %v6218 = vpop.f32.mrb[0].mxu0
        %6219 = vmatprep.mubr.bf16.mxu0 0
        %6220 = vmatmul.mubr.bf16.gmra.mrb[0].mxu0 %v6092
        %v6221 = vpop.f32.mrb[0].mxu0
        %v6222 = vadd.f32 0.0, %v6221
        %v6223 = vpop.f32.mrb[0].mxu0
        %v6224 = vpop.f32.mrb[0].mxu0
        %v6225 = vadd.f32 0.0, %v6224
        %v6226 = vpop.f32.mrb[0].mxu0
        %6227 = vmatprep.mubr.bf16.mxu0 0
        %6228 = vmatmul.mubr.bf16.gmra.mrb[0].mxu0 %v6095
        %v6229 = vpop.f32.mrb[0].mxu0
        %v6230 = vadd.f32 0.0, %v6229
        %v6231 = vpop.f32.mrb[0].mxu0
        %v6232 = vpop.f32.mrb[0].mxu0
        %v6233 = vadd.f32 0.0, %v6232
        %v6234 = vpop.f32.mrb[0].mxu0
        %6235 = vmatprep.mubr.bf16.mxu0 0
        %6236 = vmatmul.mubr.bf16.gmra.mrb[0].mxu0 %v6098
        %v6237 = vpop.f32.mrb[0].mxu0
        %v6238 = vadd.f32 0.0, %v6237
        %v6239 = vpop.f32.mrb[0].mxu0
        %v6240 = vpop.f32.mrb[0].mxu0
        %v6241 = vadd.f32 0.0, %v6240
        %v6242 = vpop.f32.mrb[0].mxu0
        %6243 = vmatprep.mubr.bf16.mxu0 0
        %6244 = vmatmul.mubr.bf16.gmra.mrb[0].mxu0 %v6101
        %v6245 = vpop.f32.mrb[0].mxu0
        %v6246 = vadd.f32 0.0, %v6245
        %v6247 = vpop.f32.mrb[0].mxu0
        %v6248 = vpop.f32.mrb[0].mxu0
        %v6249 = vadd.f32 0.0, %v6248
        %v6250 = vpop.f32.mrb[0].mxu0
        %6251 = vmatprep.mubr.bf16.mxu0 0
        %6252 = vmatmul.mubr.bf16.gmra.mrb[0].mxu0 %v6104
        %v6253 = vpop.f32.mrb[0].mxu0
        %v6254 = vadd.f32 0.0, %v6253
        %v6255 = vpop.f32.mrb[0].mxu0
        %v6256 = vpop.f32.mrb[0].mxu0
        %v6257 = vadd.f32 0.0, %v6256
        %v6258 = vpop.f32.mrb[0].mxu0
        %6259 = vmatprep.mubr.bf16.mxu0 0
        %6260 = vmatmul.mubr.bf16.gmra.mrb[0].mxu0 %v6107
        %v6261 = vpop.f32.mrb[0].mxu0
        %v6262 = vadd.f32 0.0, %v6261
        %v6263 = vpop.f32.mrb[0].mxu0
        %v6264 = vpop.f32.mrb[0].mxu0
        %v6265 = vadd.f32 0.0, %v6264
        %v6266 = vpop.f32.mrb[0].mxu0
        %6267 = vmatprep.mubr.bf16.mxu0 0
        %6268 = vmatmul.mubr.bf16.gmra.mrb[0].mxu0 %v6110
        %v6269 = vpop.f32.mrb[0].mxu0
        %v6270 = vadd.f32 0.0, %v6269
        %v6271 = vpop.f32.mrb[0].mxu0
        %v6272 = vpop.f32.mrb[0].mxu0
        %v6273 = vadd.f32 0.0, %v6272
        %v6274 = vpop.f32.mrb[0].mxu0
        %6275 = vdwg.mxu0
        %v6276 = vadd.f32 %v5806, %v6150
        %v6277 = vadd.f32 %v5807, %v6153
        %v6278 = vadd.f32 %v5808, %v6158
        %v6279 = vadd.f32 %v5809, %v6161
        %v6280 = vadd.f32 %v5810, %v6166
        %v6281 = vadd.f32 %v5811, %v6169
        %v6282 = vadd.f32 %v5812, %v6174
        %v6283 = vadd.f32 %v5813, %v6177
        %v6284 = vadd.f32 %v5814, %v6182
        %v6285 = vadd.f32 %v5815, %v6185
        %v6286 = vadd.f32 %v5816, %v6190
        %v6287 = vadd.f32 %v5817, %v6193
        %v6288 = vadd.f32 %v5818, %v6198
        %v6289 = vadd.f32 %v5819, %v6201
        %v6290 = vadd.f32 %v5820, %v6206
        %v6291 = vadd.f32 %v5821, %v6209
        %v6292 = vadd.f32 %v5822, %v6214
        %v6293 = vadd.f32 %v5823, %v6217
        %v6294 = vadd.f32 %v5824, %v6222
        %v6295 = vadd.f32 %v5825, %v6225
        %v6296 = vadd.f32 %v5826, %v6230
        %v6297 = vadd.f32 %v5827, %v6233
        %v6298 = vadd.f32 %v5828, %v6238
        %v6299 = vadd.f32 %v5829, %v6241
        %v6300 = vadd.f32 %v5830, %v6246
        %v6301 = vadd.f32 %v5831, %v6249
        %v6302 = vadd.f32 %v5832, %v6254
        %v6303 = vadd.f32 %v5833, %v6257
        %v6304 = vadd.f32 %v5834, %v6262
        %v6305 = vadd.f32 %v5835, %v6265
        %v6306 = vadd.f32 %v5836, %v6270
        %v6307 = vadd.f32 %v5837, %v6273
        %v6308 = vld [vmem:[%s366] sm:$0x1]
        %v6310 = vlaneseq
        %v6311 = vshrl.u32 %v6310, 7
        %v6312 = vsub.s32 0, %v6311
        %v6313 = vrot.slane %v6308, %v6312
        %v6315 = vadd.f32 %v6276, %v6313
        %v6316 = vadd.f32 %v6277, %v6313
        %v6317 = vadd.f32 %v6278, %v6313
        %v6318 = vadd.f32 %v6279, %v6313
        %v6319 = vadd.f32 %v6280, %v6313
        %v6320 = vadd.f32 %v6281, %v6313
        %v6321 = vadd.f32 %v6282, %v6313
        %v6322 = vadd.f32 %v6283, %v6313
        %v6323 = vadd.f32 %v6284, %v6313
        %v6324 = vadd.f32 %v6285, %v6313
        %v6325 = vadd.f32 %v6286, %v6313
        %v6326 = vadd.f32 %v6287, %v6313
        %v6327 = vadd.f32 %v6288, %v6313
        %v6328 = vadd.f32 %v6289, %v6313
        %v6329 = vadd.f32 %v6290, %v6313
        %v6330 = vadd.f32 %v6291, %v6313
        %v6331 = vadd.f32 %v6292, %v6313
        %v6332 = vadd.f32 %v6293, %v6313
        %v6333 = vadd.f32 %v6294, %v6313
        %v6334 = vadd.f32 %v6295, %v6313
        %v6335 = vadd.f32 %v6296, %v6313
        %v6336 = vadd.f32 %v6297, %v6313
        %v6337 = vadd.f32 %v6298, %v6313
        %v6338 = vadd.f32 %v6299, %v6313
        %v6339 = vadd.f32 %v6300, %v6313
        %v6340 = vadd.f32 %v6301, %v6313
        %v6341 = vadd.f32 %v6302, %v6313
        %v6342 = vadd.f32 %v6303, %v6313
        %v6343 = vadd.f32 %v6304, %v6313
        %v6344 = vadd.f32 %v6305, %v6313
        %v6345 = vadd.f32 %v6306, %v6313
        %v6346 = vadd.f32 %v6307, %v6313
        %v6347 = vxor.u32 %v6315, 2147483648
        %v6348 = vxor.u32 %v6316, 2147483648
        %v6349 = vxor.u32 %v6317, 2147483648
        %v6350 = vxor.u32 %v6318, 2147483648
        %v6351 = vxor.u32 %v6319, 2147483648
        %v6352 = vxor.u32 %v6320, 2147483648
        %v6353 = vxor.u32 %v6321, 2147483648
        %v6354 = vxor.u32 %v6322, 2147483648
        %v6355 = vxor.u32 %v6323, 2147483648
        %v6356 = vxor.u32 %v6324, 2147483648
        %v6357 = vxor.u32 %v6325, 2147483648
        %v6358 = vxor.u32 %v6326, 2147483648
        %v6359 = vxor.u32 %v6327, 2147483648
        %v6360 = vxor.u32 %v6328, 2147483648
        %v6361 = vxor.u32 %v6329, 2147483648
        %v6362 = vxor.u32 %v6330, 2147483648
        %v6363 = vxor.u32 %v6331, 2147483648
        %v6364 = vxor.u32 %v6332, 2147483648
        %v6365 = vxor.u32 %v6333, 2147483648
        %v6366 = vxor.u32 %v6334, 2147483648
        %v6367 = vxor.u32 %v6335, 2147483648
        %v6368 = vxor.u32 %v6336, 2147483648
        %v6369 = vxor.u32 %v6337, 2147483648
        %v6370 = vxor.u32 %v6338, 2147483648
        %v6371 = vxor.u32 %v6339, 2147483648
        %v6372 = vxor.u32 %v6340, 2147483648
        %v6373 = vxor.u32 %v6341, 2147483648
        %v6374 = vxor.u32 %v6342, 2147483648
        %v6375 = vxor.u32 %v6343, 2147483648
        %v6376 = vxor.u32 %v6344, 2147483648
        %v6377 = vxor.u32 %v6345, 2147483648
        %v6378 = vxor.u32 %v6346, 2147483648
        %v6379 = vmul.f32 %v6347, 1.442695
        %v6380 = vpow.pop %v6379
        %v6381 = vmul.f32 %v6348, 1.442695
        %v6382 = vpow.pop %v6381
        %v6383 = vmul.f32 %v6349, 1.442695
        %v6384 = vpow.pop %v6383
        %v6385 = vmul.f32 %v6350, 1.442695
        %v6386 = vpow.pop %v6385
        %v6387 = vmul.f32 %v6351, 1.442695
        %v6388 = vpow.pop %v6387
        %v6389 = vmul.f32 %v6352, 1.442695
        %v6390 = vpow.pop %v6389
        %v6391 = vmul.f32 %v6353, 1.442695
        %v6392 = vpow.pop %v6391
        %v6393 = vmul.f32 %v6354, 1.442695
        %v6394 = vpow.pop %v6393
        %v6395 = vmul.f32 %v6355, 1.442695
        %v6396 = vpow.pop %v6395
        %v6397 = vmul.f32 %v6356, 1.442695
        %v6398 = vpow.pop %v6397
        %v6399 = vmul.f32 %v6357, 1.442695
        %v6400 = vpow.pop %v6399
        %v6401 = vmul.f32 %v6358, 1.442695
        %v6402 = vpow.pop %v6401
        %v6403 = vmul.f32 %v6359, 1.442695
        %v6404 = vpow.pop %v6403
        %v6405 = vmul.f32 %v6360, 1.442695
        %v6406 = vpow.pop %v6405
        %v6407 = vmul.f32 %v6361, 1.442695
        %v6408 = vpow.pop %v6407
        %v6409 = vmul.f32 %v6362, 1.442695
        %v6410 = vpow.pop %v6409
        %v6411 = vmul.f32 %v6363, 1.442695
        %v6412 = vpow.pop %v6411
        %v6413 = vmul.f32 %v6364, 1.442695
        %v6414 = vpow.pop %v6413
        %v6415 = vmul.f32 %v6365, 1.442695
        %v6416 = vpow.pop %v6415
        %v6417 = vmul.f32 %v6366, 1.442695
        %v6418 = vpow.pop %v6417
        %v6419 = vmul.f32 %v6367, 1.442695
        %v6420 = vpow.pop %v6419
        %v6421 = vmul.f32 %v6368, 1.442695
        %v6422 = vpow.pop %v6421
        %v6423 = vmul.f32 %v6369, 1.442695
        %v6424 = vpow.pop %v6423
        %v6425 = vmul.f32 %v6370, 1.442695
        %v6426 = vpow.pop %v6425
        %v6427 = vmul.f32 %v6371, 1.442695
        %v6428 = vpow.pop %v6427
        %v6429 = vmul.f32 %v6372, 1.442695
        %v6430 = vpow.pop %v6429
        %v6431 = vmul.f32 %v6373, 1.442695
        %v6432 = vpow.pop %v6431
        %v6433 = vmul.f32 %v6374, 1.442695
        %v6434 = vpow.pop %v6433
        %v6435 = vmul.f32 %v6375, 1.442695
        %v6436 = vpow.pop %v6435
        %v6437 = vmul.f32 %v6376, 1.442695
        %v6438 = vpow.pop %v6437
        %v6439 = vmul.f32 %v6377, 1.442695
        %v6440 = vpow.pop %v6439
        %v6441 = vmul.f32 %v6378, 1.442695
        %v6442 = vpow.pop %v6441
        %v6443 = vadd.f32 %v6380, 1.0
        %v6444 = vadd.f32 %v6382, 1.0
        %v6445 = vadd.f32 %v6384, 1.0
        %v6446 = vadd.f32 %v6386, 1.0
        %v6447 = vadd.f32 %v6388, 1.0
        %v6448 = vadd.f32 %v6390, 1.0
        %v6449 = vadd.f32 %v6392, 1.0
        %v6450 = vadd.f32 %v6394, 1.0
        %v6451 = vadd.f32 %v6396, 1.0
        %v6452 = vadd.f32 %v6398, 1.0
        %v6453 = vadd.f32 %v6400, 1.0
        %v6454 = vadd.f32 %v6402, 1.0
        %v6455 = vadd.f32 %v6404, 1.0
        %v6456 = vadd.f32 %v6406, 1.0
        %v6457 = vadd.f32 %v6408, 1.0
        %v6458 = vadd.f32 %v6410, 1.0
        %v6459 = vadd.f32 %v6412, 1.0
        %v6460 = vadd.f32 %v6414, 1.0
        %v6461 = vadd.f32 %v6416, 1.0
        %v6462 = vadd.f32 %v6418, 1.0
        %v6463 = vadd.f32 %v6420, 1.0
        %v6464 = vadd.f32 %v6422, 1.0
        %v6465 = vadd.f32 %v6424, 1.0
        %v6466 = vadd.f32 %v6426, 1.0
        %v6467 = vadd.f32 %v6428, 1.0
        %v6468 = vadd.f32 %v6430, 1.0
        %v6469 = vadd.f32 %v6432, 1.0
        %v6470 = vadd.f32 %v6434, 1.0
        %v6471 = vadd.f32 %v6436, 1.0
        %v6472 = vadd.f32 %v6438, 1.0
        %v6473 = vadd.f32 %v6440, 1.0
        %v6474 = vadd.f32 %v6442, 1.0
        %v6475 = vrcp.pop %v6443
        %v6476 = vmul.f32 1.0, %v6475
        %v6477 = vrcp.pop %v6444
        %v6478 = vmul.f32 1.0, %v6477
        %v6479 = vrcp.pop %v6445
        %v6480 = vmul.f32 1.0, %v6479
        %v6481 = vrcp.pop %v6446
        %v6482 = vmul.f32 1.0, %v6481
        %v6483 = vrcp.pop %v6447
        %v6484 = vmul.f32 1.0, %v6483
        %v6485 = vrcp.pop %v6448
        %v6486 = vmul.f32 1.0, %v6485
        %v6487 = vrcp.pop %v6449
        %v6488 = vmul.f32 1.0, %v6487
        %v6489 = vrcp.pop %v6450
        %v6490 = vmul.f32 1.0, %v6489
        %v6491 = vrcp.pop %v6451
        %v6492 = vmul.f32 1.0, %v6491
        %v6493 = vrcp.pop %v6452
        %v6494 = vmul.f32 1.0, %v6493
        %v6495 = vrcp.pop %v6453
        %v6496 = vmul.f32 1.0, %v6495
        %v6497 = vrcp.pop %v6454
        %v6498 = vmul.f32 1.0, %v6497
        %v6499 = vrcp.pop %v6455
        %v6500 = vmul.f32 1.0, %v6499
        %v6501 = vrcp.pop %v6456
        %v6502 = vmul.f32 1.0, %v6501
        %v6503 = vrcp.pop %v6457
        %v6504 = vmul.f32 1.0, %v6503
        %v6505 = vrcp.pop %v6458
        %v6506 = vmul.f32 1.0, %v6505
        %v6507 = vrcp.pop %v6459
        %v6508 = vmul.f32 1.0, %v6507
        %v6509 = vrcp.pop %v6460
        %v6510 = vmul.f32 1.0, %v6509
        %v6511 = vrcp.pop %v6461
        %v6512 = vmul.f32 1.0, %v6511
        %v6513 = vrcp.pop %v6462
        %v6514 = vmul.f32 1.0, %v6513
        %v6515 = vrcp.pop %v6463
        %v6516 = vmul.f32 1.0, %v6515
        %v6517 = vrcp.pop %v6464
        %v6518 = vmul.f32 1.0, %v6517
        %v6519 = vrcp.pop %v6465
        %v6520 = vmul.f32 1.0, %v6519
        %v6521 = vrcp.pop %v6466
        %v6522 = vmul.f32 1.0, %v6521
        %v6523 = vrcp.pop %v6467
        %v6524 = vmul.f32 1.0, %v6523
        %v6525 = vrcp.pop %v6468
        %v6526 = vmul.f32 1.0, %v6525
        %v6527 = vrcp.pop %v6469
        %v6528 = vmul.f32 1.0, %v6527
        %v6529 = vrcp.pop %v6470
        %v6530 = vmul.f32 1.0, %v6529
        %v6531 = vrcp.pop %v6471
        %v6532 = vmul.f32 1.0, %v6531
        %v6533 = vrcp.pop %v6472
        %v6534 = vmul.f32 1.0, %v6533
        %v6535 = vrcp.pop %v6473
        %v6536 = vmul.f32 1.0, %v6535
        %v6537 = vrcp.pop %v6474
        %v6538 = vmul.f32 1.0, %v6537
        %v6539 = vmul.f32 %v6315, %v6476
        %v6540 = vmul.f32 %v6316, %v6478
        %v6541 = vmul.f32 %v6317, %v6480
        %v6542 = vmul.f32 %v6318, %v6482
        %v6543 = vmul.f32 %v6319, %v6484
        %v6544 = vmul.f32 %v6320, %v6486
        %v6545 = vmul.f32 %v6321, %v6488
        %v6546 = vmul.f32 %v6322, %v6490
        %v6547 = vmul.f32 %v6323, %v6492
        %v6548 = vmul.f32 %v6324, %v6494
        %v6549 = vmul.f32 %v6325, %v6496
        %v6550 = vmul.f32 %v6326, %v6498
        %v6551 = vmul.f32 %v6327, %v6500
        %v6552 = vmul.f32 %v6328, %v6502
        %v6553 = vmul.f32 %v6329, %v6504
        %v6554 = vmul.f32 %v6330, %v6506
        %v6555 = vmul.f32 %v6331, %v6508
        %v6556 = vmul.f32 %v6332, %v6510
        %v6557 = vmul.f32 %v6333, %v6512
        %v6558 = vmul.f32 %v6334, %v6514
        %v6559 = vmul.f32 %v6335, %v6516
        %v6560 = vmul.f32 %v6336, %v6518
        %v6561 = vmul.f32 %v6337, %v6520
        %v6562 = vmul.f32 %v6338, %v6522
        %v6563 = vmul.f32 %v6339, %v6524
        %v6564 = vmul.f32 %v6340, %v6526
        %v6565 = vmul.f32 %v6341, %v6528
        %v6566 = vmul.f32 %v6342, %v6530
        %v6567 = vmul.f32 %v6343, %v6532
        %v6568 = vmul.f32 %v6344, %v6534
        %v6569 = vmul.f32 %v6345, %v6536
        %v6570 = vmul.f32 %v6346, %v6538
        %v6571 = vpack.c.bf16 %v6540, %v6539
        %v6572 = vpack.c.bf16 %v6542, %v6541
        %v6573 = vpack.c.bf16 %v6544, %v6543
        %v6574 = vpack.c.bf16 %v6546, %v6545
        %v6575 = vpack.c.bf16 %v6548, %v6547
        %v6576 = vpack.c.bf16 %v6550, %v6549
        %v6577 = vpack.c.bf16 %v6552, %v6551
        %v6578 = vpack.c.bf16 %v6554, %v6553
        %v6579 = vpack.c.bf16 %v6556, %v6555
        %v6580 = vpack.c.bf16 %v6558, %v6557
        %v6581 = vpack.c.bf16 %v6560, %v6559
        %v6582 = vpack.c.bf16 %v6562, %v6561
        %v6583 = vpack.c.bf16 %v6564, %v6563
        %v6584 = vpack.c.bf16 %v6566, %v6565
        %v6585 = vpack.c.bf16 %v6568, %v6567
        %v6586 = vpack.c.bf16 %v6570, %v6569
        %v6603 = vunpack.c.l.b16 %v6571
        %v6604 = vunpack.c.h.b16 %v6571
        %v6605 = vunpack.c.l.b16 %v6572
        %v6606 = vunpack.c.h.b16 %v6572
        %v6607 = vunpack.c.l.b16 %v6573
        %v6608 = vunpack.c.h.b16 %v6573
        %v6609 = vunpack.c.l.b16 %v6574
        %v6610 = vunpack.c.h.b16 %v6574
        %v6611 = vunpack.c.l.b16 %v6575
        %v6612 = vunpack.c.h.b16 %v6575
        %v6613 = vunpack.c.l.b16 %v6576
        %v6614 = vunpack.c.h.b16 %v6576
        %v6615 = vunpack.c.l.b16 %v6577
        %v6616 = vunpack.c.h.b16 %v6577
        %v6617 = vunpack.c.l.b16 %v6578
        %v6618 = vunpack.c.h.b16 %v6578
        %v6619 = vunpack.c.l.b16 %v6579
        %v6620 = vunpack.c.h.b16 %v6579
        %v6621 = vunpack.c.l.b16 %v6580
        %v6622 = vunpack.c.h.b16 %v6580
        %v6623 = vunpack.c.l.b16 %v6581
        %v6624 = vunpack.c.h.b16 %v6581
        %v6625 = vunpack.c.l.b16 %v6582
        %v6626 = vunpack.c.h.b16 %v6582
        %v6627 = vunpack.c.l.b16 %v6583
        %v6628 = vunpack.c.h.b16 %v6583
        %v6629 = vunpack.c.l.b16 %v6584
        %v6630 = vunpack.c.h.b16 %v6584
        %v6631 = vunpack.c.l.b16 %v6585
        %v6632 = vunpack.c.h.b16 %v6585
        %v6633 = vunpack.c.l.b16 %v6586
        %v6634 = vunpack.c.h.b16 %v6586
        %v6635 = vpack.c.b16 %v6603, %v6603
        %v6636 = vpack.c.b16 %v6604, %v6604
        %v6637 = vpack.c.b16 %v6605, %v6605
        %v6638 = vpack.c.b16 %v6606, %v6606
        %v6639 = vpack.c.b16 %v6607, %v6607
        %v6640 = vpack.c.b16 %v6608, %v6608
        %v6641 = vpack.c.b16 %v6609, %v6609
        %v6642 = vpack.c.b16 %v6610, %v6610
        %v6643 = vpack.c.b16 %v6611, %v6611
        %v6644 = vpack.c.b16 %v6612, %v6612
        %v6645 = vpack.c.b16 %v6613, %v6613
        %v6646 = vpack.c.b16 %v6614, %v6614
        %v6647 = vpack.c.b16 %v6615, %v6615
        %v6648 = vpack.c.b16 %v6616, %v6616
        %v6649 = vpack.c.b16 %v6617, %v6617
        %v6650 = vpack.c.b16 %v6618, %v6618
        %v6651 = vpack.c.b16 %v6619, %v6619
        %v6652 = vpack.c.b16 %v6620, %v6620
        %v6653 = vpack.c.b16 %v6621, %v6621
        %v6654 = vpack.c.b16 %v6622, %v6622
        %v6655 = vpack.c.b16 %v6623, %v6623
        %v6656 = vpack.c.b16 %v6624, %v6624
        %v6657 = vpack.c.b16 %v6625, %v6625
        %v6658 = vpack.c.b16 %v6626, %v6626
        %v6659 = vpack.c.b16 %v6627, %v6627
        %v6660 = vpack.c.b16 %v6628, %v6628
        %v6661 = vpack.c.b16 %v6629, %v6629
        %v6662 = vpack.c.b16 %v6630, %v6630
        %v6663 = vpack.c.b16 %v6631, %v6631
        %v6664 = vpack.c.b16 %v6632, %v6632
        %v6665 = vpack.c.b16 %v6633, %v6633
        %v6666 = vpack.c.b16 %v6634, %v6634
        %v6668 = vshrl.u32 %v6635, 16
        %v6670 = vrot.slane %v6668, 7
        %v6671 = vshll.u32 %v6635, 16
        %v6673 = vor.u32 %v6670, %v6671
        %v6674 = vrot.slane %v6670, 4
        %v6676 = vshrl.u32 %v6636, 16
        %v6678 = vrot.slane %v6676, 7
        %v6679 = vshll.u32 %v6636, 16
        %v6681 = vor.u32 %v6678, %v6679
        %v6682 = vsel %vm745, %v6674, %v6681
        %v6683 = vrot.slane %v6678, 4
        %v6685 = vshrl.u32 %v6637, 16
        %v6687 = vrot.slane %v6685, 7
        %v6688 = vshll.u32 %v6637, 16
        %v6690 = vor.u32 %v6687, %v6688
        %v6691 = vrot.slane %v6687, 4
        %v6693 = vshrl.u32 %v6638, 16
        %v6695 = vrot.slane %v6693, 7
        %v6696 = vshll.u32 %v6638, 16
        %v6698 = vor.u32 %v6695, %v6696
        %v6699 = vsel %vm745, %v6691, %v6698
        %v6700 = vrot.slane %v6695, 4
        %v6702 = vshrl.u32 %v6639, 16
        %v6704 = vrot.slane %v6702, 7
        %v6705 = vshll.u32 %v6639, 16
        %v6707 = vor.u32 %v6704, %v6705
        %v6708 = vrot.slane %v6704, 4
        %v6710 = vshrl.u32 %v6640, 16
        %v6712 = vrot.slane %v6710, 7
        %v6713 = vshll.u32 %v6640, 16
        %v6715 = vor.u32 %v6712, %v6713
        %v6716 = vsel %vm745, %v6708, %v6715
        %v6717 = vrot.slane %v6712, 4
        %v6719 = vshrl.u32 %v6641, 16
        %v6721 = vrot.slane %v6719, 7
        %v6722 = vshll.u32 %v6641, 16
        %v6724 = vor.u32 %v6721, %v6722
        %v6725 = vrot.slane %v6721, 4
        %v6727 = vshrl.u32 %v6642, 16
        %v6729 = vrot.slane %v6727, 7
        %v6730 = vshll.u32 %v6642, 16
        %v6732 = vor.u32 %v6729, %v6730
        %v6733 = vsel %vm745, %v6725, %v6732
        %v6734 = vrot.slane %v6729, 4
        %v6736 = vshrl.u32 %v6643, 16
        %v6738 = vrot.slane %v6736, 7
        %v6739 = vshll.u32 %v6643, 16
        %v6741 = vor.u32 %v6738, %v6739
        %v6742 = vrot.slane %v6738, 4
        %v6744 = vshrl.u32 %v6644, 16
        %v6746 = vrot.slane %v6744, 7
        %v6747 = vshll.u32 %v6644, 16
        %v6749 = vor.u32 %v6746, %v6747
        %v6750 = vsel %vm745, %v6742, %v6749
        %v6751 = vrot.slane %v6746, 4
        %v6753 = vshrl.u32 %v6645, 16
        %v6755 = vrot.slane %v6753, 7
        %v6756 = vshll.u32 %v6645, 16
        %v6758 = vor.u32 %v6755, %v6756
        %v6759 = vrot.slane %v6755, 4
        %v6761 = vshrl.u32 %v6646, 16
        %v6763 = vrot.slane %v6761, 7
        %v6764 = vshll.u32 %v6646, 16
        %v6766 = vor.u32 %v6763, %v6764
        %v6767 = vsel %vm745, %v6759, %v6766
        %v6768 = vrot.slane %v6763, 4
        %v6770 = vshrl.u32 %v6647, 16
        %v6772 = vrot.slane %v6770, 7
        %v6773 = vshll.u32 %v6647, 16
        %v6775 = vor.u32 %v6772, %v6773
        %v6776 = vrot.slane %v6772, 4
        %v6778 = vshrl.u32 %v6648, 16
        %v6780 = vrot.slane %v6778, 7
        %v6781 = vshll.u32 %v6648, 16
        %v6783 = vor.u32 %v6780, %v6781
        %v6784 = vsel %vm745, %v6776, %v6783
        %v6785 = vrot.slane %v6780, 4
        %v6787 = vshrl.u32 %v6649, 16
        %v6789 = vrot.slane %v6787, 7
        %v6790 = vshll.u32 %v6649, 16
        %v6792 = vor.u32 %v6789, %v6790
        %v6793 = vrot.slane %v6789, 4
        %v6795 = vshrl.u32 %v6650, 16
        %v6797 = vrot.slane %v6795, 7
        %v6798 = vshll.u32 %v6650, 16
        %v6800 = vor.u32 %v6797, %v6798
        %v6801 = vsel %vm745, %v6793, %v6800
        %v6802 = vrot.slane %v6797, 4
        %v6804 = vshrl.u32 %v6651, 16
        %v6806 = vrot.slane %v6804, 7
        %v6807 = vshll.u32 %v6651, 16
        %v6809 = vor.u32 %v6806, %v6807
        %v6810 = vrot.slane %v6806, 4
        %v6812 = vshrl.u32 %v6652, 16
        %v6814 = vrot.slane %v6812, 7
        %v6815 = vshll.u32 %v6652, 16
        %v6817 = vor.u32 %v6814, %v6815
        %v6818 = vsel %vm745, %v6810, %v6817
        %v6819 = vrot.slane %v6814, 4
        %v6821 = vshrl.u32 %v6653, 16
        %v6823 = vrot.slane %v6821, 7
        %v6824 = vshll.u32 %v6653, 16
        %v6826 = vor.u32 %v6823, %v6824
        %v6827 = vrot.slane %v6823, 4
        %v6829 = vshrl.u32 %v6654, 16
        %v6831 = vrot.slane %v6829, 7
        %v6832 = vshll.u32 %v6654, 16
        %v6834 = vor.u32 %v6831, %v6832
        %v6835 = vsel %vm745, %v6827, %v6834
        %v6836 = vrot.slane %v6831, 4
        %v6838 = vshrl.u32 %v6655, 16
        %v6840 = vrot.slane %v6838, 7
        %v6841 = vshll.u32 %v6655, 16
        %v6843 = vor.u32 %v6840, %v6841
        %v6844 = vrot.slane %v6840, 4
        %v6846 = vshrl.u32 %v6656, 16
        %v6848 = vrot.slane %v6846, 7
        %v6849 = vshll.u32 %v6656, 16
        %v6851 = vor.u32 %v6848, %v6849
        %v6852 = vsel %vm745, %v6844, %v6851
        %v6853 = vrot.slane %v6848, 4
        %v6855 = vshrl.u32 %v6657, 16
        %v6857 = vrot.slane %v6855, 7
        %v6858 = vshll.u32 %v6657, 16
        %v6860 = vor.u32 %v6857, %v6858
        %v6861 = vrot.slane %v6857, 4
        %v6863 = vshrl.u32 %v6658, 16
        %v6865 = vrot.slane %v6863, 7
        %v6866 = vshll.u32 %v6658, 16
        %v6868 = vor.u32 %v6865, %v6866
        %v6869 = vsel %vm745, %v6861, %v6868
        %v6870 = vrot.slane %v6865, 4
        %v6872 = vshrl.u32 %v6659, 16
        %v6874 = vrot.slane %v6872, 7
        %v6875 = vshll.u32 %v6659, 16
        %v6877 = vor.u32 %v6874, %v6875
        %v6878 = vrot.slane %v6874, 4
        %v6880 = vshrl.u32 %v6660, 16
        %v6882 = vrot.slane %v6880, 7
        %v6883 = vshll.u32 %v6660, 16
        %v6885 = vor.u32 %v6882, %v6883
        %v6886 = vsel %vm745, %v6878, %v6885
        %v6887 = vrot.slane %v6882, 4
        %v6889 = vshrl.u32 %v6661, 16
        %v6891 = vrot.slane %v6889, 7
        %v6892 = vshll.u32 %v6661, 16
        %v6894 = vor.u32 %v6891, %v6892
        %v6895 = vrot.slane %v6891, 4
        %v6897 = vshrl.u32 %v6662, 16
        %v6899 = vrot.slane %v6897, 7
        %v6900 = vshll.u32 %v6662, 16
        %v6902 = vor.u32 %v6899, %v6900
        %v6903 = vsel %vm745, %v6895, %v6902
        %v6904 = vrot.slane %v6899, 4
        %v6906 = vshrl.u32 %v6663, 16
        %v6908 = vrot.slane %v6906, 7
        %v6909 = vshll.u32 %v6663, 16
        %v6911 = vor.u32 %v6908, %v6909
        %v6912 = vrot.slane %v6908, 4
        %v6914 = vshrl.u32 %v6664, 16
        %v6916 = vrot.slane %v6914, 7
        %v6917 = vshll.u32 %v6664, 16
        %v6919 = vor.u32 %v6916, %v6917
        %v6920 = vsel %vm745, %v6912, %v6919
        %v6921 = vrot.slane %v6916, 4
        %v6923 = vshrl.u32 %v6665, 16
        %v6925 = vrot.slane %v6923, 7
        %v6926 = vshll.u32 %v6665, 16
        %v6928 = vor.u32 %v6925, %v6926
        %v6929 = vrot.slane %v6925, 4
        %v6931 = vshrl.u32 %v6666, 16
        %v6933 = vrot.slane %v6931, 7
        %v6934 = vshll.u32 %v6666, 16
        %v6936 = vor.u32 %v6933, %v6934
        %v6937 = vsel %vm745, %v6929, %v6936
        %v6938 = vrot.slane %v6933, 4
        %s6987 = scalar_lea.vmem [#allocation3], 12
        %vm6988 = vcmask 1043456
        %vm6989 = vmand %vm6988, %vm1068
        %v6990 = vld [vmem:[%s6987] sm:$0xf]
        %v6991 = vsel %vm6989, %v6673, %v6990
        %6992 = vst [vmem:[%s6987] sm:$0xf] %v6991
        %6993 = vst [vmem:[%s6987 + $0x4] sm:$0xf] %v6682
        %vm6994 = vcmask 1040384
        %vm6995 = vmand %vm6994, %vm743
        %v6996 = vld [vmem:[%s6987 + $0x8] sm:$0x1]
        %v6997 = vsel %vm6995, %v6683, %v6996
        %6998 = vst [vmem:[%s6987 + $0x8] sm:$0x1] %v6997
        %v6999 = vld [vmem:[%s6987 + $0xc] sm:$0xf]
        %v7000 = vsel %vm6989, %v6690, %v6999
        %7001 = vst [vmem:[%s6987 + $0xc] sm:$0xf] %v7000
        %7002 = vst [vmem:[%s6987 + $0x10] sm:$0xf] %v6699
        %v7003 = vld [vmem:[%s6987 + $0x14] sm:$0x1]
        %v7004 = vsel %vm6995, %v6700, %v7003
        %7005 = vst [vmem:[%s6987 + $0x14] sm:$0x1] %v7004
        %v7006 = vld [vmem:[%s6987 + $0x18] sm:$0xf]
        %v7007 = vsel %vm6989, %v6707, %v7006
        %7008 = vst [vmem:[%s6987 + $0x18] sm:$0xf] %v7007
        %7009 = vst [vmem:[%s6987 + $0x1c] sm:$0xf] %v6716
        %v7010 = vld [vmem:[%s6987 + $0x20] sm:$0x1]
        %v7011 = vsel %vm6995, %v6717, %v7010
        %7012 = vst [vmem:[%s6987 + $0x20] sm:$0x1] %v7011
        %v7013 = vld [vmem:[%s6987 + $0x24] sm:$0xf]
        %v7014 = vsel %vm6989, %v6724, %v7013
        %7015 = vst [vmem:[%s6987 + $0x24] sm:$0xf] %v7014
        %7016 = vst [vmem:[%s6987 + $0x28] sm:$0xf] %v6733
        %v7017 = vld [vmem:[%s6987 + $0x2c] sm:$0x1]
        %v7018 = vsel %vm6995, %v6734, %v7017
        %7019 = vst [vmem:[%s6987 + $0x2c] sm:$0x1] %v7018
        %v7020 = vld [vmem:[%s6987 + $0x30] sm:$0xf]
        %v7021 = vsel %vm6989, %v6741, %v7020
        %7022 = vst [vmem:[%s6987 + $0x30] sm:$0xf] %v7021
        %7023 = vst [vmem:[%s6987 + $0x34] sm:$0xf] %v6750
        %v7024 = vld [vmem:[%s6987 + $0x38] sm:$0x1]
        %v7025 = vsel %vm6995, %v6751, %v7024
        %7026 = vst [vmem:[%s6987 + $0x38] sm:$0x1] %v7025
        %v7027 = vld [vmem:[%s6987 + $0x3c] sm:$0xf]
        %v7028 = vsel %vm6989, %v6758, %v7027
        %7029 = vst [vmem:[%s6987 + $0x3c] sm:$0xf] %v7028
        %7030 = vst [vmem:[%s6987 + $0x40] sm:$0xf] %v6767
        %v7031 = vld [vmem:[%s6987 + $0x44] sm:$0x1]
        %v7032 = vsel %vm6995, %v6768, %v7031
        %7033 = vst [vmem:[%s6987 + $0x44] sm:$0x1] %v7032
        %v7034 = vld [vmem:[%s6987 + $0x48] sm:$0xf]
        %v7035 = vsel %vm6989, %v6775, %v7034
        %7036 = vst [vmem:[%s6987 + $0x48] sm:$0xf] %v7035
        %7037 = vst [vmem:[%s6987 + $0x4c] sm:$0xf] %v6784
        %v7038 = vld [vmem:[%s6987 + $0x50] sm:$0x1]
        %v7039 = vsel %vm6995, %v6785, %v7038
        %7040 = vst [vmem:[%s6987 + $0x50] sm:$0x1] %v7039
        %v7041 = vld [vmem:[%s6987 + $0x54] sm:$0xf]
        %v7042 = vsel %vm6989, %v6792, %v7041
        %7043 = vst [vmem:[%s6987 + $0x54] sm:$0xf] %v7042
        %7044 = vst [vmem:[%s6987 + $0x58] sm:$0xf] %v6801
        %v7045 = vld [vmem:[%s6987 + $0x5c] sm:$0x1]
        %v7046 = vsel %vm6995, %v6802, %v7045
        %7047 = vst [vmem:[%s6987 + $0x5c] sm:$0x1] %v7046
        %v7048 = vld [vmem:[%s6987 + $0x60] sm:$0xf]
        %v7049 = vsel %vm6989, %v6809, %v7048
        %7050 = vst [vmem:[%s6987 + $0x60] sm:$0xf] %v7049
        %7051 = vst [vmem:[%s6987 + $0x64] sm:$0xf] %v6818
        %v7052 = vld [vmem:[%s6987 + $0x68] sm:$0x1]
        %v7053 = vsel %vm6995, %v6819, %v7052
        %7054 = vst [vmem:[%s6987 + $0x68] sm:$0x1] %v7053
        %v7055 = vld [vmem:[%s6987 + $0x6c] sm:$0xf]
        %v7056 = vsel %vm6989, %v6826, %v7055
        %7057 = vst [vmem:[%s6987 + $0x6c] sm:$0xf] %v7056
        %7058 = vst [vmem:[%s6987 + $0x70] sm:$0xf] %v6835
        %v7059 = vld [vmem:[%s6987 + $0x74] sm:$0x1]
        %v7060 = vsel %vm6995, %v6836, %v7059
        %7061 = vst [vmem:[%s6987 + $0x74] sm:$0x1] %v7060
        %v7062 = vld [vmem:[%s6987 + $0x78] sm:$0xf]
        %v7063 = vsel %vm6989, %v6843, %v7062
        %7064 = vst [vmem:[%s6987 + $0x78] sm:$0xf] %v7063
        %7065 = vst [vmem:[%s6987 + $0x7c] sm:$0xf] %v6852
        %v7066 = vld [vmem:[%s6987 + $0x80] sm:$0x1]
        %v7067 = vsel %vm6995, %v6853, %v7066
        %7068 = vst [vmem:[%s6987 + $0x80] sm:$0x1] %v7067
        %v7069 = vld [vmem:[%s6987 + $0x84] sm:$0xf]
        %v7070 = vsel %vm6989, %v6860, %v7069
        %7071 = vst [vmem:[%s6987 + $0x84] sm:$0xf] %v7070
        %7072 = vst [vmem:[%s6987 + $0x88] sm:$0xf] %v6869
        %v7073 = vld [vmem:[%s6987 + $0x8c] sm:$0x1]
        %v7074 = vsel %vm6995, %v6870, %v7073
        %7075 = vst [vmem:[%s6987 + $0x8c] sm:$0x1] %v7074
        %v7076 = vld [vmem:[%s6987 + $0x90] sm:$0xf]
        %v7077 = vsel %vm6989, %v6877, %v7076
        %7078 = vst [vmem:[%s6987 + $0x90] sm:$0xf] %v7077
        %7079 = vst [vmem:[%s6987 + $0x94] sm:$0xf] %v6886
        %v7080 = vld [vmem:[%s6987 + $0x98] sm:$0x1]
        %v7081 = vsel %vm6995, %v6887, %v7080
        %7082 = vst [vmem:[%s6987 + $0x98] sm:$0x1] %v7081
        %v7083 = vld [vmem:[%s6987 + $0x9c] sm:$0xf]
        %v7084 = vsel %vm6989, %v6894, %v7083
        %7085 = vst [vmem:[%s6987 + $0x9c] sm:$0xf] %v7084
        %7086 = vst [vmem:[%s6987 + $0xa0] sm:$0xf] %v6903
        %v7087 = vld [vmem:[%s6987 + $0xa4] sm:$0x1]
        %v7088 = vsel %vm6995, %v6904, %v7087
        %7089 = vst [vmem:[%s6987 + $0xa4] sm:$0x1] %v7088
        %v7090 = vld [vmem:[%s6987 + $0xa8] sm:$0xf]
        %v7091 = vsel %vm6989, %v6911, %v7090
        %7092 = vst [vmem:[%s6987 + $0xa8] sm:$0xf] %v7091
        %7093 = vst [vmem:[%s6987 + $0xac] sm:$0xf] %v6920
        %v7094 = vld [vmem:[%s6987 + $0xb0] sm:$0x1]
        %v7095 = vsel %vm6995, %v6921, %v7094
        %7096 = vst [vmem:[%s6987 + $0xb0] sm:$0x1] %v7095
        %v7097 = vld [vmem:[%s6987 + $0xb4] sm:$0xf]
        %v7098 = vsel %vm6989, %v6928, %v7097
        %7099 = vst [vmem:[%s6987 + $0xb4] sm:$0xf] %v7098
        %7100 = vst [vmem:[%s6987 + $0xb8] sm:$0xf] %v6937
        %v7101 = vld [vmem:[%s6987 + $0xbc] sm:$0x1]
        %v7102 = vsel %vm6995, %v6938, %v7101
        %7103 = vst [vmem:[%s6987 + $0xbc] sm:$0x1] %v7102
        %v7104 = vld [vmem:[#allocation3] sm:$0xf]
        %v7105 = vld [vmem:[#allocation3 + $0x4] sm:$0xf]
        %v7106 = vld [vmem:[#allocation3 + $0xc] sm:$0xf]
        %v7107 = vld [vmem:[#allocation3 + $0x10] sm:$0xf]
        %v7108 = vld [vmem:[#allocation3 + $0x18] sm:$0xf]
        %v7109 = vld [vmem:[#allocation3 + $0x1c] sm:$0xf]
        %v7110 = vld [vmem:[#allocation3 + $0x24] sm:$0xf]
        %v7111 = vld [vmem:[#allocation3 + $0x28] sm:$0xf]
        %v7112 = vld [vmem:[#allocation3 + $0x30] sm:$0xf]
        %v7113 = vld [vmem:[#allocation3 + $0x34] sm:$0xf]
        %v7114 = vld [vmem:[#allocation3 + $0x3c] sm:$0xf]
        %v7115 = vld [vmem:[#allocation3 + $0x40] sm:$0xf]
        %v7116 = vld [vmem:[#allocation3 + $0x48] sm:$0xf]
        %v7117 = vld [vmem:[#allocation3 + $0x4c] sm:$0xf]
        %v7118 = vld [vmem:[#allocation3 + $0x54] sm:$0xf]
        %v7119 = vld [vmem:[#allocation3 + $0x58] sm:$0xf]
        %v7120 = vld [vmem:[#allocation3 + $0x60] sm:$0xf]
        %v7121 = vld [vmem:[#allocation3 + $0x64] sm:$0xf]
        %v7122 = vld [vmem:[#allocation3 + $0x6c] sm:$0xf]
        %v7123 = vld [vmem:[#allocation3 + $0x70] sm:$0xf]
        %v7124 = vld [vmem:[#allocation3 + $0x78] sm:$0xf]
        %v7125 = vld [vmem:[#allocation3 + $0x7c] sm:$0xf]
        %v7126 = vld [vmem:[#allocation3 + $0x84] sm:$0xf]
        %v7127 = vld [vmem:[#allocation3 + $0x88] sm:$0xf]
        %v7128 = vld [vmem:[#allocation3 + $0x90] sm:$0xf]
        %v7129 = vld [vmem:[#allocation3 + $0x94] sm:$0xf]
        %v7130 = vld [vmem:[#allocation3 + $0x9c] sm:$0xf]
        %v7131 = vld [vmem:[#allocation3 + $0xa0] sm:$0xf]
        %v7132 = vld [vmem:[#allocation3 + $0xa8] sm:$0xf]
        %v7133 = vld [vmem:[#allocation3 + $0xac] sm:$0xf]
        %v7134 = vld [vmem:[#allocation3 + $0xb4] sm:$0xf]
        %v7135 = vld [vmem:[#allocation3 + $0xb8] sm:$0xf]
        %v7136 = vld [vmem:[%s6] sm:$0xf]
        %v7137 = vld [vmem:[%s6 + $0x4] sm:$0xf]
        %v7138 = vld [vmem:[%s6 + $0x8] sm:$0xf]
        %v7139 = vld [vmem:[%s6 + $0xc] sm:$0xf]
        %v7140 = vld [vmem:[%s6 + $0x10] sm:$0xf]
        %v7141 = vld [vmem:[%s6 + $0x14] sm:$0xf]
        %v7142 = vld [vmem:[%s6 + $0x18] sm:$0xf]
        %v7143 = vld [vmem:[%s6 + $0x1c] sm:$0xf]
        %v7144 = vld [vmem:[%s6 + $0x20] sm:$0xf]
        %v7145 = vld [vmem:[%s6 + $0x24] sm:$0xf]
        %v7146 = vld [vmem:[%s6 + $0x28] sm:$0xf]
        %v7147 = vld [vmem:[%s6 + $0x2c] sm:$0xf]
        %v7148 = vld [vmem:[%s6 + $0x30] sm:$0xf]
        %v7149 = vld [vmem:[%s6 + $0x34] sm:$0xf]
        %v7150 = vld [vmem:[%s6 + $0x38] sm:$0xf]
        %v7151 = vld [vmem:[%s6 + $0x3c] sm:$0xf]
        %v7152 = vld [vmem:[#allocation3 + $0x8] sm:$0x1]
        %v7153 = vld [vmem:[#allocation3 + $0x14] sm:$0x1]
        %v7154 = vld [vmem:[#allocation3 + $0x20] sm:$0x1]
        %v7155 = vld [vmem:[#allocation3 + $0x2c] sm:$0x1]
        %v7156 = vld [vmem:[#allocation3 + $0x38] sm:$0x1]
        %v7157 = vld [vmem:[#allocation3 + $0x44] sm:$0x1]
        %v7158 = vld [vmem:[#allocation3 + $0x50] sm:$0x1]
        %v7159 = vld [vmem:[#allocation3 + $0x5c] sm:$0x1]
        %v7160 = vld [vmem:[#allocation3 + $0x68] sm:$0x1]
        %v7161 = vld [vmem:[#allocation3 + $0x74] sm:$0x1]
        %v7162 = vld [vmem:[#allocation3 + $0x80] sm:$0x1]
        %v7163 = vld [vmem:[#allocation3 + $0x8c] sm:$0x1]
        %v7164 = vld [vmem:[#allocation3 + $0x98] sm:$0x1]
        %v7165 = vld [vmem:[#allocation3 + $0xa4] sm:$0x1]
        %v7166 = vld [vmem:[#allocation3 + $0xb0] sm:$0x1]
        %v7167 = vld [vmem:[#allocation3 + $0xbc] sm:$0x1]
        %v7169 = vshrl.u32 %v7104, 16
        %v7171 = vrot.slane %v7169, 4
        %v7172 = vshll.u32 %v7104, 16
        %v7174 = vrot.slane %v7172, 5
        %v7175 = vor.u32 %v7171, %v7174
        %v7176 = vrot.slane %v7175, 4
        %v7178 = vshll.u32 %v7105, 16
        %v7180 = vrot.slane %v7178, 5
        %v7181 = vsel %vm1801, %v7176, %v7180
        %v7182 = vshrl.u32 %v7105, 16
        %v7184 = vrot.slane %v7182, 4
        %v7185 = vor.u32 %v7184, %v7180
        %v7186 = vrot.slane %v7185, 4
        %v7188 = vshll.u32 %v7152, 16
        %v7190 = vrot.slane %v7188, 5
        %v7191 = vsel %vm1801, %v7186, %v7190
        %v7193 = vshrl.u32 %v7106, 16
        %v7195 = vrot.slane %v7193, 4
        %v7196 = vshll.u32 %v7106, 16
        %v7198 = vrot.slane %v7196, 5
        %v7199 = vor.u32 %v7195, %v7198
        %v7200 = vrot.slane %v7199, 4
        %v7202 = vshll.u32 %v7107, 16
        %v7204 = vrot.slane %v7202, 5
        %v7205 = vsel %vm1801, %v7200, %v7204
        %v7206 = vshrl.u32 %v7107, 16
        %v7208 = vrot.slane %v7206, 4
        %v7209 = vor.u32 %v7208, %v7204
        %v7210 = vrot.slane %v7209, 4
        %v7212 = vshll.u32 %v7153, 16
        %v7214 = vrot.slane %v7212, 5
        %v7215 = vsel %vm1801, %v7210, %v7214
        %v7217 = vshrl.u32 %v7108, 16
        %v7219 = vrot.slane %v7217, 4
        %v7220 = vshll.u32 %v7108, 16
        %v7222 = vrot.slane %v7220, 5
        %v7223 = vor.u32 %v7219, %v7222
        %v7224 = vrot.slane %v7223, 4
        %v7226 = vshll.u32 %v7109, 16
        %v7228 = vrot.slane %v7226, 5
        %v7229 = vsel %vm1801, %v7224, %v7228
        %v7230 = vshrl.u32 %v7109, 16
        %v7232 = vrot.slane %v7230, 4
        %v7233 = vor.u32 %v7232, %v7228
        %v7234 = vrot.slane %v7233, 4
        %v7236 = vshll.u32 %v7154, 16
        %v7238 = vrot.slane %v7236, 5
        %v7239 = vsel %vm1801, %v7234, %v7238
        %v7241 = vshrl.u32 %v7110, 16
        %v7243 = vrot.slane %v7241, 4
        %v7244 = vshll.u32 %v7110, 16
        %v7246 = vrot.slane %v7244, 5
        %v7247 = vor.u32 %v7243, %v7246
        %v7248 = vrot.slane %v7247, 4
        %v7250 = vshll.u32 %v7111, 16
        %v7252 = vrot.slane %v7250, 5
        %v7253 = vsel %vm1801, %v7248, %v7252
        %v7254 = vshrl.u32 %v7111, 16
        %v7256 = vrot.slane %v7254, 4
        %v7257 = vor.u32 %v7256, %v7252
        %v7258 = vrot.slane %v7257, 4
        %v7260 = vshll.u32 %v7155, 16
        %v7262 = vrot.slane %v7260, 5
        %v7263 = vsel %vm1801, %v7258, %v7262
        %v7265 = vshrl.u32 %v7112, 16
        %v7267 = vrot.slane %v7265, 4
        %v7268 = vshll.u32 %v7112, 16
        %v7270 = vrot.slane %v7268, 5
        %v7271 = vor.u32 %v7267, %v7270
        %v7272 = vrot.slane %v7271, 4
        %v7274 = vshll.u32 %v7113, 16
        %v7276 = vrot.slane %v7274, 5
        %v7277 = vsel %vm1801, %v7272, %v7276
        %v7278 = vshrl.u32 %v7113, 16
        %v7280 = vrot.slane %v7278, 4
        %v7281 = vor.u32 %v7280, %v7276
        %v7282 = vrot.slane %v7281, 4
        %v7284 = vshll.u32 %v7156, 16
        %v7286 = vrot.slane %v7284, 5
        %v7287 = vsel %vm1801, %v7282, %v7286
        %v7289 = vshrl.u32 %v7114, 16
        %v7291 = vrot.slane %v7289, 4
        %v7292 = vshll.u32 %v7114, 16
        %v7294 = vrot.slane %v7292, 5
        %v7295 = vor.u32 %v7291, %v7294
        %v7296 = vrot.slane %v7295, 4
        %v7298 = vshll.u32 %v7115, 16
        %v7300 = vrot.slane %v7298, 5
        %v7301 = vsel %vm1801, %v7296, %v7300
        %v7302 = vshrl.u32 %v7115, 16
        %v7304 = vrot.slane %v7302, 4
        %v7305 = vor.u32 %v7304, %v7300
        %v7306 = vrot.slane %v7305, 4
        %v7308 = vshll.u32 %v7157, 16
        %v7310 = vrot.slane %v7308, 5
        %v7311 = vsel %vm1801, %v7306, %v7310
        %v7313 = vshrl.u32 %v7116, 16
        %v7315 = vrot.slane %v7313, 4
        %v7316 = vshll.u32 %v7116, 16
        %v7318 = vrot.slane %v7316, 5
        %v7319 = vor.u32 %v7315, %v7318
        %v7320 = vrot.slane %v7319, 4
        %v7322 = vshll.u32 %v7117, 16
        %v7324 = vrot.slane %v7322, 5
        %v7325 = vsel %vm1801, %v7320, %v7324
        %v7326 = vshrl.u32 %v7117, 16
        %v7328 = vrot.slane %v7326, 4
        %v7329 = vor.u32 %v7328, %v7324
        %v7330 = vrot.slane %v7329, 4
        %v7332 = vshll.u32 %v7158, 16
        %v7334 = vrot.slane %v7332, 5
        %v7335 = vsel %vm1801, %v7330, %v7334
        %v7337 = vshrl.u32 %v7118, 16
        %v7339 = vrot.slane %v7337, 4
        %v7340 = vshll.u32 %v7118, 16
        %v7342 = vrot.slane %v7340, 5
        %v7343 = vor.u32 %v7339, %v7342
        %v7344 = vrot.slane %v7343, 4
        %v7346 = vshll.u32 %v7119, 16
        %v7348 = vrot.slane %v7346, 5
        %v7349 = vsel %vm1801, %v7344, %v7348
        %v7350 = vshrl.u32 %v7119, 16
        %v7352 = vrot.slane %v7350, 4
        %v7353 = vor.u32 %v7352, %v7348
        %v7354 = vrot.slane %v7353, 4
        %v7356 = vshll.u32 %v7159, 16
        %v7358 = vrot.slane %v7356, 5
        %v7359 = vsel %vm1801, %v7354, %v7358
        %v7361 = vshrl.u32 %v7120, 16
        %v7363 = vrot.slane %v7361, 4
        %v7364 = vshll.u32 %v7120, 16
        %v7366 = vrot.slane %v7364, 5
        %v7367 = vor.u32 %v7363, %v7366
        %v7368 = vrot.slane %v7367, 4
        %v7370 = vshll.u32 %v7121, 16
        %v7372 = vrot.slane %v7370, 5
        %v7373 = vsel %vm1801, %v7368, %v7372
        %v7374 = vshrl.u32 %v7121, 16
        %v7376 = vrot.slane %v7374, 4
        %v7377 = vor.u32 %v7376, %v7372
        %v7378 = vrot.slane %v7377, 4
        %v7380 = vshll.u32 %v7160, 16
        %v7382 = vrot.slane %v7380, 5
        %v7383 = vsel %vm1801, %v7378, %v7382
        %v7385 = vshrl.u32 %v7122, 16
        %v7387 = vrot.slane %v7385, 4
        %v7388 = vshll.u32 %v7122, 16
        %v7390 = vrot.slane %v7388, 5
        %v7391 = vor.u32 %v7387, %v7390
        %v7392 = vrot.slane %v7391, 4
        %v7394 = vshll.u32 %v7123, 16
        %v7396 = vrot.slane %v7394, 5
        %v7397 = vsel %vm1801, %v7392, %v7396
        %v7398 = vshrl.u32 %v7123, 16
        %v7400 = vrot.slane %v7398, 4
        %v7401 = vor.u32 %v7400, %v7396
        %v7402 = vrot.slane %v7401, 4
        %v7404 = vshll.u32 %v7161, 16
        %v7406 = vrot.slane %v7404, 5
        %v7407 = vsel %vm1801, %v7402, %v7406
        %v7409 = vshrl.u32 %v7124, 16
        %v7411 = vrot.slane %v7409, 4
        %v7412 = vshll.u32 %v7124, 16
        %v7414 = vrot.slane %v7412, 5
        %v7415 = vor.u32 %v7411, %v7414
        %v7416 = vrot.slane %v7415, 4
        %v7418 = vshll.u32 %v7125, 16
        %v7420 = vrot.slane %v7418, 5
        %v7421 = vsel %vm1801, %v7416, %v7420
        %v7422 = vshrl.u32 %v7125, 16
        %v7424 = vrot.slane %v7422, 4
        %v7425 = vor.u32 %v7424, %v7420
        %v7426 = vrot.slane %v7425, 4
        %v7428 = vshll.u32 %v7162, 16
        %v7430 = vrot.slane %v7428, 5
        %v7431 = vsel %vm1801, %v7426, %v7430
        %v7433 = vshrl.u32 %v7126, 16
        %v7435 = vrot.slane %v7433, 4
        %v7436 = vshll.u32 %v7126, 16
        %v7438 = vrot.slane %v7436, 5
        %v7439 = vor.u32 %v7435, %v7438
        %v7440 = vrot.slane %v7439, 4
        %v7442 = vshll.u32 %v7127, 16
        %v7444 = vrot.slane %v7442, 5
        %v7445 = vsel %vm1801, %v7440, %v7444
        %v7446 = vshrl.u32 %v7127, 16
        %v7448 = vrot.slane %v7446, 4
        %v7449 = vor.u32 %v7448, %v7444
        %v7450 = vrot.slane %v7449, 4
        %v7452 = vshll.u32 %v7163, 16
        %v7454 = vrot.slane %v7452, 5
        %v7455 = vsel %vm1801, %v7450, %v7454
        %v7457 = vshrl.u32 %v7128, 16
        %v7459 = vrot.slane %v7457, 4
        %v7460 = vshll.u32 %v7128, 16
        %v7462 = vrot.slane %v7460, 5
        %v7463 = vor.u32 %v7459, %v7462
        %v7464 = vrot.slane %v7463, 4
        %v7466 = vshll.u32 %v7129, 16
        %v7468 = vrot.slane %v7466, 5
        %v7469 = vsel %vm1801, %v7464, %v7468
        %v7470 = vshrl.u32 %v7129, 16
        %v7472 = vrot.slane %v7470, 4
        %v7473 = vor.u32 %v7472, %v7468
        %v7474 = vrot.slane %v7473, 4
        %v7476 = vshll.u32 %v7164, 16
        %v7478 = vrot.slane %v7476, 5
        %v7479 = vsel %vm1801, %v7474, %v7478
        %v7481 = vshrl.u32 %v7130, 16
        %v7483 = vrot.slane %v7481, 4
        %v7484 = vshll.u32 %v7130, 16
        %v7486 = vrot.slane %v7484, 5
        %v7487 = vor.u32 %v7483, %v7486
        %v7488 = vrot.slane %v7487, 4
        %v7490 = vshll.u32 %v7131, 16
        %v7492 = vrot.slane %v7490, 5
        %v7493 = vsel %vm1801, %v7488, %v7492
        %v7494 = vshrl.u32 %v7131, 16
        %v7496 = vrot.slane %v7494, 4
        %v7497 = vor.u32 %v7496, %v7492
        %v7498 = vrot.slane %v7497, 4
        %v7500 = vshll.u32 %v7165, 16
        %v7502 = vrot.slane %v7500, 5
        %v7503 = vsel %vm1801, %v7498, %v7502
        %v7505 = vshrl.u32 %v7132, 16
        %v7507 = vrot.slane %v7505, 4
        %v7508 = vshll.u32 %v7132, 16
        %v7510 = vrot.slane %v7508, 5
        %v7511 = vor.u32 %v7507, %v7510
        %v7512 = vrot.slane %v7511, 4
        %v7514 = vshll.u32 %v7133, 16
        %v7516 = vrot.slane %v7514, 5
        %v7517 = vsel %vm1801, %v7512, %v7516
        %v7518 = vshrl.u32 %v7133, 16
        %v7520 = vrot.slane %v7518, 4
        %v7521 = vor.u32 %v7520, %v7516
        %v7522 = vrot.slane %v7521, 4
        %v7524 = vshll.u32 %v7166, 16
        %v7526 = vrot.slane %v7524, 5
        %v7527 = vsel %vm1801, %v7522, %v7526
        %v7529 = vshrl.u32 %v7134, 16
        %v7531 = vrot.slane %v7529, 4
        %v7532 = vshll.u32 %v7134, 16
        %v7534 = vrot.slane %v7532, 5
        %v7535 = vor.u32 %v7531, %v7534
        %v7536 = vrot.slane %v7535, 4
        %v7538 = vshll.u32 %v7135, 16
        %v7540 = vrot.slane %v7538, 5
        %v7541 = vsel %vm1801, %v7536, %v7540
        %v7542 = vshrl.u32 %v7135, 16
        %v7544 = vrot.slane %v7542, 4
        %v7545 = vor.u32 %v7544, %v7540
        %v7546 = vrot.slane %v7545, 4
        %v7548 = vshll.u32 %v7167, 16
        %v7550 = vrot.slane %v7548, 5
        %v7551 = vsel %vm1801, %v7546, %v7550
        %s7552 = scalar_lea.vmem %s6, 64
        %v7553 = vld [vmem:[%s7552] sm:$0xf]
        %v7554 = vld [vmem:[%s7552 + $0x4] sm:$0xf]
        %v7555 = vld [vmem:[%s7552 + $0x8] sm:$0xf]
        %v7556 = vld [vmem:[%s7552 + $0xc] sm:$0xf]
        %v7557 = vld [vmem:[%s7552 + $0x10] sm:$0xf]
        %v7558 = vld [vmem:[%s7552 + $0x14] sm:$0xf]
        %v7559 = vld [vmem:[%s7552 + $0x18] sm:$0xf]
        %v7560 = vld [vmem:[%s7552 + $0x1c] sm:$0xf]
        %v7561 = vld [vmem:[%s7552 + $0x20] sm:$0xf]
        %v7562 = vld [vmem:[%s7552 + $0x24] sm:$0xf]
        %v7563 = vld [vmem:[%s7552 + $0x28] sm:$0xf]
        %v7564 = vld [vmem:[%s7552 + $0x2c] sm:$0xf]
        %v7565 = vld [vmem:[%s7552 + $0x30] sm:$0xf]
        %v7566 = vld [vmem:[%s7552 + $0x34] sm:$0xf]
        %v7567 = vld [vmem:[%s7552 + $0x38] sm:$0xf]
        %v7568 = vld [vmem:[%s7552 + $0x3c] sm:$0xf]
        %v7569 = vunpack.c.l.b16 %v7181
        %v7570 = vunpack.c.l.b16 %v7191
        %v7571 = vunpack.c.l.b16 %v7205
        %v7572 = vunpack.c.l.b16 %v7215
        %v7573 = vunpack.c.l.b16 %v7229
        %v7574 = vunpack.c.l.b16 %v7239
        %v7575 = vunpack.c.l.b16 %v7253
        %v7576 = vunpack.c.l.b16 %v7263
        %v7577 = vunpack.c.l.b16 %v7277
        %v7578 = vunpack.c.l.b16 %v7287
        %v7579 = vunpack.c.l.b16 %v7301
        %v7580 = vunpack.c.l.b16 %v7311
        %v7581 = vunpack.c.l.b16 %v7325
        %v7582 = vunpack.c.l.b16 %v7335
        %v7583 = vunpack.c.l.b16 %v7349
        %v7584 = vunpack.c.l.b16 %v7359
        %v7585 = vunpack.c.l.b16 %v7373
        %v7586 = vunpack.c.l.b16 %v7383
        %v7587 = vunpack.c.l.b16 %v7397
        %v7588 = vunpack.c.l.b16 %v7407
        %v7589 = vunpack.c.l.b16 %v7421
        %v7590 = vunpack.c.l.b16 %v7431
        %v7591 = vunpack.c.l.b16 %v7445
        %v7592 = vunpack.c.l.b16 %v7455
        %v7593 = vunpack.c.l.b16 %v7469
        %v7594 = vunpack.c.l.b16 %v7479
        %v7595 = vunpack.c.l.b16 %v7493
        %v7596 = vunpack.c.l.b16 %v7503
        %v7597 = vunpack.c.l.b16 %v7517
        %v7598 = vunpack.c.l.b16 %v7527
        %v7599 = vunpack.c.l.b16 %v7541
        %v7600 = vunpack.c.l.b16 %v7551
        %v7601 = vpack.c.b16 %v7570, %v7569
        %v7602 = vpack.c.b16 %v7572, %v7571
        %v7603 = vpack.c.b16 %v7574, %v7573
        %v7604 = vpack.c.b16 %v7576, %v7575
        %v7605 = vpack.c.b16 %v7578, %v7577
        %v7606 = vpack.c.b16 %v7580, %v7579
        %v7607 = vpack.c.b16 %v7582, %v7581
        %v7608 = vpack.c.b16 %v7584, %v7583
        %v7609 = vpack.c.b16 %v7586, %v7585
        %v7610 = vpack.c.b16 %v7588, %v7587
        %v7611 = vpack.c.b16 %v7590, %v7589
        %v7612 = vpack.c.b16 %v7592, %v7591
        %v7613 = vpack.c.b16 %v7594, %v7593
        %v7614 = vpack.c.b16 %v7596, %v7595
        %v7615 = vpack.c.b16 %v7598, %v7597
        %v7616 = vpack.c.b16 %v7600, %v7599
        %v7649 = vunpack.c.l.b16 %v7553
        %v7650 = vunpack.c.l.b16 %v7554
        %v7651 = vunpack.c.l.b16 %v7555
        %v7652 = vunpack.c.l.b16 %v7556
        %v7653 = vunpack.c.l.b16 %v7557
        %v7654 = vunpack.c.l.b16 %v7558
        %v7655 = vunpack.c.l.b16 %v7559
        %v7656 = vunpack.c.l.b16 %v7560
        %v7657 = vunpack.c.l.b16 %v7561
        %v7658 = vunpack.c.l.b16 %v7562
        %v7659 = vunpack.c.l.b16 %v7563
        %v7660 = vunpack.c.l.b16 %v7564
        %v7661 = vunpack.c.l.b16 %v7565
        %v7662 = vunpack.c.l.b16 %v7566
        %v7663 = vunpack.c.l.b16 %v7567
        %v7664 = vunpack.c.l.b16 %v7568
        %v7665 = vpack.c.b16 %v7650, %v7649
        %v7666 = vpack.c.b16 %v7652, %v7651
        %v7667 = vpack.c.b16 %v7654, %v7653
        %v7668 = vpack.c.b16 %v7656, %v7655
        %v7669 = vpack.c.b16 %v7658, %v7657
        %v7670 = vpack.c.b16 %v7660, %v7659
        %v7671 = vpack.c.b16 %v7662, %v7661
        %v7672 = vpack.c.b16 %v7664, %v7663
        %7681 = vmatprep.subr.bf16.mxu0 0
        %7682 = vmatpush1.bf16.msra.mxu0 %v7665
        %7683 = vmatprep.subr.bf16.mxu0 0
        %7684 = vmatpush1.bf16.msra.mxu0 %v7666
        %7685 = vmatprep.subr.bf16.mxu0 0
        %7686 = vmatpush1.bf16.msra.mxu0 %v7667
        %7687 = vmatprep.subr.bf16.mxu0 0
        %7688 = vmatpush1.bf16.msra.mxu0 %v7668
        %7689 = vmatprep.subr.bf16.mxu0 0
        %7690 = vmatpush1.bf16.msra.mxu0 %v7669
        %7691 = vmatprep.subr.bf16.mxu0 0
        %7692 = vmatpush1.bf16.msra.mxu0 %v7670
        %7693 = vmatprep.subr.bf16.mxu0 0
        %7694 = vmatpush1.bf16.msra.mxu0 %v7671
        %7695 = vmatprep.subr.bf16.mxu0 0
        %7696 = vmatpush1.bf16.msra.mxu0 %v7672
        %7697 = vmatprep.subr.bf16.mxu0 0
        %7698 = vmatpush1.bf16.msra.mxu0 0
        %7699 = vmatprep.subr.bf16.mxu0 0
        %7700 = vmatpush1.bf16.msra.mxu0 0
        %7701 = vmatprep.subr.bf16.mxu0 0
        %7702 = vmatpush1.bf16.msra.mxu0 0
        %7703 = vmatprep.subr.bf16.mxu0 0
        %7704 = vmatpush1.bf16.msra.mxu0 0
        %7705 = vmatprep.subr.bf16.mxu0 0
        %7706 = vmatpush1.bf16.msra.mxu0 0
        %7707 = vmatprep.subr.bf16.mxu0 0
        %7708 = vmatpush1.bf16.msra.mxu0 0
        %7709 = vmatprep.subr.bf16.mxu0 0
        %7710 = vmatpush1.bf16.msra.mxu0 0
        %7711 = vmatprep.subr.bf16.mxu0 0
        %7712 = vmatpush1.bf16.msra.mxu0 0
        %7713 = vmatprep.mubr.bf16.mxu0 0
        %7714 = vmatmul.mubr.bf16.gmra.mrb[0].mxu0 %v7601
        %v7715 = vpop.f32.mrb[0].mxu0
        %v7716 = vadd.f32 0.0, %v7715
        %v7717 = vpop.f32.mrb[0].mxu0
        %v7718 = vpop.f32.mrb[0].mxu0
        %v7719 = vadd.f32 0.0, %v7718
        %v7720 = vpop.f32.mrb[0].mxu0
        %7721 = vmatprep.mubr.bf16.mxu0 0
        %7722 = vmatmul.mubr.bf16.gmra.mrb[0].mxu0 %v7602
        %v7723 = vpop.f32.mrb[0].mxu0
        %v7724 = vadd.f32 0.0, %v7723
        %v7725 = vpop.f32.mrb[0].mxu0
        %v7726 = vpop.f32.mrb[0].mxu0
        %v7727 = vadd.f32 0.0, %v7726
        %v7728 = vpop.f32.mrb[0].mxu0
        %7729 = vmatprep.mubr.bf16.mxu0 0
        %7730 = vmatmul.mubr.bf16.gmra.mrb[0].mxu0 %v7603
        %v7731 = vpop.f32.mrb[0].mxu0
        %v7732 = vadd.f32 0.0, %v7731
        %v7733 = vpop.f32.mrb[0].mxu0
        %v7734 = vpop.f32.mrb[0].mxu0
        %v7735 = vadd.f32 0.0, %v7734
        %v7736 = vpop.f32.mrb[0].mxu0
        %7737 = vmatprep.mubr.bf16.mxu0 0
        %7738 = vmatmul.mubr.bf16.gmra.mrb[0].mxu0 %v7604
        %v7739 = vpop.f32.mrb[0].mxu0
        %v7740 = vadd.f32 0.0, %v7739
        %v7741 = vpop.f32.mrb[0].mxu0
        %v7742 = vpop.f32.mrb[0].mxu0
        %v7743 = vadd.f32 0.0, %v7742
        %v7744 = vpop.f32.mrb[0].mxu0
        %7745 = vmatprep.mubr.bf16.mxu0 0
        %7746 = vmatmul.mubr.bf16.gmra.mrb[0].mxu0 %v7605
        %v7747 = vpop.f32.mrb[0].mxu0
        %v7748 = vadd.f32 0.0, %v7747
        %v7749 = vpop.f32.mrb[0].mxu0
        %v7750 = vpop.f32.mrb[0].mxu0
        %v7751 = vadd.f32 0.0, %v7750
        %v7752 = vpop.f32.mrb[0].mxu0
        %7753 = vmatprep.mubr.bf16.mxu0 0
        %7754 = vmatmul.mubr.bf16.gmra.mrb[0].mxu0 %v7606
        %v7755 = vpop.f32.mrb[0].mxu0
        %v7756 = vadd.f32 0.0, %v7755
        %v7757 = vpop.f32.mrb[0].mxu0
        %v7758 = vpop.f32.mrb[0].mxu0
        %v7759 = vadd.f32 0.0, %v7758
        %v7760 = vpop.f32.mrb[0].mxu0
        %7761 = vmatprep.mubr.bf16.mxu0 0
        %7762 = vmatmul.mubr.bf16.gmra.mrb[0].mxu0 %v7607
        %v7763 = vpop.f32.mrb[0].mxu0
        %v7764 = vadd.f32 0.0, %v7763
        %v7765 = vpop.f32.mrb[0].mxu0
        %v7766 = vpop.f32.mrb[0].mxu0
        %v7767 = vadd.f32 0.0, %v7766
        %v7768 = vpop.f32.mrb[0].mxu0
        %7769 = vmatprep.mubr.bf16.mxu0 0
        %7770 = vmatmul.mubr.bf16.gmra.mrb[0].mxu0 %v7608
        %v7771 = vpop.f32.mrb[0].mxu0
        %v7772 = vadd.f32 0.0, %v7771
        %v7773 = vpop.f32.mrb[0].mxu0
        %v7774 = vpop.f32.mrb[0].mxu0
        %v7775 = vadd.f32 0.0, %v7774
        %v7776 = vpop.f32.mrb[0].mxu0
        %7777 = vmatprep.mubr.bf16.mxu0 0
        %7778 = vmatmul.mubr.bf16.gmra.mrb[0].mxu0 %v7609
        %v7779 = vpop.f32.mrb[0].mxu0
        %v7780 = vadd.f32 0.0, %v7779
        %v7781 = vpop.f32.mrb[0].mxu0
        %v7782 = vpop.f32.mrb[0].mxu0
        %v7783 = vadd.f32 0.0, %v7782
        %v7784 = vpop.f32.mrb[0].mxu0
        %7785 = vmatprep.mubr.bf16.mxu0 0
        %7786 = vmatmul.mubr.bf16.gmra.mrb[0].mxu0 %v7610
        %v7787 = vpop.f32.mrb[0].mxu0
        %v7788 = vadd.f32 0.0, %v7787
        %v7789 = vpop.f32.mrb[0].mxu0
        %v7790 = vpop.f32.mrb[0].mxu0
        %v7791 = vadd.f32 0.0, %v7790
        %v7792 = vpop.f32.mrb[0].mxu0
        %7793 = vmatprep.mubr.bf16.mxu0 0
        %7794 = vmatmul.mubr.bf16.gmra.mrb[0].mxu0 %v7611
        %v7795 = vpop.f32.mrb[0].mxu0
        %v7796 = vadd.f32 0.0, %v7795
        %v7797 = vpop.f32.mrb[0].mxu0
        %v7798 = vpop.f32.mrb[0].mxu0
        %v7799 = vadd.f32 0.0, %v7798
        %v7800 = vpop.f32.mrb[0].mxu0
        %7801 = vmatprep.mubr.bf16.mxu0 0
        %7802 = vmatmul.mubr.bf16.gmra.mrb[0].mxu0 %v7612
        %v7803 = vpop.f32.mrb[0].mxu0
        %v7804 = vadd.f32 0.0, %v7803
        %v7805 = vpop.f32.mrb[0].mxu0
        %v7806 = vpop.f32.mrb[0].mxu0
        %v7807 = vadd.f32 0.0, %v7806
        %v7808 = vpop.f32.mrb[0].mxu0
        %7809 = vmatprep.mubr.bf16.mxu0 0
        %7810 = vmatmul.mubr.bf16.gmra.mrb[0].mxu0 %v7613
        %v7811 = vpop.f32.mrb[0].mxu0
        %v7812 = vadd.f32 0.0, %v7811
        %v7813 = vpop.f32.mrb[0].mxu0
        %v7814 = vpop.f32.mrb[0].mxu0
        %v7815 = vadd.f32 0.0, %v7814
        %v7816 = vpop.f32.mrb[0].mxu0
        %7817 = vmatprep.mubr.bf16.mxu0 0
        %7818 = vmatmul.mubr.bf16.gmra.mrb[0].mxu0 %v7614
        %v7819 = vpop.f32.mrb[0].mxu0
        %v7820 = vadd.f32 0.0, %v7819
        %v7821 = vpop.f32.mrb[0].mxu0
        %v7822 = vpop.f32.mrb[0].mxu0
        %v7823 = vadd.f32 0.0, %v7822
        %v7824 = vpop.f32.mrb[0].mxu0
        %7825 = vmatprep.mubr.bf16.mxu0 0
        %7826 = vmatmul.mubr.bf16.gmra.mrb[0].mxu0 %v7615
        %v7827 = vpop.f32.mrb[0].mxu0
        %v7828 = vadd.f32 0.0, %v7827
        %v7829 = vpop.f32.mrb[0].mxu0
        %v7830 = vpop.f32.mrb[0].mxu0
        %v7831 = vadd.f32 0.0, %v7830
        %v7832 = vpop.f32.mrb[0].mxu0
        %7833 = vmatprep.mubr.bf16.mxu0 0
        %7834 = vmatmul.mubr.bf16.gmra.mrb[0].mxu0 %v7616
        %v7835 = vpop.f32.mrb[0].mxu0
        %v7836 = vadd.f32 0.0, %v7835
        %v7837 = vpop.f32.mrb[0].mxu0
        %v7838 = vpop.f32.mrb[0].mxu0
        %v7839 = vadd.f32 0.0, %v7838
        %v7840 = vpop.f32.mrb[0].mxu0
        %7841 = vdwg.mxu0
        %v7874 = vunpack.c.l.b16 %v7104
        %v7875 = vunpack.c.l.b16 %v7105
        %v7876 = vunpack.c.l.b16 %v7106
        %v7877 = vunpack.c.l.b16 %v7107
        %v7878 = vunpack.c.l.b16 %v7108
        %v7879 = vunpack.c.l.b16 %v7109
        %v7880 = vunpack.c.l.b16 %v7110
        %v7881 = vunpack.c.l.b16 %v7111
        %v7882 = vunpack.c.l.b16 %v7112
        %v7883 = vunpack.c.l.b16 %v7113
        %v7884 = vunpack.c.l.b16 %v7114
        %v7885 = vunpack.c.l.b16 %v7115
        %v7886 = vunpack.c.l.b16 %v7116
        %v7887 = vunpack.c.l.b16 %v7117
        %v7888 = vunpack.c.l.b16 %v7118
        %v7889 = vunpack.c.l.b16 %v7119
        %v7890 = vunpack.c.l.b16 %v7120
        %v7891 = vunpack.c.l.b16 %v7121
        %v7892 = vunpack.c.l.b16 %v7122
        %v7893 = vunpack.c.l.b16 %v7123
        %v7894 = vunpack.c.l.b16 %v7124
        %v7895 = vunpack.c.l.b16 %v7125
        %v7896 = vunpack.c.l.b16 %v7126
        %v7897 = vunpack.c.l.b16 %v7127
        %v7898 = vunpack.c.l.b16 %v7128
        %v7899 = vunpack.c.l.b16 %v7129
        %v7900 = vunpack.c.l.b16 %v7130
        %v7901 = vunpack.c.l.b16 %v7131
        %v7902 = vunpack.c.l.b16 %v7132
        %v7903 = vunpack.c.l.b16 %v7133
        %v7904 = vunpack.c.l.b16 %v7134
        %v7905 = vunpack.c.l.b16 %v7135
        %v7906 = vpack.c.b16 %v7875, %v7874
        %v7907 = vpack.c.b16 %v7877, %v7876
        %v7908 = vpack.c.b16 %v7879, %v7878
        %v7909 = vpack.c.b16 %v7881, %v7880
        %v7910 = vpack.c.b16 %v7883, %v7882
        %v7911 = vpack.c.b16 %v7885, %v7884
        %v7912 = vpack.c.b16 %v7887, %v7886
        %v7913 = vpack.c.b16 %v7889, %v7888
        %v7914 = vpack.c.b16 %v7891, %v7890
        %v7915 = vpack.c.b16 %v7893, %v7892
        %v7916 = vpack.c.b16 %v7895, %v7894
        %v7917 = vpack.c.b16 %v7897, %v7896
        %v7918 = vpack.c.b16 %v7899, %v7898
        %v7919 = vpack.c.b16 %v7901, %v7900
        %v7920 = vpack.c.b16 %v7903, %v7902
        %v7921 = vpack.c.b16 %v7905, %v7904
        %v7954 = vunpack.c.l.b16 %v7136
        %v7955 = vunpack.c.l.b16 %v7137
        %v7956 = vunpack.c.l.b16 %v7138
        %v7957 = vunpack.c.l.b16 %v7139
        %v7958 = vunpack.c.l.b16 %v7140
        %v7959 = vunpack.c.l.b16 %v7141
        %v7960 = vunpack.c.l.b16 %v7142
        %v7961 = vunpack.c.l.b16 %v7143
        %v7962 = vunpack.c.l.b16 %v7144
        %v7963 = vunpack.c.l.b16 %v7145
        %v7964 = vunpack.c.l.b16 %v7146
        %v7965 = vunpack.c.l.b16 %v7147
        %v7966 = vunpack.c.l.b16 %v7148
        %v7967 = vunpack.c.l.b16 %v7149
        %v7968 = vunpack.c.l.b16 %v7150
        %v7969 = vunpack.c.l.b16 %v7151
        %v7970 = vpack.c.b16 %v7955, %v7954
        %v7971 = vpack.c.b16 %v7957, %v7956
        %v7972 = vpack.c.b16 %v7959, %v7958
        %v7973 = vpack.c.b16 %v7961, %v7960
        %v7974 = vpack.c.b16 %v7963, %v7962
        %v7975 = vpack.c.b16 %v7965, %v7964
        %v7976 = vpack.c.b16 %v7967, %v7966
        %v7977 = vpack.c.b16 %v7969, %v7968
        %7986 = vmatprep.subr.bf16.mxu0 0
        %7987 = vmatpush1.bf16.msra.mxu0 %v7970
        %7988 = vmatprep.subr.bf16.mxu0 0
        %7989 = vmatpush1.bf16.msra.mxu0 %v7971
        %7990 = vmatprep.subr.bf16.mxu0 0
        %7991 = vmatpush1.bf16.msra.mxu0 %v7972
        %7992 = vmatprep.subr.bf16.mxu0 0
        %7993 = vmatpush1.bf16.msra.mxu0 %v7973
        %7994 = vmatprep.subr.bf16.mxu0 0
        %7995 = vmatpush1.bf16.msra.mxu0 %v7974
        %7996 = vmatprep.subr.bf16.mxu0 0
        %7997 = vmatpush1.bf16.msra.mxu0 %v7975
        %7998 = vmatprep.subr.bf16.mxu0 0
        %7999 = vmatpush1.bf16.msra.mxu0 %v7976
        %8000 = vmatprep.subr.bf16.mxu0 0
        %8001 = vmatpush1.bf16.msra.mxu0 %v7977
        %8002 = vmatprep.subr.bf16.mxu0 0
        %8003 = vmatpush1.bf16.msra.mxu0 0
        %8004 = vmatprep.subr.bf16.mxu0 0
        %8005 = vmatpush1.bf16.msra.mxu0 0
        %8006 = vmatprep.subr.bf16.mxu0 0
        %8007 = vmatpush1.bf16.msra.mxu0 0
        %8008 = vmatprep.subr.bf16.mxu0 0
        %8009 = vmatpush1.bf16.msra.mxu0 0
        %8010 = vmatprep.subr.bf16.mxu0 0
        %8011 = vmatpush1.bf16.msra.mxu0 0
        %8012 = vmatprep.subr.bf16.mxu0 0
        %8013 = vmatpush1.bf16.msra.mxu0 0
        %8014 = vmatprep.subr.bf16.mxu0 0
        %8015 = vmatpush1.bf16.msra.mxu0 0
        %8016 = vmatprep.subr.bf16.mxu0 0
        %8017 = vmatpush1.bf16.msra.mxu0 0
        %8018 = vmatprep.mubr.bf16.mxu0 0
        %8019 = vmatmul.mubr.bf16.gmra.mrb[0].mxu0 %v7906
        %v8020 = vpop.f32.mrb[0].mxu0
        %v8021 = vadd.f32 %v7716, %v8020
        %v8022 = vpop.f32.mrb[0].mxu0
        %v8023 = vpop.f32.mrb[0].mxu0
        %v8024 = vadd.f32 %v7719, %v8023
        %v8025 = vpop.f32.mrb[0].mxu0
        %8026 = vmatprep.mubr.bf16.mxu0 0
        %8027 = vmatmul.mubr.bf16.gmra.mrb[0].mxu0 %v7907
        %v8028 = vpop.f32.mrb[0].mxu0
        %v8029 = vadd.f32 %v7724, %v8028
        %v8030 = vpop.f32.mrb[0].mxu0
        %v8031 = vpop.f32.mrb[0].mxu0
        %v8032 = vadd.f32 %v7727, %v8031
        %v8033 = vpop.f32.mrb[0].mxu0
        %8034 = vmatprep.mubr.bf16.mxu0 0
        %8035 = vmatmul.mubr.bf16.gmra.mrb[0].mxu0 %v7908
        %v8036 = vpop.f32.mrb[0].mxu0
        %v8037 = vadd.f32 %v7732, %v8036
        %v8038 = vpop.f32.mrb[0].mxu0
        %v8039 = vpop.f32.mrb[0].mxu0
        %v8040 = vadd.f32 %v7735, %v8039
        %v8041 = vpop.f32.mrb[0].mxu0
        %8042 = vmatprep.mubr.bf16.mxu0 0
        %8043 = vmatmul.mubr.bf16.gmra.mrb[0].mxu0 %v7909
        %v8044 = vpop.f32.mrb[0].mxu0
        %v8045 = vadd.f32 %v7740, %v8044
        %v8046 = vpop.f32.mrb[0].mxu0
        %v8047 = vpop.f32.mrb[0].mxu0
        %v8048 = vadd.f32 %v7743, %v8047
        %v8049 = vpop.f32.mrb[0].mxu0
        %8050 = vmatprep.mubr.bf16.mxu0 0
        %8051 = vmatmul.mubr.bf16.gmra.mrb[0].mxu0 %v7910
        %v8052 = vpop.f32.mrb[0].mxu0
        %v8053 = vadd.f32 %v7748, %v8052
        %v8054 = vpop.f32.mrb[0].mxu0
        %v8055 = vpop.f32.mrb[0].mxu0
        %v8056 = vadd.f32 %v7751, %v8055
        %v8057 = vpop.f32.mrb[0].mxu0
        %8058 = vmatprep.mubr.bf16.mxu0 0
        %8059 = vmatmul.mubr.bf16.gmra.mrb[0].mxu0 %v7911
        %v8060 = vpop.f32.mrb[0].mxu0
        %v8061 = vadd.f32 %v7756, %v8060
        %v8062 = vpop.f32.mrb[0].mxu0
        %v8063 = vpop.f32.mrb[0].mxu0
        %v8064 = vadd.f32 %v7759, %v8063
        %v8065 = vpop.f32.mrb[0].mxu0
        %8066 = vmatprep.mubr.bf16.mxu0 0
        %8067 = vmatmul.mubr.bf16.gmra.mrb[0].mxu0 %v7912
        %v8068 = vpop.f32.mrb[0].mxu0
        %v8069 = vadd.f32 %v7764, %v8068
        %v8070 = vpop.f32.mrb[0].mxu0
        %v8071 = vpop.f32.mrb[0].mxu0
        %v8072 = vadd.f32 %v7767, %v8071
        %v8073 = vpop.f32.mrb[0].mxu0
        %8074 = vmatprep.mubr.bf16.mxu0 0
        %8075 = vmatmul.mubr.bf16.gmra.mrb[0].mxu0 %v7913
        %v8076 = vpop.f32.mrb[0].mxu0
        %v8077 = vadd.f32 %v7772, %v8076
        %v8078 = vpop.f32.mrb[0].mxu0
        %v8079 = vpop.f32.mrb[0].mxu0
        %v8080 = vadd.f32 %v7775, %v8079
        %v8081 = vpop.f32.mrb[0].mxu0
        %8082 = vmatprep.mubr.bf16.mxu0 0
        %8083 = vmatmul.mubr.bf16.gmra.mrb[0].mxu0 %v7914
        %v8084 = vpop.f32.mrb[0].mxu0
        %v8085 = vadd.f32 %v7780, %v8084
        %v8086 = vpop.f32.mrb[0].mxu0
        %v8087 = vpop.f32.mrb[0].mxu0
        %v8088 = vadd.f32 %v7783, %v8087
        %v8089 = vpop.f32.mrb[0].mxu0
        %8090 = vmatprep.mubr.bf16.mxu0 0
        %8091 = vmatmul.mubr.bf16.gmra.mrb[0].mxu0 %v7915
        %v8092 = vpop.f32.mrb[0].mxu0
        %v8093 = vadd.f32 %v7788, %v8092
        %v8094 = vpop.f32.mrb[0].mxu0
        %v8095 = vpop.f32.mrb[0].mxu0
        %v8096 = vadd.f32 %v7791, %v8095
        %v8097 = vpop.f32.mrb[0].mxu0
        %8098 = vmatprep.mubr.bf16.mxu0 0
        %8099 = vmatmul.mubr.bf16.gmra.mrb[0].mxu0 %v7916
        %v8100 = vpop.f32.mrb[0].mxu0
        %v8101 = vadd.f32 %v7796, %v8100
        %v8102 = vpop.f32.mrb[0].mxu0
        %v8103 = vpop.f32.mrb[0].mxu0
        %v8104 = vadd.f32 %v7799, %v8103
        %v8105 = vpop.f32.mrb[0].mxu0
        %8106 = vmatprep.mubr.bf16.mxu0 0
        %8107 = vmatmul.mubr.bf16.gmra.mrb[0].mxu0 %v7917
        %v8108 = vpop.f32.mrb[0].mxu0
        %v8109 = vadd.f32 %v7804, %v8108
        %v8110 = vpop.f32.mrb[0].mxu0
        %v8111 = vpop.f32.mrb[0].mxu0
        %v8112 = vadd.f32 %v7807, %v8111
        %v8113 = vpop.f32.mrb[0].mxu0
        %8114 = vmatprep.mubr.bf16.mxu0 0
        %8115 = vmatmul.mubr.bf16.gmra.mrb[0].mxu0 %v7918
        %v8116 = vpop.f32.mrb[0].mxu0
        %v8117 = vadd.f32 %v7812, %v8116
        %v8118 = vpop.f32.mrb[0].mxu0
        %v8119 = vpop.f32.mrb[0].mxu0
        %v8120 = vadd.f32 %v7815, %v8119
        %v8121 = vpop.f32.mrb[0].mxu0
        %8122 = vmatprep.mubr.bf16.mxu0 0
        %8123 = vmatmul.mubr.bf16.gmra.mrb[0].mxu0 %v7919
        %v8124 = vpop.f32.mrb[0].mxu0
        %v8125 = vadd.f32 %v7820, %v8124
        %v8126 = vpop.f32.mrb[0].mxu0
        %v8127 = vpop.f32.mrb[0].mxu0
        %v8128 = vadd.f32 %v7823, %v8127
        %v8129 = vpop.f32.mrb[0].mxu0
        %8130 = vmatprep.mubr.bf16.mxu0 0
        %8131 = vmatmul.mubr.bf16.gmra.mrb[0].mxu0 %v7920
        %v8132 = vpop.f32.mrb[0].mxu0
        %v8133 = vadd.f32 %v7828, %v8132
        %v8134 = vpop.f32.mrb[0].mxu0
        %v8135 = vpop.f32.mrb[0].mxu0
        %v8136 = vadd.f32 %v7831, %v8135
        %v8137 = vpop.f32.mrb[0].mxu0
        %8138 = vmatprep.mubr.bf16.mxu0 0
        %8139 = vmatmul.mubr.bf16.gmra.mrb[0].mxu0 %v7921
        %v8140 = vpop.f32.mrb[0].mxu0
        %v8141 = vadd.f32 %v7836, %v8140
        %v8142 = vpop.f32.mrb[0].mxu0
        %v8143 = vpop.f32.mrb[0].mxu0
        %v8144 = vadd.f32 %v7839, %v8143
        %v8145 = vpop.f32.mrb[0].mxu0
        %8146 = vdwg.mxu0
        %v8147 = vld [vmem:[#allocation3] sm:$0xe]
        %v8148 = vld [vmem:[#allocation3 + $0xc] sm:$0xe]
        %v8149 = vld [vmem:[#allocation3 + $0x18] sm:$0xe]
        %v8150 = vld [vmem:[#allocation3 + $0x24] sm:$0xe]
        %v8151 = vld [vmem:[#allocation3 + $0x30] sm:$0xe]
        %v8152 = vld [vmem:[#allocation3 + $0x3c] sm:$0xe]
        %v8153 = vld [vmem:[#allocation3 + $0x48] sm:$0xe]
        %v8154 = vld [vmem:[#allocation3 + $0x54] sm:$0xe]
        %v8155 = vld [vmem:[#allocation3 + $0x60] sm:$0xe]
        %v8156 = vld [vmem:[#allocation3 + $0x6c] sm:$0xe]
        %v8157 = vld [vmem:[#allocation3 + $0x78] sm:$0xe]
        %v8158 = vld [vmem:[#allocation3 + $0x84] sm:$0xe]
        %v8159 = vld [vmem:[#allocation3 + $0x90] sm:$0xe]
        %v8160 = vld [vmem:[#allocation3 + $0x9c] sm:$0xe]
        %v8161 = vld [vmem:[#allocation3 + $0xa8] sm:$0xe]
        %v8162 = vld [vmem:[#allocation3 + $0xb4] sm:$0xe]
        %v8195 = vrot.slane %v8147, 5
        %v8196 = vrot.slane %v8195, 4
        %v8197 = vrot.slane %v7105, 5
        %v8198 = vsel %vm2792, %v8196, %v8197
        %v8199 = vrot.slane %v8197, 4
        %v8200 = vrot.slane %v7152, 5
        %v8201 = vsel %vm2792, %v8199, %v8200
        %v8202 = vrot.slane %v8148, 5
        %v8203 = vrot.slane %v8202, 4
        %v8204 = vrot.slane %v7107, 5
        %v8205 = vsel %vm2792, %v8203, %v8204
        %v8206 = vrot.slane %v8204, 4
        %v8207 = vrot.slane %v7153, 5
        %v8208 = vsel %vm2792, %v8206, %v8207
        %v8209 = vrot.slane %v8149, 5
        %v8210 = vrot.slane %v8209, 4
        %v8211 = vrot.slane %v7109, 5
        %v8212 = vsel %vm2792, %v8210, %v8211
        %v8213 = vrot.slane %v8211, 4
        %v8214 = vrot.slane %v7154, 5
        %v8215 = vsel %vm2792, %v8213, %v8214
        %v8216 = vrot.slane %v8150, 5
        %v8217 = vrot.slane %v8216, 4
        %v8218 = vrot.slane %v7111, 5
        %v8219 = vsel %vm2792, %v8217, %v8218
        %v8220 = vrot.slane %v8218, 4
        %v8221 = vrot.slane %v7155, 5
        %v8222 = vsel %vm2792, %v8220, %v8221
        %v8223 = vrot.slane %v8151, 5
        %v8224 = vrot.slane %v8223, 4
        %v8225 = vrot.slane %v7113, 5
        %v8226 = vsel %vm2792, %v8224, %v8225
        %v8227 = vrot.slane %v8225, 4
        %v8228 = vrot.slane %v7156, 5
        %v8229 = vsel %vm2792, %v8227, %v8228
        %v8230 = vrot.slane %v8152, 5
        %v8231 = vrot.slane %v8230, 4
        %v8232 = vrot.slane %v7115, 5
        %v8233 = vsel %vm2792, %v8231, %v8232
        %v8234 = vrot.slane %v8232, 4
        %v8235 = vrot.slane %v7157, 5
        %v8236 = vsel %vm2792, %v8234, %v8235
        %v8237 = vrot.slane %v8153, 5
        %v8238 = vrot.slane %v8237, 4
        %v8239 = vrot.slane %v7117, 5
        %v8240 = vsel %vm2792, %v8238, %v8239
        %v8241 = vrot.slane %v8239, 4
        %v8242 = vrot.slane %v7158, 5
        %v8243 = vsel %vm2792, %v8241, %v8242
        %v8244 = vrot.slane %v8154, 5
        %v8245 = vrot.slane %v8244, 4
        %v8246 = vrot.slane %v7119, 5
        %v8247 = vsel %vm2792, %v8245, %v8246
        %v8248 = vrot.slane %v8246, 4
        %v8249 = vrot.slane %v7159, 5
        %v8250 = vsel %vm2792, %v8248, %v8249
        %v8251 = vrot.slane %v8155, 5
        %v8252 = vrot.slane %v8251, 4
        %v8253 = vrot.slane %v7121, 5
        %v8254 = vsel %vm2792, %v8252, %v8253
        %v8255 = vrot.slane %v8253, 4
        %v8256 = vrot.slane %v7160, 5
        %v8257 = vsel %vm2792, %v8255, %v8256
        %v8258 = vrot.slane %v8156, 5
        %v8259 = vrot.slane %v8258, 4
        %v8260 = vrot.slane %v7123, 5
        %v8261 = vsel %vm2792, %v8259, %v8260
        %v8262 = vrot.slane %v8260, 4
        %v8263 = vrot.slane %v7161, 5
        %v8264 = vsel %vm2792, %v8262, %v8263
        %v8265 = vrot.slane %v8157, 5
        %v8266 = vrot.slane %v8265, 4
        %v8267 = vrot.slane %v7125, 5
        %v8268 = vsel %vm2792, %v8266, %v8267
        %v8269 = vrot.slane %v8267, 4
        %v8270 = vrot.slane %v7162, 5
        %v8271 = vsel %vm2792, %v8269, %v8270
        %v8272 = vrot.slane %v8158, 5
        %v8273 = vrot.slane %v8272, 4
        %v8274 = vrot.slane %v7127, 5
        %v8275 = vsel %vm2792, %v8273, %v8274
        %v8276 = vrot.slane %v8274, 4
        %v8277 = vrot.slane %v7163, 5
        %v8278 = vsel %vm2792, %v8276, %v8277
        %v8279 = vrot.slane %v8159, 5
        %v8280 = vrot.slane %v8279, 4
        %v8281 = vrot.slane %v7129, 5
        %v8282 = vsel %vm2792, %v8280, %v8281
        %v8283 = vrot.slane %v8281, 4
        %v8284 = vrot.slane %v7164, 5
        %v8285 = vsel %vm2792, %v8283, %v8284
        %v8286 = vrot.slane %v8160, 5
        %v8287 = vrot.slane %v8286, 4
        %v8288 = vrot.slane %v7131, 5
        %v8289 = vsel %vm2792, %v8287, %v8288
        %v8290 = vrot.slane %v8288, 4
        %v8291 = vrot.slane %v7165, 5
        %v8292 = vsel %vm2792, %v8290, %v8291
        %v8293 = vrot.slane %v8161, 5
        %v8294 = vrot.slane %v8293, 4
        %v8295 = vrot.slane %v7133, 5
        %v8296 = vsel %vm2792, %v8294, %v8295
        %v8297 = vrot.slane %v8295, 4
        %v8298 = vrot.slane %v7166, 5
        %v8299 = vsel %vm2792, %v8297, %v8298
        %v8300 = vrot.slane %v8162, 5
        %v8301 = vrot.slane %v8300, 4
        %v8302 = vrot.slane %v7135, 5
        %v8303 = vsel %vm2792, %v8301, %v8302
        %v8304 = vrot.slane %v8302, 4
        %v8305 = vrot.slane %v7167, 5
        %v8306 = vsel %vm2792, %v8304, %v8305
        %s8307 = scalar_lea.vmem %s6, 128
        %v8308 = vld [vmem:[%s8307] sm:$0xf]
        %v8309 = vld [vmem:[%s8307 + $0x4] sm:$0xf]
        %v8310 = vld [vmem:[%s8307 + $0x8] sm:$0xf]
        %v8311 = vld [vmem:[%s8307 + $0xc] sm:$0xf]
        %v8312 = vld [vmem:[%s8307 + $0x10] sm:$0xf]
        %v8313 = vld [vmem:[%s8307 + $0x14] sm:$0xf]
        %v8314 = vld [vmem:[%s8307 + $0x18] sm:$0xf]
        %v8315 = vld [vmem:[%s8307 + $0x1c] sm:$0xf]
        %v8316 = vld [vmem:[%s8307 + $0x20] sm:$0xf]
        %v8317 = vld [vmem:[%s8307 + $0x24] sm:$0xf]
        %v8318 = vld [vmem:[%s8307 + $0x28] sm:$0xf]
        %v8319 = vld [vmem:[%s8307 + $0x2c] sm:$0xf]
        %v8320 = vld [vmem:[%s8307 + $0x30] sm:$0xf]
        %v8321 = vld [vmem:[%s8307 + $0x34] sm:$0xf]
        %v8322 = vld [vmem:[%s8307 + $0x38] sm:$0xf]
        %v8323 = vld [vmem:[%s8307 + $0x3c] sm:$0xf]
        %v8324 = vunpack.c.l.b16 %v8198
        %v8325 = vunpack.c.l.b16 %v8201
        %v8326 = vunpack.c.l.b16 %v8205
        %v8327 = vunpack.c.l.b16 %v8208
        %v8328 = vunpack.c.l.b16 %v8212
        %v8329 = vunpack.c.l.b16 %v8215
        %v8330 = vunpack.c.l.b16 %v8219
        %v8331 = vunpack.c.l.b16 %v8222
        %v8332 = vunpack.c.l.b16 %v8226
        %v8333 = vunpack.c.l.b16 %v8229
        %v8334 = vunpack.c.l.b16 %v8233
        %v8335 = vunpack.c.l.b16 %v8236
        %v8336 = vunpack.c.l.b16 %v8240
        %v8337 = vunpack.c.l.b16 %v8243
        %v8338 = vunpack.c.l.b16 %v8247
        %v8339 = vunpack.c.l.b16 %v8250
        %v8340 = vunpack.c.l.b16 %v8254
        %v8341 = vunpack.c.l.b16 %v8257
        %v8342 = vunpack.c.l.b16 %v8261
        %v8343 = vunpack.c.l.b16 %v8264
        %v8344 = vunpack.c.l.b16 %v8268
        %v8345 = vunpack.c.l.b16 %v8271
        %v8346 = vunpack.c.l.b16 %v8275
        %v8347 = vunpack.c.l.b16 %v8278
        %v8348 = vunpack.c.l.b16 %v8282
        %v8349 = vunpack.c.l.b16 %v8285
        %v8350 = vunpack.c.l.b16 %v8289
        %v8351 = vunpack.c.l.b16 %v8292
        %v8352 = vunpack.c.l.b16 %v8296
        %v8353 = vunpack.c.l.b16 %v8299
        %v8354 = vunpack.c.l.b16 %v8303
        %v8355 = vunpack.c.l.b16 %v8306
        %v8356 = vpack.c.b16 %v8325, %v8324
        %v8357 = vpack.c.b16 %v8327, %v8326
        %v8358 = vpack.c.b16 %v8329, %v8328
        %v8359 = vpack.c.b16 %v8331, %v8330
        %v8360 = vpack.c.b16 %v8333, %v8332
        %v8361 = vpack.c.b16 %v8335, %v8334
        %v8362 = vpack.c.b16 %v8337, %v8336
        %v8363 = vpack.c.b16 %v8339, %v8338
        %v8364 = vpack.c.b16 %v8341, %v8340
        %v8365 = vpack.c.b16 %v8343, %v8342
        %v8366 = vpack.c.b16 %v8345, %v8344
        %v8367 = vpack.c.b16 %v8347, %v8346
        %v8368 = vpack.c.b16 %v8349, %v8348
        %v8369 = vpack.c.b16 %v8351, %v8350
        %v8370 = vpack.c.b16 %v8353, %v8352
        %v8371 = vpack.c.b16 %v8355, %v8354
        %v8404 = vunpack.c.l.b16 %v8308
        %v8405 = vunpack.c.l.b16 %v8309
        %v8406 = vunpack.c.l.b16 %v8310
        %v8407 = vunpack.c.l.b16 %v8311
        %v8408 = vunpack.c.l.b16 %v8312
        %v8409 = vunpack.c.l.b16 %v8313
        %v8410 = vunpack.c.l.b16 %v8314
        %v8411 = vunpack.c.l.b16 %v8315
        %v8412 = vunpack.c.l.b16 %v8316
        %v8413 = vunpack.c.l.b16 %v8317
        %v8414 = vunpack.c.l.b16 %v8318
        %v8415 = vunpack.c.l.b16 %v8319
        %v8416 = vunpack.c.l.b16 %v8320
        %v8417 = vunpack.c.l.b16 %v8321
        %v8418 = vunpack.c.l.b16 %v8322
        %v8419 = vunpack.c.l.b16 %v8323
        %v8420 = vpack.c.b16 %v8405, %v8404
        %v8421 = vpack.c.b16 %v8407, %v8406
        %v8422 = vpack.c.b16 %v8409, %v8408
        %v8423 = vpack.c.b16 %v8411, %v8410
        %v8424 = vpack.c.b16 %v8413, %v8412
        %v8425 = vpack.c.b16 %v8415, %v8414
        %v8426 = vpack.c.b16 %v8417, %v8416
        %v8427 = vpack.c.b16 %v8419, %v8418
        %8436 = vmatprep.subr.bf16.mxu0 0
        %8437 = vmatpush1.bf16.msra.mxu0 %v8420
        %8438 = vmatprep.subr.bf16.mxu0 0
        %8439 = vmatpush1.bf16.msra.mxu0 %v8421
        %8440 = vmatprep.subr.bf16.mxu0 0
        %8441 = vmatpush1.bf16.msra.mxu0 %v8422
        %8442 = vmatprep.subr.bf16.mxu0 0
        %8443 = vmatpush1.bf16.msra.mxu0 %v8423
        %8444 = vmatprep.subr.bf16.mxu0 0
        %8445 = vmatpush1.bf16.msra.mxu0 %v8424
        %8446 = vmatprep.subr.bf16.mxu0 0
        %8447 = vmatpush1.bf16.msra.mxu0 %v8425
        %8448 = vmatprep.subr.bf16.mxu0 0
        %8449 = vmatpush1.bf16.msra.mxu0 %v8426
        %8450 = vmatprep.subr.bf16.mxu0 0
        %8451 = vmatpush1.bf16.msra.mxu0 %v8427
        %8452 = vmatprep.subr.bf16.mxu0 0
        %8453 = vmatpush1.bf16.msra.mxu0 0
        %8454 = vmatprep.subr.bf16.mxu0 0
        %8455 = vmatpush1.bf16.msra.mxu0 0
        %8456 = vmatprep.subr.bf16.mxu0 0
        %8457 = vmatpush1.bf16.msra.mxu0 0
        %8458 = vmatprep.subr.bf16.mxu0 0
        %8459 = vmatpush1.bf16.msra.mxu0 0
        %8460 = vmatprep.subr.bf16.mxu0 0
        %8461 = vmatpush1.bf16.msra.mxu0 0
        %8462 = vmatprep.subr.bf16.mxu0 0
        %8463 = vmatpush1.bf16.msra.mxu0 0
        %8464 = vmatprep.subr.bf16.mxu0 0
        %8465 = vmatpush1.bf16.msra.mxu0 0
        %8466 = vmatprep.subr.bf16.mxu0 0
        %8467 = vmatpush1.bf16.msra.mxu0 0
        %8468 = vmatprep.mubr.bf16.mxu0 0
        %8469 = vmatmul.mubr.bf16.gmra.mrb[0].mxu0 %v8356
        %v8470 = vpop.f32.mrb[0].mxu0
        %v8471 = vadd.f32 0.0, %v8470
        %v8472 = vpop.f32.mrb[0].mxu0
        %v8473 = vpop.f32.mrb[0].mxu0
        %v8474 = vadd.f32 0.0, %v8473
        %v8475 = vpop.f32.mrb[0].mxu0
        %8476 = vmatprep.mubr.bf16.mxu0 0
        %8477 = vmatmul.mubr.bf16.gmra.mrb[0].mxu0 %v8357
        %v8478 = vpop.f32.mrb[0].mxu0
        %v8479 = vadd.f32 0.0, %v8478
        %v8480 = vpop.f32.mrb[0].mxu0
        %v8481 = vpop.f32.mrb[0].mxu0
        %v8482 = vadd.f32 0.0, %v8481
        %v8483 = vpop.f32.mrb[0].mxu0
        %8484 = vmatprep.mubr.bf16.mxu0 0
        %8485 = vmatmul.mubr.bf16.gmra.mrb[0].mxu0 %v8358
        %v8486 = vpop.f32.mrb[0].mxu0
        %v8487 = vadd.f32 0.0, %v8486
        %v8488 = vpop.f32.mrb[0].mxu0
        %v8489 = vpop.f32.mrb[0].mxu0
        %v8490 = vadd.f32 0.0, %v8489
        %v8491 = vpop.f32.mrb[0].mxu0
        %8492 = vmatprep.mubr.bf16.mxu0 0
        %8493 = vmatmul.mubr.bf16.gmra.mrb[0].mxu0 %v8359
        %v8494 = vpop.f32.mrb[0].mxu0
        %v8495 = vadd.f32 0.0, %v8494
        %v8496 = vpop.f32.mrb[0].mxu0
        %v8497 = vpop.f32.mrb[0].mxu0
        %v8498 = vadd.f32 0.0, %v8497
        %v8499 = vpop.f32.mrb[0].mxu0
        %8500 = vmatprep.mubr.bf16.mxu0 0
        %8501 = vmatmul.mubr.bf16.gmra.mrb[0].mxu0 %v8360
        %v8502 = vpop.f32.mrb[0].mxu0
        %v8503 = vadd.f32 0.0, %v8502
        %v8504 = vpop.f32.mrb[0].mxu0
        %v8505 = vpop.f32.mrb[0].mxu0
        %v8506 = vadd.f32 0.0, %v8505
        %v8507 = vpop.f32.mrb[0].mxu0
        %8508 = vmatprep.mubr.bf16.mxu0 0
        %8509 = vmatmul.mubr.bf16.gmra.mrb[0].mxu0 %v8361
        %v8510 = vpop.f32.mrb[0].mxu0
        %v8511 = vadd.f32 0.0, %v8510
        %v8512 = vpop.f32.mrb[0].mxu0
        %v8513 = vpop.f32.mrb[0].mxu0
        %v8514 = vadd.f32 0.0, %v8513
        %v8515 = vpop.f32.mrb[0].mxu0
        %8516 = vmatprep.mubr.bf16.mxu0 0
        %8517 = vmatmul.mubr.bf16.gmra.mrb[0].mxu0 %v8362
        %v8518 = vpop.f32.mrb[0].mxu0
        %v8519 = vadd.f32 0.0, %v8518
        %v8520 = vpop.f32.mrb[0].mxu0
        %v8521 = vpop.f32.mrb[0].mxu0
        %v8522 = vadd.f32 0.0, %v8521
        %v8523 = vpop.f32.mrb[0].mxu0
        %8524 = vmatprep.mubr.bf16.mxu0 0
        %8525 = vmatmul.mubr.bf16.gmra.mrb[0].mxu0 %v8363
        %v8526 = vpop.f32.mrb[0].mxu0
        %v8527 = vadd.f32 0.0, %v8526
        %v8528 = vpop.f32.mrb[0].mxu0
        %v8529 = vpop.f32.mrb[0].mxu0
        %v8530 = vadd.f32 0.0, %v8529
        %v8531 = vpop.f32.mrb[0].mxu0
        %8532 = vmatprep.mubr.bf16.mxu0 0
        %8533 = vmatmul.mubr.bf16.gmra.mrb[0].mxu0 %v8364
        %v8534 = vpop.f32.mrb[0].mxu0
        %v8535 = vadd.f32 0.0, %v8534
        %v8536 = vpop.f32.mrb[0].mxu0
        %v8537 = vpop.f32.mrb[0].mxu0
        %v8538 = vadd.f32 0.0, %v8537
        %v8539 = vpop.f32.mrb[0].mxu0
        %8540 = vmatprep.mubr.bf16.mxu0 0
        %8541 = vmatmul.mubr.bf16.gmra.mrb[0].mxu0 %v8365
        %v8542 = vpop.f32.mrb[0].mxu0
        %v8543 = vadd.f32 0.0, %v8542
        %v8544 = vpop.f32.mrb[0].mxu0
        %v8545 = vpop.f32.mrb[0].mxu0
        %v8546 = vadd.f32 0.0, %v8545
        %v8547 = vpop.f32.mrb[0].mxu0
        %8548 = vmatprep.mubr.bf16.mxu0 0
        %8549 = vmatmul.mubr.bf16.gmra.mrb[0].mxu0 %v8366
        %v8550 = vpop.f32.mrb[0].mxu0
        %v8551 = vadd.f32 0.0, %v8550
        %v8552 = vpop.f32.mrb[0].mxu0
        %v8553 = vpop.f32.mrb[0].mxu0
        %v8554 = vadd.f32 0.0, %v8553
        %v8555 = vpop.f32.mrb[0].mxu0
        %8556 = vmatprep.mubr.bf16.mxu0 0
        %8557 = vmatmul.mubr.bf16.gmra.mrb[0].mxu0 %v8367
        %v8558 = vpop.f32.mrb[0].mxu0
        %v8559 = vadd.f32 0.0, %v8558
        %v8560 = vpop.f32.mrb[0].mxu0
        %v8561 = vpop.f32.mrb[0].mxu0
        %v8562 = vadd.f32 0.0, %v8561
        %v8563 = vpop.f32.mrb[0].mxu0
        %8564 = vmatprep.mubr.bf16.mxu0 0
        %8565 = vmatmul.mubr.bf16.gmra.mrb[0].mxu0 %v8368
        %v8566 = vpop.f32.mrb[0].mxu0
        %v8567 = vadd.f32 0.0, %v8566
        %v8568 = vpop.f32.mrb[0].mxu0
        %v8569 = vpop.f32.mrb[0].mxu0
        %v8570 = vadd.f32 0.0, %v8569
        %v8571 = vpop.f32.mrb[0].mxu0
        %8572 = vmatprep.mubr.bf16.mxu0 0
        %8573 = vmatmul.mubr.bf16.gmra.mrb[0].mxu0 %v8369
        %v8574 = vpop.f32.mrb[0].mxu0
        %v8575 = vadd.f32 0.0, %v8574
        %v8576 = vpop.f32.mrb[0].mxu0
        %v8577 = vpop.f32.mrb[0].mxu0
        %v8578 = vadd.f32 0.0, %v8577
        %v8579 = vpop.f32.mrb[0].mxu0
        %8580 = vmatprep.mubr.bf16.mxu0 0
        %8581 = vmatmul.mubr.bf16.gmra.mrb[0].mxu0 %v8370
        %v8582 = vpop.f32.mrb[0].mxu0
        %v8583 = vadd.f32 0.0, %v8582
        %v8584 = vpop.f32.mrb[0].mxu0
        %v8585 = vpop.f32.mrb[0].mxu0
        %v8586 = vadd.f32 0.0, %v8585
        %v8587 = vpop.f32.mrb[0].mxu0
        %8588 = vmatprep.mubr.bf16.mxu0 0
        %8589 = vmatmul.mubr.bf16.gmra.mrb[0].mxu0 %v8371
        %v8590 = vpop.f32.mrb[0].mxu0
        %v8591 = vadd.f32 0.0, %v8590
        %v8592 = vpop.f32.mrb[0].mxu0
        %v8593 = vpop.f32.mrb[0].mxu0
        %v8594 = vadd.f32 0.0, %v8593
        %v8595 = vpop.f32.mrb[0].mxu0
        %8596 = vdwg.mxu0
        %v8597 = vadd.f32 %v8021, %v8471
        %v8598 = vadd.f32 %v8024, %v8474
        %v8599 = vadd.f32 %v8029, %v8479
        %v8600 = vadd.f32 %v8032, %v8482
        %v8601 = vadd.f32 %v8037, %v8487
        %v8602 = vadd.f32 %v8040, %v8490
        %v8603 = vadd.f32 %v8045, %v8495
        %v8604 = vadd.f32 %v8048, %v8498
        %v8605 = vadd.f32 %v8053, %v8503
        %v8606 = vadd.f32 %v8056, %v8506
        %v8607 = vadd.f32 %v8061, %v8511
        %v8608 = vadd.f32 %v8064, %v8514
        %v8609 = vadd.f32 %v8069, %v8519
        %v8610 = vadd.f32 %v8072, %v8522
        %v8611 = vadd.f32 %v8077, %v8527
        %v8612 = vadd.f32 %v8080, %v8530
        %v8613 = vadd.f32 %v8085, %v8535
        %v8614 = vadd.f32 %v8088, %v8538
        %v8615 = vadd.f32 %v8093, %v8543
        %v8616 = vadd.f32 %v8096, %v8546
        %v8617 = vadd.f32 %v8101, %v8551
        %v8618 = vadd.f32 %v8104, %v8554
        %v8619 = vadd.f32 %v8109, %v8559
        %v8620 = vadd.f32 %v8112, %v8562
        %v8621 = vadd.f32 %v8117, %v8567
        %v8622 = vadd.f32 %v8120, %v8570
        %v8623 = vadd.f32 %v8125, %v8575
        %v8624 = vadd.f32 %v8128, %v8578
        %v8625 = vadd.f32 %v8133, %v8583
        %v8626 = vadd.f32 %v8136, %v8586
        %v8627 = vadd.f32 %v8141, %v8591
        %v8628 = vadd.f32 %v8144, %v8594
        %v8629 = vld [vmem:[%s6987] sm:$0xf]
        %v8630 = vld [vmem:[%s6987 + $0x4] sm:$0xf]
        %v8631 = vld [vmem:[%s6987 + $0xc] sm:$0xf]
        %v8632 = vld [vmem:[%s6987 + $0x10] sm:$0xf]
        %v8633 = vld [vmem:[%s6987 + $0x18] sm:$0xf]
        %v8634 = vld [vmem:[%s6987 + $0x1c] sm:$0xf]
        %v8635 = vld [vmem:[%s6987 + $0x24] sm:$0xf]
        %v8636 = vld [vmem:[%s6987 + $0x28] sm:$0xf]
        %v8637 = vld [vmem:[%s6987 + $0x30] sm:$0xf]
        %v8638 = vld [vmem:[%s6987 + $0x34] sm:$0xf]
        %v8639 = vld [vmem:[%s6987 + $0x3c] sm:$0xf]
        %v8640 = vld [vmem:[%s6987 + $0x40] sm:$0xf]
        %v8641 = vld [vmem:[%s6987 + $0x48] sm:$0xf]
        %v8642 = vld [vmem:[%s6987 + $0x4c] sm:$0xf]
        %v8643 = vld [vmem:[%s6987 + $0x54] sm:$0xf]
        %v8644 = vld [vmem:[%s6987 + $0x58] sm:$0xf]
        %v8645 = vld [vmem:[%s6987 + $0x60] sm:$0xf]
        %v8646 = vld [vmem:[%s6987 + $0x64] sm:$0xf]
        %v8647 = vld [vmem:[%s6987 + $0x6c] sm:$0xf]
        %v8648 = vld [vmem:[%s6987 + $0x70] sm:$0xf]
        %v8649 = vld [vmem:[%s6987 + $0x78] sm:$0xf]
        %v8650 = vld [vmem:[%s6987 + $0x7c] sm:$0xf]
        %v8651 = vld [vmem:[%s6987 + $0x84] sm:$0xf]
        %v8652 = vld [vmem:[%s6987 + $0x88] sm:$0xf]
        %v8653 = vld [vmem:[%s6987 + $0x90] sm:$0xf]
        %v8654 = vld [vmem:[%s6987 + $0x94] sm:$0xf]
        %v8655 = vld [vmem:[%s6987 + $0x9c] sm:$0xf]
        %v8656 = vld [vmem:[%s6987 + $0xa0] sm:$0xf]
        %v8657 = vld [vmem:[%s6987 + $0xa8] sm:$0xf]
        %v8658 = vld [vmem:[%s6987 + $0xac] sm:$0xf]
        %v8659 = vld [vmem:[%s6987 + $0xb4] sm:$0xf]
        %v8660 = vld [vmem:[%s6987 + $0xb8] sm:$0xf]
        %s8661 = scalar_lea.vmem %s6, 192
        %v8662 = vld [vmem:[%s8661] sm:$0xf]
        %v8663 = vld [vmem:[%s8661 + $0x4] sm:$0xf]
        %v8664 = vld [vmem:[%s8661 + $0x8] sm:$0xf]
        %v8665 = vld [vmem:[%s8661 + $0xc] sm:$0xf]
        %v8666 = vld [vmem:[%s8661 + $0x10] sm:$0xf]
        %v8667 = vld [vmem:[%s8661 + $0x14] sm:$0xf]
        %v8668 = vld [vmem:[%s8661 + $0x18] sm:$0xf]
        %v8669 = vld [vmem:[%s8661 + $0x1c] sm:$0xf]
        %v8670 = vld [vmem:[%s8661 + $0x20] sm:$0xf]
        %v8671 = vld [vmem:[%s8661 + $0x24] sm:$0xf]
        %v8672 = vld [vmem:[%s8661 + $0x28] sm:$0xf]
        %v8673 = vld [vmem:[%s8661 + $0x2c] sm:$0xf]
        %v8674 = vld [vmem:[%s8661 + $0x30] sm:$0xf]
        %v8675 = vld [vmem:[%s8661 + $0x34] sm:$0xf]
        %v8676 = vld [vmem:[%s8661 + $0x38] sm:$0xf]
        %v8677 = vld [vmem:[%s8661 + $0x3c] sm:$0xf]
        %v8710 = vunpack.c.l.b16 %v8629
        %v8711 = vunpack.c.l.b16 %v8630
        %v8712 = vunpack.c.l.b16 %v8631
        %v8713 = vunpack.c.l.b16 %v8632
        %v8714 = vunpack.c.l.b16 %v8633
        %v8715 = vunpack.c.l.b16 %v8634
        %v8716 = vunpack.c.l.b16 %v8635
        %v8717 = vunpack.c.l.b16 %v8636
        %v8718 = vunpack.c.l.b16 %v8637
        %v8719 = vunpack.c.l.b16 %v8638
        %v8720 = vunpack.c.l.b16 %v8639
        %v8721 = vunpack.c.l.b16 %v8640
        %v8722 = vunpack.c.l.b16 %v8641
        %v8723 = vunpack.c.l.b16 %v8642
        %v8724 = vunpack.c.l.b16 %v8643
        %v8725 = vunpack.c.l.b16 %v8644
        %v8726 = vunpack.c.l.b16 %v8645
        %v8727 = vunpack.c.l.b16 %v8646
        %v8728 = vunpack.c.l.b16 %v8647
        %v8729 = vunpack.c.l.b16 %v8648
        %v8730 = vunpack.c.l.b16 %v8649
        %v8731 = vunpack.c.l.b16 %v8650
        %v8732 = vunpack.c.l.b16 %v8651
        %v8733 = vunpack.c.l.b16 %v8652
        %v8734 = vunpack.c.l.b16 %v8653
        %v8735 = vunpack.c.l.b16 %v8654
        %v8736 = vunpack.c.l.b16 %v8655
        %v8737 = vunpack.c.l.b16 %v8656
        %v8738 = vunpack.c.l.b16 %v8657
        %v8739 = vunpack.c.l.b16 %v8658
        %v8740 = vunpack.c.l.b16 %v8659
        %v8741 = vunpack.c.l.b16 %v8660
        %v8742 = vpack.c.b16 %v8711, %v8710
        %v8743 = vpack.c.b16 %v8713, %v8712
        %v8744 = vpack.c.b16 %v8715, %v8714
        %v8745 = vpack.c.b16 %v8717, %v8716
        %v8746 = vpack.c.b16 %v8719, %v8718
        %v8747 = vpack.c.b16 %v8721, %v8720
        %v8748 = vpack.c.b16 %v8723, %v8722
        %v8749 = vpack.c.b16 %v8725, %v8724
        %v8750 = vpack.c.b16 %v8727, %v8726
        %v8751 = vpack.c.b16 %v8729, %v8728
        %v8752 = vpack.c.b16 %v8731, %v8730
        %v8753 = vpack.c.b16 %v8733, %v8732
        %v8754 = vpack.c.b16 %v8735, %v8734
        %v8755 = vpack.c.b16 %v8737, %v8736
        %v8756 = vpack.c.b16 %v8739, %v8738
        %v8757 = vpack.c.b16 %v8741, %v8740
        %v8790 = vunpack.c.l.b16 %v8662
        %v8791 = vunpack.c.l.b16 %v8663
        %v8792 = vunpack.c.l.b16 %v8664
        %v8793 = vunpack.c.l.b16 %v8665
        %v8794 = vunpack.c.l.b16 %v8666
        %v8795 = vunpack.c.l.b16 %v8667
        %v8796 = vunpack.c.l.b16 %v8668
        %v8797 = vunpack.c.l.b16 %v8669
        %v8798 = vunpack.c.l.b16 %v8670
        %v8799 = vunpack.c.l.b16 %v8671
        %v8800 = vunpack.c.l.b16 %v8672
        %v8801 = vunpack.c.l.b16 %v8673
        %v8802 = vunpack.c.l.b16 %v8674
        %v8803 = vunpack.c.l.b16 %v8675
        %v8804 = vunpack.c.l.b16 %v8676
        %v8805 = vunpack.c.l.b16 %v8677
        %v8806 = vpack.c.b16 %v8791, %v8790
        %v8807 = vpack.c.b16 %v8793, %v8792
        %v8808 = vpack.c.b16 %v8795, %v8794
        %v8809 = vpack.c.b16 %v8797, %v8796
        %v8810 = vpack.c.b16 %v8799, %v8798
        %v8811 = vpack.c.b16 %v8801, %v8800
        %v8812 = vpack.c.b16 %v8803, %v8802
        %v8813 = vpack.c.b16 %v8805, %v8804
        %8822 = vmatprep.subr.bf16.mxu0 0
        %8823 = vmatpush1.bf16.msra.mxu0 %v8806
        %8824 = vmatprep.subr.bf16.mxu0 0
        %8825 = vmatpush1.bf16.msra.mxu0 %v8807
        %8826 = vmatprep.subr.bf16.mxu0 0
        %8827 = vmatpush1.bf16.msra.mxu0 %v8808
        %8828 = vmatprep.subr.bf16.mxu0 0
        %8829 = vmatpush1.bf16.msra.mxu0 %v8809
        %8830 = vmatprep.subr.bf16.mxu0 0
        %8831 = vmatpush1.bf16.msra.mxu0 %v8810
        %8832 = vmatprep.subr.bf16.mxu0 0
        %8833 = vmatpush1.bf16.msra.mxu0 %v8811
        %8834 = vmatprep.subr.bf16.mxu0 0
        %8835 = vmatpush1.bf16.msra.mxu0 %v8812
        %8836 = vmatprep.subr.bf16.mxu0 0
        %8837 = vmatpush1.bf16.msra.mxu0 %v8813
        %8838 = vmatprep.subr.bf16.mxu0 0
        %8839 = vmatpush1.bf16.msra.mxu0 0
        %8840 = vmatprep.subr.bf16.mxu0 0
        %8841 = vmatpush1.bf16.msra.mxu0 0
        %8842 = vmatprep.subr.bf16.mxu0 0
        %8843 = vmatpush1.bf16.msra.mxu0 0
        %8844 = vmatprep.subr.bf16.mxu0 0
        %8845 = vmatpush1.bf16.msra.mxu0 0
        %8846 = vmatprep.subr.bf16.mxu0 0
        %8847 = vmatpush1.bf16.msra.mxu0 0
        %8848 = vmatprep.subr.bf16.mxu0 0
        %8849 = vmatpush1.bf16.msra.mxu0 0
        %8850 = vmatprep.subr.bf16.mxu0 0
        %8851 = vmatpush1.bf16.msra.mxu0 0
        %8852 = vmatprep.subr.bf16.mxu0 0
        %8853 = vmatpush1.bf16.msra.mxu0 0
        %8854 = vmatprep.mubr.bf16.mxu0 0
        %8855 = vmatmul.mubr.bf16.gmra.mrb[0].mxu0 %v8742
        %v8856 = vpop.f32.mrb[0].mxu0
        %v8857 = vadd.f32 0.0, %v8856
        %v8858 = vpop.f32.mrb[0].mxu0
        %v8859 = vpop.f32.mrb[0].mxu0
        %v8860 = vadd.f32 0.0, %v8859
        %v8861 = vpop.f32.mrb[0].mxu0
        %8862 = vmatprep.mubr.bf16.mxu0 0
        %8863 = vmatmul.mubr.bf16.gmra.mrb[0].mxu0 %v8743
        %v8864 = vpop.f32.mrb[0].mxu0
        %v8865 = vadd.f32 0.0, %v8864
        %v8866 = vpop.f32.mrb[0].mxu0
        %v8867 = vpop.f32.mrb[0].mxu0
        %v8868 = vadd.f32 0.0, %v8867
        %v8869 = vpop.f32.mrb[0].mxu0
        %8870 = vmatprep.mubr.bf16.mxu0 0
        %8871 = vmatmul.mubr.bf16.gmra.mrb[0].mxu0 %v8744
        %v8872 = vpop.f32.mrb[0].mxu0
        %v8873 = vadd.f32 0.0, %v8872
        %v8874 = vpop.f32.mrb[0].mxu0
        %v8875 = vpop.f32.mrb[0].mxu0
        %v8876 = vadd.f32 0.0, %v8875
        %v8877 = vpop.f32.mrb[0].mxu0
        %8878 = vmatprep.mubr.bf16.mxu0 0
        %8879 = vmatmul.mubr.bf16.gmra.mrb[0].mxu0 %v8745
        %v8880 = vpop.f32.mrb[0].mxu0
        %v8881 = vadd.f32 0.0, %v8880
        %v8882 = vpop.f32.mrb[0].mxu0
        %v8883 = vpop.f32.mrb[0].mxu0
        %v8884 = vadd.f32 0.0, %v8883
        %v8885 = vpop.f32.mrb[0].mxu0
        %8886 = vmatprep.mubr.bf16.mxu0 0
        %8887 = vmatmul.mubr.bf16.gmra.mrb[0].mxu0 %v8746
        %v8888 = vpop.f32.mrb[0].mxu0
        %v8889 = vadd.f32 0.0, %v8888
        %v8890 = vpop.f32.mrb[0].mxu0
        %v8891 = vpop.f32.mrb[0].mxu0
        %v8892 = vadd.f32 0.0, %v8891
        %v8893 = vpop.f32.mrb[0].mxu0
        %8894 = vmatprep.mubr.bf16.mxu0 0
        %8895 = vmatmul.mubr.bf16.gmra.mrb[0].mxu0 %v8747
        %v8896 = vpop.f32.mrb[0].mxu0
        %v8897 = vadd.f32 0.0, %v8896
        %v8898 = vpop.f32.mrb[0].mxu0
        %v8899 = vpop.f32.mrb[0].mxu0
        %v8900 = vadd.f32 0.0, %v8899
        %v8901 = vpop.f32.mrb[0].mxu0
        %8902 = vmatprep.mubr.bf16.mxu0 0
        %8903 = vmatmul.mubr.bf16.gmra.mrb[0].mxu0 %v8748
        %v8904 = vpop.f32.mrb[0].mxu0
        %v8905 = vadd.f32 0.0, %v8904
        %v8906 = vpop.f32.mrb[0].mxu0
        %v8907 = vpop.f32.mrb[0].mxu0
        %v8908 = vadd.f32 0.0, %v8907
        %v8909 = vpop.f32.mrb[0].mxu0
        %8910 = vmatprep.mubr.bf16.mxu0 0
        %8911 = vmatmul.mubr.bf16.gmra.mrb[0].mxu0 %v8749
        %v8912 = vpop.f32.mrb[0].mxu0
        %v8913 = vadd.f32 0.0, %v8912
        %v8914 = vpop.f32.mrb[0].mxu0
        %v8915 = vpop.f32.mrb[0].mxu0
        %v8916 = vadd.f32 0.0, %v8915
        %v8917 = vpop.f32.mrb[0].mxu0
        %8918 = vmatprep.mubr.bf16.mxu0 0
        %8919 = vmatmul.mubr.bf16.gmra.mrb[0].mxu0 %v8750
        %v8920 = vpop.f32.mrb[0].mxu0
        %v8921 = vadd.f32 0.0, %v8920
        %v8922 = vpop.f32.mrb[0].mxu0
        %v8923 = vpop.f32.mrb[0].mxu0
        %v8924 = vadd.f32 0.0, %v8923
        %v8925 = vpop.f32.mrb[0].mxu0
        %8926 = vmatprep.mubr.bf16.mxu0 0
        %8927 = vmatmul.mubr.bf16.gmra.mrb[0].mxu0 %v8751
        %v8928 = vpop.f32.mrb[0].mxu0
        %v8929 = vadd.f32 0.0, %v8928
        %v8930 = vpop.f32.mrb[0].mxu0
        %v8931 = vpop.f32.mrb[0].mxu0
        %v8932 = vadd.f32 0.0, %v8931
        %v8933 = vpop.f32.mrb[0].mxu0
        %8934 = vmatprep.mubr.bf16.mxu0 0
        %8935 = vmatmul.mubr.bf16.gmra.mrb[0].mxu0 %v8752
        %v8936 = vpop.f32.mrb[0].mxu0
        %v8937 = vadd.f32 0.0, %v8936
        %v8938 = vpop.f32.mrb[0].mxu0
        %v8939 = vpop.f32.mrb[0].mxu0
        %v8940 = vadd.f32 0.0, %v8939
        %v8941 = vpop.f32.mrb[0].mxu0
        %8942 = vmatprep.mubr.bf16.mxu0 0
        %8943 = vmatmul.mubr.bf16.gmra.mrb[0].mxu0 %v8753
        %v8944 = vpop.f32.mrb[0].mxu0
        %v8945 = vadd.f32 0.0, %v8944
        %v8946 = vpop.f32.mrb[0].mxu0
        %v8947 = vpop.f32.mrb[0].mxu0
        %v8948 = vadd.f32 0.0, %v8947
        %v8949 = vpop.f32.mrb[0].mxu0
        %8950 = vmatprep.mubr.bf16.mxu0 0
        %8951 = vmatmul.mubr.bf16.gmra.mrb[0].mxu0 %v8754
        %v8952 = vpop.f32.mrb[0].mxu0
        %v8953 = vadd.f32 0.0, %v8952
        %v8954 = vpop.f32.mrb[0].mxu0
        %v8955 = vpop.f32.mrb[0].mxu0
        %v8956 = vadd.f32 0.0, %v8955
        %v8957 = vpop.f32.mrb[0].mxu0
        %8958 = vmatprep.mubr.bf16.mxu0 0
        %8959 = vmatmul.mubr.bf16.gmra.mrb[0].mxu0 %v8755
        %v8960 = vpop.f32.mrb[0].mxu0
        %v8961 = vadd.f32 0.0, %v8960
        %v8962 = vpop.f32.mrb[0].mxu0
        %v8963 = vpop.f32.mrb[0].mxu0
        %v8964 = vadd.f32 0.0, %v8963
        %v8965 = vpop.f32.mrb[0].mxu0
        %8966 = vmatprep.mubr.bf16.mxu0 0
        %8967 = vmatmul.mubr.bf16.gmra.mrb[0].mxu0 %v8756
        %v8968 = vpop.f32.mrb[0].mxu0
        %v8969 = vadd.f32 0.0, %v8968
        %v8970 = vpop.f32.mrb[0].mxu0
        %v8971 = vpop.f32.mrb[0].mxu0
        %v8972 = vadd.f32 0.0, %v8971
        %v8973 = vpop.f32.mrb[0].mxu0
        %8974 = vmatprep.mubr.bf16.mxu0 0
        %8975 = vmatmul.mubr.bf16.gmra.mrb[0].mxu0 %v8757
        %v8976 = vpop.f32.mrb[0].mxu0
        %v8977 = vadd.f32 0.0, %v8976
        %v8978 = vpop.f32.mrb[0].mxu0
        %v8979 = vpop.f32.mrb[0].mxu0
        %v8980 = vadd.f32 0.0, %v8979
        %v8981 = vpop.f32.mrb[0].mxu0
        %8982 = vdwg.mxu0
        %v8983 = vadd.f32 %v8597, %v8857
        %v8984 = vadd.f32 %v8598, %v8860
        %v8985 = vadd.f32 %v8599, %v8865
        %v8986 = vadd.f32 %v8600, %v8868
        %v8987 = vadd.f32 %v8601, %v8873
        %v8988 = vadd.f32 %v8602, %v8876
        %v8989 = vadd.f32 %v8603, %v8881
        %v8990 = vadd.f32 %v8604, %v8884
        %v8991 = vadd.f32 %v8605, %v8889
        %v8992 = vadd.f32 %v8606, %v8892
        %v8993 = vadd.f32 %v8607, %v8897
        %v8994 = vadd.f32 %v8608, %v8900
        %v8995 = vadd.f32 %v8609, %v8905
        %v8996 = vadd.f32 %v8610, %v8908
        %v8997 = vadd.f32 %v8611, %v8913
        %v8998 = vadd.f32 %v8612, %v8916
        %v8999 = vadd.f32 %v8613, %v8921
        %v9000 = vadd.f32 %v8614, %v8924
        %v9001 = vadd.f32 %v8615, %v8929
        %v9002 = vadd.f32 %v8616, %v8932
        %v9003 = vadd.f32 %v8617, %v8937
        %v9004 = vadd.f32 %v8618, %v8940
        %v9005 = vadd.f32 %v8619, %v8945
        %v9006 = vadd.f32 %v8620, %v8948
        %v9007 = vadd.f32 %v8621, %v8953
        %v9008 = vadd.f32 %v8622, %v8956
        %v9009 = vadd.f32 %v8623, %v8961
        %v9010 = vadd.f32 %v8624, %v8964
        %v9011 = vadd.f32 %v8625, %v8969
        %v9012 = vadd.f32 %v8626, %v8972
        %v9013 = vadd.f32 %v8627, %v8977
        %v9014 = vadd.f32 %v8628, %v8980
        %v9015 = vld [vmem:[%s6987] sm:$0xf]
        %v9016 = vld [vmem:[%s6987 + $0x4] sm:$0xf]
        %v9017 = vld [vmem:[%s6987 + $0x8] sm:$0x1]
        %v9018 = vld [vmem:[%s6987 + $0xc] sm:$0xf]
        %v9019 = vld [vmem:[%s6987 + $0x10] sm:$0xf]
        %v9020 = vld [vmem:[%s6987 + $0x14] sm:$0x1]
        %v9021 = vld [vmem:[%s6987 + $0x18] sm:$0xf]
        %v9022 = vld [vmem:[%s6987 + $0x1c] sm:$0xf]
        %v9023 = vld [vmem:[%s6987 + $0x20] sm:$0x1]
        %v9024 = vld [vmem:[%s6987 + $0x24] sm:$0xf]
        %v9025 = vld [vmem:[%s6987 + $0x28] sm:$0xf]
        %v9026 = vld [vmem:[%s6987 + $0x2c] sm:$0x1]
        %v9027 = vld [vmem:[%s6987 + $0x30] sm:$0xf]
        %v9028 = vld [vmem:[%s6987 + $0x34] sm:$0xf]
        %v9029 = vld [vmem:[%s6987 + $0x38] sm:$0x1]
        %v9030 = vld [vmem:[%s6987 + $0x3c] sm:$0xf]
        %v9031 = vld [vmem:[%s6987 + $0x40] sm:$0xf]
        %v9032 = vld [vmem:[%s6987 + $0x44] sm:$0x1]
        %v9033 = vld [vmem:[%s6987 + $0x48] sm:$0xf]
        %v9034 = vld [vmem:[%s6987 + $0x4c] sm:$0xf]
        %v9035 = vld [vmem:[%s6987 + $0x50] sm:$0x1]
        %v9036 = vld [vmem:[%s6987 + $0x54] sm:$0xf]
        %v9037 = vld [vmem:[%s6987 + $0x58] sm:$0xf]
        %v9038 = vld [vmem:[%s6987 + $0x5c] sm:$0x1]
        %v9039 = vld [vmem:[%s6987 + $0x60] sm:$0xf]
        %v9040 = vld [vmem:[%s6987 + $0x64] sm:$0xf]
        %v9041 = vld [vmem:[%s6987 + $0x68] sm:$0x1]
        %v9042 = vld [vmem:[%s6987 + $0x6c] sm:$0xf]
        %v9043 = vld [vmem:[%s6987 + $0x70] sm:$0xf]
        %v9044 = vld [vmem:[%s6987 + $0x74] sm:$0x1]
        %v9045 = vld [vmem:[%s6987 + $0x78] sm:$0xf]
        %v9046 = vld [vmem:[%s6987 + $0x7c] sm:$0xf]
        %v9047 = vld [vmem:[%s6987 + $0x80] sm:$0x1]
        %v9048 = vld [vmem:[%s6987 + $0x84] sm:$0xf]
        %v9049 = vld [vmem:[%s6987 + $0x88] sm:$0xf]
        %v9050 = vld [vmem:[%s6987 + $0x8c] sm:$0x1]
        %v9051 = vld [vmem:[%s6987 + $0x90] sm:$0xf]
        %v9052 = vld [vmem:[%s6987 + $0x94] sm:$0xf]
        %v9053 = vld [vmem:[%s6987 + $0x98] sm:$0x1]
        %v9054 = vld [vmem:[%s6987 + $0x9c] sm:$0xf]
        %v9055 = vld [vmem:[%s6987 + $0xa0] sm:$0xf]
        %v9056 = vld [vmem:[%s6987 + $0xa4] sm:$0x1]
        %v9057 = vld [vmem:[%s6987 + $0xa8] sm:$0xf]
        %v9058 = vld [vmem:[%s6987 + $0xac] sm:$0xf]
        %v9059 = vld [vmem:[%s6987 + $0xb0] sm:$0x1]
        %v9060 = vld [vmem:[%s6987 + $0xb4] sm:$0xf]
        %v9061 = vld [vmem:[%s6987 + $0xb8] sm:$0xf]
        %v9062 = vld [vmem:[%s6987 + $0xbc] sm:$0x1]
        %v9064 = vshrl.u32 %v9015, 16
        %v9066 = vrot.slane %v9064, 4
        %v9067 = vshll.u32 %v9015, 16
        %v9069 = vrot.slane %v9067, 5
        %v9070 = vor.u32 %v9066, %v9069
        %v9071 = vrot.slane %v9070, 4
        %v9073 = vshll.u32 %v9016, 16
        %v9075 = vrot.slane %v9073, 5
        %v9076 = vsel %vm1801, %v9071, %v9075
        %v9077 = vshrl.u32 %v9016, 16
        %v9079 = vrot.slane %v9077, 4
        %v9080 = vor.u32 %v9079, %v9075
        %v9081 = vrot.slane %v9080, 4
        %v9083 = vshll.u32 %v9017, 16
        %v9085 = vrot.slane %v9083, 5
        %v9086 = vsel %vm1801, %v9081, %v9085
        %v9088 = vshrl.u32 %v9018, 16
        %v9090 = vrot.slane %v9088, 4
        %v9091 = vshll.u32 %v9018, 16
        %v9093 = vrot.slane %v9091, 5
        %v9094 = vor.u32 %v9090, %v9093
        %v9095 = vrot.slane %v9094, 4
        %v9097 = vshll.u32 %v9019, 16
        %v9099 = vrot.slane %v9097, 5
        %v9100 = vsel %vm1801, %v9095, %v9099
        %v9101 = vshrl.u32 %v9019, 16
        %v9103 = vrot.slane %v9101, 4
        %v9104 = vor.u32 %v9103, %v9099
        %v9105 = vrot.slane %v9104, 4
        %v9107 = vshll.u32 %v9020, 16
        %v9109 = vrot.slane %v9107, 5
        %v9110 = vsel %vm1801, %v9105, %v9109
        %v9112 = vshrl.u32 %v9021, 16
        %v9114 = vrot.slane %v9112, 4
        %v9115 = vshll.u32 %v9021, 16
        %v9117 = vrot.slane %v9115, 5
        %v9118 = vor.u32 %v9114, %v9117
        %v9119 = vrot.slane %v9118, 4
        %v9121 = vshll.u32 %v9022, 16
        %v9123 = vrot.slane %v9121, 5
        %v9124 = vsel %vm1801, %v9119, %v9123
        %v9125 = vshrl.u32 %v9022, 16
        %v9127 = vrot.slane %v9125, 4
        %v9128 = vor.u32 %v9127, %v9123
        %v9129 = vrot.slane %v9128, 4
        %v9131 = vshll.u32 %v9023, 16
        %v9133 = vrot.slane %v9131, 5
        %v9134 = vsel %vm1801, %v9129, %v9133
        %v9136 = vshrl.u32 %v9024, 16
        %v9138 = vrot.slane %v9136, 4
        %v9139 = vshll.u32 %v9024, 16
        %v9141 = vrot.slane %v9139, 5
        %v9142 = vor.u32 %v9138, %v9141
        %v9143 = vrot.slane %v9142, 4
        %v9145 = vshll.u32 %v9025, 16
        %v9147 = vrot.slane %v9145, 5
        %v9148 = vsel %vm1801, %v9143, %v9147
        %v9149 = vshrl.u32 %v9025, 16
        %v9151 = vrot.slane %v9149, 4
        %v9152 = vor.u32 %v9151, %v9147
        %v9153 = vrot.slane %v9152, 4
        %v9155 = vshll.u32 %v9026, 16
        %v9157 = vrot.slane %v9155, 5
        %v9158 = vsel %vm1801, %v9153, %v9157
        %v9160 = vshrl.u32 %v9027, 16
        %v9162 = vrot.slane %v9160, 4
        %v9163 = vshll.u32 %v9027, 16
        %v9165 = vrot.slane %v9163, 5
        %v9166 = vor.u32 %v9162, %v9165
        %v9167 = vrot.slane %v9166, 4
        %v9169 = vshll.u32 %v9028, 16
        %v9171 = vrot.slane %v9169, 5
        %v9172 = vsel %vm1801, %v9167, %v9171
        %v9173 = vshrl.u32 %v9028, 16
        %v9175 = vrot.slane %v9173, 4
        %v9176 = vor.u32 %v9175, %v9171
        %v9177 = vrot.slane %v9176, 4
        %v9179 = vshll.u32 %v9029, 16
        %v9181 = vrot.slane %v9179, 5
        %v9182 = vsel %vm1801, %v9177, %v9181
        %v9184 = vshrl.u32 %v9030, 16
        %v9186 = vrot.slane %v9184, 4
        %v9187 = vshll.u32 %v9030, 16
        %v9189 = vrot.slane %v9187, 5
        %v9190 = vor.u32 %v9186, %v9189
        %v9191 = vrot.slane %v9190, 4
        %v9193 = vshll.u32 %v9031, 16
        %v9195 = vrot.slane %v9193, 5
        %v9196 = vsel %vm1801, %v9191, %v9195
        %v9197 = vshrl.u32 %v9031, 16
        %v9199 = vrot.slane %v9197, 4
        %v9200 = vor.u32 %v9199, %v9195
        %v9201 = vrot.slane %v9200, 4
        %v9203 = vshll.u32 %v9032, 16
        %v9205 = vrot.slane %v9203, 5
        %v9206 = vsel %vm1801, %v9201, %v9205
        %v9208 = vshrl.u32 %v9033, 16
        %v9210 = vrot.slane %v9208, 4
        %v9211 = vshll.u32 %v9033, 16
        %v9213 = vrot.slane %v9211, 5
        %v9214 = vor.u32 %v9210, %v9213
        %v9215 = vrot.slane %v9214, 4
        %v9217 = vshll.u32 %v9034, 16
        %v9219 = vrot.slane %v9217, 5
        %v9220 = vsel %vm1801, %v9215, %v9219
        %v9221 = vshrl.u32 %v9034, 16
        %v9223 = vrot.slane %v9221, 4
        %v9224 = vor.u32 %v9223, %v9219
        %v9225 = vrot.slane %v9224, 4
        %v9227 = vshll.u32 %v9035, 16
        %v9229 = vrot.slane %v9227, 5
        %v9230 = vsel %vm1801, %v9225, %v9229
        %v9232 = vshrl.u32 %v9036, 16
        %v9234 = vrot.slane %v9232, 4
        %v9235 = vshll.u32 %v9036, 16
        %v9237 = vrot.slane %v9235, 5
        %v9238 = vor.u32 %v9234, %v9237
        %v9239 = vrot.slane %v9238, 4
        %v9241 = vshll.u32 %v9037, 16
        %v9243 = vrot.slane %v9241, 5
        %v9244 = vsel %vm1801, %v9239, %v9243
        %v9245 = vshrl.u32 %v9037, 16
        %v9247 = vrot.slane %v9245, 4
        %v9248 = vor.u32 %v9247, %v9243
        %v9249 = vrot.slane %v9248, 4
        %v9251 = vshll.u32 %v9038, 16
        %v9253 = vrot.slane %v9251, 5
        %v9254 = vsel %vm1801, %v9249, %v9253
        %v9256 = vshrl.u32 %v9039, 16
        %v9258 = vrot.slane %v9256, 4
        %v9259 = vshll.u32 %v9039, 16
        %v9261 = vrot.slane %v9259, 5
        %v9262 = vor.u32 %v9258, %v9261
        %v9263 = vrot.slane %v9262, 4
        %v9265 = vshll.u32 %v9040, 16
        %v9267 = vrot.slane %v9265, 5
        %v9268 = vsel %vm1801, %v9263, %v9267
        %v9269 = vshrl.u32 %v9040, 16
        %v9271 = vrot.slane %v9269, 4
        %v9272 = vor.u32 %v9271, %v9267
        %v9273 = vrot.slane %v9272, 4
        %v9275 = vshll.u32 %v9041, 16
        %v9277 = vrot.slane %v9275, 5
        %v9278 = vsel %vm1801, %v9273, %v9277
        %v9280 = vshrl.u32 %v9042, 16
        %v9282 = vrot.slane %v9280, 4
        %v9283 = vshll.u32 %v9042, 16
        %v9285 = vrot.slane %v9283, 5
        %v9286 = vor.u32 %v9282, %v9285
        %v9287 = vrot.slane %v9286, 4
        %v9289 = vshll.u32 %v9043, 16
        %v9291 = vrot.slane %v9289, 5
        %v9292 = vsel %vm1801, %v9287, %v9291
        %v9293 = vshrl.u32 %v9043, 16
        %v9295 = vrot.slane %v9293, 4
        %v9296 = vor.u32 %v9295, %v9291
        %v9297 = vrot.slane %v9296, 4
        %v9299 = vshll.u32 %v9044, 16
        %v9301 = vrot.slane %v9299, 5
        %v9302 = vsel %vm1801, %v9297, %v9301
        %v9304 = vshrl.u32 %v9045, 16
        %v9306 = vrot.slane %v9304, 4
        %v9307 = vshll.u32 %v9045, 16
        %v9309 = vrot.slane %v9307, 5
        %v9310 = vor.u32 %v9306, %v9309
        %v9311 = vrot.slane %v9310, 4
        %v9313 = vshll.u32 %v9046, 16
        %v9315 = vrot.slane %v9313, 5
        %v9316 = vsel %vm1801, %v9311, %v9315
        %v9317 = vshrl.u32 %v9046, 16
        %v9319 = vrot.slane %v9317, 4
        %v9320 = vor.u32 %v9319, %v9315
        %v9321 = vrot.slane %v9320, 4
        %v9323 = vshll.u32 %v9047, 16
        %v9325 = vrot.slane %v9323, 5
        %v9326 = vsel %vm1801, %v9321, %v9325
        %v9328 = vshrl.u32 %v9048, 16
        %v9330 = vrot.slane %v9328, 4
        %v9331 = vshll.u32 %v9048, 16
        %v9333 = vrot.slane %v9331, 5
        %v9334 = vor.u32 %v9330, %v9333
        %v9335 = vrot.slane %v9334, 4
        %v9337 = vshll.u32 %v9049, 16
        %v9339 = vrot.slane %v9337, 5
        %v9340 = vsel %vm1801, %v9335, %v9339
        %v9341 = vshrl.u32 %v9049, 16
        %v9343 = vrot.slane %v9341, 4
        %v9344 = vor.u32 %v9343, %v9339
        %v9345 = vrot.slane %v9344, 4
        %v9347 = vshll.u32 %v9050, 16
        %v9349 = vrot.slane %v9347, 5
        %v9350 = vsel %vm1801, %v9345, %v9349
        %v9352 = vshrl.u32 %v9051, 16
        %v9354 = vrot.slane %v9352, 4
        %v9355 = vshll.u32 %v9051, 16
        %v9357 = vrot.slane %v9355, 5
        %v9358 = vor.u32 %v9354, %v9357
        %v9359 = vrot.slane %v9358, 4
        %v9361 = vshll.u32 %v9052, 16
        %v9363 = vrot.slane %v9361, 5
        %v9364 = vsel %vm1801, %v9359, %v9363
        %v9365 = vshrl.u32 %v9052, 16
        %v9367 = vrot.slane %v9365, 4
        %v9368 = vor.u32 %v9367, %v9363
        %v9369 = vrot.slane %v9368, 4
        %v9371 = vshll.u32 %v9053, 16
        %v9373 = vrot.slane %v9371, 5
        %v9374 = vsel %vm1801, %v9369, %v9373
        %v9376 = vshrl.u32 %v9054, 16
        %v9378 = vrot.slane %v9376, 4
        %v9379 = vshll.u32 %v9054, 16
        %v9381 = vrot.slane %v9379, 5
        %v9382 = vor.u32 %v9378, %v9381
        %v9383 = vrot.slane %v9382, 4
        %v9385 = vshll.u32 %v9055, 16
        %v9387 = vrot.slane %v9385, 5
        %v9388 = vsel %vm1801, %v9383, %v9387
        %v9389 = vshrl.u32 %v9055, 16
        %v9391 = vrot.slane %v9389, 4
        %v9392 = vor.u32 %v9391, %v9387
        %v9393 = vrot.slane %v9392, 4
        %v9395 = vshll.u32 %v9056, 16
        %v9397 = vrot.slane %v9395, 5
        %v9398 = vsel %vm1801, %v9393, %v9397
        %v9400 = vshrl.u32 %v9057, 16
        %v9402 = vrot.slane %v9400, 4
        %v9403 = vshll.u32 %v9057, 16
        %v9405 = vrot.slane %v9403, 5
        %v9406 = vor.u32 %v9402, %v9405
        %v9407 = vrot.slane %v9406, 4
        %v9409 = vshll.u32 %v9058, 16
        %v9411 = vrot.slane %v9409, 5
        %v9412 = vsel %vm1801, %v9407, %v9411
        %v9413 = vshrl.u32 %v9058, 16
        %v9415 = vrot.slane %v9413, 4
        %v9416 = vor.u32 %v9415, %v9411
        %v9417 = vrot.slane %v9416, 4
        %v9419 = vshll.u32 %v9059, 16
        %v9421 = vrot.slane %v9419, 5
        %v9422 = vsel %vm1801, %v9417, %v9421
        %v9424 = vshrl.u32 %v9060, 16
        %v9426 = vrot.slane %v9424, 4
        %v9427 = vshll.u32 %v9060, 16
        %v9429 = vrot.slane %v9427, 5
        %v9430 = vor.u32 %v9426, %v9429
        %v9431 = vrot.slane %v9430, 4
        %v9433 = vshll.u32 %v9061, 16
        %v9435 = vrot.slane %v9433, 5
        %v9436 = vsel %vm1801, %v9431, %v9435
        %v9437 = vshrl.u32 %v9061, 16
        %v9439 = vrot.slane %v9437, 4
        %v9440 = vor.u32 %v9439, %v9435
        %v9441 = vrot.slane %v9440, 4
        %v9443 = vshll.u32 %v9062, 16
        %v9445 = vrot.slane %v9443, 5
        %v9446 = vsel %vm1801, %v9441, %v9445
        %s9447 = scalar_lea.vmem %s6, 256
        %v9448 = vld [vmem:[%s9447] sm:$0xf]
        %v9449 = vld [vmem:[%s9447 + $0x4] sm:$0xf]
        %v9450 = vld [vmem:[%s9447 + $0x8] sm:$0xf]
        %v9451 = vld [vmem:[%s9447 + $0xc] sm:$0xf]
        %v9452 = vld [vmem:[%s9447 + $0x10] sm:$0xf]
        %v9453 = vld [vmem:[%s9447 + $0x14] sm:$0xf]
        %v9454 = vld [vmem:[%s9447 + $0x18] sm:$0xf]
        %v9455 = vld [vmem:[%s9447 + $0x1c] sm:$0xf]
        %v9456 = vld [vmem:[%s9447 + $0x20] sm:$0xf]
        %v9457 = vld [vmem:[%s9447 + $0x24] sm:$0xf]
        %v9458 = vld [vmem:[%s9447 + $0x28] sm:$0xf]
        %v9459 = vld [vmem:[%s9447 + $0x2c] sm:$0xf]
        %v9460 = vld [vmem:[%s9447 + $0x30] sm:$0xf]
        %v9461 = vld [vmem:[%s9447 + $0x34] sm:$0xf]
        %v9462 = vld [vmem:[%s9447 + $0x38] sm:$0xf]
        %v9463 = vld [vmem:[%s9447 + $0x3c] sm:$0xf]
        %v9464 = vunpack.c.l.b16 %v9076
        %v9465 = vunpack.c.l.b16 %v9086
        %v9466 = vunpack.c.l.b16 %v9100
        %v9467 = vunpack.c.l.b16 %v9110
        %v9468 = vunpack.c.l.b16 %v9124
        %v9469 = vunpack.c.l.b16 %v9134
        %v9470 = vunpack.c.l.b16 %v9148
        %v9471 = vunpack.c.l.b16 %v9158
        %v9472 = vunpack.c.l.b16 %v9172
        %v9473 = vunpack.c.l.b16 %v9182
        %v9474 = vunpack.c.l.b16 %v9196
        %v9475 = vunpack.c.l.b16 %v9206
        %v9476 = vunpack.c.l.b16 %v9220
        %v9477 = vunpack.c.l.b16 %v9230
        %v9478 = vunpack.c.l.b16 %v9244
        %v9479 = vunpack.c.l.b16 %v9254
        %v9480 = vunpack.c.l.b16 %v9268
        %v9481 = vunpack.c.l.b16 %v9278
        %v9482 = vunpack.c.l.b16 %v9292
        %v9483 = vunpack.c.l.b16 %v9302
        %v9484 = vunpack.c.l.b16 %v9316
        %v9485 = vunpack.c.l.b16 %v9326
        %v9486 = vunpack.c.l.b16 %v9340
        %v9487 = vunpack.c.l.b16 %v9350
        %v9488 = vunpack.c.l.b16 %v9364
        %v9489 = vunpack.c.l.b16 %v9374
        %v9490 = vunpack.c.l.b16 %v9388
        %v9491 = vunpack.c.l.b16 %v9398
        %v9492 = vunpack.c.l.b16 %v9412
        %v9493 = vunpack.c.l.b16 %v9422
        %v9494 = vunpack.c.l.b16 %v9436
        %v9495 = vunpack.c.l.b16 %v9446
        %v9496 = vpack.c.b16 %v9465, %v9464
        %v9497 = vpack.c.b16 %v9467, %v9466
        %v9498 = vpack.c.b16 %v9469, %v9468
        %v9499 = vpack.c.b16 %v9471, %v9470
        %v9500 = vpack.c.b16 %v9473, %v9472
        %v9501 = vpack.c.b16 %v9475, %v9474
        %v9502 = vpack.c.b16 %v9477, %v9476
        %v9503 = vpack.c.b16 %v9479, %v9478
        %v9504 = vpack.c.b16 %v9481, %v9480
        %v9505 = vpack.c.b16 %v9483, %v9482
        %v9506 = vpack.c.b16 %v9485, %v9484
        %v9507 = vpack.c.b16 %v9487, %v9486
        %v9508 = vpack.c.b16 %v9489, %v9488
        %v9509 = vpack.c.b16 %v9491, %v9490
        %v9510 = vpack.c.b16 %v9493, %v9492
        %v9511 = vpack.c.b16 %v9495, %v9494
        %v9544 = vunpack.c.l.b16 %v9448
        %v9545 = vunpack.c.l.b16 %v9449
        %v9546 = vunpack.c.l.b16 %v9450
        %v9547 = vunpack.c.l.b16 %v9451
        %v9548 = vunpack.c.l.b16 %v9452
        %v9549 = vunpack.c.l.b16 %v9453
        %v9550 = vunpack.c.l.b16 %v9454
        %v9551 = vunpack.c.l.b16 %v9455
        %v9552 = vunpack.c.l.b16 %v9456
        %v9553 = vunpack.c.l.b16 %v9457
        %v9554 = vunpack.c.l.b16 %v9458
        %v9555 = vunpack.c.l.b16 %v9459
        %v9556 = vunpack.c.l.b16 %v9460
        %v9557 = vunpack.c.l.b16 %v9461
        %v9558 = vunpack.c.l.b16 %v9462
        %v9559 = vunpack.c.l.b16 %v9463
        %v9560 = vpack.c.b16 %v9545, %v9544
        %v9561 = vpack.c.b16 %v9547, %v9546
        %v9562 = vpack.c.b16 %v9549, %v9548
        %v9563 = vpack.c.b16 %v9551, %v9550
        %v9564 = vpack.c.b16 %v9553, %v9552
        %v9565 = vpack.c.b16 %v9555, %v9554
        %v9566 = vpack.c.b16 %v9557, %v9556
        %v9567 = vpack.c.b16 %v9559, %v9558
        %9576 = vmatprep.subr.bf16.mxu0 0
        %9577 = vmatpush1.bf16.msra.mxu0 %v9560
        %9578 = vmatprep.subr.bf16.mxu0 0
        %9579 = vmatpush1.bf16.msra.mxu0 %v9561
        %9580 = vmatprep.subr.bf16.mxu0 0
        %9581 = vmatpush1.bf16.msra.mxu0 %v9562
        %9582 = vmatprep.subr.bf16.mxu0 0
        %9583 = vmatpush1.bf16.msra.mxu0 %v9563
        %9584 = vmatprep.subr.bf16.mxu0 0
        %9585 = vmatpush1.bf16.msra.mxu0 %v9564
        %9586 = vmatprep.subr.bf16.mxu0 0
        %9587 = vmatpush1.bf16.msra.mxu0 %v9565
        %9588 = vmatprep.subr.bf16.mxu0 0
        %9589 = vmatpush1.bf16.msra.mxu0 %v9566
        %9590 = vmatprep.subr.bf16.mxu0 0
        %9591 = vmatpush1.bf16.msra.mxu0 %v9567
        %9592 = vmatprep.subr.bf16.mxu0 0
        %9593 = vmatpush1.bf16.msra.mxu0 0
        %9594 = vmatprep.subr.bf16.mxu0 0
        %9595 = vmatpush1.bf16.msra.mxu0 0
        %9596 = vmatprep.subr.bf16.mxu0 0
        %9597 = vmatpush1.bf16.msra.mxu0 0
        %9598 = vmatprep.subr.bf16.mxu0 0
        %9599 = vmatpush1.bf16.msra.mxu0 0
        %9600 = vmatprep.subr.bf16.mxu0 0
        %9601 = vmatpush1.bf16.msra.mxu0 0
        %9602 = vmatprep.subr.bf16.mxu0 0
        %9603 = vmatpush1.bf16.msra.mxu0 0
        %9604 = vmatprep.subr.bf16.mxu0 0
        %9605 = vmatpush1.bf16.msra.mxu0 0
        %9606 = vmatprep.subr.bf16.mxu0 0
        %9607 = vmatpush1.bf16.msra.mxu0 0
        %9608 = vmatprep.mubr.bf16.mxu0 0
        %9609 = vmatmul.mubr.bf16.gmra.mrb[0].mxu0 %v9496
        %v9610 = vpop.f32.mrb[0].mxu0
        %v9611 = vadd.f32 0.0, %v9610
        %v9612 = vpop.f32.mrb[0].mxu0
        %v9613 = vpop.f32.mrb[0].mxu0
        %v9614 = vadd.f32 0.0, %v9613
        %v9615 = vpop.f32.mrb[0].mxu0
        %9616 = vmatprep.mubr.bf16.mxu0 0
        %9617 = vmatmul.mubr.bf16.gmra.mrb[0].mxu0 %v9497
        %v9618 = vpop.f32.mrb[0].mxu0
        %v9619 = vadd.f32 0.0, %v9618
        %v9620 = vpop.f32.mrb[0].mxu0
        %v9621 = vpop.f32.mrb[0].mxu0
        %v9622 = vadd.f32 0.0, %v9621
        %v9623 = vpop.f32.mrb[0].mxu0
        %9624 = vmatprep.mubr.bf16.mxu0 0
        %9625 = vmatmul.mubr.bf16.gmra.mrb[0].mxu0 %v9498
        %v9626 = vpop.f32.mrb[0].mxu0
        %v9627 = vadd.f32 0.0, %v9626
        %v9628 = vpop.f32.mrb[0].mxu0
        %v9629 = vpop.f32.mrb[0].mxu0
        %v9630 = vadd.f32 0.0, %v9629
        %v9631 = vpop.f32.mrb[0].mxu0
        %9632 = vmatprep.mubr.bf16.mxu0 0
        %9633 = vmatmul.mubr.bf16.gmra.mrb[0].mxu0 %v9499
        %v9634 = vpop.f32.mrb[0].mxu0
        %v9635 = vadd.f32 0.0, %v9634
        %v9636 = vpop.f32.mrb[0].mxu0
        %v9637 = vpop.f32.mrb[0].mxu0
        %v9638 = vadd.f32 0.0, %v9637
        %v9639 = vpop.f32.mrb[0].mxu0
        %9640 = vmatprep.mubr.bf16.mxu0 0
        %9641 = vmatmul.mubr.bf16.gmra.mrb[0].mxu0 %v9500
        %v9642 = vpop.f32.mrb[0].mxu0
        %v9643 = vadd.f32 0.0, %v9642
        %v9644 = vpop.f32.mrb[0].mxu0
        %v9645 = vpop.f32.mrb[0].mxu0
        %v9646 = vadd.f32 0.0, %v9645
        %v9647 = vpop.f32.mrb[0].mxu0
        %9648 = vmatprep.mubr.bf16.mxu0 0
        %9649 = vmatmul.mubr.bf16.gmra.mrb[0].mxu0 %v9501
        %v9650 = vpop.f32.mrb[0].mxu0
        %v9651 = vadd.f32 0.0, %v9650
        %v9652 = vpop.f32.mrb[0].mxu0
        %v9653 = vpop.f32.mrb[0].mxu0
        %v9654 = vadd.f32 0.0, %v9653
        %v9655 = vpop.f32.mrb[0].mxu0
        %9656 = vmatprep.mubr.bf16.mxu0 0
        %9657 = vmatmul.mubr.bf16.gmra.mrb[0].mxu0 %v9502
        %v9658 = vpop.f32.mrb[0].mxu0
        %v9659 = vadd.f32 0.0, %v9658
        %v9660 = vpop.f32.mrb[0].mxu0
        %v9661 = vpop.f32.mrb[0].mxu0
        %v9662 = vadd.f32 0.0, %v9661
        %v9663 = vpop.f32.mrb[0].mxu0
        %9664 = vmatprep.mubr.bf16.mxu0 0
        %9665 = vmatmul.mubr.bf16.gmra.mrb[0].mxu0 %v9503
        %v9666 = vpop.f32.mrb[0].mxu0
        %v9667 = vadd.f32 0.0, %v9666
        %v9668 = vpop.f32.mrb[0].mxu0
        %v9669 = vpop.f32.mrb[0].mxu0
        %v9670 = vadd.f32 0.0, %v9669
        %v9671 = vpop.f32.mrb[0].mxu0
        %9672 = vmatprep.mubr.bf16.mxu0 0
        %9673 = vmatmul.mubr.bf16.gmra.mrb[0].mxu0 %v9504
        %v9674 = vpop.f32.mrb[0].mxu0
        %v9675 = vadd.f32 0.0, %v9674
        %v9676 = vpop.f32.mrb[0].mxu0
        %v9677 = vpop.f32.mrb[0].mxu0
        %v9678 = vadd.f32 0.0, %v9677
        %v9679 = vpop.f32.mrb[0].mxu0
        %9680 = vmatprep.mubr.bf16.mxu0 0
        %9681 = vmatmul.mubr.bf16.gmra.mrb[0].mxu0 %v9505
        %v9682 = vpop.f32.mrb[0].mxu0
        %v9683 = vadd.f32 0.0, %v9682
        %v9684 = vpop.f32.mrb[0].mxu0
        %v9685 = vpop.f32.mrb[0].mxu0
        %v9686 = vadd.f32 0.0, %v9685
        %v9687 = vpop.f32.mrb[0].mxu0
        %9688 = vmatprep.mubr.bf16.mxu0 0
        %9689 = vmatmul.mubr.bf16.gmra.mrb[0].mxu0 %v9506
        %v9690 = vpop.f32.mrb[0].mxu0
        %v9691 = vadd.f32 0.0, %v9690
        %v9692 = vpop.f32.mrb[0].mxu0
        %v9693 = vpop.f32.mrb[0].mxu0
        %v9694 = vadd.f32 0.0, %v9693
        %v9695 = vpop.f32.mrb[0].mxu0
        %9696 = vmatprep.mubr.bf16.mxu0 0
        %9697 = vmatmul.mubr.bf16.gmra.mrb[0].mxu0 %v9507
        %v9698 = vpop.f32.mrb[0].mxu0
        %v9699 = vadd.f32 0.0, %v9698
        %v9700 = vpop.f32.mrb[0].mxu0
        %v9701 = vpop.f32.mrb[0].mxu0
        %v9702 = vadd.f32 0.0, %v9701
        %v9703 = vpop.f32.mrb[0].mxu0
        %9704 = vmatprep.mubr.bf16.mxu0 0
        %9705 = vmatmul.mubr.bf16.gmra.mrb[0].mxu0 %v9508
        %v9706 = vpop.f32.mrb[0].mxu0
        %v9707 = vadd.f32 0.0, %v9706
        %v9708 = vpop.f32.mrb[0].mxu0
        %v9709 = vpop.f32.mrb[0].mxu0
        %v9710 = vadd.f32 0.0, %v9709
        %v9711 = vpop.f32.mrb[0].mxu0
        %9712 = vmatprep.mubr.bf16.mxu0 0
        %9713 = vmatmul.mubr.bf16.gmra.mrb[0].mxu0 %v9509
        %v9714 = vpop.f32.mrb[0].mxu0
        %v9715 = vadd.f32 0.0, %v9714
        %v9716 = vpop.f32.mrb[0].mxu0
        %v9717 = vpop.f32.mrb[0].mxu0
        %v9718 = vadd.f32 0.0, %v9717
        %v9719 = vpop.f32.mrb[0].mxu0
        %9720 = vmatprep.mubr.bf16.mxu0 0
        %9721 = vmatmul.mubr.bf16.gmra.mrb[0].mxu0 %v9510
        %v9722 = vpop.f32.mrb[0].mxu0
        %v9723 = vadd.f32 0.0, %v9722
        %v9724 = vpop.f32.mrb[0].mxu0
        %v9725 = vpop.f32.mrb[0].mxu0
        %v9726 = vadd.f32 0.0, %v9725
        %v9727 = vpop.f32.mrb[0].mxu0
        %9728 = vmatprep.mubr.bf16.mxu0 0
        %9729 = vmatmul.mubr.bf16.gmra.mrb[0].mxu0 %v9511
        %v9730 = vpop.f32.mrb[0].mxu0
        %v9731 = vadd.f32 0.0, %v9730
        %v9732 = vpop.f32.mrb[0].mxu0
        %v9733 = vpop.f32.mrb[0].mxu0
        %v9734 = vadd.f32 0.0, %v9733
        %v9735 = vpop.f32.mrb[0].mxu0
        %9736 = vdwg.mxu0
        %v9737 = vadd.f32 %v8983, %v9611
        %v9738 = vadd.f32 %v8984, %v9614
        %v9739 = vadd.f32 %v8985, %v9619
        %v9740 = vadd.f32 %v8986, %v9622
        %v9741 = vadd.f32 %v8987, %v9627
        %v9742 = vadd.f32 %v8988, %v9630
        %v9743 = vadd.f32 %v8989, %v9635
        %v9744 = vadd.f32 %v8990, %v9638
        %v9745 = vadd.f32 %v8991, %v9643
        %v9746 = vadd.f32 %v8992, %v9646
        %v9747 = vadd.f32 %v8993, %v9651
        %v9748 = vadd.f32 %v8994, %v9654
        %v9749 = vadd.f32 %v8995, %v9659
        %v9750 = vadd.f32 %v8996, %v9662
        %v9751 = vadd.f32 %v8997, %v9667
        %v9752 = vadd.f32 %v8998, %v9670
        %v9753 = vadd.f32 %v8999, %v9675
        %v9754 = vadd.f32 %v9000, %v9678
        %v9755 = vadd.f32 %v9001, %v9683
        %v9756 = vadd.f32 %v9002, %v9686
        %v9757 = vadd.f32 %v9003, %v9691
        %v9758 = vadd.f32 %v9004, %v9694
        %v9759 = vadd.f32 %v9005, %v9699
        %v9760 = vadd.f32 %v9006, %v9702
        %v9761 = vadd.f32 %v9007, %v9707
        %v9762 = vadd.f32 %v9008, %v9710
        %v9763 = vadd.f32 %v9009, %v9715
        %v9764 = vadd.f32 %v9010, %v9718
        %v9765 = vadd.f32 %v9011, %v9723
        %v9766 = vadd.f32 %v9012, %v9726
        %v9767 = vadd.f32 %v9013, %v9731
        %v9768 = vadd.f32 %v9014, %v9734
        %v9769 = vld [vmem:[%s6987] sm:$0xe]
        %v9770 = vld [vmem:[%s6987 + $0xc] sm:$0xe]
        %v9771 = vld [vmem:[%s6987 + $0x18] sm:$0xe]
        %v9772 = vld [vmem:[%s6987 + $0x24] sm:$0xe]
        %v9773 = vld [vmem:[%s6987 + $0x30] sm:$0xe]
        %v9774 = vld [vmem:[%s6987 + $0x3c] sm:$0xe]
        %v9775 = vld [vmem:[%s6987 + $0x48] sm:$0xe]
        %v9776 = vld [vmem:[%s6987 + $0x54] sm:$0xe]
        %v9777 = vld [vmem:[%s6987 + $0x60] sm:$0xe]
        %v9778 = vld [vmem:[%s6987 + $0x6c] sm:$0xe]
        %v9779 = vld [vmem:[%s6987 + $0x78] sm:$0xe]
        %v9780 = vld [vmem:[%s6987 + $0x84] sm:$0xe]
        %v9781 = vld [vmem:[%s6987 + $0x90] sm:$0xe]
        %v9782 = vld [vmem:[%s6987 + $0x9c] sm:$0xe]
        %v9783 = vld [vmem:[%s6987 + $0xa8] sm:$0xe]
        %v9784 = vld [vmem:[%s6987 + $0xb4] sm:$0xe]
        %v9833 = vrot.slane %v9769, 5
        %v9834 = vrot.slane %v9833, 4
        %v9835 = vrot.slane %v9016, 5
        %v9836 = vsel %vm2792, %v9834, %v9835
        %v9837 = vrot.slane %v9835, 4
        %v9838 = vrot.slane %v9017, 5
        %v9839 = vsel %vm2792, %v9837, %v9838
        %v9840 = vrot.slane %v9770, 5
        %v9841 = vrot.slane %v9840, 4
        %v9842 = vrot.slane %v9019, 5
        %v9843 = vsel %vm2792, %v9841, %v9842
        %v9844 = vrot.slane %v9842, 4
        %v9845 = vrot.slane %v9020, 5
        %v9846 = vsel %vm2792, %v9844, %v9845
        %v9847 = vrot.slane %v9771, 5
        %v9848 = vrot.slane %v9847, 4
        %v9849 = vrot.slane %v9022, 5
        %v9850 = vsel %vm2792, %v9848, %v9849
        %v9851 = vrot.slane %v9849, 4
        %v9852 = vrot.slane %v9023, 5
        %v9853 = vsel %vm2792, %v9851, %v9852
        %v9854 = vrot.slane %v9772, 5
        %v9855 = vrot.slane %v9854, 4
        %v9856 = vrot.slane %v9025, 5
        %v9857 = vsel %vm2792, %v9855, %v9856
        %v9858 = vrot.slane %v9856, 4
        %v9859 = vrot.slane %v9026, 5
        %v9860 = vsel %vm2792, %v9858, %v9859
        %v9861 = vrot.slane %v9773, 5
        %v9862 = vrot.slane %v9861, 4
        %v9863 = vrot.slane %v9028, 5
        %v9864 = vsel %vm2792, %v9862, %v9863
        %v9865 = vrot.slane %v9863, 4
        %v9866 = vrot.slane %v9029, 5
        %v9867 = vsel %vm2792, %v9865, %v9866
        %v9868 = vrot.slane %v9774, 5
        %v9869 = vrot.slane %v9868, 4
        %v9870 = vrot.slane %v9031, 5
        %v9871 = vsel %vm2792, %v9869, %v9870
        %v9872 = vrot.slane %v9870, 4
        %v9873 = vrot.slane %v9032, 5
        %v9874 = vsel %vm2792, %v9872, %v9873
        %v9875 = vrot.slane %v9775, 5
        %v9876 = vrot.slane %v9875, 4
        %v9877 = vrot.slane %v9034, 5
        %v9878 = vsel %vm2792, %v9876, %v9877
        %v9879 = vrot.slane %v9877, 4
        %v9880 = vrot.slane %v9035, 5
        %v9881 = vsel %vm2792, %v9879, %v9880
        %v9882 = vrot.slane %v9776, 5
        %v9883 = vrot.slane %v9882, 4
        %v9884 = vrot.slane %v9037, 5
        %v9885 = vsel %vm2792, %v9883, %v9884
        %v9886 = vrot.slane %v9884, 4
        %v9887 = vrot.slane %v9038, 5
        %v9888 = vsel %vm2792, %v9886, %v9887
        %v9889 = vrot.slane %v9777, 5
        %v9890 = vrot.slane %v9889, 4
        %v9891 = vrot.slane %v9040, 5
        %v9892 = vsel %vm2792, %v9890, %v9891
        %v9893 = vrot.slane %v9891, 4
        %v9894 = vrot.slane %v9041, 5
        %v9895 = vsel %vm2792, %v9893, %v9894
        %v9896 = vrot.slane %v9778, 5
        %v9897 = vrot.slane %v9896, 4
        %v9898 = vrot.slane %v9043, 5
        %v9899 = vsel %vm2792, %v9897, %v9898
        %v9900 = vrot.slane %v9898, 4
        %v9901 = vrot.slane %v9044, 5
        %v9902 = vsel %vm2792, %v9900, %v9901
        %v9903 = vrot.slane %v9779, 5
        %v9904 = vrot.slane %v9903, 4
        %v9905 = vrot.slane %v9046, 5
        %v9906 = vsel %vm2792, %v9904, %v9905
        %v9907 = vrot.slane %v9905, 4
        %v9908 = vrot.slane %v9047, 5
        %v9909 = vsel %vm2792, %v9907, %v9908
        %v9910 = vrot.slane %v9780, 5
        %v9911 = vrot.slane %v9910, 4
        %v9912 = vrot.slane %v9049, 5
        %v9913 = vsel %vm2792, %v9911, %v9912
        %v9914 = vrot.slane %v9912, 4
        %v9915 = vrot.slane %v9050, 5
        %v9916 = vsel %vm2792, %v9914, %v9915
        %v9917 = vrot.slane %v9781, 5
        %v9918 = vrot.slane %v9917, 4
        %v9919 = vrot.slane %v9052, 5
        %v9920 = vsel %vm2792, %v9918, %v9919
        %v9921 = vrot.slane %v9919, 4
        %v9922 = vrot.slane %v9053, 5
        %v9923 = vsel %vm2792, %v9921, %v9922
        %v9924 = vrot.slane %v9782, 5
        %v9925 = vrot.slane %v9924, 4
        %v9926 = vrot.slane %v9055, 5
        %v9927 = vsel %vm2792, %v9925, %v9926
        %v9928 = vrot.slane %v9926, 4
        %v9929 = vrot.slane %v9056, 5
        %v9930 = vsel %vm2792, %v9928, %v9929
        %v9931 = vrot.slane %v9783, 5
        %v9932 = vrot.slane %v9931, 4
        %v9933 = vrot.slane %v9058, 5
        %v9934 = vsel %vm2792, %v9932, %v9933
        %v9935 = vrot.slane %v9933, 4
        %v9936 = vrot.slane %v9059, 5
        %v9937 = vsel %vm2792, %v9935, %v9936
        %v9938 = vrot.slane %v9784, 5
        %v9939 = vrot.slane %v9938, 4
        %v9940 = vrot.slane %v9061, 5
        %v9941 = vsel %vm2792, %v9939, %v9940
        %v9942 = vrot.slane %v9940, 4
        %v9943 = vrot.slane %v9062, 5
        %v9944 = vsel %vm2792, %v9942, %v9943
        %s9945 = scalar_lea.vmem %s6, 320
        %v9946 = vld [vmem:[%s9945] sm:$0xf]
        %v9947 = vld [vmem:[%s9945 + $0x4] sm:$0xf]
        %v9948 = vld [vmem:[%s9945 + $0x8] sm:$0xf]
        %v9949 = vld [vmem:[%s9945 + $0xc] sm:$0xf]
        %v9950 = vld [vmem:[%s9945 + $0x10] sm:$0xf]
        %v9951 = vld [vmem:[%s9945 + $0x14] sm:$0xf]
        %v9952 = vld [vmem:[%s9945 + $0x18] sm:$0xf]
        %v9953 = vld [vmem:[%s9945 + $0x1c] sm:$0xf]
        %v9954 = vld [vmem:[%s9945 + $0x20] sm:$0xf]
        %v9955 = vld [vmem:[%s9945 + $0x24] sm:$0xf]
        %v9956 = vld [vmem:[%s9945 + $0x28] sm:$0xf]
        %v9957 = vld [vmem:[%s9945 + $0x2c] sm:$0xf]
        %v9958 = vld [vmem:[%s9945 + $0x30] sm:$0xf]
        %v9959 = vld [vmem:[%s9945 + $0x34] sm:$0xf]
        %v9960 = vld [vmem:[%s9945 + $0x38] sm:$0xf]
        %v9961 = vld [vmem:[%s9945 + $0x3c] sm:$0xf]
        %v9962 = vunpack.c.l.b16 %v9836
        %v9963 = vunpack.c.l.b16 %v9839
        %v9964 = vunpack.c.l.b16 %v9843
        %v9965 = vunpack.c.l.b16 %v9846
        %v9966 = vunpack.c.l.b16 %v9850
        %v9967 = vunpack.c.l.b16 %v9853
        %v9968 = vunpack.c.l.b16 %v9857
        %v9969 = vunpack.c.l.b16 %v9860
        %v9970 = vunpack.c.l.b16 %v9864
        %v9971 = vunpack.c.l.b16 %v9867
        %v9972 = vunpack.c.l.b16 %v9871
        %v9973 = vunpack.c.l.b16 %v9874
        %v9974 = vunpack.c.l.b16 %v9878
        %v9975 = vunpack.c.l.b16 %v9881
        %v9976 = vunpack.c.l.b16 %v9885
        %v9977 = vunpack.c.l.b16 %v9888
        %v9978 = vunpack.c.l.b16 %v9892
        %v9979 = vunpack.c.l.b16 %v9895
        %v9980 = vunpack.c.l.b16 %v9899
        %v9981 = vunpack.c.l.b16 %v9902
        %v9982 = vunpack.c.l.b16 %v9906
        %v9983 = vunpack.c.l.b16 %v9909
        %v9984 = vunpack.c.l.b16 %v9913
        %v9985 = vunpack.c.l.b16 %v9916
        %v9986 = vunpack.c.l.b16 %v9920
        %v9987 = vunpack.c.l.b16 %v9923
        %v9988 = vunpack.c.l.b16 %v9927
        %v9989 = vunpack.c.l.b16 %v9930
        %v9990 = vunpack.c.l.b16 %v9934
        %v9991 = vunpack.c.l.b16 %v9937
        %v9992 = vunpack.c.l.b16 %v9941
        %v9993 = vunpack.c.l.b16 %v9944
        %v9994 = vpack.c.b16 %v9963, %v9962
        %v9995 = vpack.c.b16 %v9965, %v9964
        %v9996 = vpack.c.b16 %v9967, %v9966
        %v9997 = vpack.c.b16 %v9969, %v9968
        %v9998 = vpack.c.b16 %v9971, %v9970
        %v9999 = vpack.c.b16 %v9973, %v9972
        %v10000 = vpack.c.b16 %v9975, %v9974
        %v10001 = vpack.c.b16 %v9977, %v9976
        %v10002 = vpack.c.b16 %v9979, %v9978
        %v10003 = vpack.c.b16 %v9981, %v9980
        %v10004 = vpack.c.b16 %v9983, %v9982
        %v10005 = vpack.c.b16 %v9985, %v9984
        %v10006 = vpack.c.b16 %v9987, %v9986
        %v10007 = vpack.c.b16 %v9989, %v9988
        %v10008 = vpack.c.b16 %v9991, %v9990
        %v10009 = vpack.c.b16 %v9993, %v9992
        %v10042 = vunpack.c.l.b16 %v9946
        %v10043 = vunpack.c.l.b16 %v9947
        %v10044 = vunpack.c.l.b16 %v9948
        %v10045 = vunpack.c.l.b16 %v9949
        %v10046 = vunpack.c.l.b16 %v9950
        %v10047 = vunpack.c.l.b16 %v9951
        %v10048 = vunpack.c.l.b16 %v9952
        %v10049 = vunpack.c.l.b16 %v9953
        %v10050 = vunpack.c.l.b16 %v9954
        %v10051 = vunpack.c.l.b16 %v9955
        %v10052 = vunpack.c.l.b16 %v9956
        %v10053 = vunpack.c.l.b16 %v9957
        %v10054 = vunpack.c.l.b16 %v9958
        %v10055 = vunpack.c.l.b16 %v9959
        %v10056 = vunpack.c.l.b16 %v9960
        %v10057 = vunpack.c.l.b16 %v9961
        %v10058 = vpack.c.b16 %v10043, %v10042
        %v10059 = vpack.c.b16 %v10045, %v10044
        %v10060 = vpack.c.b16 %v10047, %v10046
        %v10061 = vpack.c.b16 %v10049, %v10048
        %v10062 = vpack.c.b16 %v10051, %v10050
        %v10063 = vpack.c.b16 %v10053, %v10052
        %v10064 = vpack.c.b16 %v10055, %v10054
        %v10065 = vpack.c.b16 %v10057, %v10056
        %10074 = vmatprep.subr.bf16.mxu0 0
        %10075 = vmatpush1.bf16.msra.mxu0 %v10058
        %10076 = vmatprep.subr.bf16.mxu0 0
        %10077 = vmatpush1.bf16.msra.mxu0 %v10059
        %10078 = vmatprep.subr.bf16.mxu0 0
        %10079 = vmatpush1.bf16.msra.mxu0 %v10060
        %10080 = vmatprep.subr.bf16.mxu0 0
        %10081 = vmatpush1.bf16.msra.mxu0 %v10061
        %10082 = vmatprep.subr.bf16.mxu0 0
        %10083 = vmatpush1.bf16.msra.mxu0 %v10062
        %10084 = vmatprep.subr.bf16.mxu0 0
        %10085 = vmatpush1.bf16.msra.mxu0 %v10063
        %10086 = vmatprep.subr.bf16.mxu0 0
        %10087 = vmatpush1.bf16.msra.mxu0 %v10064
        %10088 = vmatprep.subr.bf16.mxu0 0
        %10089 = vmatpush1.bf16.msra.mxu0 %v10065
        %10090 = vmatprep.subr.bf16.mxu0 0
        %10091 = vmatpush1.bf16.msra.mxu0 0
        %10092 = vmatprep.subr.bf16.mxu0 0
        %10093 = vmatpush1.bf16.msra.mxu0 0
        %10094 = vmatprep.subr.bf16.mxu0 0
        %10095 = vmatpush1.bf16.msra.mxu0 0
        %10096 = vmatprep.subr.bf16.mxu0 0
        %10097 = vmatpush1.bf16.msra.mxu0 0
        %10098 = vmatprep.subr.bf16.mxu0 0
        %10099 = vmatpush1.bf16.msra.mxu0 0
        %10100 = vmatprep.subr.bf16.mxu0 0
        %10101 = vmatpush1.bf16.msra.mxu0 0
        %10102 = vmatprep.subr.bf16.mxu0 0
        %10103 = vmatpush1.bf16.msra.mxu0 0
        %10104 = vmatprep.subr.bf16.mxu0 0
        %10105 = vmatpush1.bf16.msra.mxu0 0
        %10106 = vmatprep.mubr.bf16.mxu0 0
        %10107 = vmatmul.mubr.bf16.gmra.mrb[0].mxu0 %v9994
        %v10108 = vpop.f32.mrb[0].mxu0
        %v10109 = vadd.f32 0.0, %v10108
        %v10110 = vpop.f32.mrb[0].mxu0
        %v10111 = vpop.f32.mrb[0].mxu0
        %v10112 = vadd.f32 0.0, %v10111
        %v10113 = vpop.f32.mrb[0].mxu0
        %10114 = vmatprep.mubr.bf16.mxu0 0
        %10115 = vmatmul.mubr.bf16.gmra.mrb[0].mxu0 %v9995
        %v10116 = vpop.f32.mrb[0].mxu0
        %v10117 = vadd.f32 0.0, %v10116
        %v10118 = vpop.f32.mrb[0].mxu0
        %v10119 = vpop.f32.mrb[0].mxu0
        %v10120 = vadd.f32 0.0, %v10119
        %v10121 = vpop.f32.mrb[0].mxu0
        %10122 = vmatprep.mubr.bf16.mxu0 0
        %10123 = vmatmul.mubr.bf16.gmra.mrb[0].mxu0 %v9996
        %v10124 = vpop.f32.mrb[0].mxu0
        %v10125 = vadd.f32 0.0, %v10124
        %v10126 = vpop.f32.mrb[0].mxu0
        %v10127 = vpop.f32.mrb[0].mxu0
        %v10128 = vadd.f32 0.0, %v10127
        %v10129 = vpop.f32.mrb[0].mxu0
        %10130 = vmatprep.mubr.bf16.mxu0 0
        %10131 = vmatmul.mubr.bf16.gmra.mrb[0].mxu0 %v9997
        %v10132 = vpop.f32.mrb[0].mxu0
        %v10133 = vadd.f32 0.0, %v10132
        %v10134 = vpop.f32.mrb[0].mxu0
        %v10135 = vpop.f32.mrb[0].mxu0
        %v10136 = vadd.f32 0.0, %v10135
        %v10137 = vpop.f32.mrb[0].mxu0
        %10138 = vmatprep.mubr.bf16.mxu0 0
        %10139 = vmatmul.mubr.bf16.gmra.mrb[0].mxu0 %v9998
        %v10140 = vpop.f32.mrb[0].mxu0
        %v10141 = vadd.f32 0.0, %v10140
        %v10142 = vpop.f32.mrb[0].mxu0
        %v10143 = vpop.f32.mrb[0].mxu0
        %v10144 = vadd.f32 0.0, %v10143
        %v10145 = vpop.f32.mrb[0].mxu0
        %10146 = vmatprep.mubr.bf16.mxu0 0
        %10147 = vmatmul.mubr.bf16.gmra.mrb[0].mxu0 %v9999
        %v10148 = vpop.f32.mrb[0].mxu0
        %v10149 = vadd.f32 0.0, %v10148
        %v10150 = vpop.f32.mrb[0].mxu0
        %v10151 = vpop.f32.mrb[0].mxu0
        %v10152 = vadd.f32 0.0, %v10151
        %v10153 = vpop.f32.mrb[0].mxu0
        %10154 = vmatprep.mubr.bf16.mxu0 0
        %10155 = vmatmul.mubr.bf16.gmra.mrb[0].mxu0 %v10000
        %v10156 = vpop.f32.mrb[0].mxu0
        %v10157 = vadd.f32 0.0, %v10156
        %v10158 = vpop.f32.mrb[0].mxu0
        %v10159 = vpop.f32.mrb[0].mxu0
        %v10160 = vadd.f32 0.0, %v10159
        %v10161 = vpop.f32.mrb[0].mxu0
        %10162 = vmatprep.mubr.bf16.mxu0 0
        %10163 = vmatmul.mubr.bf16.gmra.mrb[0].mxu0 %v10001
        %v10164 = vpop.f32.mrb[0].mxu0
        %v10165 = vadd.f32 0.0, %v10164
        %v10166 = vpop.f32.mrb[0].mxu0
        %v10167 = vpop.f32.mrb[0].mxu0
        %v10168 = vadd.f32 0.0, %v10167
        %v10169 = vpop.f32.mrb[0].mxu0
        %10170 = vmatprep.mubr.bf16.mxu0 0
        %10171 = vmatmul.mubr.bf16.gmra.mrb[0].mxu0 %v10002
        %v10172 = vpop.f32.mrb[0].mxu0
        %v10173 = vadd.f32 0.0, %v10172
        %v10174 = vpop.f32.mrb[0].mxu0
        %v10175 = vpop.f32.mrb[0].mxu0
        %v10176 = vadd.f32 0.0, %v10175
        %v10177 = vpop.f32.mrb[0].mxu0
        %10178 = vmatprep.mubr.bf16.mxu0 0
        %10179 = vmatmul.mubr.bf16.gmra.mrb[0].mxu0 %v10003
        %v10180 = vpop.f32.mrb[0].mxu0
        %v10181 = vadd.f32 0.0, %v10180
        %v10182 = vpop.f32.mrb[0].mxu0
        %v10183 = vpop.f32.mrb[0].mxu0
        %v10184 = vadd.f32 0.0, %v10183
        %v10185 = vpop.f32.mrb[0].mxu0
        %10186 = vmatprep.mubr.bf16.mxu0 0
        %10187 = vmatmul.mubr.bf16.gmra.mrb[0].mxu0 %v10004
        %v10188 = vpop.f32.mrb[0].mxu0
        %v10189 = vadd.f32 0.0, %v10188
        %v10190 = vpop.f32.mrb[0].mxu0
        %v10191 = vpop.f32.mrb[0].mxu0
        %v10192 = vadd.f32 0.0, %v10191
        %v10193 = vpop.f32.mrb[0].mxu0
        %10194 = vmatprep.mubr.bf16.mxu0 0
        %10195 = vmatmul.mubr.bf16.gmra.mrb[0].mxu0 %v10005
        %v10196 = vpop.f32.mrb[0].mxu0
        %v10197 = vadd.f32 0.0, %v10196
        %v10198 = vpop.f32.mrb[0].mxu0
        %v10199 = vpop.f32.mrb[0].mxu0
        %v10200 = vadd.f32 0.0, %v10199
        %v10201 = vpop.f32.mrb[0].mxu0
        %10202 = vmatprep.mubr.bf16.mxu0 0
        %10203 = vmatmul.mubr.bf16.gmra.mrb[0].mxu0 %v10006
        %v10204 = vpop.f32.mrb[0].mxu0
        %v10205 = vadd.f32 0.0, %v10204
        %v10206 = vpop.f32.mrb[0].mxu0
        %v10207 = vpop.f32.mrb[0].mxu0
        %v10208 = vadd.f32 0.0, %v10207
        %v10209 = vpop.f32.mrb[0].mxu0
        %10210 = vmatprep.mubr.bf16.mxu0 0
        %10211 = vmatmul.mubr.bf16.gmra.mrb[0].mxu0 %v10007
        %v10212 = vpop.f32.mrb[0].mxu0
        %v10213 = vadd.f32 0.0, %v10212
        %v10214 = vpop.f32.mrb[0].mxu0
        %v10215 = vpop.f32.mrb[0].mxu0
        %v10216 = vadd.f32 0.0, %v10215
        %v10217 = vpop.f32.mrb[0].mxu0
        %10218 = vmatprep.mubr.bf16.mxu0 0
        %10219 = vmatmul.mubr.bf16.gmra.mrb[0].mxu0 %v10008
        %v10220 = vpop.f32.mrb[0].mxu0
        %v10221 = vadd.f32 0.0, %v10220
        %v10222 = vpop.f32.mrb[0].mxu0
        %v10223 = vpop.f32.mrb[0].mxu0
        %v10224 = vadd.f32 0.0, %v10223
        %v10225 = vpop.f32.mrb[0].mxu0
        %10226 = vmatprep.mubr.bf16.mxu0 0
        %10227 = vmatmul.mubr.bf16.gmra.mrb[0].mxu0 %v10009
        %v10228 = vpop.f32.mrb[0].mxu0
        %v10229 = vadd.f32 0.0, %v10228
        %v10230 = vpop.f32.mrb[0].mxu0
        %v10231 = vpop.f32.mrb[0].mxu0
        %v10232 = vadd.f32 0.0, %v10231
        %v10233 = vpop.f32.mrb[0].mxu0
        %10234 = vdwg.mxu0
        %v10235 = vadd.f32 %v9737, %v10109
        %v10236 = vadd.f32 %v9738, %v10112
        %v10237 = vadd.f32 %v9739, %v10117
        %v10238 = vadd.f32 %v9740, %v10120
        %v10239 = vadd.f32 %v9741, %v10125
        %v10240 = vadd.f32 %v9742, %v10128
        %v10241 = vadd.f32 %v9743, %v10133
        %v10242 = vadd.f32 %v9744, %v10136
        %v10243 = vadd.f32 %v9745, %v10141
        %v10244 = vadd.f32 %v9746, %v10144
        %v10245 = vadd.f32 %v9747, %v10149
        %v10246 = vadd.f32 %v9748, %v10152
        %v10247 = vadd.f32 %v9749, %v10157
        %v10248 = vadd.f32 %v9750, %v10160
        %v10249 = vadd.f32 %v9751, %v10165
        %v10250 = vadd.f32 %v9752, %v10168
        %v10251 = vadd.f32 %v9753, %v10173
        %v10252 = vadd.f32 %v9754, %v10176
        %v10253 = vadd.f32 %v9755, %v10181
        %v10254 = vadd.f32 %v9756, %v10184
        %v10255 = vadd.f32 %v9757, %v10189
        %v10256 = vadd.f32 %v9758, %v10192
        %v10257 = vadd.f32 %v9759, %v10197
        %v10258 = vadd.f32 %v9760, %v10200
        %v10259 = vadd.f32 %v9761, %v10205
        %v10260 = vadd.f32 %v9762, %v10208
        %v10261 = vadd.f32 %v9763, %v10213
        %v10262 = vadd.f32 %v9764, %v10216
        %v10263 = vadd.f32 %v9765, %v10221
        %v10264 = vadd.f32 %v9766, %v10224
        %v10265 = vadd.f32 %v9767, %v10229
        %v10266 = vadd.f32 %v9768, %v10232
        %s10267 = scalar_lea.vmem [#allocation3], 24
        %v10268 = vld [vmem:[%s10267] sm:$0xf]
        %v10269 = vld [vmem:[%s10267 + $0x4] sm:$0xf]
        %v10270 = vld [vmem:[%s10267 + $0xc] sm:$0xf]
        %v10271 = vld [vmem:[%s10267 + $0x10] sm:$0xf]
        %v10272 = vld [vmem:[%s10267 + $0x18] sm:$0xf]
        %v10273 = vld [vmem:[%s10267 + $0x1c] sm:$0xf]
        %v10274 = vld [vmem:[%s10267 + $0x24] sm:$0xf]
        %v10275 = vld [vmem:[%s10267 + $0x28] sm:$0xf]
        %v10276 = vld [vmem:[%s10267 + $0x30] sm:$0xf]
        %v10277 = vld [vmem:[%s10267 + $0x34] sm:$0xf]
        %v10278 = vld [vmem:[%s10267 + $0x3c] sm:$0xf]
        %v10279 = vld [vmem:[%s10267 + $0x40] sm:$0xf]
        %v10280 = vld [vmem:[%s10267 + $0x48] sm:$0xf]
        %v10281 = vld [vmem:[%s10267 + $0x4c] sm:$0xf]
        %v10282 = vld [vmem:[%s10267 + $0x54] sm:$0xf]
        %v10283 = vld [vmem:[%s10267 + $0x58] sm:$0xf]
        %v10284 = vld [vmem:[%s10267 + $0x60] sm:$0xf]
        %v10285 = vld [vmem:[%s10267 + $0x64] sm:$0xf]
        %v10286 = vld [vmem:[%s10267 + $0x6c] sm:$0xf]
        %v10287 = vld [vmem:[%s10267 + $0x70] sm:$0xf]
        %v10288 = vld [vmem:[%s10267 + $0x78] sm:$0xf]
        %v10289 = vld [vmem:[%s10267 + $0x7c] sm:$0xf]
        %v10290 = vld [vmem:[%s10267 + $0x84] sm:$0xf]
        %v10291 = vld [vmem:[%s10267 + $0x88] sm:$0xf]
        %v10292 = vld [vmem:[%s10267 + $0x90] sm:$0xf]
        %v10293 = vld [vmem:[%s10267 + $0x94] sm:$0xf]
        %v10294 = vld [vmem:[%s10267 + $0x9c] sm:$0xf]
        %v10295 = vld [vmem:[%s10267 + $0xa0] sm:$0xf]
        %v10296 = vld [vmem:[%s10267 + $0xa8] sm:$0xf]
        %v10297 = vld [vmem:[%s10267 + $0xac] sm:$0xf]
        %v10298 = vld [vmem:[%s10267 + $0xb4] sm:$0xf]
        %v10299 = vld [vmem:[%s10267 + $0xb8] sm:$0xf]
        %s10300 = scalar_lea.vmem %s6, 384
        %v10301 = vld [vmem:[%s10300] sm:$0xf]
        %v10302 = vld [vmem:[%s10300 + $0x4] sm:$0xf]
        %v10303 = vld [vmem:[%s10300 + $0x8] sm:$0xf]
        %v10304 = vld [vmem:[%s10300 + $0xc] sm:$0xf]
        %v10305 = vld [vmem:[%s10300 + $0x10] sm:$0xf]
        %v10306 = vld [vmem:[%s10300 + $0x14] sm:$0xf]
        %v10307 = vld [vmem:[%s10300 + $0x18] sm:$0xf]
        %v10308 = vld [vmem:[%s10300 + $0x1c] sm:$0xf]
        %v10309 = vld [vmem:[%s10300 + $0x20] sm:$0xf]
        %v10310 = vld [vmem:[%s10300 + $0x24] sm:$0xf]
        %v10311 = vld [vmem:[%s10300 + $0x28] sm:$0xf]
        %v10312 = vld [vmem:[%s10300 + $0x2c] sm:$0xf]
        %v10313 = vld [vmem:[%s10300 + $0x30] sm:$0xf]
        %v10314 = vld [vmem:[%s10300 + $0x34] sm:$0xf]
        %v10315 = vld [vmem:[%s10300 + $0x38] sm:$0xf]
        %v10316 = vld [vmem:[%s10300 + $0x3c] sm:$0xf]
        %v10349 = vunpack.c.l.b16 %v10268
        %v10350 = vunpack.c.l.b16 %v10269
        %v10351 = vunpack.c.l.b16 %v10270
        %v10352 = vunpack.c.l.b16 %v10271
        %v10353 = vunpack.c.l.b16 %v10272
        %v10354 = vunpack.c.l.b16 %v10273
        %v10355 = vunpack.c.l.b16 %v10274
        %v10356 = vunpack.c.l.b16 %v10275
        %v10357 = vunpack.c.l.b16 %v10276
        %v10358 = vunpack.c.l.b16 %v10277
        %v10359 = vunpack.c.l.b16 %v10278
        %v10360 = vunpack.c.l.b16 %v10279
        %v10361 = vunpack.c.l.b16 %v10280
        %v10362 = vunpack.c.l.b16 %v10281
        %v10363 = vunpack.c.l.b16 %v10282
        %v10364 = vunpack.c.l.b16 %v10283
        %v10365 = vunpack.c.l.b16 %v10284
        %v10366 = vunpack.c.l.b16 %v10285
        %v10367 = vunpack.c.l.b16 %v10286
        %v10368 = vunpack.c.l.b16 %v10287
        %v10369 = vunpack.c.l.b16 %v10288
        %v10370 = vunpack.c.l.b16 %v10289
        %v10371 = vunpack.c.l.b16 %v10290
        %v10372 = vunpack.c.l.b16 %v10291
        %v10373 = vunpack.c.l.b16 %v10292
        %v10374 = vunpack.c.l.b16 %v10293
        %v10375 = vunpack.c.l.b16 %v10294
        %v10376 = vunpack.c.l.b16 %v10295
        %v10377 = vunpack.c.l.b16 %v10296
        %v10378 = vunpack.c.l.b16 %v10297
        %v10379 = vunpack.c.l.b16 %v10298
        %v10380 = vunpack.c.l.b16 %v10299
        %v10381 = vpack.c.b16 %v10350, %v10349
        %v10382 = vpack.c.b16 %v10352, %v10351
        %v10383 = vpack.c.b16 %v10354, %v10353
        %v10384 = vpack.c.b16 %v10356, %v10355
        %v10385 = vpack.c.b16 %v10358, %v10357
        %v10386 = vpack.c.b16 %v10360, %v10359
        %v10387 = vpack.c.b16 %v10362, %v10361
        %v10388 = vpack.c.b16 %v10364, %v10363
        %v10389 = vpack.c.b16 %v10366, %v10365
        %v10390 = vpack.c.b16 %v10368, %v10367
        %v10391 = vpack.c.b16 %v10370, %v10369
        %v10392 = vpack.c.b16 %v10372, %v10371
        %v10393 = vpack.c.b16 %v10374, %v10373
        %v10394 = vpack.c.b16 %v10376, %v10375
        %v10395 = vpack.c.b16 %v10378, %v10377
        %v10396 = vpack.c.b16 %v10380, %v10379
        %v10429 = vunpack.c.l.b16 %v10301
        %v10430 = vunpack.c.l.b16 %v10302
        %v10431 = vunpack.c.l.b16 %v10303
        %v10432 = vunpack.c.l.b16 %v10304
        %v10433 = vunpack.c.l.b16 %v10305
        %v10434 = vunpack.c.l.b16 %v10306
        %v10435 = vunpack.c.l.b16 %v10307
        %v10436 = vunpack.c.l.b16 %v10308
        %v10437 = vunpack.c.l.b16 %v10309
        %v10438 = vunpack.c.l.b16 %v10310
        %v10439 = vunpack.c.l.b16 %v10311
        %v10440 = vunpack.c.l.b16 %v10312
        %v10441 = vunpack.c.l.b16 %v10313
        %v10442 = vunpack.c.l.b16 %v10314
        %v10443 = vunpack.c.l.b16 %v10315
        %v10444 = vunpack.c.l.b16 %v10316
        %v10445 = vpack.c.b16 %v10430, %v10429
        %v10446 = vpack.c.b16 %v10432, %v10431
        %v10447 = vpack.c.b16 %v10434, %v10433
        %v10448 = vpack.c.b16 %v10436, %v10435
        %v10449 = vpack.c.b16 %v10438, %v10437
        %v10450 = vpack.c.b16 %v10440, %v10439
        %v10451 = vpack.c.b16 %v10442, %v10441
        %v10452 = vpack.c.b16 %v10444, %v10443
        %10461 = vmatprep.subr.bf16.mxu0 0
        %10462 = vmatpush1.bf16.msra.mxu0 %v10445
        %10463 = vmatprep.subr.bf16.mxu0 0
        %10464 = vmatpush1.bf16.msra.mxu0 %v10446
        %10465 = vmatprep.subr.bf16.mxu0 0
        %10466 = vmatpush1.bf16.msra.mxu0 %v10447
        %10467 = vmatprep.subr.bf16.mxu0 0
        %10468 = vmatpush1.bf16.msra.mxu0 %v10448
        %10469 = vmatprep.subr.bf16.mxu0 0
        %10470 = vmatpush1.bf16.msra.mxu0 %v10449
        %10471 = vmatprep.subr.bf16.mxu0 0
        %10472 = vmatpush1.bf16.msra.mxu0 %v10450
        %10473 = vmatprep.subr.bf16.mxu0 0
        %10474 = vmatpush1.bf16.msra.mxu0 %v10451
        %10475 = vmatprep.subr.bf16.mxu0 0
        %10476 = vmatpush1.bf16.msra.mxu0 %v10452
        %10477 = vmatprep.subr.bf16.mxu0 0
        %10478 = vmatpush1.bf16.msra.mxu0 0
        %10479 = vmatprep.subr.bf16.mxu0 0
        %10480 = vmatpush1.bf16.msra.mxu0 0
        %10481 = vmatprep.subr.bf16.mxu0 0
        %10482 = vmatpush1.bf16.msra.mxu0 0
        %10483 = vmatprep.subr.bf16.mxu0 0
        %10484 = vmatpush1.bf16.msra.mxu0 0
        %10485 = vmatprep.subr.bf16.mxu0 0
        %10486 = vmatpush1.bf16.msra.mxu0 0
        %10487 = vmatprep.subr.bf16.mxu0 0
        %10488 = vmatpush1.bf16.msra.mxu0 0
        %10489 = vmatprep.subr.bf16.mxu0 0
        %10490 = vmatpush1.bf16.msra.mxu0 0
        %10491 = vmatprep.subr.bf16.mxu0 0
        %10492 = vmatpush1.bf16.msra.mxu0 0
        %10493 = vmatprep.mubr.bf16.mxu0 0
        %10494 = vmatmul.mubr.bf16.gmra.mrb[0].mxu0 %v10381
        %v10495 = vpop.f32.mrb[0].mxu0
        %v10496 = vadd.f32 0.0, %v10495
        %v10497 = vpop.f32.mrb[0].mxu0
        %v10498 = vpop.f32.mrb[0].mxu0
        %v10499 = vadd.f32 0.0, %v10498
        %v10500 = vpop.f32.mrb[0].mxu0
        %10501 = vmatprep.mubr.bf16.mxu0 0
        %10502 = vmatmul.mubr.bf16.gmra.mrb[0].mxu0 %v10382
        %v10503 = vpop.f32.mrb[0].mxu0
        %v10504 = vadd.f32 0.0, %v10503
        %v10505 = vpop.f32.mrb[0].mxu0
        %v10506 = vpop.f32.mrb[0].mxu0
        %v10507 = vadd.f32 0.0, %v10506
        %v10508 = vpop.f32.mrb[0].mxu0
        %10509 = vmatprep.mubr.bf16.mxu0 0
        %10510 = vmatmul.mubr.bf16.gmra.mrb[0].mxu0 %v10383
        %v10511 = vpop.f32.mrb[0].mxu0
        %v10512 = vadd.f32 0.0, %v10511
        %v10513 = vpop.f32.mrb[0].mxu0
        %v10514 = vpop.f32.mrb[0].mxu0
        %v10515 = vadd.f32 0.0, %v10514
        %v10516 = vpop.f32.mrb[0].mxu0
        %10517 = vmatprep.mubr.bf16.mxu0 0
        %10518 = vmatmul.mubr.bf16.gmra.mrb[0].mxu0 %v10384
        %v10519 = vpop.f32.mrb[0].mxu0
        %v10520 = vadd.f32 0.0, %v10519
        %v10521 = vpop.f32.mrb[0].mxu0
        %v10522 = vpop.f32.mrb[0].mxu0
        %v10523 = vadd.f32 0.0, %v10522
        %v10524 = vpop.f32.mrb[0].mxu0
        %10525 = vmatprep.mubr.bf16.mxu0 0
        %10526 = vmatmul.mubr.bf16.gmra.mrb[0].mxu0 %v10385
        %v10527 = vpop.f32.mrb[0].mxu0
        %v10528 = vadd.f32 0.0, %v10527
        %v10529 = vpop.f32.mrb[0].mxu0
        %v10530 = vpop.f32.mrb[0].mxu0
        %v10531 = vadd.f32 0.0, %v10530
        %v10532 = vpop.f32.mrb[0].mxu0
        %10533 = vmatprep.mubr.bf16.mxu0 0
        %10534 = vmatmul.mubr.bf16.gmra.mrb[0].mxu0 %v10386
        %v10535 = vpop.f32.mrb[0].mxu0
        %v10536 = vadd.f32 0.0, %v10535
        %v10537 = vpop.f32.mrb[0].mxu0
        %v10538 = vpop.f32.mrb[0].mxu0
        %v10539 = vadd.f32 0.0, %v10538
        %v10540 = vpop.f32.mrb[0].mxu0
        %10541 = vmatprep.mubr.bf16.mxu0 0
        %10542 = vmatmul.mubr.bf16.gmra.mrb[0].mxu0 %v10387
        %v10543 = vpop.f32.mrb[0].mxu0
        %v10544 = vadd.f32 0.0, %v10543
        %v10545 = vpop.f32.mrb[0].mxu0
        %v10546 = vpop.f32.mrb[0].mxu0
        %v10547 = vadd.f32 0.0, %v10546
        %v10548 = vpop.f32.mrb[0].mxu0
        %10549 = vmatprep.mubr.bf16.mxu0 0
        %10550 = vmatmul.mubr.bf16.gmra.mrb[0].mxu0 %v10388
        %v10551 = vpop.f32.mrb[0].mxu0
        %v10552 = vadd.f32 0.0, %v10551
        %v10553 = vpop.f32.mrb[0].mxu0
        %v10554 = vpop.f32.mrb[0].mxu0
        %v10555 = vadd.f32 0.0, %v10554
        %v10556 = vpop.f32.mrb[0].mxu0
        %10557 = vmatprep.mubr.bf16.mxu0 0
        %10558 = vmatmul.mubr.bf16.gmra.mrb[0].mxu0 %v10389
        %v10559 = vpop.f32.mrb[0].mxu0
        %v10560 = vadd.f32 0.0, %v10559
        %v10561 = vpop.f32.mrb[0].mxu0
        %v10562 = vpop.f32.mrb[0].mxu0
        %v10563 = vadd.f32 0.0, %v10562
        %v10564 = vpop.f32.mrb[0].mxu0
        %10565 = vmatprep.mubr.bf16.mxu0 0
        %10566 = vmatmul.mubr.bf16.gmra.mrb[0].mxu0 %v10390
        %v10567 = vpop.f32.mrb[0].mxu0
        %v10568 = vadd.f32 0.0, %v10567
        %v10569 = vpop.f32.mrb[0].mxu0
        %v10570 = vpop.f32.mrb[0].mxu0
        %v10571 = vadd.f32 0.0, %v10570
        %v10572 = vpop.f32.mrb[0].mxu0
        %10573 = vmatprep.mubr.bf16.mxu0 0
        %10574 = vmatmul.mubr.bf16.gmra.mrb[0].mxu0 %v10391
        %v10575 = vpop.f32.mrb[0].mxu0
        %v10576 = vadd.f32 0.0, %v10575
        %v10577 = vpop.f32.mrb[0].mxu0
        %v10578 = vpop.f32.mrb[0].mxu0
        %v10579 = vadd.f32 0.0, %v10578
        %v10580 = vpop.f32.mrb[0].mxu0
        %10581 = vmatprep.mubr.bf16.mxu0 0
        %10582 = vmatmul.mubr.bf16.gmra.mrb[0].mxu0 %v10392
        %v10583 = vpop.f32.mrb[0].mxu0
        %v10584 = vadd.f32 0.0, %v10583
        %v10585 = vpop.f32.mrb[0].mxu0
        %v10586 = vpop.f32.mrb[0].mxu0
        %v10587 = vadd.f32 0.0, %v10586
        %v10588 = vpop.f32.mrb[0].mxu0
        %10589 = vmatprep.mubr.bf16.mxu0 0
        %10590 = vmatmul.mubr.bf16.gmra.mrb[0].mxu0 %v10393
        %v10591 = vpop.f32.mrb[0].mxu0
        %v10592 = vadd.f32 0.0, %v10591
        %v10593 = vpop.f32.mrb[0].mxu0
        %v10594 = vpop.f32.mrb[0].mxu0
        %v10595 = vadd.f32 0.0, %v10594
        %v10596 = vpop.f32.mrb[0].mxu0
        %10597 = vmatprep.mubr.bf16.mxu0 0
        %10598 = vmatmul.mubr.bf16.gmra.mrb[0].mxu0 %v10394
        %v10599 = vpop.f32.mrb[0].mxu0
        %v10600 = vadd.f32 0.0, %v10599
        %v10601 = vpop.f32.mrb[0].mxu0
        %v10602 = vpop.f32.mrb[0].mxu0
        %v10603 = vadd.f32 0.0, %v10602
        %v10604 = vpop.f32.mrb[0].mxu0
        %10605 = vmatprep.mubr.bf16.mxu0 0
        %10606 = vmatmul.mubr.bf16.gmra.mrb[0].mxu0 %v10395
        %v10607 = vpop.f32.mrb[0].mxu0
        %v10608 = vadd.f32 0.0, %v10607
        %v10609 = vpop.f32.mrb[0].mxu0
        %v10610 = vpop.f32.mrb[0].mxu0
        %v10611 = vadd.f32 0.0, %v10610
        %v10612 = vpop.f32.mrb[0].mxu0
        %10613 = vmatprep.mubr.bf16.mxu0 0
        %10614 = vmatmul.mubr.bf16.gmra.mrb[0].mxu0 %v10396
        %v10615 = vpop.f32.mrb[0].mxu0
        %v10616 = vadd.f32 0.0, %v10615
        %v10617 = vpop.f32.mrb[0].mxu0
        %v10618 = vpop.f32.mrb[0].mxu0
        %v10619 = vadd.f32 0.0, %v10618
        %v10620 = vpop.f32.mrb[0].mxu0
        %10621 = vdwg.mxu0
        %v10622 = vadd.f32 %v10235, %v10496
        %v10623 = vadd.f32 %v10236, %v10499
        %v10624 = vadd.f32 %v10237, %v10504
        %v10625 = vadd.f32 %v10238, %v10507
        %v10626 = vadd.f32 %v10239, %v10512
        %v10627 = vadd.f32 %v10240, %v10515
        %v10628 = vadd.f32 %v10241, %v10520
        %v10629 = vadd.f32 %v10242, %v10523
        %v10630 = vadd.f32 %v10243, %v10528
        %v10631 = vadd.f32 %v10244, %v10531
        %v10632 = vadd.f32 %v10245, %v10536
        %v10633 = vadd.f32 %v10246, %v10539
        %v10634 = vadd.f32 %v10247, %v10544
        %v10635 = vadd.f32 %v10248, %v10547
        %v10636 = vadd.f32 %v10249, %v10552
        %v10637 = vadd.f32 %v10250, %v10555
        %v10638 = vadd.f32 %v10251, %v10560
        %v10639 = vadd.f32 %v10252, %v10563
        %v10640 = vadd.f32 %v10253, %v10568
        %v10641 = vadd.f32 %v10254, %v10571
        %v10642 = vadd.f32 %v10255, %v10576
        %v10643 = vadd.f32 %v10256, %v10579
        %v10644 = vadd.f32 %v10257, %v10584
        %v10645 = vadd.f32 %v10258, %v10587
        %v10646 = vadd.f32 %v10259, %v10592
        %v10647 = vadd.f32 %v10260, %v10595
        %v10648 = vadd.f32 %v10261, %v10600
        %v10649 = vadd.f32 %v10262, %v10603
        %v10650 = vadd.f32 %v10263, %v10608
        %v10651 = vadd.f32 %v10264, %v10611
        %v10652 = vadd.f32 %v10265, %v10616
        %v10653 = vadd.f32 %v10266, %v10619
        %v10654 = vld [vmem:[%s10267] sm:$0xf]
        %v10655 = vld [vmem:[%s10267 + $0x4] sm:$0xf]
        %v10656 = vld [vmem:[%s10267 + $0x8] sm:$0x1]
        %v10657 = vld [vmem:[%s10267 + $0xc] sm:$0xf]
        %v10658 = vld [vmem:[%s10267 + $0x10] sm:$0xf]
        %v10659 = vld [vmem:[%s10267 + $0x14] sm:$0x1]
        %v10660 = vld [vmem:[%s10267 + $0x18] sm:$0xf]
        %v10661 = vld [vmem:[%s10267 + $0x1c] sm:$0xf]
        %v10662 = vld [vmem:[%s10267 + $0x20] sm:$0x1]
        %v10663 = vld [vmem:[%s10267 + $0x24] sm:$0xf]
        %v10664 = vld [vmem:[%s10267 + $0x28] sm:$0xf]
        %v10665 = vld [vmem:[%s10267 + $0x2c] sm:$0x1]
        %v10666 = vld [vmem:[%s10267 + $0x30] sm:$0xf]
        %v10667 = vld [vmem:[%s10267 + $0x34] sm:$0xf]
        %v10668 = vld [vmem:[%s10267 + $0x38] sm:$0x1]
        %v10669 = vld [vmem:[%s10267 + $0x3c] sm:$0xf]
        %v10670 = vld [vmem:[%s10267 + $0x40] sm:$0xf]
        %v10671 = vld [vmem:[%s10267 + $0x44] sm:$0x1]
        %v10672 = vld [vmem:[%s10267 + $0x48] sm:$0xf]
        %v10673 = vld [vmem:[%s10267 + $0x4c] sm:$0xf]
        %v10674 = vld [vmem:[%s10267 + $0x50] sm:$0x1]
        %v10675 = vld [vmem:[%s10267 + $0x54] sm:$0xf]
        %v10676 = vld [vmem:[%s10267 + $0x58] sm:$0xf]
        %v10677 = vld [vmem:[%s10267 + $0x5c] sm:$0x1]
        %v10678 = vld [vmem:[%s10267 + $0x60] sm:$0xf]
        %v10679 = vld [vmem:[%s10267 + $0x64] sm:$0xf]
        %v10680 = vld [vmem:[%s10267 + $0x68] sm:$0x1]
        %v10681 = vld [vmem:[%s10267 + $0x6c] sm:$0xf]
        %v10682 = vld [vmem:[%s10267 + $0x70] sm:$0xf]
        %v10683 = vld [vmem:[%s10267 + $0x74] sm:$0x1]
        %v10684 = vld [vmem:[%s10267 + $0x78] sm:$0xf]
        %v10685 = vld [vmem:[%s10267 + $0x7c] sm:$0xf]
        %v10686 = vld [vmem:[%s10267 + $0x80] sm:$0x1]
        %v10687 = vld [vmem:[%s10267 + $0x84] sm:$0xf]
        %v10688 = vld [vmem:[%s10267 + $0x88] sm:$0xf]
        %v10689 = vld [vmem:[%s10267 + $0x8c] sm:$0x1]
        %v10690 = vld [vmem:[%s10267 + $0x90] sm:$0xf]
        %v10691 = vld [vmem:[%s10267 + $0x94] sm:$0xf]
        %v10692 = vld [vmem:[%s10267 + $0x98] sm:$0x1]
        %v10693 = vld [vmem:[%s10267 + $0x9c] sm:$0xf]
        %v10694 = vld [vmem:[%s10267 + $0xa0] sm:$0xf]
        %v10695 = vld [vmem:[%s10267 + $0xa4] sm:$0x1]
        %v10696 = vld [vmem:[%s10267 + $0xa8] sm:$0xf]
        %v10697 = vld [vmem:[%s10267 + $0xac] sm:$0xf]
        %v10698 = vld [vmem:[%s10267 + $0xb0] sm:$0x1]
        %v10699 = vld [vmem:[%s10267 + $0xb4] sm:$0xf]
        %v10700 = vld [vmem:[%s10267 + $0xb8] sm:$0xf]
        %v10701 = vld [vmem:[%s10267 + $0xbc] sm:$0x1]
        %v10703 = vshrl.u32 %v10654, 16
        %v10705 = vrot.slane %v10703, 4
        %v10706 = vshll.u32 %v10654, 16
        %v10708 = vrot.slane %v10706, 5
        %v10709 = vor.u32 %v10705, %v10708
        %v10710 = vrot.slane %v10709, 4
        %v10712 = vshll.u32 %v10655, 16
        %v10714 = vrot.slane %v10712, 5
        %v10715 = vsel %vm1801, %v10710, %v10714
        %v10716 = vshrl.u32 %v10655, 16
        %v10718 = vrot.slane %v10716, 4
        %v10719 = vor.u32 %v10718, %v10714
        %v10720 = vrot.slane %v10719, 4
        %v10722 = vshll.u32 %v10656, 16
        %v10724 = vrot.slane %v10722, 5
        %v10725 = vsel %vm1801, %v10720, %v10724
        %v10727 = vshrl.u32 %v10657, 16
        %v10729 = vrot.slane %v10727, 4
        %v10730 = vshll.u32 %v10657, 16
        %v10732 = vrot.slane %v10730, 5
        %v10733 = vor.u32 %v10729, %v10732
        %v10734 = vrot.slane %v10733, 4
        %v10736 = vshll.u32 %v10658, 16
        %v10738 = vrot.slane %v10736, 5
        %v10739 = vsel %vm1801, %v10734, %v10738
        %v10740 = vshrl.u32 %v10658, 16
        %v10742 = vrot.slane %v10740, 4
        %v10743 = vor.u32 %v10742, %v10738
        %v10744 = vrot.slane %v10743, 4
        %v10746 = vshll.u32 %v10659, 16
        %v10748 = vrot.slane %v10746, 5
        %v10749 = vsel %vm1801, %v10744, %v10748
        %v10751 = vshrl.u32 %v10660, 16
        %v10753 = vrot.slane %v10751, 4
        %v10754 = vshll.u32 %v10660, 16
        %v10756 = vrot.slane %v10754, 5
        %v10757 = vor.u32 %v10753, %v10756
        %v10758 = vrot.slane %v10757, 4
        %v10760 = vshll.u32 %v10661, 16
        %v10762 = vrot.slane %v10760, 5
        %v10763 = vsel %vm1801, %v10758, %v10762
        %v10764 = vshrl.u32 %v10661, 16
        %v10766 = vrot.slane %v10764, 4
        %v10767 = vor.u32 %v10766, %v10762
        %v10768 = vrot.slane %v10767, 4
        %v10770 = vshll.u32 %v10662, 16
        %v10772 = vrot.slane %v10770, 5
        %v10773 = vsel %vm1801, %v10768, %v10772
        %v10775 = vshrl.u32 %v10663, 16
        %v10777 = vrot.slane %v10775, 4
        %v10778 = vshll.u32 %v10663, 16
        %v10780 = vrot.slane %v10778, 5
        %v10781 = vor.u32 %v10777, %v10780
        %v10782 = vrot.slane %v10781, 4
        %v10784 = vshll.u32 %v10664, 16
        %v10786 = vrot.slane %v10784, 5
        %v10787 = vsel %vm1801, %v10782, %v10786
        %v10788 = vshrl.u32 %v10664, 16
        %v10790 = vrot.slane %v10788, 4
        %v10791 = vor.u32 %v10790, %v10786
        %v10792 = vrot.slane %v10791, 4
        %v10794 = vshll.u32 %v10665, 16
        %v10796 = vrot.slane %v10794, 5
        %v10797 = vsel %vm1801, %v10792, %v10796
        %v10799 = vshrl.u32 %v10666, 16
        %v10801 = vrot.slane %v10799, 4
        %v10802 = vshll.u32 %v10666, 16
        %v10804 = vrot.slane %v10802, 5
        %v10805 = vor.u32 %v10801, %v10804
        %v10806 = vrot.slane %v10805, 4
        %v10808 = vshll.u32 %v10667, 16
        %v10810 = vrot.slane %v10808, 5
        %v10811 = vsel %vm1801, %v10806, %v10810
        %v10812 = vshrl.u32 %v10667, 16
        %v10814 = vrot.slane %v10812, 4
        %v10815 = vor.u32 %v10814, %v10810
        %v10816 = vrot.slane %v10815, 4
        %v10818 = vshll.u32 %v10668, 16
        %v10820 = vrot.slane %v10818, 5
        %v10821 = vsel %vm1801, %v10816, %v10820
        %v10823 = vshrl.u32 %v10669, 16
        %v10825 = vrot.slane %v10823, 4
        %v10826 = vshll.u32 %v10669, 16
        %v10828 = vrot.slane %v10826, 5
        %v10829 = vor.u32 %v10825, %v10828
        %v10830 = vrot.slane %v10829, 4
        %v10832 = vshll.u32 %v10670, 16
        %v10834 = vrot.slane %v10832, 5
        %v10835 = vsel %vm1801, %v10830, %v10834
        %v10836 = vshrl.u32 %v10670, 16
        %v10838 = vrot.slane %v10836, 4
        %v10839 = vor.u32 %v10838, %v10834
        %v10840 = vrot.slane %v10839, 4
        %v10842 = vshll.u32 %v10671, 16
        %v10844 = vrot.slane %v10842, 5
        %v10845 = vsel %vm1801, %v10840, %v10844
        %v10847 = vshrl.u32 %v10672, 16
        %v10849 = vrot.slane %v10847, 4
        %v10850 = vshll.u32 %v10672, 16
        %v10852 = vrot.slane %v10850, 5
        %v10853 = vor.u32 %v10849, %v10852
        %v10854 = vrot.slane %v10853, 4
        %v10856 = vshll.u32 %v10673, 16
        %v10858 = vrot.slane %v10856, 5
        %v10859 = vsel %vm1801, %v10854, %v10858
        %v10860 = vshrl.u32 %v10673, 16
        %v10862 = vrot.slane %v10860, 4
        %v10863 = vor.u32 %v10862, %v10858
        %v10864 = vrot.slane %v10863, 4
        %v10866 = vshll.u32 %v10674, 16
        %v10868 = vrot.slane %v10866, 5
        %v10869 = vsel %vm1801, %v10864, %v10868
        %v10871 = vshrl.u32 %v10675, 16
        %v10873 = vrot.slane %v10871, 4
        %v10874 = vshll.u32 %v10675, 16
        %v10876 = vrot.slane %v10874, 5
        %v10877 = vor.u32 %v10873, %v10876
        %v10878 = vrot.slane %v10877, 4
        %v10880 = vshll.u32 %v10676, 16
        %v10882 = vrot.slane %v10880, 5
        %v10883 = vsel %vm1801, %v10878, %v10882
        %v10884 = vshrl.u32 %v10676, 16
        %v10886 = vrot.slane %v10884, 4
        %v10887 = vor.u32 %v10886, %v10882
        %v10888 = vrot.slane %v10887, 4
        %v10890 = vshll.u32 %v10677, 16
        %v10892 = vrot.slane %v10890, 5
        %v10893 = vsel %vm1801, %v10888, %v10892
        %v10895 = vshrl.u32 %v10678, 16
        %v10897 = vrot.slane %v10895, 4
        %v10898 = vshll.u32 %v10678, 16
        %v10900 = vrot.slane %v10898, 5
        %v10901 = vor.u32 %v10897, %v10900
        %v10902 = vrot.slane %v10901, 4
        %v10904 = vshll.u32 %v10679, 16
        %v10906 = vrot.slane %v10904, 5
        %v10907 = vsel %vm1801, %v10902, %v10906
        %v10908 = vshrl.u32 %v10679, 16
        %v10910 = vrot.slane %v10908, 4
        %v10911 = vor.u32 %v10910, %v10906
        %v10912 = vrot.slane %v10911, 4
        %v10914 = vshll.u32 %v10680, 16
        %v10916 = vrot.slane %v10914, 5
        %v10917 = vsel %vm1801, %v10912, %v10916
        %v10919 = vshrl.u32 %v10681, 16
        %v10921 = vrot.slane %v10919, 4
        %v10922 = vshll.u32 %v10681, 16
        %v10924 = vrot.slane %v10922, 5
        %v10925 = vor.u32 %v10921, %v10924
        %v10926 = vrot.slane %v10925, 4
        %v10928 = vshll.u32 %v10682, 16
        %v10930 = vrot.slane %v10928, 5
        %v10931 = vsel %vm1801, %v10926, %v10930
        %v10932 = vshrl.u32 %v10682, 16
        %v10934 = vrot.slane %v10932, 4
        %v10935 = vor.u32 %v10934, %v10930
        %v10936 = vrot.slane %v10935, 4
        %v10938 = vshll.u32 %v10683, 16
        %v10940 = vrot.slane %v10938, 5
        %v10941 = vsel %vm1801, %v10936, %v10940
        %v10943 = vshrl.u32 %v10684, 16
        %v10945 = vrot.slane %v10943, 4
        %v10946 = vshll.u32 %v10684, 16
        %v10948 = vrot.slane %v10946, 5
        %v10949 = vor.u32 %v10945, %v10948
        %v10950 = vrot.slane %v10949, 4
        %v10952 = vshll.u32 %v10685, 16
        %v10954 = vrot.slane %v10952, 5
        %v10955 = vsel %vm1801, %v10950, %v10954
        %v10956 = vshrl.u32 %v10685, 16
        %v10958 = vrot.slane %v10956, 4
        %v10959 = vor.u32 %v10958, %v10954
        %v10960 = vrot.slane %v10959, 4
        %v10962 = vshll.u32 %v10686, 16
        %v10964 = vrot.slane %v10962, 5
        %v10965 = vsel %vm1801, %v10960, %v10964
        %v10967 = vshrl.u32 %v10687, 16
        %v10969 = vrot.slane %v10967, 4
        %v10970 = vshll.u32 %v10687, 16
        %v10972 = vrot.slane %v10970, 5
        %v10973 = vor.u32 %v10969, %v10972
        %v10974 = vrot.slane %v10973, 4
        %v10976 = vshll.u32 %v10688, 16
        %v10978 = vrot.slane %v10976, 5
        %v10979 = vsel %vm1801, %v10974, %v10978
        %v10980 = vshrl.u32 %v10688, 16
        %v10982 = vrot.slane %v10980, 4
        %v10983 = vor.u32 %v10982, %v10978
        %v10984 = vrot.slane %v10983, 4
        %v10986 = vshll.u32 %v10689, 16
        %v10988 = vrot.slane %v10986, 5
        %v10989 = vsel %vm1801, %v10984, %v10988
        %v10991 = vshrl.u32 %v10690, 16
        %v10993 = vrot.slane %v10991, 4
        %v10994 = vshll.u32 %v10690, 16
        %v10996 = vrot.slane %v10994, 5
        %v10997 = vor.u32 %v10993, %v10996
        %v10998 = vrot.slane %v10997, 4
        %v11000 = vshll.u32 %v10691, 16
        %v11002 = vrot.slane %v11000, 5
        %v11003 = vsel %vm1801, %v10998, %v11002
        %v11004 = vshrl.u32 %v10691, 16
        %v11006 = vrot.slane %v11004, 4
        %v11007 = vor.u32 %v11006, %v11002
        %v11008 = vrot.slane %v11007, 4
        %v11010 = vshll.u32 %v10692, 16
        %v11012 = vrot.slane %v11010, 5
        %v11013 = vsel %vm1801, %v11008, %v11012
        %v11015 = vshrl.u32 %v10693, 16
        %v11017 = vrot.slane %v11015, 4
        %v11018 = vshll.u32 %v10693, 16
        %v11020 = vrot.slane %v11018, 5
        %v11021 = vor.u32 %v11017, %v11020
        %v11022 = vrot.slane %v11021, 4
        %v11024 = vshll.u32 %v10694, 16
        %v11026 = vrot.slane %v11024, 5
        %v11027 = vsel %vm1801, %v11022, %v11026
        %v11028 = vshrl.u32 %v10694, 16
        %v11030 = vrot.slane %v11028, 4
        %v11031 = vor.u32 %v11030, %v11026
        %v11032 = vrot.slane %v11031, 4
        %v11034 = vshll.u32 %v10695, 16
        %v11036 = vrot.slane %v11034, 5
        %v11037 = vsel %vm1801, %v11032, %v11036
        %v11039 = vshrl.u32 %v10696, 16
        %v11041 = vrot.slane %v11039, 4
        %v11042 = vshll.u32 %v10696, 16
        %v11044 = vrot.slane %v11042, 5
        %v11045 = vor.u32 %v11041, %v11044
        %v11046 = vrot.slane %v11045, 4
        %v11048 = vshll.u32 %v10697, 16
        %v11050 = vrot.slane %v11048, 5
        %v11051 = vsel %vm1801, %v11046, %v11050
        %v11052 = vshrl.u32 %v10697, 16
        %v11054 = vrot.slane %v11052, 4
        %v11055 = vor.u32 %v11054, %v11050
        %v11056 = vrot.slane %v11055, 4
        %v11058 = vshll.u32 %v10698, 16
        %v11060 = vrot.slane %v11058, 5
        %v11061 = vsel %vm1801, %v11056, %v11060
        %v11063 = vshrl.u32 %v10699, 16
        %v11065 = vrot.slane %v11063, 4
        %v11066 = vshll.u32 %v10699, 16
        %v11068 = vrot.slane %v11066, 5
        %v11069 = vor.u32 %v11065, %v11068
        %v11070 = vrot.slane %v11069, 4
        %v11072 = vshll.u32 %v10700, 16
        %v11074 = vrot.slane %v11072, 5
        %v11075 = vsel %vm1801, %v11070, %v11074
        %v11076 = vshrl.u32 %v10700, 16
        %v11078 = vrot.slane %v11076, 4
        %v11079 = vor.u32 %v11078, %v11074
        %v11080 = vrot.slane %v11079, 4
        %v11082 = vshll.u32 %v10701, 16
        %v11084 = vrot.slane %v11082, 5
        %v11085 = vsel %vm1801, %v11080, %v11084
        %s11086 = scalar_lea.vmem %s6, 448
        %v11087 = vld [vmem:[%s11086] sm:$0xf]
        %v11088 = vld [vmem:[%s11086 + $0x4] sm:$0xf]
        %v11089 = vld [vmem:[%s11086 + $0x8] sm:$0xf]
        %v11090 = vld [vmem:[%s11086 + $0xc] sm:$0xf]
        %v11091 = vld [vmem:[%s11086 + $0x10] sm:$0xf]
        %v11092 = vld [vmem:[%s11086 + $0x14] sm:$0xf]
        %v11093 = vld [vmem:[%s11086 + $0x18] sm:$0xf]
        %v11094 = vld [vmem:[%s11086 + $0x1c] sm:$0xf]
        %v11095 = vld [vmem:[%s11086 + $0x20] sm:$0xf]
        %v11096 = vld [vmem:[%s11086 + $0x24] sm:$0xf]
        %v11097 = vld [vmem:[%s11086 + $0x28] sm:$0xf]
        %v11098 = vld [vmem:[%s11086 + $0x2c] sm:$0xf]
        %v11099 = vld [vmem:[%s11086 + $0x30] sm:$0xf]
        %v11100 = vld [vmem:[%s11086 + $0x34] sm:$0xf]
        %v11101 = vld [vmem:[%s11086 + $0x38] sm:$0xf]
        %v11102 = vld [vmem:[%s11086 + $0x3c] sm:$0xf]
        %v11103 = vunpack.c.l.b16 %v10715
        %v11104 = vunpack.c.l.b16 %v10725
        %v11105 = vunpack.c.l.b16 %v10739
        %v11106 = vunpack.c.l.b16 %v10749
        %v11107 = vunpack.c.l.b16 %v10763
        %v11108 = vunpack.c.l.b16 %v10773
        %v11109 = vunpack.c.l.b16 %v10787
        %v11110 = vunpack.c.l.b16 %v10797
        %v11111 = vunpack.c.l.b16 %v10811
        %v11112 = vunpack.c.l.b16 %v10821
        %v11113 = vunpack.c.l.b16 %v10835
        %v11114 = vunpack.c.l.b16 %v10845
        %v11115 = vunpack.c.l.b16 %v10859
        %v11116 = vunpack.c.l.b16 %v10869
        %v11117 = vunpack.c.l.b16 %v10883
        %v11118 = vunpack.c.l.b16 %v10893
        %v11119 = vunpack.c.l.b16 %v10907
        %v11120 = vunpack.c.l.b16 %v10917
        %v11121 = vunpack.c.l.b16 %v10931
        %v11122 = vunpack.c.l.b16 %v10941
        %v11123 = vunpack.c.l.b16 %v10955
        %v11124 = vunpack.c.l.b16 %v10965
        %v11125 = vunpack.c.l.b16 %v10979
        %v11126 = vunpack.c.l.b16 %v10989
        %v11127 = vunpack.c.l.b16 %v11003
        %v11128 = vunpack.c.l.b16 %v11013
        %v11129 = vunpack.c.l.b16 %v11027
        %v11130 = vunpack.c.l.b16 %v11037
        %v11131 = vunpack.c.l.b16 %v11051
        %v11132 = vunpack.c.l.b16 %v11061
        %v11133 = vunpack.c.l.b16 %v11075
        %v11134 = vunpack.c.l.b16 %v11085
        %v11135 = vpack.c.b16 %v11104, %v11103
        %v11136 = vpack.c.b16 %v11106, %v11105
        %v11137 = vpack.c.b16 %v11108, %v11107
        %v11138 = vpack.c.b16 %v11110, %v11109
        %v11139 = vpack.c.b16 %v11112, %v11111
        %v11140 = vpack.c.b16 %v11114, %v11113
        %v11141 = vpack.c.b16 %v11116, %v11115
        %v11142 = vpack.c.b16 %v11118, %v11117
        %v11143 = vpack.c.b16 %v11120, %v11119
        %v11144 = vpack.c.b16 %v11122, %v11121
        %v11145 = vpack.c.b16 %v11124, %v11123
        %v11146 = vpack.c.b16 %v11126, %v11125
        %v11147 = vpack.c.b16 %v11128, %v11127
        %v11148 = vpack.c.b16 %v11130, %v11129
        %v11149 = vpack.c.b16 %v11132, %v11131
        %v11150 = vpack.c.b16 %v11134, %v11133
        %v11183 = vunpack.c.l.b16 %v11087
        %v11184 = vunpack.c.l.b16 %v11088
        %v11185 = vunpack.c.l.b16 %v11089
        %v11186 = vunpack.c.l.b16 %v11090
        %v11187 = vunpack.c.l.b16 %v11091
        %v11188 = vunpack.c.l.b16 %v11092
        %v11189 = vunpack.c.l.b16 %v11093
        %v11190 = vunpack.c.l.b16 %v11094
        %v11191 = vunpack.c.l.b16 %v11095
        %v11192 = vunpack.c.l.b16 %v11096
        %v11193 = vunpack.c.l.b16 %v11097
        %v11194 = vunpack.c.l.b16 %v11098
        %v11195 = vunpack.c.l.b16 %v11099
        %v11196 = vunpack.c.l.b16 %v11100
        %v11197 = vunpack.c.l.b16 %v11101
        %v11198 = vunpack.c.l.b16 %v11102
        %v11199 = vpack.c.b16 %v11184, %v11183
        %v11200 = vpack.c.b16 %v11186, %v11185
        %v11201 = vpack.c.b16 %v11188, %v11187
        %v11202 = vpack.c.b16 %v11190, %v11189
        %v11203 = vpack.c.b16 %v11192, %v11191
        %v11204 = vpack.c.b16 %v11194, %v11193
        %v11205 = vpack.c.b16 %v11196, %v11195
        %v11206 = vpack.c.b16 %v11198, %v11197
        %11215 = vmatprep.subr.bf16.mxu0 0
        %11216 = vmatpush1.bf16.msra.mxu0 %v11199
        %11217 = vmatprep.subr.bf16.mxu0 0
        %11218 = vmatpush1.bf16.msra.mxu0 %v11200
        %11219 = vmatprep.subr.bf16.mxu0 0
        %11220 = vmatpush1.bf16.msra.mxu0 %v11201
        %11221 = vmatprep.subr.bf16.mxu0 0
        %11222 = vmatpush1.bf16.msra.mxu0 %v11202
        %11223 = vmatprep.subr.bf16.mxu0 0
        %11224 = vmatpush1.bf16.msra.mxu0 %v11203
        %11225 = vmatprep.subr.bf16.mxu0 0
        %11226 = vmatpush1.bf16.msra.mxu0 %v11204
        %11227 = vmatprep.subr.bf16.mxu0 0
        %11228 = vmatpush1.bf16.msra.mxu0 %v11205
        %11229 = vmatprep.subr.bf16.mxu0 0
        %11230 = vmatpush1.bf16.msra.mxu0 %v11206
        %11231 = vmatprep.subr.bf16.mxu0 0
        %11232 = vmatpush1.bf16.msra.mxu0 0
        %11233 = vmatprep.subr.bf16.mxu0 0
        %11234 = vmatpush1.bf16.msra.mxu0 0
        %11235 = vmatprep.subr.bf16.mxu0 0
        %11236 = vmatpush1.bf16.msra.mxu0 0
        %11237 = vmatprep.subr.bf16.mxu0 0
        %11238 = vmatpush1.bf16.msra.mxu0 0
        %11239 = vmatprep.subr.bf16.mxu0 0
        %11240 = vmatpush1.bf16.msra.mxu0 0
        %11241 = vmatprep.subr.bf16.mxu0 0
        %11242 = vmatpush1.bf16.msra.mxu0 0
        %11243 = vmatprep.subr.bf16.mxu0 0
        %11244 = vmatpush1.bf16.msra.mxu0 0
        %11245 = vmatprep.subr.bf16.mxu0 0
        %11246 = vmatpush1.bf16.msra.mxu0 0
        %11247 = vmatprep.mubr.bf16.mxu0 0
        %11248 = vmatmul.mubr.bf16.gmra.mrb[0].mxu0 %v11135
        %v11249 = vpop.f32.mrb[0].mxu0
        %v11250 = vadd.f32 0.0, %v11249
        %v11251 = vpop.f32.mrb[0].mxu0
        %v11252 = vpop.f32.mrb[0].mxu0
        %v11253 = vadd.f32 0.0, %v11252
        %v11254 = vpop.f32.mrb[0].mxu0
        %11255 = vmatprep.mubr.bf16.mxu0 0
        %11256 = vmatmul.mubr.bf16.gmra.mrb[0].mxu0 %v11136
        %v11257 = vpop.f32.mrb[0].mxu0
        %v11258 = vadd.f32 0.0, %v11257
        %v11259 = vpop.f32.mrb[0].mxu0
        %v11260 = vpop.f32.mrb[0].mxu0
        %v11261 = vadd.f32 0.0, %v11260
        %v11262 = vpop.f32.mrb[0].mxu0
        %11263 = vmatprep.mubr.bf16.mxu0 0
        %11264 = vmatmul.mubr.bf16.gmra.mrb[0].mxu0 %v11137
        %v11265 = vpop.f32.mrb[0].mxu0
        %v11266 = vadd.f32 0.0, %v11265
        %v11267 = vpop.f32.mrb[0].mxu0
        %v11268 = vpop.f32.mrb[0].mxu0
        %v11269 = vadd.f32 0.0, %v11268
        %v11270 = vpop.f32.mrb[0].mxu0
        %11271 = vmatprep.mubr.bf16.mxu0 0
        %11272 = vmatmul.mubr.bf16.gmra.mrb[0].mxu0 %v11138
        %v11273 = vpop.f32.mrb[0].mxu0
        %v11274 = vadd.f32 0.0, %v11273
        %v11275 = vpop.f32.mrb[0].mxu0
        %v11276 = vpop.f32.mrb[0].mxu0
        %v11277 = vadd.f32 0.0, %v11276
        %v11278 = vpop.f32.mrb[0].mxu0
        %11279 = vmatprep.mubr.bf16.mxu0 0
        %11280 = vmatmul.mubr.bf16.gmra.mrb[0].mxu0 %v11139
        %v11281 = vpop.f32.mrb[0].mxu0
        %v11282 = vadd.f32 0.0, %v11281
        %v11283 = vpop.f32.mrb[0].mxu0
        %v11284 = vpop.f32.mrb[0].mxu0
        %v11285 = vadd.f32 0.0, %v11284
        %v11286 = vpop.f32.mrb[0].mxu0
        %11287 = vmatprep.mubr.bf16.mxu0 0
        %11288 = vmatmul.mubr.bf16.gmra.mrb[0].mxu0 %v11140
        %v11289 = vpop.f32.mrb[0].mxu0
        %v11290 = vadd.f32 0.0, %v11289
        %v11291 = vpop.f32.mrb[0].mxu0
        %v11292 = vpop.f32.mrb[0].mxu0
        %v11293 = vadd.f32 0.0, %v11292
        %v11294 = vpop.f32.mrb[0].mxu0
        %11295 = vmatprep.mubr.bf16.mxu0 0
        %11296 = vmatmul.mubr.bf16.gmra.mrb[0].mxu0 %v11141
        %v11297 = vpop.f32.mrb[0].mxu0
        %v11298 = vadd.f32 0.0, %v11297
        %v11299 = vpop.f32.mrb[0].mxu0
        %v11300 = vpop.f32.mrb[0].mxu0
        %v11301 = vadd.f32 0.0, %v11300
        %v11302 = vpop.f32.mrb[0].mxu0
        %11303 = vmatprep.mubr.bf16.mxu0 0
        %11304 = vmatmul.mubr.bf16.gmra.mrb[0].mxu0 %v11142
        %v11305 = vpop.f32.mrb[0].mxu0
        %v11306 = vadd.f32 0.0, %v11305
        %v11307 = vpop.f32.mrb[0].mxu0
        %v11308 = vpop.f32.mrb[0].mxu0
        %v11309 = vadd.f32 0.0, %v11308
        %v11310 = vpop.f32.mrb[0].mxu0
        %11311 = vmatprep.mubr.bf16.mxu0 0
        %11312 = vmatmul.mubr.bf16.gmra.mrb[0].mxu0 %v11143
        %v11313 = vpop.f32.mrb[0].mxu0
        %v11314 = vadd.f32 0.0, %v11313
        %v11315 = vpop.f32.mrb[0].mxu0
        %v11316 = vpop.f32.mrb[0].mxu0
        %v11317 = vadd.f32 0.0, %v11316
        %v11318 = vpop.f32.mrb[0].mxu0
        %11319 = vmatprep.mubr.bf16.mxu0 0
        %11320 = vmatmul.mubr.bf16.gmra.mrb[0].mxu0 %v11144
        %v11321 = vpop.f32.mrb[0].mxu0
        %v11322 = vadd.f32 0.0, %v11321
        %v11323 = vpop.f32.mrb[0].mxu0
        %v11324 = vpop.f32.mrb[0].mxu0
        %v11325 = vadd.f32 0.0, %v11324
        %v11326 = vpop.f32.mrb[0].mxu0
        %11327 = vmatprep.mubr.bf16.mxu0 0
        %11328 = vmatmul.mubr.bf16.gmra.mrb[0].mxu0 %v11145
        %v11329 = vpop.f32.mrb[0].mxu0
        %v11330 = vadd.f32 0.0, %v11329
        %v11331 = vpop.f32.mrb[0].mxu0
        %v11332 = vpop.f32.mrb[0].mxu0
        %v11333 = vadd.f32 0.0, %v11332
        %v11334 = vpop.f32.mrb[0].mxu0
        %11335 = vmatprep.mubr.bf16.mxu0 0
        %11336 = vmatmul.mubr.bf16.gmra.mrb[0].mxu0 %v11146
        %v11337 = vpop.f32.mrb[0].mxu0
        %v11338 = vadd.f32 0.0, %v11337
        %v11339 = vpop.f32.mrb[0].mxu0
        %v11340 = vpop.f32.mrb[0].mxu0
        %v11341 = vadd.f32 0.0, %v11340
        %v11342 = vpop.f32.mrb[0].mxu0
        %11343 = vmatprep.mubr.bf16.mxu0 0
        %11344 = vmatmul.mubr.bf16.gmra.mrb[0].mxu0 %v11147
        %v11345 = vpop.f32.mrb[0].mxu0
        %v11346 = vadd.f32 0.0, %v11345
        %v11347 = vpop.f32.mrb[0].mxu0
        %v11348 = vpop.f32.mrb[0].mxu0
        %v11349 = vadd.f32 0.0, %v11348
        %v11350 = vpop.f32.mrb[0].mxu0
        %11351 = vmatprep.mubr.bf16.mxu0 0
        %11352 = vmatmul.mubr.bf16.gmra.mrb[0].mxu0 %v11148
        %v11353 = vpop.f32.mrb[0].mxu0
        %v11354 = vadd.f32 0.0, %v11353
        %v11355 = vpop.f32.mrb[0].mxu0
        %v11356 = vpop.f32.mrb[0].mxu0
        %v11357 = vadd.f32 0.0, %v11356
        %v11358 = vpop.f32.mrb[0].mxu0
        %11359 = vmatprep.mubr.bf16.mxu0 0
        %11360 = vmatmul.mubr.bf16.gmra.mrb[0].mxu0 %v11149
        %v11361 = vpop.f32.mrb[0].mxu0
        %v11362 = vadd.f32 0.0, %v11361
        %v11363 = vpop.f32.mrb[0].mxu0
        %v11364 = vpop.f32.mrb[0].mxu0
        %v11365 = vadd.f32 0.0, %v11364
        %v11366 = vpop.f32.mrb[0].mxu0
        %11367 = vmatprep.mubr.bf16.mxu0 0
        %11368 = vmatmul.mubr.bf16.gmra.mrb[0].mxu0 %v11150
        %v11369 = vpop.f32.mrb[0].mxu0
        %v11370 = vadd.f32 0.0, %v11369
        %v11371 = vpop.f32.mrb[0].mxu0
        %v11372 = vpop.f32.mrb[0].mxu0
        %v11373 = vadd.f32 0.0, %v11372
        %v11374 = vpop.f32.mrb[0].mxu0
        %11375 = vdwg.mxu0
        %v11376 = vadd.f32 %v10622, %v11250
        %v11377 = vadd.f32 %v10623, %v11253
        %v11378 = vadd.f32 %v10624, %v11258
        %v11379 = vadd.f32 %v10625, %v11261
        %v11380 = vadd.f32 %v10626, %v11266
        %v11381 = vadd.f32 %v10627, %v11269
        %v11382 = vadd.f32 %v10628, %v11274
        %v11383 = vadd.f32 %v10629, %v11277
        %v11384 = vadd.f32 %v10630, %v11282
        %v11385 = vadd.f32 %v10631, %v11285
        %v11386 = vadd.f32 %v10632, %v11290
        %v11387 = vadd.f32 %v10633, %v11293
        %v11388 = vadd.f32 %v10634, %v11298
        %v11389 = vadd.f32 %v10635, %v11301
        %v11390 = vadd.f32 %v10636, %v11306
        %v11391 = vadd.f32 %v10637, %v11309
        %v11392 = vadd.f32 %v10638, %v11314
        %v11393 = vadd.f32 %v10639, %v11317
        %v11394 = vadd.f32 %v10640, %v11322
        %v11395 = vadd.f32 %v10641, %v11325
        %v11396 = vadd.f32 %v10642, %v11330
        %v11397 = vadd.f32 %v10643, %v11333
        %v11398 = vadd.f32 %v10644, %v11338
        %v11399 = vadd.f32 %v10645, %v11341
        %v11400 = vadd.f32 %v10646, %v11346
        %v11401 = vadd.f32 %v10647, %v11349
        %v11402 = vadd.f32 %v10648, %v11354
        %v11403 = vadd.f32 %v10649, %v11357
        %v11404 = vadd.f32 %v10650, %v11362
        %v11405 = vadd.f32 %v10651, %v11365
        %v11406 = vadd.f32 %v10652, %v11370
        %v11407 = vadd.f32 %v10653, %v11373
        %v11408 = vld [vmem:[%s10267] sm:$0xe]
        %v11409 = vld [vmem:[%s10267 + $0xc] sm:$0xe]
        %v11410 = vld [vmem:[%s10267 + $0x18] sm:$0xe]
        %v11411 = vld [vmem:[%s10267 + $0x24] sm:$0xe]
        %v11412 = vld [vmem:[%s10267 + $0x30] sm:$0xe]
        %v11413 = vld [vmem:[%s10267 + $0x3c] sm:$0xe]
        %v11414 = vld [vmem:[%s10267 + $0x48] sm:$0xe]
        %v11415 = vld [vmem:[%s10267 + $0x54] sm:$0xe]
        %v11416 = vld [vmem:[%s10267 + $0x60] sm:$0xe]
        %v11417 = vld [vmem:[%s10267 + $0x6c] sm:$0xe]
        %v11418 = vld [vmem:[%s10267 + $0x78] sm:$0xe]
        %v11419 = vld [vmem:[%s10267 + $0x84] sm:$0xe]
        %v11420 = vld [vmem:[%s10267 + $0x90] sm:$0xe]
        %v11421 = vld [vmem:[%s10267 + $0x9c] sm:$0xe]
        %v11422 = vld [vmem:[%s10267 + $0xa8] sm:$0xe]
        %v11423 = vld [vmem:[%s10267 + $0xb4] sm:$0xe]
        %v11472 = vrot.slane %v11408, 5
        %v11473 = vrot.slane %v11472, 4
        %v11474 = vrot.slane %v10655, 5
        %v11475 = vsel %vm2792, %v11473, %v11474
        %v11476 = vrot.slane %v11474, 4
        %v11477 = vrot.slane %v10656, 5
        %v11478 = vsel %vm2792, %v11476, %v11477
        %v11479 = vrot.slane %v11409, 5
        %v11480 = vrot.slane %v11479, 4
        %v11481 = vrot.slane %v10658, 5
        %v11482 = vsel %vm2792, %v11480, %v11481
        %v11483 = vrot.slane %v11481, 4
        %v11484 = vrot.slane %v10659, 5
        %v11485 = vsel %vm2792, %v11483, %v11484
        %v11486 = vrot.slane %v11410, 5
        %v11487 = vrot.slane %v11486, 4
        %v11488 = vrot.slane %v10661, 5
        %v11489 = vsel %vm2792, %v11487, %v11488
        %v11490 = vrot.slane %v11488, 4
        %v11491 = vrot.slane %v10662, 5
        %v11492 = vsel %vm2792, %v11490, %v11491
        %v11493 = vrot.slane %v11411, 5
        %v11494 = vrot.slane %v11493, 4
        %v11495 = vrot.slane %v10664, 5
        %v11496 = vsel %vm2792, %v11494, %v11495
        %v11497 = vrot.slane %v11495, 4
        %v11498 = vrot.slane %v10665, 5
        %v11499 = vsel %vm2792, %v11497, %v11498
        %v11500 = vrot.slane %v11412, 5
        %v11501 = vrot.slane %v11500, 4
        %v11502 = vrot.slane %v10667, 5
        %v11503 = vsel %vm2792, %v11501, %v11502
        %v11504 = vrot.slane %v11502, 4
        %v11505 = vrot.slane %v10668, 5
        %v11506 = vsel %vm2792, %v11504, %v11505
        %v11507 = vrot.slane %v11413, 5
        %v11508 = vrot.slane %v11507, 4
        %v11509 = vrot.slane %v10670, 5
        %v11510 = vsel %vm2792, %v11508, %v11509
        %v11511 = vrot.slane %v11509, 4
        %v11512 = vrot.slane %v10671, 5
        %v11513 = vsel %vm2792, %v11511, %v11512
        %v11514 = vrot.slane %v11414, 5
        %v11515 = vrot.slane %v11514, 4
        %v11516 = vrot.slane %v10673, 5
        %v11517 = vsel %vm2792, %v11515, %v11516
        %v11518 = vrot.slane %v11516, 4
        %v11519 = vrot.slane %v10674, 5
        %v11520 = vsel %vm2792, %v11518, %v11519
        %v11521 = vrot.slane %v11415, 5
        %v11522 = vrot.slane %v11521, 4
        %v11523 = vrot.slane %v10676, 5
        %v11524 = vsel %vm2792, %v11522, %v11523
        %v11525 = vrot.slane %v11523, 4
        %v11526 = vrot.slane %v10677, 5
        %v11527 = vsel %vm2792, %v11525, %v11526
        %v11528 = vrot.slane %v11416, 5
        %v11529 = vrot.slane %v11528, 4
        %v11530 = vrot.slane %v10679, 5
        %v11531 = vsel %vm2792, %v11529, %v11530
        %v11532 = vrot.slane %v11530, 4
        %v11533 = vrot.slane %v10680, 5
        %v11534 = vsel %vm2792, %v11532, %v11533
        %v11535 = vrot.slane %v11417, 5
        %v11536 = vrot.slane %v11535, 4
        %v11537 = vrot.slane %v10682, 5
        %v11538 = vsel %vm2792, %v11536, %v11537
        %v11539 = vrot.slane %v11537, 4
        %v11540 = vrot.slane %v10683, 5
        %v11541 = vsel %vm2792, %v11539, %v11540
        %v11542 = vrot.slane %v11418, 5
        %v11543 = vrot.slane %v11542, 4
        %v11544 = vrot.slane %v10685, 5
        %v11545 = vsel %vm2792, %v11543, %v11544
        %v11546 = vrot.slane %v11544, 4
        %v11547 = vrot.slane %v10686, 5
        %v11548 = vsel %vm2792, %v11546, %v11547
        %v11549 = vrot.slane %v11419, 5
        %v11550 = vrot.slane %v11549, 4
        %v11551 = vrot.slane %v10688, 5
        %v11552 = vsel %vm2792, %v11550, %v11551
        %v11553 = vrot.slane %v11551, 4
        %v11554 = vrot.slane %v10689, 5
        %v11555 = vsel %vm2792, %v11553, %v11554
        %v11556 = vrot.slane %v11420, 5
        %v11557 = vrot.slane %v11556, 4
        %v11558 = vrot.slane %v10691, 5
        %v11559 = vsel %vm2792, %v11557, %v11558
        %v11560 = vrot.slane %v11558, 4
        %v11561 = vrot.slane %v10692, 5
        %v11562 = vsel %vm2792, %v11560, %v11561
        %v11563 = vrot.slane %v11421, 5
        %v11564 = vrot.slane %v11563, 4
        %v11565 = vrot.slane %v10694, 5
        %v11566 = vsel %vm2792, %v11564, %v11565
        %v11567 = vrot.slane %v11565, 4
        %v11568 = vrot.slane %v10695, 5
        %v11569 = vsel %vm2792, %v11567, %v11568
        %v11570 = vrot.slane %v11422, 5
        %v11571 = vrot.slane %v11570, 4
        %v11572 = vrot.slane %v10697, 5
        %v11573 = vsel %vm2792, %v11571, %v11572
        %v11574 = vrot.slane %v11572, 4
        %v11575 = vrot.slane %v10698, 5
        %v11576 = vsel %vm2792, %v11574, %v11575
        %v11577 = vrot.slane %v11423, 5
        %v11578 = vrot.slane %v11577, 4
        %v11579 = vrot.slane %v10700, 5
        %v11580 = vsel %vm2792, %v11578, %v11579
        %v11581 = vrot.slane %v11579, 4
        %v11582 = vrot.slane %v10701, 5
        %v11583 = vsel %vm2792, %v11581, %v11582
        %s11584 = scalar_lea.vmem %s6, 512
        %v11585 = vld [vmem:[%s11584] sm:$0xf]
        %v11586 = vld [vmem:[%s11584 + $0x4] sm:$0xf]
        %v11587 = vld [vmem:[%s11584 + $0x8] sm:$0xf]
        %v11588 = vld [vmem:[%s11584 + $0xc] sm:$0xf]
        %v11589 = vld [vmem:[%s11584 + $0x10] sm:$0xf]
        %v11590 = vld [vmem:[%s11584 + $0x14] sm:$0xf]
        %v11591 = vld [vmem:[%s11584 + $0x18] sm:$0xf]
        %v11592 = vld [vmem:[%s11584 + $0x1c] sm:$0xf]
        %v11593 = vld [vmem:[%s11584 + $0x20] sm:$0xf]
        %v11594 = vld [vmem:[%s11584 + $0x24] sm:$0xf]
        %v11595 = vld [vmem:[%s11584 + $0x28] sm:$0xf]
        %v11596 = vld [vmem:[%s11584 + $0x2c] sm:$0xf]
        %v11597 = vld [vmem:[%s11584 + $0x30] sm:$0xf]
        %v11598 = vld [vmem:[%s11584 + $0x34] sm:$0xf]
        %v11599 = vld [vmem:[%s11584 + $0x38] sm:$0xf]
        %v11600 = vld [vmem:[%s11584 + $0x3c] sm:$0xf]
        %v11601 = vunpack.c.l.b16 %v11475
        %v11602 = vunpack.c.l.b16 %v11478
        %v11603 = vunpack.c.l.b16 %v11482
        %v11604 = vunpack.c.l.b16 %v11485
        %v11605 = vunpack.c.l.b16 %v11489
        %v11606 = vunpack.c.l.b16 %v11492
        %v11607 = vunpack.c.l.b16 %v11496
        %v11608 = vunpack.c.l.b16 %v11499
        %v11609 = vunpack.c.l.b16 %v11503
        %v11610 = vunpack.c.l.b16 %v11506
        %v11611 = vunpack.c.l.b16 %v11510
        %v11612 = vunpack.c.l.b16 %v11513
        %v11613 = vunpack.c.l.b16 %v11517
        %v11614 = vunpack.c.l.b16 %v11520
        %v11615 = vunpack.c.l.b16 %v11524
        %v11616 = vunpack.c.l.b16 %v11527
        %v11617 = vunpack.c.l.b16 %v11531
        %v11618 = vunpack.c.l.b16 %v11534
        %v11619 = vunpack.c.l.b16 %v11538
        %v11620 = vunpack.c.l.b16 %v11541
        %v11621 = vunpack.c.l.b16 %v11545
        %v11622 = vunpack.c.l.b16 %v11548
        %v11623 = vunpack.c.l.b16 %v11552
        %v11624 = vunpack.c.l.b16 %v11555
        %v11625 = vunpack.c.l.b16 %v11559
        %v11626 = vunpack.c.l.b16 %v11562
        %v11627 = vunpack.c.l.b16 %v11566
        %v11628 = vunpack.c.l.b16 %v11569
        %v11629 = vunpack.c.l.b16 %v11573
        %v11630 = vunpack.c.l.b16 %v11576
        %v11631 = vunpack.c.l.b16 %v11580
        %v11632 = vunpack.c.l.b16 %v11583
        %v11633 = vpack.c.b16 %v11602, %v11601
        %v11634 = vpack.c.b16 %v11604, %v11603
        %v11635 = vpack.c.b16 %v11606, %v11605
        %v11636 = vpack.c.b16 %v11608, %v11607
        %v11637 = vpack.c.b16 %v11610, %v11609
        %v11638 = vpack.c.b16 %v11612, %v11611
        %v11639 = vpack.c.b16 %v11614, %v11613
        %v11640 = vpack.c.b16 %v11616, %v11615
        %v11641 = vpack.c.b16 %v11618, %v11617
        %v11642 = vpack.c.b16 %v11620, %v11619
        %v11643 = vpack.c.b16 %v11622, %v11621
        %v11644 = vpack.c.b16 %v11624, %v11623
        %v11645 = vpack.c.b16 %v11626, %v11625
        %v11646 = vpack.c.b16 %v11628, %v11627
        %v11647 = vpack.c.b16 %v11630, %v11629
        %v11648 = vpack.c.b16 %v11632, %v11631
        %v11681 = vunpack.c.l.b16 %v11585
        %v11682 = vunpack.c.l.b16 %v11586
        %v11683 = vunpack.c.l.b16 %v11587
        %v11684 = vunpack.c.l.b16 %v11588
        %v11685 = vunpack.c.l.b16 %v11589
        %v11686 = vunpack.c.l.b16 %v11590
        %v11687 = vunpack.c.l.b16 %v11591
        %v11688 = vunpack.c.l.b16 %v11592
        %v11689 = vunpack.c.l.b16 %v11593
        %v11690 = vunpack.c.l.b16 %v11594
        %v11691 = vunpack.c.l.b16 %v11595
        %v11692 = vunpack.c.l.b16 %v11596
        %v11693 = vunpack.c.l.b16 %v11597
        %v11694 = vunpack.c.l.b16 %v11598
        %v11695 = vunpack.c.l.b16 %v11599
        %v11696 = vunpack.c.l.b16 %v11600
        %v11697 = vpack.c.b16 %v11682, %v11681
        %v11698 = vpack.c.b16 %v11684, %v11683
        %v11699 = vpack.c.b16 %v11686, %v11685
        %v11700 = vpack.c.b16 %v11688, %v11687
        %v11701 = vpack.c.b16 %v11690, %v11689
        %v11702 = vpack.c.b16 %v11692, %v11691
        %v11703 = vpack.c.b16 %v11694, %v11693
        %v11704 = vpack.c.b16 %v11696, %v11695
        %11713 = vmatprep.subr.bf16.mxu0 0
        %11714 = vmatpush1.bf16.msra.mxu0 %v11697
        %11715 = vmatprep.subr.bf16.mxu0 0
        %11716 = vmatpush1.bf16.msra.mxu0 %v11698
        %11717 = vmatprep.subr.bf16.mxu0 0
        %11718 = vmatpush1.bf16.msra.mxu0 %v11699
        %11719 = vmatprep.subr.bf16.mxu0 0
        %11720 = vmatpush1.bf16.msra.mxu0 %v11700
        %11721 = vmatprep.subr.bf16.mxu0 0
        %11722 = vmatpush1.bf16.msra.mxu0 %v11701
        %11723 = vmatprep.subr.bf16.mxu0 0
        %11724 = vmatpush1.bf16.msra.mxu0 %v11702
        %11725 = vmatprep.subr.bf16.mxu0 0
        %11726 = vmatpush1.bf16.msra.mxu0 %v11703
        %11727 = vmatprep.subr.bf16.mxu0 0
        %11728 = vmatpush1.bf16.msra.mxu0 %v11704
        %11729 = vmatprep.subr.bf16.mxu0 0
        %11730 = vmatpush1.bf16.msra.mxu0 0
        %11731 = vmatprep.subr.bf16.mxu0 0
        %11732 = vmatpush1.bf16.msra.mxu0 0
        %11733 = vmatprep.subr.bf16.mxu0 0
        %11734 = vmatpush1.bf16.msra.mxu0 0
        %11735 = vmatprep.subr.bf16.mxu0 0
        %11736 = vmatpush1.bf16.msra.mxu0 0
        %11737 = vmatprep.subr.bf16.mxu0 0
        %11738 = vmatpush1.bf16.msra.mxu0 0
        %11739 = vmatprep.subr.bf16.mxu0 0
        %11740 = vmatpush1.bf16.msra.mxu0 0
        %11741 = vmatprep.subr.bf16.mxu0 0
        %11742 = vmatpush1.bf16.msra.mxu0 0
        %11743 = vmatprep.subr.bf16.mxu0 0
        %11744 = vmatpush1.bf16.msra.mxu0 0
        %11745 = vmatprep.mubr.bf16.mxu0 0
        %11746 = vmatmul.mubr.bf16.gmra.mrb[0].mxu0 %v11633
        %v11747 = vpop.f32.mrb[0].mxu0
        %v11748 = vadd.f32 0.0, %v11747
        %v11749 = vpop.f32.mrb[0].mxu0
        %v11750 = vpop.f32.mrb[0].mxu0
        %v11751 = vadd.f32 0.0, %v11750
        %v11752 = vpop.f32.mrb[0].mxu0
        %11753 = vmatprep.mubr.bf16.mxu0 0
        %11754 = vmatmul.mubr.bf16.gmra.mrb[0].mxu0 %v11634
        %v11755 = vpop.f32.mrb[0].mxu0
        %v11756 = vadd.f32 0.0, %v11755
        %v11757 = vpop.f32.mrb[0].mxu0
        %v11758 = vpop.f32.mrb[0].mxu0
        %v11759 = vadd.f32 0.0, %v11758
        %v11760 = vpop.f32.mrb[0].mxu0
        %11761 = vmatprep.mubr.bf16.mxu0 0
        %11762 = vmatmul.mubr.bf16.gmra.mrb[0].mxu0 %v11635
        %v11763 = vpop.f32.mrb[0].mxu0
        %v11764 = vadd.f32 0.0, %v11763
        %v11765 = vpop.f32.mrb[0].mxu0
        %v11766 = vpop.f32.mrb[0].mxu0
        %v11767 = vadd.f32 0.0, %v11766
        %v11768 = vpop.f32.mrb[0].mxu0
        %11769 = vmatprep.mubr.bf16.mxu0 0
        %11770 = vmatmul.mubr.bf16.gmra.mrb[0].mxu0 %v11636
        %v11771 = vpop.f32.mrb[0].mxu0
        %v11772 = vadd.f32 0.0, %v11771
        %v11773 = vpop.f32.mrb[0].mxu0
        %v11774 = vpop.f32.mrb[0].mxu0
        %v11775 = vadd.f32 0.0, %v11774
        %v11776 = vpop.f32.mrb[0].mxu0
        %11777 = vmatprep.mubr.bf16.mxu0 0
        %11778 = vmatmul.mubr.bf16.gmra.mrb[0].mxu0 %v11637
        %v11779 = vpop.f32.mrb[0].mxu0
        %v11780 = vadd.f32 0.0, %v11779
        %v11781 = vpop.f32.mrb[0].mxu0
        %v11782 = vpop.f32.mrb[0].mxu0
        %v11783 = vadd.f32 0.0, %v11782
        %v11784 = vpop.f32.mrb[0].mxu0
        %11785 = vmatprep.mubr.bf16.mxu0 0
        %11786 = vmatmul.mubr.bf16.gmra.mrb[0].mxu0 %v11638
        %v11787 = vpop.f32.mrb[0].mxu0
        %v11788 = vadd.f32 0.0, %v11787
        %v11789 = vpop.f32.mrb[0].mxu0
        %v11790 = vpop.f32.mrb[0].mxu0
        %v11791 = vadd.f32 0.0, %v11790
        %v11792 = vpop.f32.mrb[0].mxu0
        %11793 = vmatprep.mubr.bf16.mxu0 0
        %11794 = vmatmul.mubr.bf16.gmra.mrb[0].mxu0 %v11639
        %v11795 = vpop.f32.mrb[0].mxu0
        %v11796 = vadd.f32 0.0, %v11795
        %v11797 = vpop.f32.mrb[0].mxu0
        %v11798 = vpop.f32.mrb[0].mxu0
        %v11799 = vadd.f32 0.0, %v11798
        %v11800 = vpop.f32.mrb[0].mxu0
        %11801 = vmatprep.mubr.bf16.mxu0 0
        %11802 = vmatmul.mubr.bf16.gmra.mrb[0].mxu0 %v11640
        %v11803 = vpop.f32.mrb[0].mxu0
        %v11804 = vadd.f32 0.0, %v11803
        %v11805 = vpop.f32.mrb[0].mxu0
        %v11806 = vpop.f32.mrb[0].mxu0
        %v11807 = vadd.f32 0.0, %v11806
        %v11808 = vpop.f32.mrb[0].mxu0
        %11809 = vmatprep.mubr.bf16.mxu0 0
        %11810 = vmatmul.mubr.bf16.gmra.mrb[0].mxu0 %v11641
        %v11811 = vpop.f32.mrb[0].mxu0
        %v11812 = vadd.f32 0.0, %v11811
        %v11813 = vpop.f32.mrb[0].mxu0
        %v11814 = vpop.f32.mrb[0].mxu0
        %v11815 = vadd.f32 0.0, %v11814
        %v11816 = vpop.f32.mrb[0].mxu0
        %11817 = vmatprep.mubr.bf16.mxu0 0
        %11818 = vmatmul.mubr.bf16.gmra.mrb[0].mxu0 %v11642
        %v11819 = vpop.f32.mrb[0].mxu0
        %v11820 = vadd.f32 0.0, %v11819
        %v11821 = vpop.f32.mrb[0].mxu0
        %v11822 = vpop.f32.mrb[0].mxu0
        %v11823 = vadd.f32 0.0, %v11822
        %v11824 = vpop.f32.mrb[0].mxu0
        %11825 = vmatprep.mubr.bf16.mxu0 0
        %11826 = vmatmul.mubr.bf16.gmra.mrb[0].mxu0 %v11643
        %v11827 = vpop.f32.mrb[0].mxu0
        %v11828 = vadd.f32 0.0, %v11827
        %v11829 = vpop.f32.mrb[0].mxu0
        %v11830 = vpop.f32.mrb[0].mxu0
        %v11831 = vadd.f32 0.0, %v11830
        %v11832 = vpop.f32.mrb[0].mxu0
        %11833 = vmatprep.mubr.bf16.mxu0 0
        %11834 = vmatmul.mubr.bf16.gmra.mrb[0].mxu0 %v11644
        %v11835 = vpop.f32.mrb[0].mxu0
        %v11836 = vadd.f32 0.0, %v11835
        %v11837 = vpop.f32.mrb[0].mxu0
        %v11838 = vpop.f32.mrb[0].mxu0
        %v11839 = vadd.f32 0.0, %v11838
        %v11840 = vpop.f32.mrb[0].mxu0
        %11841 = vmatprep.mubr.bf16.mxu0 0
        %11842 = vmatmul.mubr.bf16.gmra.mrb[0].mxu0 %v11645
        %v11843 = vpop.f32.mrb[0].mxu0
        %v11844 = vadd.f32 0.0, %v11843
        %v11845 = vpop.f32.mrb[0].mxu0
        %v11846 = vpop.f32.mrb[0].mxu0
        %v11847 = vadd.f32 0.0, %v11846
        %v11848 = vpop.f32.mrb[0].mxu0
        %11849 = vmatprep.mubr.bf16.mxu0 0
        %11850 = vmatmul.mubr.bf16.gmra.mrb[0].mxu0 %v11646
        %v11851 = vpop.f32.mrb[0].mxu0
        %v11852 = vadd.f32 0.0, %v11851
        %v11853 = vpop.f32.mrb[0].mxu0
        %v11854 = vpop.f32.mrb[0].mxu0
        %v11855 = vadd.f32 0.0, %v11854
        %v11856 = vpop.f32.mrb[0].mxu0
        %11857 = vmatprep.mubr.bf16.mxu0 0
        %11858 = vmatmul.mubr.bf16.gmra.mrb[0].mxu0 %v11647
        %v11859 = vpop.f32.mrb[0].mxu0
        %v11860 = vadd.f32 0.0, %v11859
        %v11861 = vpop.f32.mrb[0].mxu0
        %v11862 = vpop.f32.mrb[0].mxu0
        %v11863 = vadd.f32 0.0, %v11862
        %v11864 = vpop.f32.mrb[0].mxu0
        %11865 = vmatprep.mubr.bf16.mxu0 0
        %11866 = vmatmul.mubr.bf16.gmra.mrb[0].mxu0 %v11648
        %v11867 = vpop.f32.mrb[0].mxu0
        %v11868 = vadd.f32 0.0, %v11867
        %v11869 = vpop.f32.mrb[0].mxu0
        %v11870 = vpop.f32.mrb[0].mxu0
        %v11871 = vadd.f32 0.0, %v11870
        %v11872 = vpop.f32.mrb[0].mxu0
        %11873 = vdwg.mxu0
        %v11874 = vadd.f32 %v11376, %v11748
        %v11875 = vadd.f32 %v11377, %v11751
        %v11876 = vadd.f32 %v11378, %v11756
        %v11877 = vadd.f32 %v11379, %v11759
        %v11878 = vadd.f32 %v11380, %v11764
        %v11879 = vadd.f32 %v11381, %v11767
        %v11880 = vadd.f32 %v11382, %v11772
        %v11881 = vadd.f32 %v11383, %v11775
        %v11882 = vadd.f32 %v11384, %v11780
        %v11883 = vadd.f32 %v11385, %v11783
        %v11884 = vadd.f32 %v11386, %v11788
        %v11885 = vadd.f32 %v11387, %v11791
        %v11886 = vadd.f32 %v11388, %v11796
        %v11887 = vadd.f32 %v11389, %v11799
        %v11888 = vadd.f32 %v11390, %v11804
        %v11889 = vadd.f32 %v11391, %v11807
        %v11890 = vadd.f32 %v11392, %v11812
        %v11891 = vadd.f32 %v11393, %v11815
        %v11892 = vadd.f32 %v11394, %v11820
        %v11893 = vadd.f32 %v11395, %v11823
        %v11894 = vadd.f32 %v11396, %v11828
        %v11895 = vadd.f32 %v11397, %v11831
        %v11896 = vadd.f32 %v11398, %v11836
        %v11897 = vadd.f32 %v11399, %v11839
        %v11898 = vadd.f32 %v11400, %v11844
        %v11899 = vadd.f32 %v11401, %v11847
        %v11900 = vadd.f32 %v11402, %v11852
        %v11901 = vadd.f32 %v11403, %v11855
        %v11902 = vadd.f32 %v11404, %v11860
        %v11903 = vadd.f32 %v11405, %v11863
        %v11904 = vadd.f32 %v11406, %v11868
        %v11905 = vadd.f32 %v11407, %v11871
        %v11906 = vld [vmem:[%s7] sm:$0x1]
        %v11908 = vlaneseq
        %v11909 = vshrl.u32 %v11908, 7
        %v11910 = vsub.s32 0, %v11909
        %v11911 = vrot.slane %v11906, %v11910
        %v11913 = vadd.f32 %v11874, %v11911
        %v11914 = vadd.f32 %v11875, %v11911
        %v11915 = vadd.f32 %v11876, %v11911
        %v11916 = vadd.f32 %v11877, %v11911
        %v11917 = vadd.f32 %v11878, %v11911
        %v11918 = vadd.f32 %v11879, %v11911
        %v11919 = vadd.f32 %v11880, %v11911
        %v11920 = vadd.f32 %v11881, %v11911
        %v11921 = vadd.f32 %v11882, %v11911
        %v11922 = vadd.f32 %v11883, %v11911
        %v11923 = vadd.f32 %v11884, %v11911
        %v11924 = vadd.f32 %v11885, %v11911
        %v11925 = vadd.f32 %v11886, %v11911
        %v11926 = vadd.f32 %v11887, %v11911
        %v11927 = vadd.f32 %v11888, %v11911
        %v11928 = vadd.f32 %v11889, %v11911
        %v11929 = vadd.f32 %v11890, %v11911
        %v11930 = vadd.f32 %v11891, %v11911
        %v11931 = vadd.f32 %v11892, %v11911
        %v11932 = vadd.f32 %v11893, %v11911
        %v11933 = vadd.f32 %v11894, %v11911
        %v11934 = vadd.f32 %v11895, %v11911
        %v11935 = vadd.f32 %v11896, %v11911
        %v11936 = vadd.f32 %v11897, %v11911
        %v11937 = vadd.f32 %v11898, %v11911
        %v11938 = vadd.f32 %v11899, %v11911
        %v11939 = vadd.f32 %v11900, %v11911
        %v11940 = vadd.f32 %v11901, %v11911
        %v11941 = vadd.f32 %v11902, %v11911
        %v11942 = vadd.f32 %v11903, %v11911
        %v11943 = vadd.f32 %v11904, %v11911
        %v11944 = vadd.f32 %v11905, %v11911
        %v11945 = vld [vmem:[%s358] sm:$0xff]
        %v11946 = vld [vmem:[%s358 + $0x8] sm:$0xff]
        %v11947 = vld [vmem:[%s358 + $0x10] sm:$0xff]
        %v11948 = vld [vmem:[%s358 + $0x18] sm:$0xff]
        %v11949 = vld [vmem:[%s358 + $0x20] sm:$0xff]
        %v11950 = vld [vmem:[%s358 + $0x28] sm:$0xff]
        %v11951 = vld [vmem:[%s358 + $0x30] sm:$0xff]
        %v11952 = vld [vmem:[%s358 + $0x38] sm:$0xff]
        %v11953 = vld [vmem:[%s358 + $0x40] sm:$0xff]
        %v11954 = vld [vmem:[%s358 + $0x48] sm:$0xff]
        %v11955 = vld [vmem:[%s358 + $0x50] sm:$0xff]
        %v11956 = vld [vmem:[%s358 + $0x58] sm:$0xff]
        %v11957 = vld [vmem:[%s358 + $0x60] sm:$0xff]
        %v11958 = vld [vmem:[%s358 + $0x68] sm:$0xff]
        %v11959 = vld [vmem:[%s358 + $0x70] sm:$0xff]
        %v11960 = vld [vmem:[%s358 + $0x78] sm:$0xff]
        %v11961 = vld [vmem:[%s358 + $0x80] sm:$0xff]
        %v11962 = vld [vmem:[%s358 + $0x88] sm:$0xff]
        %v11963 = vld [vmem:[%s358 + $0x90] sm:$0xff]
        %v11964 = vld [vmem:[%s358 + $0x98] sm:$0xff]
        %v11965 = vld [vmem:[%s358 + $0xa0] sm:$0xff]
        %v11966 = vld [vmem:[%s358 + $0xa8] sm:$0xff]
        %v11967 = vld [vmem:[%s358 + $0xb0] sm:$0xff]
        %v11968 = vld [vmem:[%s358 + $0xb8] sm:$0xff]
        %v11969 = vld [vmem:[%s358 + $0xc0] sm:$0xff]
        %v11970 = vld [vmem:[%s358 + $0xc8] sm:$0xff]
        %v11971 = vld [vmem:[%s358 + $0xd0] sm:$0xff]
        %v11972 = vld [vmem:[%s358 + $0xd8] sm:$0xff]
        %v11973 = vld [vmem:[%s358 + $0xe0] sm:$0xff]
        %v11974 = vld [vmem:[%s358 + $0xe8] sm:$0xff]
        %v11975 = vld [vmem:[%s358 + $0xf0] sm:$0xff]
        %v11976 = vld [vmem:[%s358 + $0xf8] sm:$0xff]
        %v11977 = vsub.f32 %v11945, %v11913
        %v11978 = vsub.f32 %v11946, %v11914
        %v11979 = vsub.f32 %v11947, %v11915
        %v11980 = vsub.f32 %v11948, %v11916
        %v11981 = vsub.f32 %v11949, %v11917
        %v11982 = vsub.f32 %v11950, %v11918
        %v11983 = vsub.f32 %v11951, %v11919
        %v11984 = vsub.f32 %v11952, %v11920
        %v11985 = vsub.f32 %v11953, %v11921
        %v11986 = vsub.f32 %v11954, %v11922
        %v11987 = vsub.f32 %v11955, %v11923
        %v11988 = vsub.f32 %v11956, %v11924
        %v11989 = vsub.f32 %v11957, %v11925
        %v11990 = vsub.f32 %v11958, %v11926
        %v11991 = vsub.f32 %v11959, %v11927
        %v11992 = vsub.f32 %v11960, %v11928
        %v11993 = vsub.f32 %v11961, %v11929
        %v11994 = vsub.f32 %v11962, %v11930
        %v11995 = vsub.f32 %v11963, %v11931
        %v11996 = vsub.f32 %v11964, %v11932
        %v11997 = vsub.f32 %v11965, %v11933
        %v11998 = vsub.f32 %v11966, %v11934
        %v11999 = vsub.f32 %v11967, %v11935
        %v12000 = vsub.f32 %v11968, %v11936
        %v12001 = vsub.f32 %v11969, %v11937
        %v12002 = vsub.f32 %v11970, %v11938
        %v12003 = vsub.f32 %v11971, %v11939
        %v12004 = vsub.f32 %v11972, %v11940
        %v12005 = vsub.f32 %v11973, %v11941
        %v12006 = vsub.f32 %v11974, %v11942
        %v12007 = vsub.f32 %v11975, %v11943
        %v12008 = vsub.f32 %v11976, %v11944
        %v12009 = vmul.f32 %v11977, %v11977
        %v12010 = vmul.f32 %v11978, %v11978
        %v12011 = vmul.f32 %v11979, %v11979
        %v12012 = vmul.f32 %v11980, %v11980
        %v12013 = vmul.f32 %v11981, %v11981
        %v12014 = vmul.f32 %v11982, %v11982
        %v12015 = vmul.f32 %v11983, %v11983
        %v12016 = vmul.f32 %v11984, %v11984
        %v12017 = vmul.f32 %v11985, %v11985
        %v12018 = vmul.f32 %v11986, %v11986
        %v12019 = vmul.f32 %v11987, %v11987
        %v12020 = vmul.f32 %v11988, %v11988
        %v12021 = vmul.f32 %v11989, %v11989
        %v12022 = vmul.f32 %v11990, %v11990
        %v12023 = vmul.f32 %v11991, %v11991
        %v12024 = vmul.f32 %v11992, %v11992
        %v12025 = vmul.f32 %v11993, %v11993
        %v12026 = vmul.f32 %v11994, %v11994
        %v12027 = vmul.f32 %v11995, %v11995
        %v12028 = vmul.f32 %v11996, %v11996
        %v12029 = vmul.f32 %v11997, %v11997
        %v12030 = vmul.f32 %v11998, %v11998
        %v12031 = vmul.f32 %v11999, %v11999
        %v12032 = vmul.f32 %v12000, %v12000
        %v12033 = vmul.f32 %v12001, %v12001
        %v12034 = vmul.f32 %v12002, %v12002
        %v12035 = vmul.f32 %v12003, %v12003
        %v12036 = vmul.f32 %v12004, %v12004
        %v12037 = vmul.f32 %v12005, %v12005
        %v12038 = vmul.f32 %v12006, %v12006
        %v12039 = vmul.f32 %v12007, %v12007
        %v12040 = vmul.f32 %v12008, %v12008
        %vm12041 = vcmask 31744
        %v12042 = vsel %vm12041, %v12009, 0.0
        %12043 = vadd.xlane.f32.xlu0 %v12042
        %v12044 = vpop.xlane.xlu0 %12043
        %v12045 = vsel %vm12041, %v12010, 0.0
        %12046 = vadd.xlane.f32.xlu0 %v12045
        %v12047 = vpop.xlane.xlu0 %12046
        %v12048 = vsel %vm12041, %v12011, 0.0
        %12049 = vadd.xlane.f32.xlu0 %v12048
        %v12050 = vpop.xlane.xlu0 %12049
        %v12051 = vsel %vm12041, %v12012, 0.0
        %12052 = vadd.xlane.f32.xlu0 %v12051
        %v12053 = vpop.xlane.xlu0 %12052
        %v12054 = vsel %vm12041, %v12013, 0.0
        %12055 = vadd.xlane.f32.xlu0 %v12054
        %v12056 = vpop.xlane.xlu0 %12055
        %v12057 = vsel %vm12041, %v12014, 0.0
        %12058 = vadd.xlane.f32.xlu0 %v12057
        %v12059 = vpop.xlane.xlu0 %12058
        %v12060 = vsel %vm12041, %v12015, 0.0
        %12061 = vadd.xlane.f32.xlu0 %v12060
        %v12062 = vpop.xlane.xlu0 %12061
        %v12063 = vsel %vm12041, %v12016, 0.0
        %12064 = vadd.xlane.f32.xlu0 %v12063
        %v12065 = vpop.xlane.xlu0 %12064
        %v12066 = vsel %vm12041, %v12017, 0.0
        %12067 = vadd.xlane.f32.xlu0 %v12066
        %v12068 = vpop.xlane.xlu0 %12067
        %v12069 = vsel %vm12041, %v12018, 0.0
        %12070 = vadd.xlane.f32.xlu0 %v12069
        %v12071 = vpop.xlane.xlu0 %12070
        %v12072 = vsel %vm12041, %v12019, 0.0
        %12073 = vadd.xlane.f32.xlu0 %v12072
        %v12074 = vpop.xlane.xlu0 %12073
        %v12075 = vsel %vm12041, %v12020, 0.0
        %12076 = vadd.xlane.f32.xlu0 %v12075
        %v12077 = vpop.xlane.xlu0 %12076
        %v12078 = vsel %vm12041, %v12021, 0.0
        %12079 = vadd.xlane.f32.xlu0 %v12078
        %v12080 = vpop.xlane.xlu0 %12079
        %v12081 = vsel %vm12041, %v12022, 0.0
        %12082 = vadd.xlane.f32.xlu0 %v12081
        %v12083 = vpop.xlane.xlu0 %12082
        %v12084 = vsel %vm12041, %v12023, 0.0
        %12085 = vadd.xlane.f32.xlu0 %v12084
        %v12086 = vpop.xlane.xlu0 %12085
        %v12087 = vsel %vm12041, %v12024, 0.0
        %12088 = vadd.xlane.f32.xlu0 %v12087
        %v12089 = vpop.xlane.xlu0 %12088
        %v12090 = vsel %vm12041, %v12025, 0.0
        %12091 = vadd.xlane.f32.xlu0 %v12090
        %v12092 = vpop.xlane.xlu0 %12091
        %v12093 = vsel %vm12041, %v12026, 0.0
        %12094 = vadd.xlane.f32.xlu0 %v12093
        %v12095 = vpop.xlane.xlu0 %12094
        %v12096 = vsel %vm12041, %v12027, 0.0
        %12097 = vadd.xlane.f32.xlu0 %v12096
        %v12098 = vpop.xlane.xlu0 %12097
        %v12099 = vsel %vm12041, %v12028, 0.0
        %12100 = vadd.xlane.f32.xlu0 %v12099
        %v12101 = vpop.xlane.xlu0 %12100
        %v12102 = vsel %vm12041, %v12029, 0.0
        %12103 = vadd.xlane.f32.xlu0 %v12102
        %v12104 = vpop.xlane.xlu0 %12103
        %v12105 = vsel %vm12041, %v12030, 0.0
        %12106 = vadd.xlane.f32.xlu0 %v12105
        %v12107 = vpop.xlane.xlu0 %12106
        %v12108 = vsel %vm12041, %v12031, 0.0
        %12109 = vadd.xlane.f32.xlu0 %v12108
        %v12110 = vpop.xlane.xlu0 %12109
        %v12111 = vsel %vm12041, %v12032, 0.0
        %12112 = vadd.xlane.f32.xlu0 %v12111
        %v12113 = vpop.xlane.xlu0 %12112
        %v12114 = vsel %vm12041, %v12033, 0.0
        %12115 = vadd.xlane.f32.xlu0 %v12114
        %v12116 = vpop.xlane.xlu0 %12115
        %v12117 = vsel %vm12041, %v12034, 0.0
        %12118 = vadd.xlane.f32.xlu0 %v12117
        %v12119 = vpop.xlane.xlu0 %12118
        %v12120 = vsel %vm12041, %v12035, 0.0
        %12121 = vadd.xlane.f32.xlu0 %v12120
        %v12122 = vpop.xlane.xlu0 %12121
        %v12123 = vsel %vm12041, %v12036, 0.0
        %12124 = vadd.xlane.f32.xlu0 %v12123
        %v12125 = vpop.xlane.xlu0 %12124
        %v12126 = vsel %vm12041, %v12037, 0.0
        %12127 = vadd.xlane.f32.xlu0 %v12126
        %v12128 = vpop.xlane.xlu0 %12127
        %v12129 = vsel %vm12041, %v12038, 0.0
        %12130 = vadd.xlane.f32.xlu0 %v12129
        %v12131 = vpop.xlane.xlu0 %12130
        %v12132 = vsel %vm12041, %v12039, 0.0
        %12133 = vadd.xlane.f32.xlu0 %v12132
        %v12134 = vpop.xlane.xlu0 %12133
        %v12135 = vsel %vm12041, %v12040, 0.0
        %12136 = vadd.xlane.f32.xlu0 %v12135
        %v12137 = vpop.xlane.xlu0 %12136
        %v12138 = vadd.f32 %v12044, %v12047
        %v12139 = vadd.f32 %v12138, %v12050
        %v12140 = vadd.f32 %v12139, %v12053
        %v12141 = vadd.f32 %v12140, %v12056
        %v12142 = vadd.f32 %v12141, %v12059
        %v12143 = vadd.f32 %v12142, %v12062
        %v12144 = vadd.f32 %v12143, %v12065
        %v12145 = vadd.f32 %v12144, %v12068
        %v12146 = vadd.f32 %v12145, %v12071
        %v12147 = vadd.f32 %v12146, %v12074
        %v12148 = vadd.f32 %v12147, %v12077
        %v12149 = vadd.f32 %v12148, %v12080
        %v12150 = vadd.f32 %v12149, %v12083
        %v12151 = vadd.f32 %v12150, %v12086
        %v12152 = vadd.f32 %v12151, %v12089
        %v12153 = vadd.f32 %v12152, %v12092
        %v12154 = vadd.f32 %v12153, %v12095
        %v12155 = vadd.f32 %v12154, %v12098
        %v12156 = vadd.f32 %v12155, %v12101
        %v12157 = vadd.f32 %v12156, %v12104
        %v12158 = vadd.f32 %v12157, %v12107
        %v12159 = vadd.f32 %v12158, %v12110
        %v12160 = vadd.f32 %v12159, %v12113
        %v12161 = vadd.f32 %v12160, %v12116
        %v12162 = vadd.f32 %v12161, %v12119
        %v12163 = vadd.f32 %v12162, %v12122
        %v12164 = vadd.f32 %v12163, %v12125
        %v12165 = vadd.f32 %v12164, %v12128
        %v12166 = vadd.f32 %v12165, %v12131
        %v12167 = vadd.f32 %v12166, %v12134
        %v12168 = vadd.f32 %v12167, %v12137
        %v12169 = vrot.slane %v12168, 4
        %v12170 = vadd.f32 %v12168, %v12169
        %v12171 = vrot.slane %v12170, 2
        %v12172 = vadd.f32 %v12170, %v12171
        %v12173 = vrot.slane %v12172, 1
        %v12174 = vadd.f32 %v12172, %v12173
        %vm12175 = vcmask 0
        %12176 = vst.msk [vmem:[%s369] sm:$0x1] %vm12175, %v12174
        %p12177 = scmp.lt.s32.totalorder %s20, 1
        %s12178 = scalar_select %p12177, %s20, 1
        %s12179 = scalar_lea.vmem %s8, %s12178
        // Predicated region
        $region57: #{conditional_gaussian_diffusion_loss.1} parent=51 // pred_check
          %p12180 = pneg %p226
        $region58: #{conditional_gaussian_diffusion_loss.1} parent=51 // pred_check_branch
          %12182 = sbr.rel (%p12180) target = $region60
        $region59: #{conditional_gaussian_diffusion_loss.1} parent=51 // pred_region
          _
        $region60: #{conditional_gaussian_diffusion_loss.1} parent=51 // pred_fallthru
          _
      $region52: #{conditional_gaussian_diffusion_loss.1} parent=5 // pred_fallthru
        _
      %p12183 = scmp.le.s32.totalorder 2, %s15
      // Predicated region
      $region61: #{conditional_gaussian_diffusion_loss.1} parent=5 // pred_check
        %p12184 = pneg %p12183
      $region62: #{conditional_gaussian_diffusion_loss.1} parent=5 // pred_check_branch
        %12186 = sbr.rel (%p12184) target = $region64
      $region63: #{conditional_gaussian_diffusion_loss.1} parent=5 // pred_region
        %s12187 = ssub.s32 %s15, 2
        // Predicated region
        $region65: #{conditional_gaussian_diffusion_loss.1} parent=63 // pred_check
          %p12188 = pneg %p232
        $region66: #{conditional_gaussian_diffusion_loss.1} parent=63 // pred_check_branch
          %12190 = sbr.rel (%p12188) target = $region68
        $region67: #{conditional_gaussian_diffusion_loss.1} parent=63 // pred_region
          %p12191 = scmp.lt.s32.totalorder %s21, 1
          %s12192 = scalar_select %p12191, %s21, 1
          %s12193 = scalar_lea.vmem %s8, %s12192
        $region68: #{conditional_gaussian_diffusion_loss.1} parent=63 // pred_fallthru
          _
      $region64: #{conditional_gaussian_diffusion_loss.1} parent=5 // pred_fallthru
        _
    $region6: #{conditional_gaussian_diffusion_loss.1} parent=1 // loop_footer
      %s19 = sadd.s32 1, %s15
    $region7: #{conditional_gaussian_diffusion_loss.1} parent=1 // loop_footer_branch
      %14 = sbr.rel target = $region3
    $region8: #{conditional_gaussian_diffusion_loss.1} parent=1 // loop_exit
      _
    %12194 = vsyncpa [#allocation5], 1
    %s12195 = scalar_lea.sflag [#allocation5], 1
    %12196 = vsyncpa %s12195, 1

</llo_original>
